<compile_context>
chip_gen: v7x
topology: tpu7x:2x2x1
jax: 0.10.0
libtpu: 0.0.40
codegen_flags: <defaults>
</compile_context>

<pallas_src>
import functools
import math

import jax
import jax.numpy as jnp
from jax import lax
from jax.experimental import pallas as pl
from jax.experimental.pallas import tpu as pltpu

LN_EPS = 1e-5


def _ln_rows(y, gamma, beta):
    """Row-wise LayerNorm over the last dim; gamma/beta shaped (1, d)."""
    mu = jnp.mean(y, axis=-1, keepdims=True)
    var = jnp.mean(jnp.square(y - mu), axis=-1, keepdims=True)
    return (y - mu) * lax.rsqrt(var + LN_EPS) * gamma + beta


# ---------------------------------------------------------------------------
# Kernel 1: fused multi-head attention + out-proj + residual + LayerNorm.
# ---------------------------------------------------------------------------
def _mha_kernel(nhead,
                x_ref, qpos_ref, kv_ref, kpos_ref, bias_ref,
                wq_ref, bq_ref, wk_ref, bk_ref, wv_ref, bv_ref,
                wo_ref, bo_ref, g_ref, b_ref, out_ref):
    x = x_ref[0]                                   # (Sq, d) residual / query base
    q_in = x + qpos_ref[0]
    kv = kv_ref[0]                                 # (Sk, d)
    k_in = kv + kpos_ref[0]

    q = jnp.dot(q_in, wq_ref[...], preferred_element_type=jnp.float32) + bq_ref[...]
    k = jnp.dot(k_in, wk_ref[...], preferred_element_type=jnp.float32) + bk_ref[...]
    v = jnp.dot(kv, wv_ref[...], preferred_element_type=jnp.float32) + bv_ref[...]

    d = x.shape[-1]
    hd = d // nhead
    scale = 1.0 / math.sqrt(hd)
    bias = bias_ref[0]                             # (1, Sk) additive key-padding bias

    ctx_parts = []
    for h in range(nhead):
        qh = q[:, h * hd:(h + 1) * hd]
        kh = k[:, h * hd:(h + 1) * hd]
        vh = v[:, h * hd:(h + 1) * hd]
        s = jnp.einsum("qd,kd->qk", qh, kh,
                       preferred_element_type=jnp.float32) * scale + bias
        s = s - jnp.max(s, axis=-1, keepdims=True)
        p = jnp.exp(s)
        p = p / jnp.sum(p, axis=-1, keepdims=True)
        ctx_parts.append(jnp.dot(p, vh, preferred_element_type=jnp.float32))
    ctx = jnp.concatenate(ctx_parts, axis=-1)      # (Sq, d) heads concatenated

    attn = jnp.dot(ctx, wo_ref[...], preferred_element_type=jnp.float32) + bo_ref[...]
    out_ref[0] = _ln_rows(x + attn, g_ref[...], b_ref[...])


def fused_mha(x, q_pos, kv, k_pos, key_bias, p, ln_g, ln_b, nhead):
    bs, sq, d = x.shape
    sk = kv.shape[1]
    row_q = pl.BlockSpec((1, sq, d), lambda b: (b, 0, 0))
    row_k = pl.BlockSpec((1, sk, d), lambda b: (b, 0, 0))
    mat = pl.BlockSpec((d, d), lambda b: (0, 0))
    vec_d = pl.BlockSpec((1, d), lambda b: (0, 0))
    bias_spec = pl.BlockSpec((1, 1, sk), lambda b: (b, 0, 0))
    kern = functools.partial(_mha_kernel, nhead)
    return pl.pallas_call(
        kern,
        out_shape=jax.ShapeDtypeStruct((bs, sq, d), x.dtype),
        grid_spec=pltpu.PrefetchScalarGridSpec(
            num_scalar_prefetch=0,
            grid=(bs,),
            in_specs=[row_q, row_q, row_k, row_k, bias_spec,
                      mat, vec_d, mat, vec_d, mat, vec_d,
                      mat, vec_d, vec_d, vec_d],
            out_specs=row_q,
        ),
        compiler_params=pltpu.CompilerParams(
            dimension_semantics=("parallel",)),
    )(x, q_pos, kv, k_pos, key_bias,
      p["wq"], p["bq"].reshape(1, d), p["wk"], p["bk"].reshape(1, d),
      p["wv"], p["bv"].reshape(1, d), p["wo"], p["bo"].reshape(1, d),
      ln_g.reshape(1, d), ln_b.reshape(1, d))


# ---------------------------------------------------------------------------
# Kernel 2: fused FFN (linear1 -> ReLU -> linear2) + residual + LayerNorm.
# ---------------------------------------------------------------------------
def _ffn_kernel(x_ref, w1_ref, b1_ref, w2_ref, b2_ref, g_ref, b_ref, out_ref):
    x = x_ref[0]                                   # (Sq, d)
    hidden = jnp.dot(x, w1_ref[...], preferred_element_type=jnp.float32) + b1_ref[...]
    hidden = jnp.maximum(hidden, 0.0)
    y = x + jnp.dot(hidden, w2_ref[...], preferred_element_type=jnp.float32) + b2_ref[...]
    out_ref[0] = _ln_rows(y, g_ref[...], b_ref[...])


def fused_ffn(x, w1, b1, w2, b2, ln_g, ln_b):
    bs, sq, d = x.shape
    ff = w1.shape[1]
    row = pl.BlockSpec((1, sq, d), lambda b: (b, 0, 0))
    return pl.pallas_call(
        _ffn_kernel,
        out_shape=jax.ShapeDtypeStruct((bs, sq, d), x.dtype),
        grid_spec=pltpu.PrefetchScalarGridSpec(
            num_scalar_prefetch=0,
            grid=(bs,),
            in_specs=[row,
                      pl.BlockSpec((d, ff), lambda b: (0, 0)),
                      pl.BlockSpec((1, ff), lambda b: (0, 0)),
                      pl.BlockSpec((ff, d), lambda b: (0, 0)),
                      pl.BlockSpec((1, d), lambda b: (0, 0)),
                      pl.BlockSpec((1, d), lambda b: (0, 0)),
                      pl.BlockSpec((1, d), lambda b: (0, 0))],
            out_specs=row,
        ),
        compiler_params=pltpu.CompilerParams(
            dimension_semantics=("parallel",)),
    )(x, w1, b1.reshape(1, ff), w2, b2.reshape(1, d),
      ln_g.reshape(1, d), ln_b.reshape(1, d))


# ---------------------------------------------------------------------------
# Kernel 3: plain LayerNorm (decoder's final norm).
# ---------------------------------------------------------------------------
def _ln_kernel(x_ref, g_ref, b_ref, out_ref):
    out_ref[0] = _ln_rows(x_ref[0], g_ref[...], b_ref[...])


def layer_norm(x, g, b):
    bs, sq, d = x.shape
    row = pl.BlockSpec((1, sq, d), lambda i: (i, 0, 0))
    vec = pl.BlockSpec((1, d), lambda i: (0, 0))
    return pl.pallas_call(
        _ln_kernel,
        out_shape=jax.ShapeDtypeStruct((bs, sq, d), x.dtype),
        grid_spec=pltpu.PrefetchScalarGridSpec(
            num_scalar_prefetch=0, grid=(bs,),
            in_specs=[row, vec, vec], out_specs=row),
        compiler_params=pltpu.CompilerParams(
            dimension_semantics=("parallel",)),
    )(x, g.reshape(1, d), b.reshape(1, d))


# ---------------------------------------------------------------------------
# Full forward pass (matches transformer_layer.forward in inference mode).
# ---------------------------------------------------------------------------
def transformer_layer_forward(params, src, mask, pos_embed, od_memory, od_pos,
                              od_mask, nhead):
    bs, c, h, w = src.shape
    hw = h * w
    x = src.reshape(bs, c, hw).transpose(0, 2, 1)            # (bs, HW, d)
    pos = pos_embed.reshape(bs, c, hw).transpose(0, 2, 1)    # (bs, HW, d)
    src_bias = jnp.where(mask.reshape(bs, 1, hw),
                         jnp.float32(-1e30), jnp.float32(0.0))
    mem_bias = jnp.where(od_mask[:, None, :],
                         jnp.float32(-1e30), jnp.float32(0.0))
    zero_bias = jnp.zeros((bs, 1, hw), jnp.float32)

    # --- encoder layer (post-norm) ---
    enc = params["enc"]
    e1 = fused_mha(x, pos, x, pos, src_bias, enc["sa"],
                   enc["ln1_g"], enc["ln1_b"], nhead)
    enc_out = fused_ffn(e1, enc["w1"], enc["b1"], enc["w2"], enc["b2"],
                        enc["ln2_g"], enc["ln2_b"])

    # --- decoder layer (post-norm): self-attn, cross-attn, FFN ---
    dec = params["dec"]
    tgt = enc_out
    d1 = fused_mha(tgt, pos, tgt, pos, zero_bias, dec["sa"],
                   dec["ln1_g"], dec["ln1_b"], nhead)
    d2 = fused_mha(d1, pos, od_memory, od_pos, mem_bias, dec["ca"],
                   dec["ln2_g"], dec["ln2_b"], nhead)
    d3 = fused_ffn(d2, dec["w1"], dec["b1"], dec["w2"], dec["b2"],
                   dec["ln3_g"], dec["ln3_b"])

    # decoder final norm; hs.transpose(1,2)[-1] == (bs, HW, d) which is
    # exactly this layout, so no extra permutation is needed.
    return layer_norm(d3, params["dec_norm_g"], params["dec_norm_b"])


# ---------------------------------------------------------------------------
# Pure-JAX reference (same math, no Pallas) for validation.
# ---------------------------------------------------------------------------
def _ref_mha(x, q_pos, kv, k_pos, key_mask, p, nhead):
    bs, sq, d = x.shape
    sk = kv.shape[1]
    hd = d // nhead
    q = (x + q_pos) @ p["wq"] + p["bq"]
    k = (kv + k_pos) @ p["wk"] + p["bk"]
    v = kv @ p["wv"] + p["bv"]
    q = q.reshape(bs, sq, nhead, hd).transpose(0, 2, 1, 3)
    k = k.reshape(bs, sk, nhead, hd).transpose(0, 2, 1, 3)
    v = v.reshape(bs, sk, nhead, hd).transpose(0, 2, 1, 3)
    s = jnp.einsum("bhqd,bhkd->bhqk", q, k) / math.sqrt(hd)
    if key_mask is not None:
        s = s + jnp.where(key_mask[:, None, None, :], -1e30, 0.0)
    a = jax.nn.softmax(s, axis=-1)
    ctx = jnp.einsum("bhqk,bhkd->bhqd", a, v)
    ctx = ctx.transpose(0, 2, 1, 3).reshape(bs, sq, d)
    return ctx @ p["wo"] + p["bo"]


def _ref_ln(x, g, b):
    mu = x.mean(-1, keepdims=True)
    var = ((x - mu) ** 2).mean(-1, keepdims=True)
    return (x - mu) / jnp.sqrt(var + LN_EPS) * g + b


def _ref_forward(params, src, mask, pos_embed, od_memory, od_pos, od_mask,
                 nhead):
    bs, c, h, w = src.shape
    hw = h * w
    x = src.reshape(bs, c, hw).transpose(0, 2, 1)
    pos = pos_embed.reshape(bs, c, hw).transpose(0, 2, 1)
    m = mask.reshape(bs, hw)

    enc = params["enc"]
    t = _ref_ln(x + _ref_mha(x, pos, x, pos, m, enc["sa"], nhead),
                enc["ln1_g"], enc["ln1_b"])
    ff = jnp.maximum(t @ enc["w1"] + enc["b1"], 0.0) @ enc["w2"] + enc["b2"]
    enc_out = _ref_ln(t + ff, enc["ln2_g"], enc["ln2_b"])

    dec = params["dec"]
    tgt = enc_out
    t = _ref_ln(tgt + _ref_mha(tgt, pos, tgt, pos, None, dec["sa"], nhead),
                dec["ln1_g"], dec["ln1_b"])
    t = _ref_ln(t + _ref_mha(t, pos, od_memory, od_pos, od_mask, dec["ca"],
                             nhead),
                dec["ln2_g"], dec["ln2_b"])
    ff = jnp.maximum(t @ dec["w1"] + dec["b1"], 0.0) @ dec["w2"] + dec["b2"]
    t = _ref_ln(t + ff, dec["ln3_g"], dec["ln3_b"])
    return _ref_ln(t, params["dec_norm_g"], params["dec_norm_b"])


# ---------------------------------------------------------------------------
# Deterministic parameter construction.
# ---------------------------------------------------------------------------
def init_params(key, d_model, nhead, dim_ff):
    keys = iter(jax.random.split(key, 64))

    def mat(n_in, n_out):
        return jax.random.normal(next(keys), (n_in, n_out),
                                 jnp.float32) * (1.0 / math.sqrt(n_in))

    def vec(n, scale=0.02):
        return jax.random.normal(next(keys), (n,), jnp.float32) * scale

    def attn():
        return dict(wq=mat(d_model, d_model), bq=vec(d_model),
                    wk=mat(d_model, d_model), bk=vec(d_model),
                    wv=mat(d_model, d_model), bv=vec(d_model),
                    wo=mat(d_model, d_model), bo=vec(d_model))

    def ln():
        return 1.0 + vec(d_model, 0.05), vec(d_model, 0.05)

    enc = dict(sa=attn(), w1=mat(d_model, dim_ff), b1=vec(dim_ff),
               w2=mat(dim_ff, d_model), b2=vec(d_model))
    enc["ln1_g"], enc["ln1_b"] = ln()
    enc["ln2_g"], enc["ln2_b"] = ln()

    dec = dict(sa=attn(), ca=attn(), w1=mat(d_model, dim_ff), b1=vec(dim_ff),
               w2=mat(dim_ff, d_model), b2=vec(d_model))
    dec["ln1_g"], dec["ln1_b"] = ln()
    dec["ln2_g"], dec["ln2_b"] = ln()
    dec["ln3_g"], dec["ln3_b"] = ln()

    g, b = ln()
    # TODO(synk): nn.Dropout (identity at inference) and the unused fc_to512
    # linear of TransformerDecoderLayer are intentionally not modeled.
    return dict(enc=enc, dec=dec, dec_norm_g=g, dec_norm_b=b)


if __name__ == "__main__":
    # Small shapes consistent with the module (d_model kept a multiple of 128
    # so the lane axis is dense).
    d_model, nhead, dim_ff = 128, 4, 256
    bs, h, w = 2, 4, 4
    s_od = 24

    key = jax.random.PRNGKey(0)
    k_par, k_src, k_pos, k_mem, k_mpos = jax.random.split(key, 5)

    params = init_params(k_par, d_model, nhead, dim_ff)
    src = jax.random.normal(k_src, (bs, d_model, h, w), jnp.float32)
    pos_embed = jax.random.normal(k_pos, (bs, d_model, h, w), jnp.float32) * 0.1
    od_memory = jax.random.normal(k_mem, (bs, s_od, d_model), jnp.float32)
    od_pos = jax.random.normal(k_mpos, (bs, s_od, d_model), jnp.float32) * 0.1

    # Deterministic key-padding masks (True = padded / ignored); never all-True.
    mask = jnp.zeros((bs, h, w), dtype=bool).at[1, -1, :].set(True)
    od_mask = jnp.zeros((bs, s_od), dtype=bool).at[0, -5:].set(True)

    fwd = jax.jit(functools.partial(transformer_layer_forward, nhead=nhead))
    out = jax.block_until_ready(fwd(params, src, mask, pos_embed,
                                    od_memory, od_pos, od_mask))

    ref = _ref_forward(params, src, mask, pos_embed, od_memory, od_pos,
                       od_mask, nhead)
    assert out.shape == (bs, h * w, d_model), out.shape
    err = float(jnp.max(jnp.abs(out - ref)))
    assert err < 3e-2, f"mismatch vs reference: max abs err = {err}"
    print("KERNEL_OK")
</pallas_src>

<mosaic_0001>
module attributes {stable_mosaic.version = 11 : i64} {
  func.func @_ffn_kernel(%arg0: i32, %arg1: memref<1x16x128xf32, #tpu.memory_space<vmem>>, %arg2: memref<128x256xf32, #tpu.memory_space<vmem>>, %arg3: memref<1x256xf32, #tpu.memory_space<vmem>>, %arg4: memref<256x128xf32, #tpu.memory_space<vmem>>, %arg5: memref<1x128xf32, #tpu.memory_space<vmem>>, %arg6: memref<1x128xf32, #tpu.memory_space<vmem>>, %arg7: memref<1x128xf32, #tpu.memory_space<vmem>>, %arg8: memref<1x16x128xf32, #tpu.memory_space<vmem>>) attributes {dimension_semantics = [#tpu.dimension_semantics<parallel>], iteration_bounds = array<i64: 2>, scalar_prefetch = 0 : i64, scratch_operands = 0 : i64, tpu.core_type = #tpu.core_type<tc>, window_params = [{transform_indices = @transform_0, window_bounds = array<i64: 1, 16, 128>}, {pipeline_mode = #tpu.pipeline_mode<synchronous>, transform_indices = @transform_1, window_bounds = array<i64: 128, 256>}, {pipeline_mode = #tpu.pipeline_mode<synchronous>, transform_indices = @transform_2, window_bounds = array<i64: 1, 256>}, {pipeline_mode = #tpu.pipeline_mode<synchronous>, transform_indices = @transform_3, window_bounds = array<i64: 256, 128>}, {pipeline_mode = #tpu.pipeline_mode<synchronous>, transform_indices = @transform_4, window_bounds = array<i64: 1, 128>}, {pipeline_mode = #tpu.pipeline_mode<synchronous>, transform_indices = @transform_5, window_bounds = array<i64: 1, 128>}, {pipeline_mode = #tpu.pipeline_mode<synchronous>, transform_indices = @transform_6, window_bounds = array<i64: 1, 128>}, {transform_indices = @transform_7, window_bounds = array<i64: 1, 16, 128>}]} {
    %c0 = arith.constant 0 : index
    %c0_0 = arith.constant 0 : index
    %c0_1 = arith.constant 0 : index
    %0 = vector.load %arg1[%c0, %c0_0, %c0_1] : memref<1x16x128xf32, #tpu.memory_space<vmem>>, vector<1x16x128xf32>
    %1 = vector.shape_cast %0 : vector<1x16x128xf32> to vector<16x128xf32>
    %c0_2 = arith.constant 0 : index
    %c0_3 = arith.constant 0 : index
    %2 = vector.load %arg2[%c0_2, %c0_3] : memref<128x256xf32, #tpu.memory_space<vmem>>, vector<128x256xf32>
    %cst = arith.constant dense<0.000000e+00> : vector<16x256xf32>
    %3 = tpu.matmul %1, %2, %cst {dimension_numbers = #tpu.dot_dimension_numbers<[1], [0], [0], [1], [0, 0, 1, 1], [], []>} : vector<16x128xf32>, vector<128x256xf32>, vector<16x256xf32> -> vector<16x256xf32>
    %c0_4 = arith.constant 0 : index
    %c0_5 = arith.constant 0 : index
    %4 = vector.load %arg3[%c0_4, %c0_5] : memref<1x256xf32, #tpu.memory_space<vmem>>, vector<1x256xf32>
    %5 = vector.broadcast %4 : vector<1x256xf32> to vector<16x256xf32>
    %6 = arith.addf %3, %5 : vector<16x256xf32>
    %cst_6 = arith.constant 0.000000e+00 : f32
    %7 = vector.broadcast %cst_6 : f32 to vector<16x256xf32>
    %8 = arith.maximumf %6, %7 : vector<16x256xf32>
    %c0_7 = arith.constant 0 : index
    %c0_8 = arith.constant 0 : index
    %9 = vector.load %arg4[%c0_7, %c0_8] : memref<256x128xf32, #tpu.memory_space<vmem>>, vector<256x128xf32>
    %cst_9 = arith.constant dense<0.000000e+00> : vector<16x128xf32>
    %10 = tpu.matmul %8, %9, %cst_9 {dimension_numbers = #tpu.dot_dimension_numbers<[1], [0], [0], [1], [0, 0, 1, 1], [], []>} : vector<16x256xf32>, vector<256x128xf32>, vector<16x128xf32> -> vector<16x128xf32>
    %11 = arith.addf %1, %10 : vector<16x128xf32>
    %c0_10 = arith.constant 0 : index
    %c0_11 = arith.constant 0 : index
    %12 = vector.load %arg5[%c0_10, %c0_11] : memref<1x128xf32, #tpu.memory_space<vmem>>, vector<1x128xf32>
    %13 = vector.broadcast %12 : vector<1x128xf32> to vector<16x128xf32>
    %14 = arith.addf %11, %13 : vector<16x128xf32>
    %c0_12 = arith.constant 0 : index
    %c0_13 = arith.constant 0 : index
    %15 = vector.load %arg6[%c0_12, %c0_13] : memref<1x128xf32, #tpu.memory_space<vmem>>, vector<1x128xf32>
    %c0_14 = arith.constant 0 : index
    %c0_15 = arith.constant 0 : index
    %16 = vector.load %arg7[%c0_14, %c0_15] : memref<1x128xf32, #tpu.memory_space<vmem>>, vector<1x128xf32>
    %cst_16 = arith.constant dense<0.000000e+00> : vector<16xf32>
    %17 = vector.multi_reduction <add>, %14, %cst_16 [1] : vector<16x128xf32> to vector<16xf32>
    %18 = vector.shape_cast %17 : vector<16xf32> to vector<16x1xf32>
    %cst_17 = arith.constant 1.280000e+02 : f32
    %19 = vector.broadcast %cst_17 : f32 to vector<16x1xf32>
    %20 = arith.divf %18, %19 : vector<16x1xf32>
    %21 = vector.broadcast %20 : vector<16x1xf32> to vector<16x128xf32>
    %22 = arith.subf %14, %21 : vector<16x128xf32>
    %23 = arith.mulf %22, %22 : vector<16x128xf32>
    %cst_18 = arith.constant dense<0.000000e+00> : vector<16xf32>
    %24 = vector.multi_reduction <add>, %23, %cst_18 [1] : vector<16x128xf32> to vector<16xf32>
    %25 = vector.shape_cast %24 : vector<16xf32> to vector<16x1xf32>
    %cst_19 = arith.constant 1.280000e+02 : f32
    %26 = vector.broadcast %cst_19 : f32 to vector<16x1xf32>
    %27 = arith.divf %25, %26 : vector<16x1xf32>
    %28 = vector.broadcast %20 : vector<16x1xf32> to vector<16x128xf32>
    %29 = arith.subf %14, %28 : vector<16x128xf32>
    %cst_20 = arith.constant 9.99999974E-6 : f32
    %30 = vector.broadcast %cst_20 : f32 to vector<16x1xf32>
    %31 = arith.addf %27, %30 : vector<16x1xf32>
    %32 = math.rsqrt %31 : vector<16x1xf32>
    %33 = vector.broadcast %32 : vector<16x1xf32> to vector<16x128xf32>
    %34 = arith.mulf %29, %33 : vector<16x128xf32>
    %35 = vector.broadcast %15 : vector<1x128xf32> to vector<16x128xf32>
    %36 = arith.mulf %34, %35 : vector<16x128xf32>
    %37 = vector.broadcast %16 : vector<1x128xf32> to vector<16x128xf32>
    %38 = arith.addf %36, %37 : vector<16x128xf32>
    %c0_21 = arith.constant 0 : index
    %c0_22 = arith.constant 0 : index
    %c0_23 = arith.constant 0 : index
    %39 = vector.load %arg8[%c0_21, %c0_22, %c0_23] : memref<1x16x128xf32, #tpu.memory_space<vmem>>, vector<1x16x128xf32>
    %40 = vector.shape_cast %39 : vector<1x16x128xf32> to vector<16x128xf32>
    %41 = vector.shape_cast %38 : vector<16x128xf32> to vector<1x16x128xf32>
    tpu.vector_store %arg8[%c0_21, %c0_22, %c0_23], %41 {strides = array<i32>} : memref<1x16x128xf32, #tpu.memory_space<vmem>>, vector<1x16x128xf32>,
    return
  }
  func.func @transform_0(%arg0: i32) -> (i32, i32, i32) {
    %c0_i32 = arith.constant 0 : i32
    %c0_i32_0 = arith.constant 0 : i32
    %c0_i32_1 = arith.constant 0 : i32
    return %arg0, %c0_i32, %c0_i32_0 : i32, i32, i32
  }
  func.func @transform_1(%arg0: i32) -> (i32, i32) {
    %c0_i32 = arith.constant 0 : i32
    %c0_i32_0 = arith.constant 0 : i32
    %c0_i32_1 = arith.constant 0 : i32
    return %c0_i32, %c0_i32_0 : i32, i32
  }
  func.func @transform_2(%arg0: i32) -> (i32, i32) {
    %c0_i32 = arith.constant 0 : i32
    %c0_i32_0 = arith.constant 0 : i32
    %c0_i32_1 = arith.constant 0 : i32
    return %c0_i32, %c0_i32_0 : i32, i32
  }
  func.func @transform_3(%arg0: i32) -> (i32, i32) {
    %c0_i32 = arith.constant 0 : i32
    %c0_i32_0 = arith.constant 0 : i32
    %c0_i32_1 = arith.constant 0 : i32
    return %c0_i32, %c0_i32_0 : i32, i32
  }
  func.func @transform_4(%arg0: i32) -> (i32, i32) {
    %c0_i32 = arith.constant 0 : i32
    %c0_i32_0 = arith.constant 0 : i32
    %c0_i32_1 = arith.constant 0 : i32
    return %c0_i32, %c0_i32_0 : i32, i32
  }
  func.func @transform_5(%arg0: i32) -> (i32, i32) {
    %c0_i32 = arith.constant 0 : i32
    %c0_i32_0 = arith.constant 0 : i32
    %c0_i32_1 = arith.constant 0 : i32
    return %c0_i32, %c0_i32_0 : i32, i32
  }
  func.func @transform_6(%arg0: i32) -> (i32, i32) {
    %c0_i32 = arith.constant 0 : i32
    %c0_i32_0 = arith.constant 0 : i32
    %c0_i32_1 = arith.constant 0 : i32
    return %c0_i32, %c0_i32_0 : i32, i32
  }
  func.func @transform_7(%arg0: i32) -> (i32, i32, i32) {
    %c0_i32 = arith.constant 0 : i32
    %c0_i32_0 = arith.constant 0 : i32
    %c0_i32_1 = arith.constant 0 : i32
    return %arg0, %c0_i32, %c0_i32_0 : i32, i32, i32
  }
}

module attributes {stable_mosaic.version = 11 : i64} {
  func.func @_mha_kernel(%arg0: i32, %arg1: memref<1x16x128xf32, #tpu.memory_space<vmem>>, %arg2: memref<1x16x128xf32, #tpu.memory_space<vmem>>, %arg3: memref<1x16x128xf32, #tpu.memory_space<vmem>>, %arg4: memref<1x16x128xf32, #tpu.memory_space<vmem>>, %arg5: memref<1x1x16xf32, #tpu.memory_space<vmem>>, %arg6: memref<128x128xf32, #tpu.memory_space<vmem>>, %arg7: memref<1x128xf32, #tpu.memory_space<vmem>>, %arg8: memref<128x128xf32, #tpu.memory_space<vmem>>, %arg9: memref<1x128xf32, #tpu.memory_space<vmem>>, %arg10: memref<128x128xf32, #tpu.memory_space<vmem>>, %arg11: memref<1x128xf32, #tpu.memory_space<vmem>>, %arg12: memref<128x128xf32, #tpu.memory_space<vmem>>, %arg13: memref<1x128xf32, #tpu.memory_space<vmem>>, %arg14: memref<1x128xf32, #tpu.memory_space<vmem>>, %arg15: memref<1x128xf32, #tpu.memory_space<vmem>>, %arg16: memref<1x16x128xf32, #tpu.memory_space<vmem>>) attributes {dimension_semantics = [#tpu.dimension_semantics<parallel>], iteration_bounds = array<i64: 2>, scalar_prefetch = 0 : i64, scratch_operands = 0 : i64, tpu.core_type = #tpu.core_type<tc>, window_params = [{transform_indices = @transform_0, window_bounds = array<i64: 1, 16, 128>}, {transform_indices = @transform_1, window_bounds = array<i64: 1, 16, 128>}, {transform_indices = @transform_2, window_bounds = array<i64: 1, 16, 128>}, {transform_indices = @transform_3, window_bounds = array<i64: 1, 16, 128>}, {transform_indices = @transform_4, window_bounds = array<i64: 1, 1, 16>}, {pipeline_mode = #tpu.pipeline_mode<synchronous>, transform_indices = @transform_5, window_bounds = array<i64: 128, 128>}, {pipeline_mode = #tpu.pipeline_mode<synchronous>, transform_indices = @transform_6, window_bounds = array<i64: 1, 128>}, {pipeline_mode = #tpu.pipeline_mode<synchronous>, transform_indices = @transform_7, window_bounds = array<i64: 128, 128>}, {pipeline_mode = #tpu.pipeline_mode<synchronous>, transform_indices = @transform_8, window_bounds = array<i64: 1, 128>}, {pipeline_mode = #tpu.pipeline_mode<synchronous>, transform_indices = @transform_9, window_bounds = array<i64: 128, 128>}, {pipeline_mode = #tpu.pipeline_mode<synchronous>, transform_indices = @transform_10, window_bounds = array<i64: 1, 128>}, {pipeline_mode = #tpu.pipeline_mode<synchronous>, transform_indices = @transform_11, window_bounds = array<i64: 128, 128>}, {pipeline_mode = #tpu.pipeline_mode<synchronous>, transform_indices = @transform_12, window_bounds = array<i64: 1, 128>}, {pipeline_mode = #tpu.pipeline_mode<synchronous>, transform_indices = @transform_13, window_bounds = array<i64: 1, 128>}, {pipeline_mode = #tpu.pipeline_mode<synchronous>, transform_indices = @transform_14, window_bounds = array<i64: 1, 128>}, {transform_indices = @transform_15, window_bounds = array<i64: 1, 16, 128>}]} {
    %c0 = arith.constant 0 : index
    %c0_0 = arith.constant 0 : index
    %c0_1 = arith.constant 0 : index
    %0 = vector.load %arg1[%c0, %c0_0, %c0_1] : memref<1x16x128xf32, #tpu.memory_space<vmem>>, vector<1x16x128xf32>
    %1 = vector.shape_cast %0 : vector<1x16x128xf32> to vector<16x128xf32>
    %c0_2 = arith.constant 0 : index
    %c0_3 = arith.constant 0 : index
    %c0_4 = arith.constant 0 : index
    %2 = vector.load %arg2[%c0_2, %c0_3, %c0_4] : memref<1x16x128xf32, #tpu.memory_space<vmem>>, vector<1x16x128xf32>
    %3 = vector.shape_cast %2 : vector<1x16x128xf32> to vector<16x128xf32>
    %4 = arith.addf %1, %3 : vector<16x128xf32>
    %c0_5 = arith.constant 0 : index
    %c0_6 = arith.constant 0 : index
    %c0_7 = arith.constant 0 : index
    %5 = vector.load %arg3[%c0_5, %c0_6, %c0_7] : memref<1x16x128xf32, #tpu.memory_space<vmem>>, vector<1x16x128xf32>
    %6 = vector.shape_cast %5 : vector<1x16x128xf32> to vector<16x128xf32>
    %c0_8 = arith.constant 0 : index
    %c0_9 = arith.constant 0 : index
    %c0_10 = arith.constant 0 : index
    %7 = vector.load %arg4[%c0_8, %c0_9, %c0_10] : memref<1x16x128xf32, #tpu.memory_space<vmem>>, vector<1x16x128xf32>
    %8 = vector.shape_cast %7 : vector<1x16x128xf32> to vector<16x128xf32>
    %9 = arith.addf %6, %8 : vector<16x128xf32>
    %c0_11 = arith.constant 0 : index
    %c0_12 = arith.constant 0 : index
    %10 = vector.load %arg6[%c0_11, %c0_12] : memref<128x128xf32, #tpu.memory_space<vmem>>, vector<128x128xf32>
    %cst = arith.constant dense<0.000000e+00> : vector<16x128xf32>
    %11 = tpu.matmul %4, %10, %cst {dimension_numbers = #tpu.dot_dimension_numbers<[1], [0], [0], [1], [0, 0, 1, 1], [], []>} : vector<16x128xf32>, vector<128x128xf32>, vector<16x128xf32> -> vector<16x128xf32>
    %c0_13 = arith.constant 0 : index
    %c0_14 = arith.constant 0 : index
    %12 = vector.load %arg7[%c0_13, %c0_14] : memref<1x128xf32, #tpu.memory_space<vmem>>, vector<1x128xf32>
    %13 = vector.broadcast %12 : vector<1x128xf32> to vector<16x128xf32>
    %14 = arith.addf %11, %13 : vector<16x128xf32>
    %c0_15 = arith.constant 0 : index
    %c0_16 = arith.constant 0 : index
    %15 = vector.load %arg8[%c0_15, %c0_16] : memref<128x128xf32, #tpu.memory_space<vmem>>, vector<128x128xf32>
    %cst_17 = arith.constant dense<0.000000e+00> : vector<16x128xf32>
    %16 = tpu.matmul %9, %15, %cst_17 {dimension_numbers = #tpu.dot_dimension_numbers<[1], [0], [0], [1], [0, 0, 1, 1], [], []>} : vector<16x128xf32>, vector<128x128xf32>, vector<16x128xf32> -> vector<16x128xf32>
    %c0_18 = arith.constant 0 : index
    %c0_19 = arith.constant 0 : index
    %17 = vector.load %arg9[%c0_18, %c0_19] : memref<1x128xf32, #tpu.memory_space<vmem>>, vector<1x128xf32>
    %18 = vector.broadcast %17 : vector<1x128xf32> to vector<16x128xf32>
    %19 = arith.addf %16, %18 : vector<16x128xf32>
    %c0_20 = arith.constant 0 : index
    %c0_21 = arith.constant 0 : index
    %20 = vector.load %arg10[%c0_20, %c0_21] : memref<128x128xf32, #tpu.memory_space<vmem>>, vector<128x128xf32>
    %cst_22 = arith.constant dense<0.000000e+00> : vector<16x128xf32>
    %21 = tpu.matmul %6, %20, %cst_22 {dimension_numbers = #tpu.dot_dimension_numbers<[1], [0], [0], [1], [0, 0, 1, 1], [], []>} : vector<16x128xf32>, vector<128x128xf32>, vector<16x128xf32> -> vector<16x128xf32>
    %c0_23 = arith.constant 0 : index
    %c0_24 = arith.constant 0 : index
    %22 = vector.load %arg11[%c0_23, %c0_24] : memref<1x128xf32, #tpu.memory_space<vmem>>, vector<1x128xf32>
    %23 = vector.broadcast %22 : vector<1x128xf32> to vector<16x128xf32>
    %24 = arith.addf %21, %23 : vector<16x128xf32>
    %c0_25 = arith.constant 0 : index
    %c0_26 = arith.constant 0 : index
    %c0_27 = arith.constant 0 : index
    %25 = vector.load %arg5[%c0_25, %c0_26, %c0_27] : memref<1x1x16xf32, #tpu.memory_space<vmem>>, vector<1x1x16xf32>
    %26 = vector.shape_cast %25 : vector<1x1x16xf32> to vector<1x16xf32>
    %27 = vector.extract_strided_slice %14 {offsets = [0, 0], sizes = [16, 32], strides = [1, 1]} : vector<16x128xf32> to vector<16x32xf32>
    %28 = vector.extract_strided_slice %19 {offsets = [0, 0], sizes = [16, 32], strides = [1, 1]} : vector<16x128xf32> to vector<16x32xf32>
    %29 = vector.extract_strided_slice %24 {offsets = [0, 0], sizes = [16, 32], strides = [1, 1]} : vector<16x128xf32> to vector<16x32xf32>
    "tpu.trace_start"() <{level = 10 : i32, message = "qd,kd->qk"}> : () -> ()
    %cst_28 = arith.constant dense<0.000000e+00> : vector<16x16xf32>
    %30 = tpu.matmul %27, %28, %cst_28 {dimension_numbers = #tpu.dot_dimension_numbers<[1], [1], [0], [0], [0, 0, 1, 0], [], []>} : vector<16x32xf32>, vector<16x32xf32>, vector<16x16xf32> -> vector<16x16xf32>
    "tpu.trace_stop"() : () -> ()
    %cst_29 = arith.constant 0.176776692 : f32
    %31 = vector.broadcast %cst_29 : f32 to vector<16x16xf32>
    %32 = arith.mulf %30, %31 : vector<16x16xf32>
    %33 = vector.broadcast %26 : vector<1x16xf32> to vector<16x16xf32>
    %34 = arith.addf %32, %33 : vector<16x16xf32>
    %cst_30 = arith.constant dense<0xFF800000> : vector<16xf32>
    %35 = vector.multi_reduction <maximumf>, %34, %cst_30 [1] : vector<16x16xf32> to vector<16xf32>
    %36 = vector.shape_cast %35 : vector<16xf32> to vector<16x1xf32>
    %37 = vector.broadcast %36 : vector<16x1xf32> to vector<16x16xf32>
    %38 = arith.subf %34, %37 : vector<16x16xf32>
    %39 = math.exp %38 : vector<16x16xf32>
    %cst_31 = arith.constant dense<0.000000e+00> : vector<16xf32>
    %40 = vector.multi_reduction <add>, %39, %cst_31 [1] : vector<16x16xf32> to vector<16xf32>
    %41 = vector.shape_cast %40 : vector<16xf32> to vector<16x1xf32>
    %42 = vector.broadcast %41 : vector<16x1xf32> to vector<16x16xf32>
    %43 = arith.divf %39, %42 : vector<16x16xf32>
    %cst_32 = arith.constant dense<0.000000e+00> : vector<16x32xf32>
    %44 = tpu.matmul %43, %29, %cst_32 {dimension_numbers = #tpu.dot_dimension_numbers<[1], [0], [0], [1], [0, 0, 1, 1], [], []>} : vector<16x16xf32>, vector<16x32xf32>, vector<16x32xf32> -> vector<16x32xf32>
    %45 = vector.extract_strided_slice %14 {offsets = [0, 32], sizes = [16, 32], strides = [1, 1]} : vector<16x128xf32> to vector<16x32xf32>
    %46 = vector.extract_strided_slice %19 {offsets = [0, 32], sizes = [16, 32], strides = [1, 1]} : vector<16x128xf32> to vector<16x32xf32>
    %47 = vector.extract_strided_slice %24 {offsets = [0, 32], sizes = [16, 32], strides = [1, 1]} : vector<16x128xf32> to vector<16x32xf32>
    "tpu.trace_start"() <{level = 10 : i32, message = "qd,kd->qk"}> : () -> ()
    %cst_33 = arith.constant dense<0.000000e+00> : vector<16x16xf32>
    %48 = tpu.matmul %45, %46, %cst_33 {dimension_numbers = #tpu.dot_dimension_numbers<[1], [1], [0], [0], [0, 0, 1, 0], [], []>} : vector<16x32xf32>, vector<16x32xf32>, vector<16x16xf32> -> vector<16x16xf32>
    "tpu.trace_stop"() : () -> ()
    %cst_34 = arith.constant 0.176776692 : f32
    %49 = vector.broadcast %cst_34 : f32 to vector<16x16xf32>
    %50 = arith.mulf %48, %49 : vector<16x16xf32>
    %51 = vector.broadcast %26 : vector<1x16xf32> to vector<16x16xf32>
    %52 = arith.addf %50, %51 : vector<16x16xf32>
    %cst_35 = arith.constant dense<0xFF800000> : vector<16xf32>
    %53 = vector.multi_reduction <maximumf>, %52, %cst_35 [1] : vector<16x16xf32> to vector<16xf32>
    %54 = vector.shape_cast %53 : vector<16xf32> to vector<16x1xf32>
    %55 = vector.broadcast %54 : vector<16x1xf32> to vector<16x16xf32>
    %56 = arith.subf %52, %55 : vector<16x16xf32>
    %57 = math.exp %56 : vector<16x16xf32>
    %cst_36 = arith.constant dense<0.000000e+00> : vector<16xf32>
    %58 = vector.multi_reduction <add>, %57, %cst_36 [1] : vector<16x16xf32> to vector<16xf32>
    %59 = vector.shape_cast %58 : vector<16xf32> to vector<16x1xf32>
    %60 = vector.broadcast %59 : vector<16x1xf32> to vector<16x16xf32>
    %61 = arith.divf %57, %60 : vector<16x16xf32>
    %cst_37 = arith.constant dense<0.000000e+00> : vector<16x32xf32>
    %62 = tpu.matmul %61, %47, %cst_37 {dimension_numbers = #tpu.dot_dimension_numbers<[1], [0], [0], [1], [0, 0, 1, 1], [], []>} : vector<16x16xf32>, vector<16x32xf32>, vector<16x32xf32> -> vector<16x32xf32>
    %63 = vector.extract_strided_slice %14 {offsets = [0, 64], sizes = [16, 32], strides = [1, 1]} : vector<16x128xf32> to vector<16x32xf32>
    %64 = vector.extract_strided_slice %19 {offsets = [0, 64], sizes = [16, 32], strides = [1, 1]} : vector<16x128xf32> to vector<16x32xf32>
    %65 = vector.extract_strided_slice %24 {offsets = [0, 64], sizes = [16, 32], strides = [1, 1]} : vector<16x128xf32> to vector<16x32xf32>
    "tpu.trace_start"() <{level = 10 : i32, message = "qd,kd->qk"}> : () -> ()
    %cst_38 = arith.constant dense<0.000000e+00> : vector<16x16xf32>
    %66 = tpu.matmul %63, %64, %cst_38 {dimension_numbers = #tpu.dot_dimension_numbers<[1], [1], [0], [0], [0, 0, 1, 0], [], []>} : vector<16x32xf32>, vector<16x32xf32>, vector<16x16xf32> -> vector<16x16xf32>
    "tpu.trace_stop"() : () -> ()
    %cst_39 = arith.constant 0.176776692 : f32
    %67 = vector.broadcast %cst_39 : f32 to vector<16x16xf32>
    %68 = arith.mulf %66, %67 : vector<16x16xf32>
    %69 = vector.broadcast %26 : vector<1x16xf32> to vector<16x16xf32>
    %70 = arith.addf %68, %69 : vector<16x16xf32>
    %cst_40 = arith.constant dense<0xFF800000> : vector<16xf32>
    %71 = vector.multi_reduction <maximumf>, %70, %cst_40 [1] : vector<16x16xf32> to vector<16xf32>
    %72 = vector.shape_cast %71 : vector<16xf32> to vector<16x1xf32>
    %73 = vector.broadcast %72 : vector<16x1xf32> to vector<16x16xf32>
    %74 = arith.subf %70, %73 : vector<16x16xf32>
    %75 = math.exp %74 : vector<16x16xf32>
    %cst_41 = arith.constant dense<0.000000e+00> : vector<16xf32>
    %76 = vector.multi_reduction <add>, %75, %cst_41 [1] : vector<16x16xf32> to vector<16xf32>
    %77 = vector.shape_cast %76 : vector<16xf32> to vector<16x1xf32>
    %78 = vector.broadcast %77 : vector<16x1xf32> to vector<16x16xf32>
    %79 = arith.divf %75, %78 : vector<16x16xf32>
    %cst_42 = arith.constant dense<0.000000e+00> : vector<16x32xf32>
    %80 = tpu.matmul %79, %65, %cst_42 {dimension_numbers = #tpu.dot_dimension_numbers<[1], [0], [0], [1], [0, 0, 1, 1], [], []>} : vector<16x16xf32>, vector<16x32xf32>, vector<16x32xf32> -> vector<16x32xf32>
    %81 = vector.extract_strided_slice %14 {offsets = [0, 96], sizes = [16, 32], strides = [1, 1]} : vector<16x128xf32> to vector<16x32xf32>
    %82 = vector.extract_strided_slice %19 {offsets = [0, 96], sizes = [16, 32], strides = [1, 1]} : vector<16x128xf32> to vector<16x32xf32>
    %83 = vector.extract_strided_slice %24 {offsets = [0, 96], sizes = [16, 32], strides = [1, 1]} : vector<16x128xf32> to vector<16x32xf32>
    "tpu.trace_start"() <{level = 10 : i32, message = "qd,kd->qk"}> : () -> ()
    %cst_43 = arith.constant dense<0.000000e+00> : vector<16x16xf32>
    %84 = tpu.matmul %81, %82, %cst_43 {dimension_numbers = #tpu.dot_dimension_numbers<[1], [1], [0], [0], [0, 0, 1, 0], [], []>} : vector<16x32xf32>, vector<16x32xf32>, vector<16x16xf32> -> vector<16x16xf32>
    "tpu.trace_stop"() : () -> ()
    %cst_44 = arith.constant 0.176776692 : f32
    %85 = vector.broadcast %cst_44 : f32 to vector<16x16xf32>
    %86 = arith.mulf %84, %85 : vector<16x16xf32>
    %87 = vector.broadcast %26 : vector<1x16xf32> to vector<16x16xf32>
    %88 = arith.addf %86, %87 : vector<16x16xf32>
    %cst_45 = arith.constant dense<0xFF800000> : vector<16xf32>
    %89 = vector.multi_reduction <maximumf>, %88, %cst_45 [1] : vector<16x16xf32> to vector<16xf32>
    %90 = vector.shape_cast %89 : vector<16xf32> to vector<16x1xf32>
    %91 = vector.broadcast %90 : vector<16x1xf32> to vector<16x16xf32>
    %92 = arith.subf %88, %91 : vector<16x16xf32>
    %93 = math.exp %92 : vector<16x16xf32>
    %cst_46 = arith.constant dense<0.000000e+00> : vector<16xf32>
    %94 = vector.multi_reduction <add>, %93, %cst_46 [1] : vector<16x16xf32> to vector<16xf32>
    %95 = vector.shape_cast %94 : vector<16xf32> to vector<16x1xf32>
    %96 = vector.broadcast %95 : vector<16x1xf32> to vector<16x16xf32>
    %97 = arith.divf %93, %96 : vector<16x16xf32>
    %cst_47 = arith.constant dense<0.000000e+00> : vector<16x32xf32>
    %98 = tpu.matmul %97, %83, %cst_47 {dimension_numbers = #tpu.dot_dimension_numbers<[1], [0], [0], [1], [0, 0, 1, 1], [], []>} : vector<16x16xf32>, vector<16x32xf32>, vector<16x32xf32> -> vector<16x32xf32>
    %99 = tpu.concatenate %44, %62, %80, %98 in 1 : vector<16x32xf32>, vector<16x32xf32>, vector<16x32xf32>, vector<16x32xf32> -> vector<16x128xf32>
    %c0_48 = arith.constant 0 : index
    %c0_49 = arith.constant 0 : index
    %100 = vector.load %arg12[%c0_48, %c0_49] : memref<128x128xf32, #tpu.memory_space<vmem>>, vector<128x128xf32>
    %cst_50 = arith.constant dense<0.000000e+00> : vector<16x128xf32>
    %101 = tpu.matmul %99, %100, %cst_50 {dimension_numbers = #tpu.dot_dimension_numbers<[1], [0], [0], [1], [0, 0, 1, 1], [], []>} : vector<16x128xf32>, vector<128x128xf32>, vector<16x128xf32> -> vector<16x128xf32>
    %c0_51 = arith.constant 0 : index
    %c0_52 = arith.constant 0 : index
    %102 = vector.load %arg13[%c0_51, %c0_52] : memref<1x128xf32, #tpu.memory_space<vmem>>, vector<1x128xf32>
    %103 = vector.broadcast %102 : vector<1x128xf32> to vector<16x128xf32>
    %104 = arith.addf %101, %103 : vector<16x128xf32>
    %105 = arith.addf %1, %104 : vector<16x128xf32>
    %c0_53 = arith.constant 0 : index
    %c0_54 = arith.constant 0 : index
    %106 = vector.load %arg14[%c0_53, %c0_54] : memref<1x128xf32, #tpu.memory_space<vmem>>, vector<1x128xf32>
    %c0_55 = arith.constant 0 : index
    %c0_56 = arith.constant 0 : index
    %107 = vector.load %arg15[%c0_55, %c0_56] : memref<1x128xf32, #tpu.memory_space<vmem>>, vector<1x128xf32>
    %cst_57 = arith.constant dense<0.000000e+00> : vector<16xf32>
    %108 = vector.multi_reduction <add>, %105, %cst_57 [1] : vector<16x128xf32> to vector<16xf32>
    %109 = vector.shape_cast %108 : vector<16xf32> to vector<16x1xf32>
    %cst_58 = arith.constant 1.280000e+02 : f32
    %110 = vector.broadcast %cst_58 : f32 to vector<16x1xf32>
    %111 = arith.divf %109, %110 : vector<16x1xf32>
    %112 = vector.broadcast %111 : vector<16x1xf32> to vector<16x128xf32>
    %113 = arith.subf %105, %112 : vector<16x128xf32>
    %114 = arith.mulf %113, %113 : vector<16x128xf32>
    %cst_59 = arith.constant dense<0.000000e+00> : vector<16xf32>
    %115 = vector.multi_reduction <add>, %114, %cst_59 [1] : vector<16x128xf32> to vector<16xf32>
    %116 = vector.shape_cast %115 : vector<16xf32> to vector<16x1xf32>
    %cst_60 = arith.constant 1.280000e+02 : f32
    %117 = vector.broadcast %cst_60 : f32 to vector<16x1xf32>
    %118 = arith.divf %116, %117 : vector<16x1xf32>
    %119 = vector.broadcast %111 : vector<16x1xf32> to vector<16x128xf32>
    %120 = arith.subf %105, %119 : vector<16x128xf32>
    %cst_61 = arith.constant 9.99999974E-6 : f32
    %121 = vector.broadcast %cst_61 : f32 to vector<16x1xf32>
    %122 = arith.addf %118, %121 : vector<16x1xf32>
    %123 = math.rsqrt %122 : vector<16x1xf32>
    %124 = vector.broadcast %123 : vector<16x1xf32> to vector<16x128xf32>
    %125 = arith.mulf %120, %124 : vector<16x128xf32>
    %126 = vector.broadcast %106 : vector<1x128xf32> to vector<16x128xf32>
    %127 = arith.mulf %125, %126 : vector<16x128xf32>
    %128 = vector.broadcast %107 : vector<1x128xf32> to vector<16x128xf32>
    %129 = arith.addf %127, %128 : vector<16x128xf32>
    %c0_62 = arith.constant 0 : index
    %c0_63 = arith.constant 0 : index
    %c0_64 = arith.constant 0 : index
    %130 = vector.load %arg16[%c0_62, %c0_63, %c0_64] : memref<1x16x128xf32, #tpu.memory_space<vmem>>, vector<1x16x128xf32>
    %131 = vector.shape_cast %130 : vector<1x16x128xf32> to vector<16x128xf32>
    %132 = vector.shape_cast %129 : vector<16x128xf32> to vector<1x16x128xf32>
    tpu.vector_store %arg16[%c0_62, %c0_63, %c0_64], %132 {strides = array<i32>} : memref<1x16x128xf32, #tpu.memory_space<vmem>>, vector<1x16x128xf32>,
    return
  }
  func.func @transform_0(%arg0: i32) -> (i32, i32, i32) {
    %c0_i32 = arith.constant 0 : i32
    %c0_i32_0 = arith.constant 0 : i32
    %c0_i32_1 = arith.constant 0 : i32
    return %arg0, %c0_i32, %c0_i32_0 : i32, i32, i32
  }
  func.func @transform_1(%arg0: i32) -> (i32, i32, i32) {
    %c0_i32 = arith.constant 0 : i32
    %c0_i32_0 = arith.constant 0 : i32
    %c0_i32_1 = arith.constant 0 : i32
    return %arg0, %c0_i32, %c0_i32_0 : i32, i32, i32
  }
  func.func @transform_2(%arg0: i32) -> (i32, i32, i32) {
    %c0_i32 = arith.constant 0 : i32
    %c0_i32_0 = arith.constant 0 : i32
    %c0_i32_1 = arith.constant 0 : i32
    return %arg0, %c0_i32, %c0_i32_0 : i32, i32, i32
  }
  func.func @transform_3(%arg0: i32) -> (i32, i32, i32) {
    %c0_i32 = arith.constant 0 : i32
    %c0_i32_0 = arith.constant 0 : i32
    %c0_i32_1 = arith.constant 0 : i32
    return %arg0, %c0_i32, %c0_i32_0 : i32, i32, i32
  }
  func.func @transform_4(%arg0: i32) -> (i32, i32, i32) {
    %c0_i32 = arith.constant 0 : i32
    %c0_i32_0 = arith.constant 0 : i32
    %c0_i32_1 = arith.constant 0 : i32
    return %arg0, %c0_i32, %c0_i32_0 : i32, i32, i32
  }
  func.func @transform_5(%arg0: i32) -> (i32, i32) {
    %c0_i32 = arith.constant 0 : i32
    %c0_i32_0 = arith.constant 0 : i32
    %c0_i32_1 = arith.constant 0 : i32
    return %c0_i32, %c0_i32_0 : i32, i32
  }
  func.func @transform_6(%arg0: i32) -> (i32, i32) {
    %c0_i32 = arith.constant 0 : i32
    %c0_i32_0 = arith.constant 0 : i32
    %c0_i32_1 = arith.constant 0 : i32
    return %c0_i32, %c0_i32_0 : i32, i32
  }
  func.func @transform_7(%arg0: i32) -> (i32, i32) {
    %c0_i32 = arith.constant 0 : i32
    %c0_i32_0 = arith.constant 0 : i32
    %c0_i32_1 = arith.constant 0 : i32
    return %c0_i32, %c0_i32_0 : i32, i32
  }
  func.func @transform_8(%arg0: i32) -> (i32, i32) {
    %c0_i32 = arith.constant 0 : i32
    %c0_i32_0 = arith.constant 0 : i32
    %c0_i32_1 = arith.constant 0 : i32
    return %c0_i32, %c0_i32_0 : i32, i32
  }
  func.func @transform_9(%arg0: i32) -> (i32, i32) {
    %c0_i32 = arith.constant 0 : i32
    %c0_i32_0 = arith.constant 0 : i32
    %c0_i32_1 = arith.constant 0 : i32
    return %c0_i32, %c0_i32_0 : i32, i32
  }
  func.func @transform_10(%arg0: i32) -> (i32, i32) {
    %c0_i32 = arith.constant 0 : i32
    %c0_i32_0 = arith.constant 0 : i32
    %c0_i32_1 = arith.constant 0 : i32
    return %c0_i32, %c0_i32_0 : i32, i32
  }
  func.func @transform_11(%arg0: i32) -> (i32, i32) {
    %c0_i32 = arith.constant 0 : i32
    %c0_i32_0 = arith.constant 0 : i32
    %c0_i32_1 = arith.constant 0 : i32
    return %c0_i32, %c0_i32_0 : i32, i32
  }
  func.func @transform_12(%arg0: i32) -> (i32, i32) {
    %c0_i32 = arith.constant 0 : i32
    %c0_i32_0 = arith.constant 0 : i32
    %c0_i32_1 = arith.constant 0 : i32
    return %c0_i32, %c0_i32_0 : i32, i32
  }
  func.func @transform_13(%arg0: i32) -> (i32, i32) {
    %c0_i32 = arith.constant 0 : i32
    %c0_i32_0 = arith.constant 0 : i32
    %c0_i32_1 = arith.constant 0 : i32
    return %c0_i32, %c0_i32_0 : i32, i32
  }
  func.func @transform_14(%arg0: i32) -> (i32, i32) {
    %c0_i32 = arith.constant 0 : i32
    %c0_i32_0 = arith.constant 0 : i32
    %c0_i32_1 = arith.constant 0 : i32
    return %c0_i32, %c0_i32_0 : i32, i32
  }
  func.func @transform_15(%arg0: i32) -> (i32, i32, i32) {
    %c0_i32 = arith.constant 0 : i32
    %c0_i32_0 = arith.constant 0 : i32
    %c0_i32_1 = arith.constant 0 : i32
    return %arg0, %c0_i32, %c0_i32_0 : i32, i32, i32
  }
}

module attributes {stable_mosaic.version = 11 : i64} {
  func.func @_mha_kernel(%arg0: i32, %arg1: memref<1x16x128xf32, #tpu.memory_space<vmem>>, %arg2: memref<1x16x128xf32, #tpu.memory_space<vmem>>, %arg3: memref<1x24x128xf32, #tpu.memory_space<vmem>>, %arg4: memref<1x24x128xf32, #tpu.memory_space<vmem>>, %arg5: memref<1x1x24xf32, #tpu.memory_space<vmem>>, %arg6: memref<128x128xf32, #tpu.memory_space<vmem>>, %arg7: memref<1x128xf32, #tpu.memory_space<vmem>>, %arg8: memref<128x128xf32, #tpu.memory_space<vmem>>, %arg9: memref<1x128xf32, #tpu.memory_space<vmem>>, %arg10: memref<128x128xf32, #tpu.memory_space<vmem>>, %arg11: memref<1x128xf32, #tpu.memory_space<vmem>>, %arg12: memref<128x128xf32, #tpu.memory_space<vmem>>, %arg13: memref<1x128xf32, #tpu.memory_space<vmem>>, %arg14: memref<1x128xf32, #tpu.memory_space<vmem>>, %arg15: memref<1x128xf32, #tpu.memory_space<vmem>>, %arg16: memref<1x16x128xf32, #tpu.memory_space<vmem>>) attributes {dimension_semantics = [#tpu.dimension_semantics<parallel>], iteration_bounds = array<i64: 2>, scalar_prefetch = 0 : i64, scratch_operands = 0 : i64, tpu.core_type = #tpu.core_type<tc>, window_params = [{transform_indices = @transform_0, window_bounds = array<i64: 1, 16, 128>}, {transform_indices = @transform_1, window_bounds = array<i64: 1, 16, 128>}, {transform_indices = @transform_2, window_bounds = array<i64: 1, 24, 128>}, {transform_indices = @transform_3, window_bounds = array<i64: 1, 24, 128>}, {transform_indices = @transform_4, window_bounds = array<i64: 1, 1, 24>}, {pipeline_mode = #tpu.pipeline_mode<synchronous>, transform_indices = @transform_5, window_bounds = array<i64: 128, 128>}, {pipeline_mode = #tpu.pipeline_mode<synchronous>, transform_indices = @transform_6, window_bounds = array<i64: 1, 128>}, {pipeline_mode = #tpu.pipeline_mode<synchronous>, transform_indices = @transform_7, window_bounds = array<i64: 128, 128>}, {pipeline_mode = #tpu.pipeline_mode<synchronous>, transform_indices = @transform_8, window_bounds = array<i64: 1, 128>}, {pipeline_mode = #tpu.pipeline_mode<synchronous>, transform_indices = @transform_9, window_bounds = array<i64: 128, 128>}, {pipeline_mode = #tpu.pipeline_mode<synchronous>, transform_indices = @transform_10, window_bounds = array<i64: 1, 128>}, {pipeline_mode = #tpu.pipeline_mode<synchronous>, transform_indices = @transform_11, window_bounds = array<i64: 128, 128>}, {pipeline_mode = #tpu.pipeline_mode<synchronous>, transform_indices = @transform_12, window_bounds = array<i64: 1, 128>}, {pipeline_mode = #tpu.pipeline_mode<synchronous>, transform_indices = @transform_13, window_bounds = array<i64: 1, 128>}, {pipeline_mode = #tpu.pipeline_mode<synchronous>, transform_indices = @transform_14, window_bounds = array<i64: 1, 128>}, {transform_indices = @transform_15, window_bounds = array<i64: 1, 16, 128>}]} {
    %c0 = arith.constant 0 : index
    %c0_0 = arith.constant 0 : index
    %c0_1 = arith.constant 0 : index
    %0 = vector.load %arg1[%c0, %c0_0, %c0_1] : memref<1x16x128xf32, #tpu.memory_space<vmem>>, vector<1x16x128xf32>
    %1 = vector.shape_cast %0 : vector<1x16x128xf32> to vector<16x128xf32>
    %c0_2 = arith.constant 0 : index
    %c0_3 = arith.constant 0 : index
    %c0_4 = arith.constant 0 : index
    %2 = vector.load %arg2[%c0_2, %c0_3, %c0_4] : memref<1x16x128xf32, #tpu.memory_space<vmem>>, vector<1x16x128xf32>
    %3 = vector.shape_cast %2 : vector<1x16x128xf32> to vector<16x128xf32>
    %4 = arith.addf %1, %3 : vector<16x128xf32>
    %c0_5 = arith.constant 0 : index
    %c0_6 = arith.constant 0 : index
    %c0_7 = arith.constant 0 : index
    %5 = vector.load %arg3[%c0_5, %c0_6, %c0_7] : memref<1x24x128xf32, #tpu.memory_space<vmem>>, vector<1x24x128xf32>
    %6 = vector.shape_cast %5 : vector<1x24x128xf32> to vector<24x128xf32>
    %c0_8 = arith.constant 0 : index
    %c0_9 = arith.constant 0 : index
    %c0_10 = arith.constant 0 : index
    %7 = vector.load %arg4[%c0_8, %c0_9, %c0_10] : memref<1x24x128xf32, #tpu.memory_space<vmem>>, vector<1x24x128xf32>
    %8 = vector.shape_cast %7 : vector<1x24x128xf32> to vector<24x128xf32>
    %9 = arith.addf %6, %8 : vector<24x128xf32>
    %c0_11 = arith.constant 0 : index
    %c0_12 = arith.constant 0 : index
    %10 = vector.load %arg6[%c0_11, %c0_12] : memref<128x128xf32, #tpu.memory_space<vmem>>, vector<128x128xf32>
    %cst = arith.constant dense<0.000000e+00> : vector<16x128xf32>
    %11 = tpu.matmul %4, %10, %cst {dimension_numbers = #tpu.dot_dimension_numbers<[1], [0], [0], [1], [0, 0, 1, 1], [], []>} : vector<16x128xf32>, vector<128x128xf32>, vector<16x128xf32> -> vector<16x128xf32>
    %c0_13 = arith.constant 0 : index
    %c0_14 = arith.constant 0 : index
    %12 = vector.load %arg7[%c0_13, %c0_14] : memref<1x128xf32, #tpu.memory_space<vmem>>, vector<1x128xf32>
    %13 = vector.broadcast %12 : vector<1x128xf32> to vector<16x128xf32>
    %14 = arith.addf %11, %13 : vector<16x128xf32>
    %c0_15 = arith.constant 0 : index
    %c0_16 = arith.constant 0 : index
    %15 = vector.load %arg8[%c0_15, %c0_16] : memref<128x128xf32, #tpu.memory_space<vmem>>, vector<128x128xf32>
    %cst_17 = arith.constant dense<0.000000e+00> : vector<24x128xf32>
    %16 = tpu.matmul %9, %15, %cst_17 {dimension_numbers = #tpu.dot_dimension_numbers<[1], [0], [0], [1], [0, 0, 1, 1], [], []>} : vector<24x128xf32>, vector<128x128xf32>, vector<24x128xf32> -> vector<24x128xf32>
    %c0_18 = arith.constant 0 : index
    %c0_19 = arith.constant 0 : index
    %17 = vector.load %arg9[%c0_18, %c0_19] : memref<1x128xf32, #tpu.memory_space<vmem>>, vector<1x128xf32>
    %18 = vector.broadcast %17 : vector<1x128xf32> to vector<24x128xf32>
    %19 = arith.addf %16, %18 : vector<24x128xf32>
    %c0_20 = arith.constant 0 : index
    %c0_21 = arith.constant 0 : index
    %20 = vector.load %arg10[%c0_20, %c0_21] : memref<128x128xf32, #tpu.memory_space<vmem>>, vector<128x128xf32>
    %cst_22 = arith.constant dense<0.000000e+00> : vector<24x128xf32>
    %21 = tpu.matmul %6, %20, %cst_22 {dimension_numbers = #tpu.dot_dimension_numbers<[1], [0], [0], [1], [0, 0, 1, 1], [], []>} : vector<24x128xf32>, vector<128x128xf32>, vector<24x128xf32> -> vector<24x128xf32>
    %c0_23 = arith.constant 0 : index
    %c0_24 = arith.constant 0 : index
    %22 = vector.load %arg11[%c0_23, %c0_24] : memref<1x128xf32, #tpu.memory_space<vmem>>, vector<1x128xf32>
    %23 = vector.broadcast %22 : vector<1x128xf32> to vector<24x128xf32>
    %24 = arith.addf %21, %23 : vector<24x128xf32>
    %c0_25 = arith.constant 0 : index
    %c0_26 = arith.constant 0 : index
    %c0_27 = arith.constant 0 : index
    %25 = vector.load %arg5[%c0_25, %c0_26, %c0_27] : memref<1x1x24xf32, #tpu.memory_space<vmem>>, vector<1x1x24xf32>
    %26 = vector.shape_cast %25 : vector<1x1x24xf32> to vector<1x24xf32>
    %27 = vector.extract_strided_slice %14 {offsets = [0, 0], sizes = [16, 32], strides = [1, 1]} : vector<16x128xf32> to vector<16x32xf32>
    %28 = vector.extract_strided_slice %19 {offsets = [0, 0], sizes = [24, 32], strides = [1, 1]} : vector<24x128xf32> to vector<24x32xf32>
    %29 = vector.extract_strided_slice %24 {offsets = [0, 0], sizes = [24, 32], strides = [1, 1]} : vector<24x128xf32> to vector<24x32xf32>
    "tpu.trace_start"() <{level = 10 : i32, message = "qd,kd->qk"}> : () -> ()
    %cst_28 = arith.constant dense<0.000000e+00> : vector<16x24xf32>
    %30 = tpu.matmul %27, %28, %cst_28 {dimension_numbers = #tpu.dot_dimension_numbers<[1], [1], [0], [0], [0, 0, 1, 0], [], []>} : vector<16x32xf32>, vector<24x32xf32>, vector<16x24xf32> -> vector<16x24xf32>
    "tpu.trace_stop"() : () -> ()
    %cst_29 = arith.constant 0.176776692 : f32
    %31 = vector.broadcast %cst_29 : f32 to vector<16x24xf32>
    %32 = arith.mulf %30, %31 : vector<16x24xf32>
    %33 = vector.broadcast %26 : vector<1x24xf32> to vector<16x24xf32>
    %34 = arith.addf %32, %33 : vector<16x24xf32>
    %cst_30 = arith.constant dense<0xFF800000> : vector<16xf32>
    %35 = vector.multi_reduction <maximumf>, %34, %cst_30 [1] : vector<16x24xf32> to vector<16xf32>
    %36 = vector.shape_cast %35 : vector<16xf32> to vector<16x1xf32>
    %37 = vector.broadcast %36 : vector<16x1xf32> to vector<16x24xf32>
    %38 = arith.subf %34, %37 : vector<16x24xf32>
    %39 = math.exp %38 : vector<16x24xf32>
    %cst_31 = arith.constant dense<0.000000e+00> : vector<16xf32>
    %40 = vector.multi_reduction <add>, %39, %cst_31 [1] : vector<16x24xf32> to vector<16xf32>
    %41 = vector.shape_cast %40 : vector<16xf32> to vector<16x1xf32>
    %42 = vector.broadcast %41 : vector<16x1xf32> to vector<16x24xf32>
    %43 = arith.divf %39, %42 : vector<16x24xf32>
    %cst_32 = arith.constant dense<0.000000e+00> : vector<16x32xf32>
    %44 = tpu.matmul %43, %29, %cst_32 {dimension_numbers = #tpu.dot_dimension_numbers<[1], [0], [0], [1], [0, 0, 1, 1], [], []>} : vector<16x24xf32>, vector<24x32xf32>, vector<16x32xf32> -> vector<16x32xf32>
    %45 = vector.extract_strided_slice %14 {offsets = [0, 32], sizes = [16, 32], strides = [1, 1]} : vector<16x128xf32> to vector<16x32xf32>
    %46 = vector.extract_strided_slice %19 {offsets = [0, 32], sizes = [24, 32], strides = [1, 1]} : vector<24x128xf32> to vector<24x32xf32>
    %47 = vector.extract_strided_slice %24 {offsets = [0, 32], sizes = [24, 32], strides = [1, 1]} : vector<24x128xf32> to vector<24x32xf32>
    "tpu.trace_start"() <{level = 10 : i32, message = "qd,kd->qk"}> : () -> ()
    %cst_33 = arith.constant dense<0.000000e+00> : vector<16x24xf32>
    %48 = tpu.matmul %45, %46, %cst_33 {dimension_numbers = #tpu.dot_dimension_numbers<[1], [1], [0], [0], [0, 0, 1, 0], [], []>} : vector<16x32xf32>, vector<24x32xf32>, vector<16x24xf32> -> vector<16x24xf32>
    "tpu.trace_stop"() : () -> ()
    %cst_34 = arith.constant 0.176776692 : f32
    %49 = vector.broadcast %cst_34 : f32 to vector<16x24xf32>
    %50 = arith.mulf %48, %49 : vector<16x24xf32>
    %51 = vector.broadcast %26 : vector<1x24xf32> to vector<16x24xf32>
    %52 = arith.addf %50, %51 : vector<16x24xf32>
    %cst_35 = arith.constant dense<0xFF800000> : vector<16xf32>
    %53 = vector.multi_reduction <maximumf>, %52, %cst_35 [1] : vector<16x24xf32> to vector<16xf32>
    %54 = vector.shape_cast %53 : vector<16xf32> to vector<16x1xf32>
    %55 = vector.broadcast %54 : vector<16x1xf32> to vector<16x24xf32>
    %56 = arith.subf %52, %55 : vector<16x24xf32>
    %57 = math.exp %56 : vector<16x24xf32>
    %cst_36 = arith.constant dense<0.000000e+00> : vector<16xf32>
    %58 = vector.multi_reduction <add>, %57, %cst_36 [1] : vector<16x24xf32> to vector<16xf32>
    %59 = vector.shape_cast %58 : vector<16xf32> to vector<16x1xf32>
    %60 = vector.broadcast %59 : vector<16x1xf32> to vector<16x24xf32>
    %61 = arith.divf %57, %60 : vector<16x24xf32>
    %cst_37 = arith.constant dense<0.000000e+00> : vector<16x32xf32>
    %62 = tpu.matmul %61, %47, %cst_37 {dimension_numbers = #tpu.dot_dimension_numbers<[1], [0], [0], [1], [0, 0, 1, 1], [], []>} : vector<16x24xf32>, vector<24x32xf32>, vector<16x32xf32> -> vector<16x32xf32>
    %63 = vector.extract_strided_slice %14 {offsets = [0, 64], sizes = [16, 32], strides = [1, 1]} : vector<16x128xf32> to vector<16x32xf32>
    %64 = vector.extract_strided_slice %19 {offsets = [0, 64], sizes = [24, 32], strides = [1, 1]} : vector<24x128xf32> to vector<24x32xf32>
    %65 = vector.extract_strided_slice %24 {offsets = [0, 64], sizes = [24, 32], strides = [1, 1]} : vector<24x128xf32> to vector<24x32xf32>
    "tpu.trace_start"() <{level = 10 : i32, message = "qd,kd->qk"}> : () -> ()
    %cst_38 = arith.constant dense<0.000000e+00> : vector<16x24xf32>
    %66 = tpu.matmul %63, %64, %cst_38 {dimension_numbers = #tpu.dot_dimension_numbers<[1], [1], [0], [0], [0, 0, 1, 0], [], []>} : vector<16x32xf32>, vector<24x32xf32>, vector<16x24xf32> -> vector<16x24xf32>
    "tpu.trace_stop"() : () -> ()
    %cst_39 = arith.constant 0.176776692 : f32
    %67 = vector.broadcast %cst_39 : f32 to vector<16x24xf32>
    %68 = arith.mulf %66, %67 : vector<16x24xf32>
    %69 = vector.broadcast %26 : vector<1x24xf32> to vector<16x24xf32>
    %70 = arith.addf %68, %69 : vector<16x24xf32>
    %cst_40 = arith.constant dense<0xFF800000> : vector<16xf32>
    %71 = vector.multi_reduction <maximumf>, %70, %cst_40 [1] : vector<16x24xf32> to vector<16xf32>
    %72 = vector.shape_cast %71 : vector<16xf32> to vector<16x1xf32>
    %73 = vector.broadcast %72 : vector<16x1xf32> to vector<16x24xf32>
    %74 = arith.subf %70, %73 : vector<16x24xf32>
    %75 = math.exp %74 : vector<16x24xf32>
    %cst_41 = arith.constant dense<0.000000e+00> : vector<16xf32>
    %76 = vector.multi_reduction <add>, %75, %cst_41 [1] : vector<16x24xf32> to vector<16xf32>
    %77 = vector.shape_cast %76 : vector<16xf32> to vector<16x1xf32>
    %78 = vector.broadcast %77 : vector<16x1xf32> to vector<16x24xf32>
    %79 = arith.divf %75, %78 : vector<16x24xf32>
    %cst_42 = arith.constant dense<0.000000e+00> : vector<16x32xf32>
    %80 = tpu.matmul %79, %65, %cst_42 {dimension_numbers = #tpu.dot_dimension_numbers<[1], [0], [0], [1], [0, 0, 1, 1], [], []>} : vector<16x24xf32>, vector<24x32xf32>, vector<16x32xf32> -> vector<16x32xf32>
    %81 = vector.extract_strided_slice %14 {offsets = [0, 96], sizes = [16, 32], strides = [1, 1]} : vector<16x128xf32> to vector<16x32xf32>
    %82 = vector.extract_strided_slice %19 {offsets = [0, 96], sizes = [24, 32], strides = [1, 1]} : vector<24x128xf32> to vector<24x32xf32>
    %83 = vector.extract_strided_slice %24 {offsets = [0, 96], sizes = [24, 32], strides = [1, 1]} : vector<24x128xf32> to vector<24x32xf32>
    "tpu.trace_start"() <{level = 10 : i32, message = "qd,kd->qk"}> : () -> ()
    %cst_43 = arith.constant dense<0.000000e+00> : vector<16x24xf32>
    %84 = tpu.matmul %81, %82, %cst_43 {dimension_numbers = #tpu.dot_dimension_numbers<[1], [1], [0], [0], [0, 0, 1, 0], [], []>} : vector<16x32xf32>, vector<24x32xf32>, vector<16x24xf32> -> vector<16x24xf32>
    "tpu.trace_stop"() : () -> ()
    %cst_44 = arith.constant 0.176776692 : f32
    %85 = vector.broadcast %cst_44 : f32 to vector<16x24xf32>
    %86 = arith.mulf %84, %85 : vector<16x24xf32>
    %87 = vector.broadcast %26 : vector<1x24xf32> to vector<16x24xf32>
    %88 = arith.addf %86, %87 : vector<16x24xf32>
    %cst_45 = arith.constant dense<0xFF800000> : vector<16xf32>
    %89 = vector.multi_reduction <maximumf>, %88, %cst_45 [1] : vector<16x24xf32> to vector<16xf32>
    %90 = vector.shape_cast %89 : vector<16xf32> to vector<16x1xf32>
    %91 = vector.broadcast %90 : vector<16x1xf32> to vector<16x24xf32>
    %92 = arith.subf %88, %91 : vector<16x24xf32>
    %93 = math.exp %92 : vector<16x24xf32>
    %cst_46 = arith.constant dense<0.000000e+00> : vector<16xf32>
    %94 = vector.multi_reduction <add>, %93, %cst_46 [1] : vector<16x24xf32> to vector<16xf32>
    %95 = vector.shape_cast %94 : vector<16xf32> to vector<16x1xf32>
    %96 = vector.broadcast %95 : vector<16x1xf32> to vector<16x24xf32>
    %97 = arith.divf %93, %96 : vector<16x24xf32>
    %cst_47 = arith.constant dense<0.000000e+00> : vector<16x32xf32>
    %98 = tpu.matmul %97, %83, %cst_47 {dimension_numbers = #tpu.dot_dimension_numbers<[1], [0], [0], [1], [0, 0, 1, 1], [], []>} : vector<16x24xf32>, vector<24x32xf32>, vector<16x32xf32> -> vector<16x32xf32>
    %99 = tpu.concatenate %44, %62, %80, %98 in 1 : vector<16x32xf32>, vector<16x32xf32>, vector<16x32xf32>, vector<16x32xf32> -> vector<16x128xf32>
    %c0_48 = arith.constant 0 : index
    %c0_49 = arith.constant 0 : index
    %100 = vector.load %arg12[%c0_48, %c0_49] : memref<128x128xf32, #tpu.memory_space<vmem>>, vector<128x128xf32>
    %cst_50 = arith.constant dense<0.000000e+00> : vector<16x128xf32>
    %101 = tpu.matmul %99, %100, %cst_50 {dimension_numbers = #tpu.dot_dimension_numbers<[1], [0], [0], [1], [0, 0, 1, 1], [], []>} : vector<16x128xf32>, vector<128x128xf32>, vector<16x128xf32> -> vector<16x128xf32>
    %c0_51 = arith.constant 0 : index
    %c0_52 = arith.constant 0 : index
    %102 = vector.load %arg13[%c0_51, %c0_52] : memref<1x128xf32, #tpu.memory_space<vmem>>, vector<1x128xf32>
    %103 = vector.broadcast %102 : vector<1x128xf32> to vector<16x128xf32>
    %104 = arith.addf %101, %103 : vector<16x128xf32>
    %105 = arith.addf %1, %104 : vector<16x128xf32>
    %c0_53 = arith.constant 0 : index
    %c0_54 = arith.constant 0 : index
    %106 = vector.load %arg14[%c0_53, %c0_54] : memref<1x128xf32, #tpu.memory_space<vmem>>, vector<1x128xf32>
    %c0_55 = arith.constant 0 : index
    %c0_56 = arith.constant 0 : index
    %107 = vector.load %arg15[%c0_55, %c0_56] : memref<1x128xf32, #tpu.memory_space<vmem>>, vector<1x128xf32>
    %cst_57 = arith.constant dense<0.000000e+00> : vector<16xf32>
    %108 = vector.multi_reduction <add>, %105, %cst_57 [1] : vector<16x128xf32> to vector<16xf32>
    %109 = vector.shape_cast %108 : vector<16xf32> to vector<16x1xf32>
    %cst_58 = arith.constant 1.280000e+02 : f32
    %110 = vector.broadcast %cst_58 : f32 to vector<16x1xf32>
    %111 = arith.divf %109, %110 : vector<16x1xf32>
    %112 = vector.broadcast %111 : vector<16x1xf32> to vector<16x128xf32>
    %113 = arith.subf %105, %112 : vector<16x128xf32>
    %114 = arith.mulf %113, %113 : vector<16x128xf32>
    %cst_59 = arith.constant dense<0.000000e+00> : vector<16xf32>
    %115 = vector.multi_reduction <add>, %114, %cst_59 [1] : vector<16x128xf32> to vector<16xf32>
    %116 = vector.shape_cast %115 : vector<16xf32> to vector<16x1xf32>
    %cst_60 = arith.constant 1.280000e+02 : f32
    %117 = vector.broadcast %cst_60 : f32 to vector<16x1xf32>
    %118 = arith.divf %116, %117 : vector<16x1xf32>
    %119 = vector.broadcast %111 : vector<16x1xf32> to vector<16x128xf32>
    %120 = arith.subf %105, %119 : vector<16x128xf32>
    %cst_61 = arith.constant 9.99999974E-6 : f32
    %121 = vector.broadcast %cst_61 : f32 to vector<16x1xf32>
    %122 = arith.addf %118, %121 : vector<16x1xf32>
    %123 = math.rsqrt %122 : vector<16x1xf32>
    %124 = vector.broadcast %123 : vector<16x1xf32> to vector<16x128xf32>
    %125 = arith.mulf %120, %124 : vector<16x128xf32>
    %126 = vector.broadcast %106 : vector<1x128xf32> to vector<16x128xf32>
    %127 = arith.mulf %125, %126 : vector<16x128xf32>
    %128 = vector.broadcast %107 : vector<1x128xf32> to vector<16x128xf32>
    %129 = arith.addf %127, %128 : vector<16x128xf32>
    %c0_62 = arith.constant 0 : index
    %c0_63 = arith.constant 0 : index
    %c0_64 = arith.constant 0 : index
    %130 = vector.load %arg16[%c0_62, %c0_63, %c0_64] : memref<1x16x128xf32, #tpu.memory_space<vmem>>, vector<1x16x128xf32>
    %131 = vector.shape_cast %130 : vector<1x16x128xf32> to vector<16x128xf32>
    %132 = vector.shape_cast %129 : vector<16x128xf32> to vector<1x16x128xf32>
    tpu.vector_store %arg16[%c0_62, %c0_63, %c0_64], %132 {strides = array<i32>} : memref<1x16x128xf32, #tpu.memory_space<vmem>>, vector<1x16x128xf32>,
    return
  }
  func.func @transform_0(%arg0: i32) -> (i32, i32, i32) {
    %c0_i32 = arith.constant 0 : i32
    %c0_i32_0 = arith.constant 0 : i32
    %c0_i32_1 = arith.constant 0 : i32
    return %arg0, %c0_i32, %c0_i32_0 : i32, i32, i32
  }
  func.func @transform_1(%arg0: i32) -> (i32, i32, i32) {
    %c0_i32 = arith.constant 0 : i32
    %c0_i32_0 = arith.constant 0 : i32
    %c0_i32_1 = arith.constant 0 : i32
    return %arg0, %c0_i32, %c0_i32_0 : i32, i32, i32
  }
  func.func @transform_2(%arg0: i32) -> (i32, i32, i32) {
    %c0_i32 = arith.constant 0 : i32
    %c0_i32_0 = arith.constant 0 : i32
    %c0_i32_1 = arith.constant 0 : i32
    return %arg0, %c0_i32, %c0_i32_0 : i32, i32, i32
  }
  func.func @transform_3(%arg0: i32) -> (i32, i32, i32) {
    %c0_i32 = arith.constant 0 : i32
    %c0_i32_0 = arith.constant 0 : i32
    %c0_i32_1 = arith.constant 0 : i32
    return %arg0, %c0_i32, %c0_i32_0 : i32, i32, i32
  }
  func.func @transform_4(%arg0: i32) -> (i32, i32, i32) {
    %c0_i32 = arith.constant 0 : i32
    %c0_i32_0 = arith.constant 0 : i32
    %c0_i32_1 = arith.constant 0 : i32
    return %arg0, %c0_i32, %c0_i32_0 : i32, i32, i32
  }
  func.func @transform_5(%arg0: i32) -> (i32, i32) {
    %c0_i32 = arith.constant 0 : i32
    %c0_i32_0 = arith.constant 0 : i32
    %c0_i32_1 = arith.constant 0 : i32
    return %c0_i32, %c0_i32_0 : i32, i32
  }
  func.func @transform_6(%arg0: i32) -> (i32, i32) {
    %c0_i32 = arith.constant 0 : i32
    %c0_i32_0 = arith.constant 0 : i32
    %c0_i32_1 = arith.constant 0 : i32
    return %c0_i32, %c0_i32_0 : i32, i32
  }
  func.func @transform_7(%arg0: i32) -> (i32, i32) {
    %c0_i32 = arith.constant 0 : i32
    %c0_i32_0 = arith.constant 0 : i32
    %c0_i32_1 = arith.constant 0 : i32
    return %c0_i32, %c0_i32_0 : i32, i32
  }
  func.func @transform_8(%arg0: i32) -> (i32, i32) {
    %c0_i32 = arith.constant 0 : i32
    %c0_i32_0 = arith.constant 0 : i32
    %c0_i32_1 = arith.constant 0 : i32
    return %c0_i32, %c0_i32_0 : i32, i32
  }
  func.func @transform_9(%arg0: i32) -> (i32, i32) {
    %c0_i32 = arith.constant 0 : i32
    %c0_i32_0 = arith.constant 0 : i32
    %c0_i32_1 = arith.constant 0 : i32
    return %c0_i32, %c0_i32_0 : i32, i32
  }
  func.func @transform_10(%arg0: i32) -> (i32, i32) {
    %c0_i32 = arith.constant 0 : i32
    %c0_i32_0 = arith.constant 0 : i32
    %c0_i32_1 = arith.constant 0 : i32
    return %c0_i32, %c0_i32_0 : i32, i32
  }
  func.func @transform_11(%arg0: i32) -> (i32, i32) {
    %c0_i32 = arith.constant 0 : i32
    %c0_i32_0 = arith.constant 0 : i32
    %c0_i32_1 = arith.constant 0 : i32
    return %c0_i32, %c0_i32_0 : i32, i32
  }
  func.func @transform_12(%arg0: i32) -> (i32, i32) {
    %c0_i32 = arith.constant 0 : i32
    %c0_i32_0 = arith.constant 0 : i32
    %c0_i32_1 = arith.constant 0 : i32
    return %c0_i32, %c0_i32_0 : i32, i32
  }
  func.func @transform_13(%arg0: i32) -> (i32, i32) {
    %c0_i32 = arith.constant 0 : i32
    %c0_i32_0 = arith.constant 0 : i32
    %c0_i32_1 = arith.constant 0 : i32
    return %c0_i32, %c0_i32_0 : i32, i32
  }
  func.func @transform_14(%arg0: i32) -> (i32, i32) {
    %c0_i32 = arith.constant 0 : i32
    %c0_i32_0 = arith.constant 0 : i32
    %c0_i32_1 = arith.constant 0 : i32
    return %c0_i32, %c0_i32_0 : i32, i32
  }
  func.func @transform_15(%arg0: i32) -> (i32, i32, i32) {
    %c0_i32 = arith.constant 0 : i32
    %c0_i32_0 = arith.constant 0 : i32
    %c0_i32_1 = arith.constant 0 : i32
    return %arg0, %c0_i32, %c0_i32_0 : i32, i32, i32
  }
}

module attributes {stable_mosaic.version = 11 : i64} {
  func.func @_mha_kernel(%arg0: i32, %arg1: memref<1x16x128xf32, #tpu.memory_space<vmem>>, %arg2: memref<1x16x128xf32, #tpu.memory_space<vmem>>, %arg3: memref<1x16x128xf32, #tpu.memory_space<vmem>>, %arg4: memref<1x16x128xf32, #tpu.memory_space<vmem>>, %arg5: memref<1x1x16xf32, #tpu.memory_space<vmem>>, %arg6: memref<128x128xf32, #tpu.memory_space<vmem>>, %arg7: memref<1x128xf32, #tpu.memory_space<vmem>>, %arg8: memref<128x128xf32, #tpu.memory_space<vmem>>, %arg9: memref<1x128xf32, #tpu.memory_space<vmem>>, %arg10: memref<128x128xf32, #tpu.memory_space<vmem>>, %arg11: memref<1x128xf32, #tpu.memory_space<vmem>>, %arg12: memref<128x128xf32, #tpu.memory_space<vmem>>, %arg13: memref<1x128xf32, #tpu.memory_space<vmem>>, %arg14: memref<1x128xf32, #tpu.memory_space<vmem>>, %arg15: memref<1x128xf32, #tpu.memory_space<vmem>>, %arg16: memref<1x16x128xf32, #tpu.memory_space<vmem>>) attributes {dimension_semantics = [#tpu.dimension_semantics<parallel>], iteration_bounds = array<i64: 2>, scalar_prefetch = 0 : i64, scratch_operands = 0 : i64, tpu.core_type = #tpu.core_type<tc>, window_params = [{transform_indices = @transform_0, window_bounds = array<i64: 1, 16, 128>}, {transform_indices = @transform_1, window_bounds = array<i64: 1, 16, 128>}, {transform_indices = @transform_2, window_bounds = array<i64: 1, 16, 128>}, {transform_indices = @transform_3, window_bounds = array<i64: 1, 16, 128>}, {transform_indices = @transform_4, window_bounds = array<i64: 1, 1, 16>}, {pipeline_mode = #tpu.pipeline_mode<synchronous>, transform_indices = @transform_5, window_bounds = array<i64: 128, 128>}, {pipeline_mode = #tpu.pipeline_mode<synchronous>, transform_indices = @transform_6, window_bounds = array<i64: 1, 128>}, {pipeline_mode = #tpu.pipeline_mode<synchronous>, transform_indices = @transform_7, window_bounds = array<i64: 128, 128>}, {pipeline_mode = #tpu.pipeline_mode<synchronous>, transform_indices = @transform_8, window_bounds = array<i64: 1, 128>}, {pipeline_mode = #tpu.pipeline_mode<synchronous>, transform_indices = @transform_9, window_bounds = array<i64: 128, 128>}, {pipeline_mode = #tpu.pipeline_mode<synchronous>, transform_indices = @transform_10, window_bounds = array<i64: 1, 128>}, {pipeline_mode = #tpu.pipeline_mode<synchronous>, transform_indices = @transform_11, window_bounds = array<i64: 128, 128>}, {pipeline_mode = #tpu.pipeline_mode<synchronous>, transform_indices = @transform_12, window_bounds = array<i64: 1, 128>}, {pipeline_mode = #tpu.pipeline_mode<synchronous>, transform_indices = @transform_13, window_bounds = array<i64: 1, 128>}, {pipeline_mode = #tpu.pipeline_mode<synchronous>, transform_indices = @transform_14, window_bounds = array<i64: 1, 128>}, {transform_indices = @transform_15, window_bounds = array<i64: 1, 16, 128>}]} {
    %c0 = arith.constant 0 : index
    %c0_0 = arith.constant 0 : index
    %c0_1 = arith.constant 0 : index
    %0 = vector.load %arg1[%c0, %c0_0, %c0_1] : memref<1x16x128xf32, #tpu.memory_space<vmem>>, vector<1x16x128xf32>
    %1 = vector.shape_cast %0 : vector<1x16x128xf32> to vector<16x128xf32>
    %c0_2 = arith.constant 0 : index
    %c0_3 = arith.constant 0 : index
    %c0_4 = arith.constant 0 : index
    %2 = vector.load %arg2[%c0_2, %c0_3, %c0_4] : memref<1x16x128xf32, #tpu.memory_space<vmem>>, vector<1x16x128xf32>
    %3 = vector.shape_cast %2 : vector<1x16x128xf32> to vector<16x128xf32>
    %4 = arith.addf %1, %3 : vector<16x128xf32>
    %c0_5 = arith.constant 0 : index
    %c0_6 = arith.constant 0 : index
    %c0_7 = arith.constant 0 : index
    %5 = vector.load %arg3[%c0_5, %c0_6, %c0_7] : memref<1x16x128xf32, #tpu.memory_space<vmem>>, vector<1x16x128xf32>
    %6 = vector.shape_cast %5 : vector<1x16x128xf32> to vector<16x128xf32>
    %c0_8 = arith.constant 0 : index
    %c0_9 = arith.constant 0 : index
    %c0_10 = arith.constant 0 : index
    %7 = vector.load %arg4[%c0_8, %c0_9, %c0_10] : memref<1x16x128xf32, #tpu.memory_space<vmem>>, vector<1x16x128xf32>
    %8 = vector.shape_cast %7 : vector<1x16x128xf32> to vector<16x128xf32>
    %9 = arith.addf %6, %8 : vector<16x128xf32>
    %c0_11 = arith.constant 0 : index
    %c0_12 = arith.constant 0 : index
    %10 = vector.load %arg6[%c0_11, %c0_12] : memref<128x128xf32, #tpu.memory_space<vmem>>, vector<128x128xf32>
    %cst = arith.constant dense<0.000000e+00> : vector<16x128xf32>
    %11 = tpu.matmul %4, %10, %cst {dimension_numbers = #tpu.dot_dimension_numbers<[1], [0], [0], [1], [0, 0, 1, 1], [], []>} : vector<16x128xf32>, vector<128x128xf32>, vector<16x128xf32> -> vector<16x128xf32>
    %c0_13 = arith.constant 0 : index
    %c0_14 = arith.constant 0 : index
    %12 = vector.load %arg7[%c0_13, %c0_14] : memref<1x128xf32, #tpu.memory_space<vmem>>, vector<1x128xf32>
    %13 = vector.broadcast %12 : vector<1x128xf32> to vector<16x128xf32>
    %14 = arith.addf %11, %13 : vector<16x128xf32>
    %c0_15 = arith.constant 0 : index
    %c0_16 = arith.constant 0 : index
    %15 = vector.load %arg8[%c0_15, %c0_16] : memref<128x128xf32, #tpu.memory_space<vmem>>, vector<128x128xf32>
    %cst_17 = arith.constant dense<0.000000e+00> : vector<16x128xf32>
    %16 = tpu.matmul %9, %15, %cst_17 {dimension_numbers = #tpu.dot_dimension_numbers<[1], [0], [0], [1], [0, 0, 1, 1], [], []>} : vector<16x128xf32>, vector<128x128xf32>, vector<16x128xf32> -> vector<16x128xf32>
    %c0_18 = arith.constant 0 : index
    %c0_19 = arith.constant 0 : index
    %17 = vector.load %arg9[%c0_18, %c0_19] : memref<1x128xf32, #tpu.memory_space<vmem>>, vector<1x128xf32>
    %18 = vector.broadcast %17 : vector<1x128xf32> to vector<16x128xf32>
    %19 = arith.addf %16, %18 : vector<16x128xf32>
    %c0_20 = arith.constant 0 : index
    %c0_21 = arith.constant 0 : index
    %20 = vector.load %arg10[%c0_20, %c0_21] : memref<128x128xf32, #tpu.memory_space<vmem>>, vector<128x128xf32>
    %cst_22 = arith.constant dense<0.000000e+00> : vector<16x128xf32>
    %21 = tpu.matmul %6, %20, %cst_22 {dimension_numbers = #tpu.dot_dimension_numbers<[1], [0], [0], [1], [0, 0, 1, 1], [], []>} : vector<16x128xf32>, vector<128x128xf32>, vector<16x128xf32> -> vector<16x128xf32>
    %c0_23 = arith.constant 0 : index
    %c0_24 = arith.constant 0 : index
    %22 = vector.load %arg11[%c0_23, %c0_24] : memref<1x128xf32, #tpu.memory_space<vmem>>, vector<1x128xf32>
    %23 = vector.broadcast %22 : vector<1x128xf32> to vector<16x128xf32>
    %24 = arith.addf %21, %23 : vector<16x128xf32>
    %c0_25 = arith.constant 0 : index
    %c0_26 = arith.constant 0 : index
    %c0_27 = arith.constant 0 : index
    %25 = vector.load %arg5[%c0_25, %c0_26, %c0_27] : memref<1x1x16xf32, #tpu.memory_space<vmem>>, vector<1x1x16xf32>
    %26 = vector.shape_cast %25 : vector<1x1x16xf32> to vector<1x16xf32>
    %27 = vector.extract_strided_slice %14 {offsets = [0, 0], sizes = [16, 32], strides = [1, 1]} : vector<16x128xf32> to vector<16x32xf32>
    %28 = vector.extract_strided_slice %19 {offsets = [0, 0], sizes = [16, 32], strides = [1, 1]} : vector<16x128xf32> to vector<16x32xf32>
    %29 = vector.extract_strided_slice %24 {offsets = [0, 0], sizes = [16, 32], strides = [1, 1]} : vector<16x128xf32> to vector<16x32xf32>
    "tpu.trace_start"() <{level = 10 : i32, message = "qd,kd->qk"}> : () -> ()
    %cst_28 = arith.constant dense<0.000000e+00> : vector<16x16xf32>
    %30 = tpu.matmul %27, %28, %cst_28 {dimension_numbers = #tpu.dot_dimension_numbers<[1], [1], [0], [0], [0, 0, 1, 0], [], []>} : vector<16x32xf32>, vector<16x32xf32>, vector<16x16xf32> -> vector<16x16xf32>
    "tpu.trace_stop"() : () -> ()
    %cst_29 = arith.constant 0.176776692 : f32
    %31 = vector.broadcast %cst_29 : f32 to vector<16x16xf32>
    %32 = arith.mulf %30, %31 : vector<16x16xf32>
    %33 = vector.broadcast %26 : vector<1x16xf32> to vector<16x16xf32>
    %34 = arith.addf %32, %33 : vector<16x16xf32>
    %cst_30 = arith.constant dense<0xFF800000> : vector<16xf32>
    %35 = vector.multi_reduction <maximumf>, %34, %cst_30 [1] : vector<16x16xf32> to vector<16xf32>
    %36 = vector.shape_cast %35 : vector<16xf32> to vector<16x1xf32>
    %37 = vector.broadcast %36 : vector<16x1xf32> to vector<16x16xf32>
    %38 = arith.subf %34, %37 : vector<16x16xf32>
    %39 = math.exp %38 : vector<16x16xf32>
    %cst_31 = arith.constant dense<0.000000e+00> : vector<16xf32>
    %40 = vector.multi_reduction <add>, %39, %cst_31 [1] : vector<16x16xf32> to vector<16xf32>
    %41 = vector.shape_cast %40 : vector<16xf32> to vector<16x1xf32>
    %42 = vector.broadcast %41 : vector<16x1xf32> to vector<16x16xf32>
    %43 = arith.divf %39, %42 : vector<16x16xf32>
    %cst_32 = arith.constant dense<0.000000e+00> : vector<16x32xf32>
    %44 = tpu.matmul %43, %29, %cst_32 {dimension_numbers = #tpu.dot_dimension_numbers<[1], [0], [0], [1], [0, 0, 1, 1], [], []>} : vector<16x16xf32>, vector<16x32xf32>, vector<16x32xf32> -> vector<16x32xf32>
    %45 = vector.extract_strided_slice %14 {offsets = [0, 32], sizes = [16, 32], strides = [1, 1]} : vector<16x128xf32> to vector<16x32xf32>
    %46 = vector.extract_strided_slice %19 {offsets = [0, 32], sizes = [16, 32], strides = [1, 1]} : vector<16x128xf32> to vector<16x32xf32>
    %47 = vector.extract_strided_slice %24 {offsets = [0, 32], sizes = [16, 32], strides = [1, 1]} : vector<16x128xf32> to vector<16x32xf32>
    "tpu.trace_start"() <{level = 10 : i32, message = "qd,kd->qk"}> : () -> ()
    %cst_33 = arith.constant dense<0.000000e+00> : vector<16x16xf32>
    %48 = tpu.matmul %45, %46, %cst_33 {dimension_numbers = #tpu.dot_dimension_numbers<[1], [1], [0], [0], [0, 0, 1, 0], [], []>} : vector<16x32xf32>, vector<16x32xf32>, vector<16x16xf32> -> vector<16x16xf32>
    "tpu.trace_stop"() : () -> ()
    %cst_34 = arith.constant 0.176776692 : f32
    %49 = vector.broadcast %cst_34 : f32 to vector<16x16xf32>
    %50 = arith.mulf %48, %49 : vector<16x16xf32>
    %51 = vector.broadcast %26 : vector<1x16xf32> to vector<16x16xf32>
    %52 = arith.addf %50, %51 : vector<16x16xf32>
    %cst_35 = arith.constant dense<0xFF800000> : vector<16xf32>
    %53 = vector.multi_reduction <maximumf>, %52, %cst_35 [1] : vector<16x16xf32> to vector<16xf32>
    %54 = vector.shape_cast %53 : vector<16xf32> to vector<16x1xf32>
    %55 = vector.broadcast %54 : vector<16x1xf32> to vector<16x16xf32>
    %56 = arith.subf %52, %55 : vector<16x16xf32>
    %57 = math.exp %56 : vector<16x16xf32>
    %cst_36 = arith.constant dense<0.000000e+00> : vector<16xf32>
    %58 = vector.multi_reduction <add>, %57, %cst_36 [1] : vector<16x16xf32> to vector<16xf32>
    %59 = vector.shape_cast %58 : vector<16xf32> to vector<16x1xf32>
    %60 = vector.broadcast %59 : vector<16x1xf32> to vector<16x16xf32>
    %61 = arith.divf %57, %60 : vector<16x16xf32>
    %cst_37 = arith.constant dense<0.000000e+00> : vector<16x32xf32>
    %62 = tpu.matmul %61, %47, %cst_37 {dimension_numbers = #tpu.dot_dimension_numbers<[1], [0], [0], [1], [0, 0, 1, 1], [], []>} : vector<16x16xf32>, vector<16x32xf32>, vector<16x32xf32> -> vector<16x32xf32>
    %63 = vector.extract_strided_slice %14 {offsets = [0, 64], sizes = [16, 32], strides = [1, 1]} : vector<16x128xf32> to vector<16x32xf32>
    %64 = vector.extract_strided_slice %19 {offsets = [0, 64], sizes = [16, 32], strides = [1, 1]} : vector<16x128xf32> to vector<16x32xf32>
    %65 = vector.extract_strided_slice %24 {offsets = [0, 64], sizes = [16, 32], strides = [1, 1]} : vector<16x128xf32> to vector<16x32xf32>
    "tpu.trace_start"() <{level = 10 : i32, message = "qd,kd->qk"}> : () -> ()
    %cst_38 = arith.constant dense<0.000000e+00> : vector<16x16xf32>
    %66 = tpu.matmul %63, %64, %cst_38 {dimension_numbers = #tpu.dot_dimension_numbers<[1], [1], [0], [0], [0, 0, 1, 0], [], []>} : vector<16x32xf32>, vector<16x32xf32>, vector<16x16xf32> -> vector<16x16xf32>
    "tpu.trace_stop"() : () -> ()
    %cst_39 = arith.constant 0.176776692 : f32
    %67 = vector.broadcast %cst_39 : f32 to vector<16x16xf32>
    %68 = arith.mulf %66, %67 : vector<16x16xf32>
    %69 = vector.broadcast %26 : vector<1x16xf32> to vector<16x16xf32>
    %70 = arith.addf %68, %69 : vector<16x16xf32>
    %cst_40 = arith.constant dense<0xFF800000> : vector<16xf32>
    %71 = vector.multi_reduction <maximumf>, %70, %cst_40 [1] : vector<16x16xf32> to vector<16xf32>
    %72 = vector.shape_cast %71 : vector<16xf32> to vector<16x1xf32>
    %73 = vector.broadcast %72 : vector<16x1xf32> to vector<16x16xf32>
    %74 = arith.subf %70, %73 : vector<16x16xf32>
    %75 = math.exp %74 : vector<16x16xf32>
    %cst_41 = arith.constant dense<0.000000e+00> : vector<16xf32>
    %76 = vector.multi_reduction <add>, %75, %cst_41 [1] : vector<16x16xf32> to vector<16xf32>
    %77 = vector.shape_cast %76 : vector<16xf32> to vector<16x1xf32>
    %78 = vector.broadcast %77 : vector<16x1xf32> to vector<16x16xf32>
    %79 = arith.divf %75, %78 : vector<16x16xf32>
    %cst_42 = arith.constant dense<0.000000e+00> : vector<16x32xf32>
    %80 = tpu.matmul %79, %65, %cst_42 {dimension_numbers = #tpu.dot_dimension_numbers<[1], [0], [0], [1], [0, 0, 1, 1], [], []>} : vector<16x16xf32>, vector<16x32xf32>, vector<16x32xf32> -> vector<16x32xf32>
    %81 = vector.extract_strided_slice %14 {offsets = [0, 96], sizes = [16, 32], strides = [1, 1]} : vector<16x128xf32> to vector<16x32xf32>
    %82 = vector.extract_strided_slice %19 {offsets = [0, 96], sizes = [16, 32], strides = [1, 1]} : vector<16x128xf32> to vector<16x32xf32>
    %83 = vector.extract_strided_slice %24 {offsets = [0, 96], sizes = [16, 32], strides = [1, 1]} : vector<16x128xf32> to vector<16x32xf32>
    "tpu.trace_start"() <{level = 10 : i32, message = "qd,kd->qk"}> : () -> ()
    %cst_43 = arith.constant dense<0.000000e+00> : vector<16x16xf32>
    %84 = tpu.matmul %81, %82, %cst_43 {dimension_numbers = #tpu.dot_dimension_numbers<[1], [1], [0], [0], [0, 0, 1, 0], [], []>} : vector<16x32xf32>, vector<16x32xf32>, vector<16x16xf32> -> vector<16x16xf32>
    "tpu.trace_stop"() : () -> ()
    %cst_44 = arith.constant 0.176776692 : f32
    %85 = vector.broadcast %cst_44 : f32 to vector<16x16xf32>
    %86 = arith.mulf %84, %85 : vector<16x16xf32>
    %87 = vector.broadcast %26 : vector<1x16xf32> to vector<16x16xf32>
    %88 = arith.addf %86, %87 : vector<16x16xf32>
    %cst_45 = arith.constant dense<0xFF800000> : vector<16xf32>
    %89 = vector.multi_reduction <maximumf>, %88, %cst_45 [1] : vector<16x16xf32> to vector<16xf32>
    %90 = vector.shape_cast %89 : vector<16xf32> to vector<16x1xf32>
    %91 = vector.broadcast %90 : vector<16x1xf32> to vector<16x16xf32>
    %92 = arith.subf %88, %91 : vector<16x16xf32>
    %93 = math.exp %92 : vector<16x16xf32>
    %cst_46 = arith.constant dense<0.000000e+00> : vector<16xf32>
    %94 = vector.multi_reduction <add>, %93, %cst_46 [1] : vector<16x16xf32> to vector<16xf32>
    %95 = vector.shape_cast %94 : vector<16xf32> to vector<16x1xf32>
    %96 = vector.broadcast %95 : vector<16x1xf32> to vector<16x16xf32>
    %97 = arith.divf %93, %96 : vector<16x16xf32>
    %cst_47 = arith.constant dense<0.000000e+00> : vector<16x32xf32>
    %98 = tpu.matmul %97, %83, %cst_47 {dimension_numbers = #tpu.dot_dimension_numbers<[1], [0], [0], [1], [0, 0, 1, 1], [], []>} : vector<16x16xf32>, vector<16x32xf32>, vector<16x32xf32> -> vector<16x32xf32>
    %99 = tpu.concatenate %44, %62, %80, %98 in 1 : vector<16x32xf32>, vector<16x32xf32>, vector<16x32xf32>, vector<16x32xf32> -> vector<16x128xf32>
    %c0_48 = arith.constant 0 : index
    %c0_49 = arith.constant 0 : index
    %100 = vector.load %arg12[%c0_48, %c0_49] : memref<128x128xf32, #tpu.memory_space<vmem>>, vector<128x128xf32>
    %cst_50 = arith.constant dense<0.000000e+00> : vector<16x128xf32>
    %101 = tpu.matmul %99, %100, %cst_50 {dimension_numbers = #tpu.dot_dimension_numbers<[1], [0], [0], [1], [0, 0, 1, 1], [], []>} : vector<16x128xf32>, vector<128x128xf32>, vector<16x128xf32> -> vector<16x128xf32>
    %c0_51 = arith.constant 0 : index
    %c0_52 = arith.constant 0 : index
    %102 = vector.load %arg13[%c0_51, %c0_52] : memref<1x128xf32, #tpu.memory_space<vmem>>, vector<1x128xf32>
    %103 = vector.broadcast %102 : vector<1x128xf32> to vector<16x128xf32>
    %104 = arith.addf %101, %103 : vector<16x128xf32>
    %105 = arith.addf %1, %104 : vector<16x128xf32>
    %c0_53 = arith.constant 0 : index
    %c0_54 = arith.constant 0 : index
    %106 = vector.load %arg14[%c0_53, %c0_54] : memref<1x128xf32, #tpu.memory_space<vmem>>, vector<1x128xf32>
    %c0_55 = arith.constant 0 : index
    %c0_56 = arith.constant 0 : index
    %107 = vector.load %arg15[%c0_55, %c0_56] : memref<1x128xf32, #tpu.memory_space<vmem>>, vector<1x128xf32>
    %cst_57 = arith.constant dense<0.000000e+00> : vector<16xf32>
    %108 = vector.multi_reduction <add>, %105, %cst_57 [1] : vector<16x128xf32> to vector<16xf32>
    %109 = vector.shape_cast %108 : vector<16xf32> to vector<16x1xf32>
    %cst_58 = arith.constant 1.280000e+02 : f32
    %110 = vector.broadcast %cst_58 : f32 to vector<16x1xf32>
    %111 = arith.divf %109, %110 : vector<16x1xf32>
    %112 = vector.broadcast %111 : vector<16x1xf32> to vector<16x128xf32>
    %113 = arith.subf %105, %112 : vector<16x128xf32>
    %114 = arith.mulf %113, %113 : vector<16x128xf32>
    %cst_59 = arith.constant dense<0.000000e+00> : vector<16xf32>
    %115 = vector.multi_reduction <add>, %114, %cst_59 [1] : vector<16x128xf32> to vector<16xf32>
    %116 = vector.shape_cast %115 : vector<16xf32> to vector<16x1xf32>
    %cst_60 = arith.constant 1.280000e+02 : f32
    %117 = vector.broadcast %cst_60 : f32 to vector<16x1xf32>
    %118 = arith.divf %116, %117 : vector<16x1xf32>
    %119 = vector.broadcast %111 : vector<16x1xf32> to vector<16x128xf32>
    %120 = arith.subf %105, %119 : vector<16x128xf32>
    %cst_61 = arith.constant 9.99999974E-6 : f32
    %121 = vector.broadcast %cst_61 : f32 to vector<16x1xf32>
    %122 = arith.addf %118, %121 : vector<16x1xf32>
    %123 = math.rsqrt %122 : vector<16x1xf32>
    %124 = vector.broadcast %123 : vector<16x1xf32> to vector<16x128xf32>
    %125 = arith.mulf %120, %124 : vector<16x128xf32>
    %126 = vector.broadcast %106 : vector<1x128xf32> to vector<16x128xf32>
    %127 = arith.mulf %125, %126 : vector<16x128xf32>
    %128 = vector.broadcast %107 : vector<1x128xf32> to vector<16x128xf32>
    %129 = arith.addf %127, %128 : vector<16x128xf32>
    %c0_62 = arith.constant 0 : index
    %c0_63 = arith.constant 0 : index
    %c0_64 = arith.constant 0 : index
    %130 = vector.load %arg16[%c0_62, %c0_63, %c0_64] : memref<1x16x128xf32, #tpu.memory_space<vmem>>, vector<1x16x128xf32>
    %131 = vector.shape_cast %130 : vector<1x16x128xf32> to vector<16x128xf32>
    %132 = vector.shape_cast %129 : vector<16x128xf32> to vector<1x16x128xf32>
    tpu.vector_store %arg16[%c0_62, %c0_63, %c0_64], %132 {strides = array<i32>} : memref<1x16x128xf32, #tpu.memory_space<vmem>>, vector<1x16x128xf32>,
    return
  }
  func.func @transform_0(%arg0: i32) -> (i32, i32, i32) {
    %c0_i32 = arith.constant 0 : i32
    %c0_i32_0 = arith.constant 0 : i32
    %c0_i32_1 = arith.constant 0 : i32
    return %arg0, %c0_i32, %c0_i32_0 : i32, i32, i32
  }
  func.func @transform_1(%arg0: i32) -> (i32, i32, i32) {
    %c0_i32 = arith.constant 0 : i32
    %c0_i32_0 = arith.constant 0 : i32
    %c0_i32_1 = arith.constant 0 : i32
    return %arg0, %c0_i32, %c0_i32_0 : i32, i32, i32
  }
  func.func @transform_2(%arg0: i32) -> (i32, i32, i32) {
    %c0_i32 = arith.constant 0 : i32
    %c0_i32_0 = arith.constant 0 : i32
    %c0_i32_1 = arith.constant 0 : i32
    return %arg0, %c0_i32, %c0_i32_0 : i32, i32, i32
  }
  func.func @transform_3(%arg0: i32) -> (i32, i32, i32) {
    %c0_i32 = arith.constant 0 : i32
    %c0_i32_0 = arith.constant 0 : i32
    %c0_i32_1 = arith.constant 0 : i32
    return %arg0, %c0_i32, %c0_i32_0 : i32, i32, i32
  }
  func.func @transform_4(%arg0: i32) -> (i32, i32, i32) {
    %c0_i32 = arith.constant 0 : i32
    %c0_i32_0 = arith.constant 0 : i32
    %c0_i32_1 = arith.constant 0 : i32
    return %arg0, %c0_i32, %c0_i32_0 : i32, i32, i32
  }
  func.func @transform_5(%arg0: i32) -> (i32, i32) {
    %c0_i32 = arith.constant 0 : i32
    %c0_i32_0 = arith.constant 0 : i32
    %c0_i32_1 = arith.constant 0 : i32
    return %c0_i32, %c0_i32_0 : i32, i32
  }
  func.func @transform_6(%arg0: i32) -> (i32, i32) {
    %c0_i32 = arith.constant 0 : i32
    %c0_i32_0 = arith.constant 0 : i32
    %c0_i32_1 = arith.constant 0 : i32
    return %c0_i32, %c0_i32_0 : i32, i32
  }
  func.func @transform_7(%arg0: i32) -> (i32, i32) {
    %c0_i32 = arith.constant 0 : i32
    %c0_i32_0 = arith.constant 0 : i32
    %c0_i32_1 = arith.constant 0 : i32
    return %c0_i32, %c0_i32_0 : i32, i32
  }
  func.func @transform_8(%arg0: i32) -> (i32, i32) {
    %c0_i32 = arith.constant 0 : i32
    %c0_i32_0 = arith.constant 0 : i32
    %c0_i32_1 = arith.constant 0 : i32
    return %c0_i32, %c0_i32_0 : i32, i32
  }
  func.func @transform_9(%arg0: i32) -> (i32, i32) {
    %c0_i32 = arith.constant 0 : i32
    %c0_i32_0 = arith.constant 0 : i32
    %c0_i32_1 = arith.constant 0 : i32
    return %c0_i32, %c0_i32_0 : i32, i32
  }
  func.func @transform_10(%arg0: i32) -> (i32, i32) {
    %c0_i32 = arith.constant 0 : i32
    %c0_i32_0 = arith.constant 0 : i32
    %c0_i32_1 = arith.constant 0 : i32
    return %c0_i32, %c0_i32_0 : i32, i32
  }
  func.func @transform_11(%arg0: i32) -> (i32, i32) {
    %c0_i32 = arith.constant 0 : i32
    %c0_i32_0 = arith.constant 0 : i32
    %c0_i32_1 = arith.constant 0 : i32
    return %c0_i32, %c0_i32_0 : i32, i32
  }
  func.func @transform_12(%arg0: i32) -> (i32, i32) {
    %c0_i32 = arith.constant 0 : i32
    %c0_i32_0 = arith.constant 0 : i32
    %c0_i32_1 = arith.constant 0 : i32
    return %c0_i32, %c0_i32_0 : i32, i32
  }
  func.func @transform_13(%arg0: i32) -> (i32, i32) {
    %c0_i32 = arith.constant 0 : i32
    %c0_i32_0 = arith.constant 0 : i32
    %c0_i32_1 = arith.constant 0 : i32
    return %c0_i32, %c0_i32_0 : i32, i32
  }
  func.func @transform_14(%arg0: i32) -> (i32, i32) {
    %c0_i32 = arith.constant 0 : i32
    %c0_i32_0 = arith.constant 0 : i32
    %c0_i32_1 = arith.constant 0 : i32
    return %c0_i32, %c0_i32_0 : i32, i32
  }
  func.func @transform_15(%arg0: i32) -> (i32, i32, i32) {
    %c0_i32 = arith.constant 0 : i32
    %c0_i32_0 = arith.constant 0 : i32
    %c0_i32_1 = arith.constant 0 : i32
    return %arg0, %c0_i32, %c0_i32_0 : i32, i32, i32
  }
}

module attributes {stable_mosaic.version = 11 : i64} {
  func.func @_ln_kernel(%arg0: i32, %arg1: memref<1x16x128xf32, #tpu.memory_space<vmem>>, %arg2: memref<1x128xf32, #tpu.memory_space<vmem>>, %arg3: memref<1x128xf32, #tpu.memory_space<vmem>>, %arg4: memref<1x16x128xf32, #tpu.memory_space<vmem>>) attributes {dimension_semantics = [#tpu.dimension_semantics<parallel>], iteration_bounds = array<i64: 2>, scalar_prefetch = 0 : i64, scratch_operands = 0 : i64, tpu.core_type = #tpu.core_type<tc>, window_params = [{transform_indices = @transform_0, window_bounds = array<i64: 1, 16, 128>}, {pipeline_mode = #tpu.pipeline_mode<synchronous>, transform_indices = @transform_1, window_bounds = array<i64: 1, 128>}, {pipeline_mode = #tpu.pipeline_mode<synchronous>, transform_indices = @transform_2, window_bounds = array<i64: 1, 128>}, {transform_indices = @transform_3, window_bounds = array<i64: 1, 16, 128>}]} {
    %c0 = arith.constant 0 : index
    %c0_0 = arith.constant 0 : index
    %c0_1 = arith.constant 0 : index
    %0 = vector.load %arg1[%c0, %c0_0, %c0_1] : memref<1x16x128xf32, #tpu.memory_space<vmem>>, vector<1x16x128xf32>
    %1 = vector.shape_cast %0 : vector<1x16x128xf32> to vector<16x128xf32>
    %c0_2 = arith.constant 0 : index
    %c0_3 = arith.constant 0 : index
    %2 = vector.load %arg2[%c0_2, %c0_3] : memref<1x128xf32, #tpu.memory_space<vmem>>, vector<1x128xf32>
    %c0_4 = arith.constant 0 : index
    %c0_5 = arith.constant 0 : index
    %3 = vector.load %arg3[%c0_4, %c0_5] : memref<1x128xf32, #tpu.memory_space<vmem>>, vector<1x128xf32>
    %cst = arith.constant dense<0.000000e+00> : vector<16xf32>
    %4 = vector.multi_reduction <add>, %1, %cst [1] : vector<16x128xf32> to vector<16xf32>
    %5 = vector.shape_cast %4 : vector<16xf32> to vector<16x1xf32>
    %cst_6 = arith.constant 1.280000e+02 : f32
    %6 = vector.broadcast %cst_6 : f32 to vector<16x1xf32>
    %7 = arith.divf %5, %6 : vector<16x1xf32>
    %8 = vector.broadcast %7 : vector<16x1xf32> to vector<16x128xf32>
    %9 = arith.subf %1, %8 : vector<16x128xf32>
    %10 = arith.mulf %9, %9 : vector<16x128xf32>
    %cst_7 = arith.constant dense<0.000000e+00> : vector<16xf32>
    %11 = vector.multi_reduction <add>, %10, %cst_7 [1] : vector<16x128xf32> to vector<16xf32>
    %12 = vector.shape_cast %11 : vector<16xf32> to vector<16x1xf32>
    %cst_8 = arith.constant 1.280000e+02 : f32
    %13 = vector.broadcast %cst_8 : f32 to vector<16x1xf32>
    %14 = arith.divf %12, %13 : vector<16x1xf32>
    %15 = vector.broadcast %7 : vector<16x1xf32> to vector<16x128xf32>
    %16 = arith.subf %1, %15 : vector<16x128xf32>
    %cst_9 = arith.constant 9.99999974E-6 : f32
    %17 = vector.broadcast %cst_9 : f32 to vector<16x1xf32>
    %18 = arith.addf %14, %17 : vector<16x1xf32>
    %19 = math.rsqrt %18 : vector<16x1xf32>
    %20 = vector.broadcast %19 : vector<16x1xf32> to vector<16x128xf32>
    %21 = arith.mulf %16, %20 : vector<16x128xf32>
    %22 = vector.broadcast %2 : vector<1x128xf32> to vector<16x128xf32>
    %23 = arith.mulf %21, %22 : vector<16x128xf32>
    %24 = vector.broadcast %3 : vector<1x128xf32> to vector<16x128xf32>
    %25 = arith.addf %23, %24 : vector<16x128xf32>
    %c0_10 = arith.constant 0 : index
    %c0_11 = arith.constant 0 : index
    %c0_12 = arith.constant 0 : index
    %26 = vector.load %arg4[%c0_10, %c0_11, %c0_12] : memref<1x16x128xf32, #tpu.memory_space<vmem>>, vector<1x16x128xf32>
    %27 = vector.shape_cast %26 : vector<1x16x128xf32> to vector<16x128xf32>
    %28 = vector.shape_cast %25 : vector<16x128xf32> to vector<1x16x128xf32>
    tpu.vector_store %arg4[%c0_10, %c0_11, %c0_12], %28 {strides = array<i32>} : memref<1x16x128xf32, #tpu.memory_space<vmem>>, vector<1x16x128xf32>,
    return
  }
  func.func @transform_0(%arg0: i32) -> (i32, i32, i32) {
    %c0_i32 = arith.constant 0 : i32
    %c0_i32_0 = arith.constant 0 : i32
    %c0_i32_1 = arith.constant 0 : i32
    return %arg0, %c0_i32, %c0_i32_0 : i32, i32, i32
  }
  func.func @transform_1(%arg0: i32) -> (i32, i32) {
    %c0_i32 = arith.constant 0 : i32
    %c0_i32_0 = arith.constant 0 : i32
    %c0_i32_1 = arith.constant 0 : i32
    return %c0_i32, %c0_i32_0 : i32, i32
  }
  func.func @transform_2(%arg0: i32) -> (i32, i32) {
    %c0_i32 = arith.constant 0 : i32
    %c0_i32_0 = arith.constant 0 : i32
    %c0_i32_1 = arith.constant 0 : i32
    return %c0_i32, %c0_i32_0 : i32, i32
  }
  func.func @transform_3(%arg0: i32) -> (i32, i32, i32) {
    %c0_i32 = arith.constant 0 : i32
    %c0_i32_0 = arith.constant 0 : i32
    %c0_i32_1 = arith.constant 0 : i32
    return %arg0, %c0_i32, %c0_i32_0 : i32, i32, i32
  }
}

</mosaic_0001>

<llo_original>
// kernel: transformer_layer_forward.7
$region0: #{transformer_layer_forward.7}
  #allocation0 [shape = 'u32[]', space=smem, size = 0x4, offset = 0x4, fixed_abs, tag = 'smem constant byte address 0x4 - core index']
  #allocation1 [shape = 'u32[144,128]{1,0:T(1,128)}', space=vmem, size = 0x12000, scoped, tag = 'internal scratch']
  %s0 = inlined_call_operand.vmem [shape: f32[2,16,128], index: 0, kind: input, shape index: {}]
  %s1 = inlined_call_operand.vmem [shape: f32[128,256], index: 1, kind: input, shape index: {}]
  %s2 = inlined_call_operand.vmem [shape: f32[1,256], index: 2, kind: input, shape index: {}]
  %s3 = inlined_call_operand.vmem [shape: f32[256,128], index: 3, kind: input, shape index: {}]
  %s4 = inlined_call_operand.vmem [shape: f32[1,128], index: 4, kind: input, shape index: {}]
  %s5 = inlined_call_operand.vmem [shape: f32[1,128], index: 5, kind: input, shape index: {}]
  %s6 = inlined_call_operand.vmem [shape: f32[1,128], index: 6, kind: input, shape index: {}]
  %s7 = inlined_call_operand.vmem [shape: f32[2,16,128], index: 7, kind: output, shape index: {}]
  %s8 = sld [smem:[#allocation0]]
  $region61: #{transformer_layer_forward.7} parent=0
    _
  %s10 = ssub.s32 1, %s8
  %s11 = scalar_select 0, %s10, %s8
  loop: start=0, step=1, limit=4
  $region2: #{transformer_layer_forward.7} parent=0 // loop_pre_header
    _
  $region3: #{transformer_layer_forward.7} parent=0 // loop_header
    %s13 = sphi 0, %s17
    %p14 = scmp.ge.s32.totalorder %s13, 4
    %s23 = sphi 0, %s25
    %s26 = sphi 0, %s23
    %s27 = sphi 0, %s26
    %s43 = sphi 0, %s27
    %s47 = sphi 0, %s47
    %s49 = sphi 0, %s47
    %s50 = sphi 0, %s49
    %s64 = sphi 0, %s50
    %s68 = sphi 0, %s68
    %s70 = sphi 0, %s68
    %s71 = sphi 0, %s70
    %s85 = sphi 0, %s71
    %s89 = sphi 0, %s89
    %s91 = sphi 0, %s89
    %s92 = sphi 0, %s91
    %s106 = sphi 0, %s92
    %s110 = sphi 0, %s110
    %s112 = sphi 0, %s110
    %s113 = sphi 0, %s112
    %s127 = sphi 0, %s113
    %s131 = sphi 0, %s131
    %s133 = sphi 0, %s131
    %s134 = sphi 0, %s133
    %s148 = sphi 0, %s134
    %s152 = sphi 0, %s152
    %s154 = sphi 0, %s152
    %s155 = sphi 0, %s154
    %s169 = sphi 0, %s155
    %s175 = sphi 0, %s177
    %s178 = sphi 0, %s175
    %s179 = sphi 0, %s178
    %s195 = sphi 0, %s179
  $region4: #{transformer_layer_forward.7} parent=0 // loop_header_branch
    %16 = sbr.rel (%p14) target = $region8
  $region5: #{transformer_layer_forward.7} parent=0 // loop_body
    %s18 = ssub.s32 %s13, 1
    %s19 = ssub.s32 %s13, 2
    %s20 = sadd.s32 %s13, 1
    %s21 = ssub.s32 %s13, %s20
    %p22 = scmp.eq.s32.totalorder %s21, 0
    %s24 = sadd.s32 %s23, 1
    %s25 = scalar_select %p22, %s23, %s24
    %p28 = pneg %p22
    %p29 = scmp.eq.s32.totalorder %s13, 1
    %p30 = por %p28, %p29
    %p31 = scmp.ne.s32.totalorder %s23, %s26
    %p32 = scmp.eq.s32.totalorder %s13, 0
    %p33 = por %p31, %p32
    %p34 = scmp.ne.s32.totalorder %s23, %s26
    %p35 = scmp.eq.s32.totalorder %s18, 1
    %p36 = por %p34, %p35
    %p37 = scmp.ne.s32.totalorder %s26, %s27
    %p38 = scmp.eq.s32.totalorder %s18, 0
    %p39 = por %p37, %p38
    %p40 = scmp.ne.s32.totalorder %s26, %s27
    %p41 = scmp.eq.s32.totalorder %s19, 1
    %p42 = por %p40, %p41
    %p44 = scmp.ne.s32.totalorder %s27, %s43
    %p45 = scmp.eq.s32.totalorder %s19, 0
    %p46 = por %p44, %p45
    %s48 = sadd.s32 %s47, 1
    %p51 = scmp.eq.s32.totalorder %s13, 1
    %p52 = scmp.ne.s32.totalorder %s47, %s49
    %p53 = scmp.eq.s32.totalorder %s13, 0
    %p54 = por %p52, %p53
    %p55 = scmp.ne.s32.totalorder %s47, %s49
    %p56 = scmp.eq.s32.totalorder %s18, 1
    %p57 = por %p55, %p56
    %p58 = scmp.ne.s32.totalorder %s49, %s50
    %p59 = scmp.eq.s32.totalorder %s18, 0
    %p60 = por %p58, %p59
    %p61 = scmp.ne.s32.totalorder %s49, %s50
    %p62 = scmp.eq.s32.totalorder %s19, 1
    %p63 = por %p61, %p62
    %p65 = scmp.ne.s32.totalorder %s50, %s64
    %p66 = scmp.eq.s32.totalorder %s19, 0
    %p67 = por %p65, %p66
    %s69 = sadd.s32 %s68, 1
    %p72 = scmp.eq.s32.totalorder %s13, 1
    %p73 = scmp.ne.s32.totalorder %s68, %s70
    %p74 = scmp.eq.s32.totalorder %s13, 0
    %p75 = por %p73, %p74
    %p76 = scmp.ne.s32.totalorder %s68, %s70
    %p77 = scmp.eq.s32.totalorder %s18, 1
    %p78 = por %p76, %p77
    %p79 = scmp.ne.s32.totalorder %s70, %s71
    %p80 = scmp.eq.s32.totalorder %s18, 0
    %p81 = por %p79, %p80
    %p82 = scmp.ne.s32.totalorder %s70, %s71
    %p83 = scmp.eq.s32.totalorder %s19, 1
    %p84 = por %p82, %p83
    %p86 = scmp.ne.s32.totalorder %s71, %s85
    %p87 = scmp.eq.s32.totalorder %s19, 0
    %p88 = por %p86, %p87
    %s90 = sadd.s32 %s89, 1
    %p93 = scmp.eq.s32.totalorder %s13, 1
    %p94 = scmp.ne.s32.totalorder %s89, %s91
    %p95 = scmp.eq.s32.totalorder %s13, 0
    %p96 = por %p94, %p95
    %p97 = scmp.ne.s32.totalorder %s89, %s91
    %p98 = scmp.eq.s32.totalorder %s18, 1
    %p99 = por %p97, %p98
    %p100 = scmp.ne.s32.totalorder %s91, %s92
    %p101 = scmp.eq.s32.totalorder %s18, 0
    %p102 = por %p100, %p101
    %p103 = scmp.ne.s32.totalorder %s91, %s92
    %p104 = scmp.eq.s32.totalorder %s19, 1
    %p105 = por %p103, %p104
    %p107 = scmp.ne.s32.totalorder %s92, %s106
    %p108 = scmp.eq.s32.totalorder %s19, 0
    %p109 = por %p107, %p108
    %s111 = sadd.s32 %s110, 1
    %p114 = scmp.eq.s32.totalorder %s13, 1
    %p115 = scmp.ne.s32.totalorder %s110, %s112
    %p116 = scmp.eq.s32.totalorder %s13, 0
    %p117 = por %p115, %p116
    %p118 = scmp.ne.s32.totalorder %s110, %s112
    %p119 = scmp.eq.s32.totalorder %s18, 1
    %p120 = por %p118, %p119
    %p121 = scmp.ne.s32.totalorder %s112, %s113
    %p122 = scmp.eq.s32.totalorder %s18, 0
    %p123 = por %p121, %p122
    %p124 = scmp.ne.s32.totalorder %s112, %s113
    %p125 = scmp.eq.s32.totalorder %s19, 1
    %p126 = por %p124, %p125
    %p128 = scmp.ne.s32.totalorder %s113, %s127
    %p129 = scmp.eq.s32.totalorder %s19, 0
    %p130 = por %p128, %p129
    %s132 = sadd.s32 %s131, 1
    %p135 = scmp.eq.s32.totalorder %s13, 1
    %p136 = scmp.ne.s32.totalorder %s131, %s133
    %p137 = scmp.eq.s32.totalorder %s13, 0
    %p138 = por %p136, %p137
    %p139 = scmp.ne.s32.totalorder %s131, %s133
    %p140 = scmp.eq.s32.totalorder %s18, 1
    %p141 = por %p139, %p140
    %p142 = scmp.ne.s32.totalorder %s133, %s134
    %p143 = scmp.eq.s32.totalorder %s18, 0
    %p144 = por %p142, %p143
    %p145 = scmp.ne.s32.totalorder %s133, %s134
    %p146 = scmp.eq.s32.totalorder %s19, 1
    %p147 = por %p145, %p146
    %p149 = scmp.ne.s32.totalorder %s134, %s148
    %p150 = scmp.eq.s32.totalorder %s19, 0
    %p151 = por %p149, %p150
    %s153 = sadd.s32 %s152, 1
    %p156 = scmp.eq.s32.totalorder %s13, 1
    %p157 = scmp.ne.s32.totalorder %s152, %s154
    %p158 = scmp.eq.s32.totalorder %s13, 0
    %p159 = por %p157, %p158
    %p160 = scmp.ne.s32.totalorder %s152, %s154
    %p161 = scmp.eq.s32.totalorder %s18, 1
    %p162 = por %p160, %p161
    %p163 = scmp.ne.s32.totalorder %s154, %s155
    %p164 = scmp.eq.s32.totalorder %s18, 0
    %p165 = por %p163, %p164
    %p166 = scmp.ne.s32.totalorder %s154, %s155
    %p167 = scmp.eq.s32.totalorder %s19, 1
    %p168 = por %p166, %p167
    %p170 = scmp.ne.s32.totalorder %s155, %s169
    %p171 = scmp.eq.s32.totalorder %s19, 0
    %p172 = por %p170, %p171
    %s173 = ssub.s32 %s13, %s20
    %p174 = scmp.eq.s32.totalorder %s173, 0
    %s176 = sadd.s32 %s175, 1
    %s177 = scalar_select %p174, %s175, %s176
    %p180 = pneg %p174
    %p181 = scmp.eq.s32.totalorder %s13, 1
    %p182 = por %p180, %p181
    %p183 = scmp.ne.s32.totalorder %s175, %s178
    %p184 = scmp.eq.s32.totalorder %s13, 0
    %p185 = por %p183, %p184
    %p186 = scmp.ne.s32.totalorder %s175, %s178
    %p187 = scmp.eq.s32.totalorder %s18, 1
    %p188 = por %p186, %p187
    %p189 = scmp.ne.s32.totalorder %s178, %s179
    %p190 = scmp.eq.s32.totalorder %s18, 0
    %p191 = por %p189, %p190
    %p192 = scmp.ne.s32.totalorder %s178, %s179
    %p193 = scmp.eq.s32.totalorder %s19, 1
    %p194 = por %p192, %p193
    %p196 = scmp.ne.s32.totalorder %s179, %s195
    %p197 = scmp.eq.s32.totalorder %s19, 0
    %p198 = por %p196, %p197
    %p199 = scmp.le.s32.totalorder 1, %s13
    %p200 = scmp.lt.s32.totalorder %s13, 3
    %p201 = pnand %p199, %p200
    %p202 = pneg %p201
    // Predicated region
    $region9: #{transformer_layer_forward.7} parent=5 // pred_check
      _
    $region10: #{transformer_layer_forward.7} parent=5 // pred_check_branch
      %204 = sbr.rel (%p201) target = $region12
    $region11: #{transformer_layer_forward.7} parent=5 // pred_region
      %s205 = ssub.s32 %s13, 1
      // Predicated region
      $region13: #{transformer_layer_forward.7} parent=11 // pred_check
        %p206 = pneg %p60
      $region14: #{transformer_layer_forward.7} parent=11 // pred_check_branch
        %208 = sbr.rel (%p206) target = $region16
      $region15: #{transformer_layer_forward.7} parent=11 // pred_region
        _
      $region16: #{transformer_layer_forward.7} parent=11 // pred_fallthru
        _
      // Predicated region
      $region17: #{transformer_layer_forward.7} parent=11 // pred_check
        %p209 = pneg %p81
      $region18: #{transformer_layer_forward.7} parent=11 // pred_check_branch
        %211 = sbr.rel (%p209) target = $region20
      $region19: #{transformer_layer_forward.7} parent=11 // pred_region
        _
      $region20: #{transformer_layer_forward.7} parent=11 // pred_fallthru
        _
      // Predicated region
      $region21: #{transformer_layer_forward.7} parent=11 // pred_check
        %p212 = pneg %p102
      $region22: #{transformer_layer_forward.7} parent=11 // pred_check_branch
        %214 = sbr.rel (%p212) target = $region24
      $region23: #{transformer_layer_forward.7} parent=11 // pred_region
        _
      $region24: #{transformer_layer_forward.7} parent=11 // pred_fallthru
        _
      // Predicated region
      $region25: #{transformer_layer_forward.7} parent=11 // pred_check
        %p215 = pneg %p123
      $region26: #{transformer_layer_forward.7} parent=11 // pred_check_branch
        %217 = sbr.rel (%p215) target = $region28
      $region27: #{transformer_layer_forward.7} parent=11 // pred_region
        _
      $region28: #{transformer_layer_forward.7} parent=11 // pred_fallthru
        _
      // Predicated region
      $region29: #{transformer_layer_forward.7} parent=11 // pred_check
        %p218 = pneg %p144
      $region30: #{transformer_layer_forward.7} parent=11 // pred_check_branch
        %220 = sbr.rel (%p218) target = $region32
      $region31: #{transformer_layer_forward.7} parent=11 // pred_region
        _
      $region32: #{transformer_layer_forward.7} parent=11 // pred_fallthru
        _
      // Predicated region
      $region33: #{transformer_layer_forward.7} parent=11 // pred_check
        %p221 = pneg %p165
      $region34: #{transformer_layer_forward.7} parent=11 // pred_check_branch
        %223 = sbr.rel (%p221) target = $region36
      $region35: #{transformer_layer_forward.7} parent=11 // pred_region
        _
      $region36: #{transformer_layer_forward.7} parent=11 // pred_fallthru
        _
    $region12: #{transformer_layer_forward.7} parent=5 // pred_fallthru
      _
    %p224 = scmp.lt.s32.totalorder %s13, 2
    // Predicated region
    $region37: #{transformer_layer_forward.7} parent=5 // pred_check
      %p225 = pneg %p224
    $region38: #{transformer_layer_forward.7} parent=5 // pred_check_branch
      %227 = sbr.rel (%p225) target = $region40
    $region39: #{transformer_layer_forward.7} parent=5 // pred_region
      // Predicated region
      $region41: #{transformer_layer_forward.7} parent=39 // pred_check
        %p228 = pneg %p33
      $region42: #{transformer_layer_forward.7} parent=39 // pred_check_branch
        %230 = sbr.rel (%p228) target = $region44
      $region43: #{transformer_layer_forward.7} parent=39 // pred_region
        %p231 = scmp.lt.s32.totalorder %s13, 1
        %s232 = scalar_select %p231, %s13, 1
        %s233 = smul.addr %s232, 2
        %s234 = smul.addr %s233, 8
        %s235 = scalar_lea.vmem %s0, %s234
      $region44: #{transformer_layer_forward.7} parent=39 // pred_fallthru
        _
    $region40: #{transformer_layer_forward.7} parent=5 // pred_fallthru
      _
    %p236 = scmp.le.s32.totalorder 1, %s13
    %p237 = scmp.lt.s32.totalorder %s13, 3
    %p238 = pnand %p236, %p237
    %p239 = pneg %p238
    // Predicated region
    $region45: #{transformer_layer_forward.7} parent=5 // pred_check
      _
    $region46: #{transformer_layer_forward.7} parent=5 // pred_check_branch
      %241 = sbr.rel (%p238) target = $region48
    $region47: #{transformer_layer_forward.7} parent=5 // pred_region
      %s242 = ssub.s32 %s13, 1
      %p243 = scmp.lt.s32.totalorder %s18, 1
      %s244 = scalar_select %p243, %s18, 1
      %s245 = smul.addr %s244, 2
      %s246 = smul.addr %s245, 8
      %s247 = scalar_lea.vmem %s0, %s246
      %p248 = pneg %p39
      %p249 = pneg %p36
      %p250 = pneg %p60
      %p251 = pneg %p57
      %p252 = pneg %p81
      %p253 = pneg %p78
      %p254 = pneg %p102
      %p255 = pneg %p99
      %p256 = pneg %p123
      %p257 = pneg %p120
      %p258 = pneg %p144
      %p259 = pneg %p141
      %p260 = pneg %p165
      %p261 = pneg %p162
      %p262 = pneg %p191
      %p263 = pneg %p188
      %p264 = scmp.lt.s32.totalorder %s18, 1
      %s265 = scalar_select %p264, %s18, 1
      %s266 = smul.addr %s265, 2
      %s267 = smul.addr %s266, 8
      %s268 = scalar_lea.vmem %s7, %s267
      %p269 = scmp.lt.s32.totalorder %s18, 1
      %s270 = scalar_select %p269, %s18, 1
      %s271 = smul.addr %s270, 2
      %s272 = smul.addr %s271, 8
      %s273 = scalar_lea.vmem %s0, %s272
      %p274 = scmp.lt.s32.totalorder %s18, 1
      %s275 = scalar_select %p274, %s18, 1
      %s276 = smul.addr %s275, 2
      %s277 = smul.addr %s276, 8
      %s278 = scalar_lea.vmem %s7, %s277
      %v279 = vld [vmem:[%s273] sm:$0xff]
      %v280 = vld [vmem:[%s273 + $0x8] sm:$0xff]
      %v281 = vld [vmem:[%s1] sm:$0xff]
      %v282 = vld [vmem:[%s1 + $0x8] sm:$0xff]
      %v283 = vld [vmem:[%s1 + $0x10] sm:$0xff]
      %v284 = vld [vmem:[%s1 + $0x18] sm:$0xff]
      %v285 = vld [vmem:[%s1 + $0x20] sm:$0xff]
      %v286 = vld [vmem:[%s1 + $0x28] sm:$0xff]
      %v287 = vld [vmem:[%s1 + $0x30] sm:$0xff]
      %v288 = vld [vmem:[%s1 + $0x38] sm:$0xff]
      %v289 = vld [vmem:[%s1 + $0x40] sm:$0xff]
      %v290 = vld [vmem:[%s1 + $0x48] sm:$0xff]
      %v291 = vld [vmem:[%s1 + $0x50] sm:$0xff]
      %v292 = vld [vmem:[%s1 + $0x58] sm:$0xff]
      %v293 = vld [vmem:[%s1 + $0x60] sm:$0xff]
      %v294 = vld [vmem:[%s1 + $0x68] sm:$0xff]
      %v295 = vld [vmem:[%s1 + $0x70] sm:$0xff]
      %v296 = vld [vmem:[%s1 + $0x78] sm:$0xff]
      %v297 = vld [vmem:[%s1 + $0x80] sm:$0xff]
      %v298 = vld [vmem:[%s1 + $0x88] sm:$0xff]
      %v299 = vld [vmem:[%s1 + $0x90] sm:$0xff]
      %v300 = vld [vmem:[%s1 + $0x98] sm:$0xff]
      %v301 = vld [vmem:[%s1 + $0xa0] sm:$0xff]
      %v302 = vld [vmem:[%s1 + $0xa8] sm:$0xff]
      %v303 = vld [vmem:[%s1 + $0xb0] sm:$0xff]
      %v304 = vld [vmem:[%s1 + $0xb8] sm:$0xff]
      %v305 = vld [vmem:[%s1 + $0xc0] sm:$0xff]
      %v306 = vld [vmem:[%s1 + $0xc8] sm:$0xff]
      %v307 = vld [vmem:[%s1 + $0xd0] sm:$0xff]
      %v308 = vld [vmem:[%s1 + $0xd8] sm:$0xff]
      %v309 = vld [vmem:[%s1 + $0xe0] sm:$0xff]
      %v310 = vld [vmem:[%s1 + $0xe8] sm:$0xff]
      %v311 = vld [vmem:[%s1 + $0xf0] sm:$0xff]
      %v312 = vld [vmem:[%s1 + $0xf8] sm:$0xff]
      %v313 = vld [vmem:[%s2] sm:$0x3]
      %v315 = vlaneseq
      %v316 = vshrl.u32 %v315, 7
      %v317 = vsub.s32 0, %v316
      %v318 = vrot.slane %v313, %v317
      %v319 = vlaneseq
      %v320 = vshrl.u32 %v319, 7
      %v321 = vsub.s32 1, %v320
      %v322 = vrot.slane %v313, %v321
      %325 = vmatprep.subr.mxu0 %v282
      %326 = vmatpush1.msra.mxu0 %v281
      %327 = vmatprep.subr.mxu0 %v284
      %328 = vmatpush1.msra.mxu0 %v283
      %329 = vmatprep.subr.mxu0 %v286
      %330 = vmatpush1.msra.mxu0 %v285
      %331 = vmatprep.subr.mxu0 %v288
      %332 = vmatpush1.msra.mxu0 %v287
      %333 = vmatprep.subr.mxu0 %v290
      %334 = vmatpush1.msra.mxu0 %v289
      %335 = vmatprep.subr.mxu0 %v292
      %336 = vmatpush1.msra.mxu0 %v291
      %337 = vmatprep.subr.mxu0 %v294
      %338 = vmatpush1.msra.mxu0 %v293
      %339 = vmatprep.subr.mxu0 %v296
      %340 = vmatpush1.msra.mxu0 %v295
      %341 = vmatprep.subr.mxu0 %v298
      %342 = vmatpush1.msra.mxu0 %v297
      %343 = vmatprep.subr.mxu0 %v300
      %344 = vmatpush1.msra.mxu0 %v299
      %345 = vmatprep.subr.mxu0 %v302
      %346 = vmatpush1.msra.mxu0 %v301
      %347 = vmatprep.subr.mxu0 %v304
      %348 = vmatpush1.msra.mxu0 %v303
      %349 = vmatprep.subr.mxu0 %v306
      %350 = vmatpush1.msra.mxu0 %v305
      %351 = vmatprep.subr.mxu0 %v308
      %352 = vmatpush1.msra.mxu0 %v307
      %353 = vmatprep.subr.mxu0 %v310
      %354 = vmatpush1.msra.mxu0 %v309
      %355 = vmatprep.subr.mxu0 %v312
      %356 = vmatpush1.msra.mxu0 %v311
      %357 = vmatprep.subr.mxu0 0.0
      %358 = vmatpush1.msra.mxu0 0.0
      %359 = vmatprep.subr.mxu0 0.0
      %360 = vmatpush1.msra.mxu0 0.0
      %361 = vmatprep.subr.mxu0 0.0
      %362 = vmatpush1.msra.mxu0 0.0
      %363 = vmatprep.subr.mxu0 0.0
      %364 = vmatpush1.msra.mxu0 0.0
      %365 = vmatprep.subr.mxu0 0.0
      %366 = vmatpush1.msra.mxu0 0.0
      %367 = vmatprep.subr.mxu0 0.0
      %368 = vmatpush1.msra.mxu0 0.0
      %369 = vmatprep.subr.mxu0 0.0
      %370 = vmatpush1.msra.mxu0 0.0
      %371 = vmatprep.subr.mxu0 0.0
      %372 = vmatpush1.msra.mxu0 0.0
      %373 = vmatprep.subr.mxu0 0.0
      %374 = vmatpush1.msra.mxu0 0.0
      %375 = vmatprep.subr.mxu0 0.0
      %376 = vmatpush1.msra.mxu0 0.0
      %377 = vmatprep.subr.mxu0 0.0
      %378 = vmatpush1.msra.mxu0 0.0
      %379 = vmatprep.subr.mxu0 0.0
      %380 = vmatpush1.msra.mxu0 0.0
      %381 = vmatprep.subr.mxu0 0.0
      %382 = vmatpush1.msra.mxu0 0.0
      %383 = vmatprep.subr.mxu0 0.0
      %384 = vmatpush1.msra.mxu0 0.0
      %385 = vmatprep.subr.mxu0 0.0
      %386 = vmatpush1.msra.mxu0 0.0
      %387 = vmatprep.subr.mxu0 0.0
      %388 = vmatpush1.msra.mxu0 0.0
      %389 = vmatprep.mubr.f32.mxu0 0.0
      %390 = vmatmul.mubr.f32.gmra.mrb[0].mxu0 %v279
      %v391 = vpop.f32.mrb[0].mxu0
      %v392 = vadd.f32 %v318, %v391
      %v393 = vpop.f32.mrb[0].mxu0
      %v394 = vadd.f32 %v322, %v393
      %395 = vmatprep.mubr.f32.mxu0 0.0
      %396 = vmatmul.mubr.f32.gmra.mrb[0].mxu0 %v280
      %v397 = vpop.f32.mrb[0].mxu0
      %v398 = vadd.f32 %v318, %v397
      %v399 = vpop.f32.mrb[0].mxu0
      %v400 = vadd.f32 %v322, %v399
      %401 = vdwg.mxu0
      %v402 = vmax.f32 %v392, 0.0
      %v403 = vmax.f32 %v394, 0.0
      %v404 = vmax.f32 %v398, 0.0
      %v405 = vmax.f32 %v400, 0.0
      %v406 = vld [vmem:[%s3] sm:$0xff]
      %v407 = vld [vmem:[%s3 + $0x8] sm:$0xff]
      %v408 = vld [vmem:[%s3 + $0x10] sm:$0xff]
      %v409 = vld [vmem:[%s3 + $0x18] sm:$0xff]
      %v410 = vld [vmem:[%s3 + $0x20] sm:$0xff]
      %v411 = vld [vmem:[%s3 + $0x28] sm:$0xff]
      %v412 = vld [vmem:[%s3 + $0x30] sm:$0xff]
      %v413 = vld [vmem:[%s3 + $0x38] sm:$0xff]
      %v414 = vld [vmem:[%s3 + $0x40] sm:$0xff]
      %v415 = vld [vmem:[%s3 + $0x48] sm:$0xff]
      %v416 = vld [vmem:[%s3 + $0x50] sm:$0xff]
      %v417 = vld [vmem:[%s3 + $0x58] sm:$0xff]
      %v418 = vld [vmem:[%s3 + $0x60] sm:$0xff]
      %v419 = vld [vmem:[%s3 + $0x68] sm:$0xff]
      %v420 = vld [vmem:[%s3 + $0x70] sm:$0xff]
      %v421 = vld [vmem:[%s3 + $0x78] sm:$0xff]
      %v422 = vld [vmem:[%s3 + $0x80] sm:$0xff]
      %v423 = vld [vmem:[%s3 + $0x88] sm:$0xff]
      %v424 = vld [vmem:[%s3 + $0x90] sm:$0xff]
      %v425 = vld [vmem:[%s3 + $0x98] sm:$0xff]
      %v426 = vld [vmem:[%s3 + $0xa0] sm:$0xff]
      %v427 = vld [vmem:[%s3 + $0xa8] sm:$0xff]
      %v428 = vld [vmem:[%s3 + $0xb0] sm:$0xff]
      %v429 = vld [vmem:[%s3 + $0xb8] sm:$0xff]
      %v430 = vld [vmem:[%s3 + $0xc0] sm:$0xff]
      %v431 = vld [vmem:[%s3 + $0xc8] sm:$0xff]
      %v432 = vld [vmem:[%s3 + $0xd0] sm:$0xff]
      %v433 = vld [vmem:[%s3 + $0xd8] sm:$0xff]
      %v434 = vld [vmem:[%s3 + $0xe0] sm:$0xff]
      %v435 = vld [vmem:[%s3 + $0xe8] sm:$0xff]
      %v436 = vld [vmem:[%s3 + $0xf0] sm:$0xff]
      %v437 = vld [vmem:[%s3 + $0xf8] sm:$0xff]
      %438 = vmatprep.subr.mxu0 0.0
      %439 = vmatpush1.msra.mxu0 %v406
      %440 = vmatprep.subr.mxu0 0.0
      %441 = vmatpush1.msra.mxu0 %v407
      %442 = vmatprep.subr.mxu0 0.0
      %443 = vmatpush1.msra.mxu0 %v408
      %444 = vmatprep.subr.mxu0 0.0
      %445 = vmatpush1.msra.mxu0 %v409
      %446 = vmatprep.subr.mxu0 0.0
      %447 = vmatpush1.msra.mxu0 %v410
      %448 = vmatprep.subr.mxu0 0.0
      %449 = vmatpush1.msra.mxu0 %v411
      %450 = vmatprep.subr.mxu0 0.0
      %451 = vmatpush1.msra.mxu0 %v412
      %452 = vmatprep.subr.mxu0 0.0
      %453 = vmatpush1.msra.mxu0 %v413
      %454 = vmatprep.subr.mxu0 0.0
      %455 = vmatpush1.msra.mxu0 %v414
      %456 = vmatprep.subr.mxu0 0.0
      %457 = vmatpush1.msra.mxu0 %v415
      %458 = vmatprep.subr.mxu0 0.0
      %459 = vmatpush1.msra.mxu0 %v416
      %460 = vmatprep.subr.mxu0 0.0
      %461 = vmatpush1.msra.mxu0 %v417
      %462 = vmatprep.subr.mxu0 0.0
      %463 = vmatpush1.msra.mxu0 %v418
      %464 = vmatprep.subr.mxu0 0.0
      %465 = vmatpush1.msra.mxu0 %v419
      %466 = vmatprep.subr.mxu0 0.0
      %467 = vmatpush1.msra.mxu0 %v420
      %468 = vmatprep.subr.mxu0 0.0
      %469 = vmatpush1.msra.mxu0 %v421
      %470 = vmatprep.subr.mxu0 0.0
      %471 = vmatpush1.msra.mxu0 %v422
      %472 = vmatprep.subr.mxu0 0.0
      %473 = vmatpush1.msra.mxu0 %v423
      %474 = vmatprep.subr.mxu0 0.0
      %475 = vmatpush1.msra.mxu0 %v424
      %476 = vmatprep.subr.mxu0 0.0
      %477 = vmatpush1.msra.mxu0 %v425
      %478 = vmatprep.subr.mxu0 0.0
      %479 = vmatpush1.msra.mxu0 %v426
      %480 = vmatprep.subr.mxu0 0.0
      %481 = vmatpush1.msra.mxu0 %v427
      %482 = vmatprep.subr.mxu0 0.0
      %483 = vmatpush1.msra.mxu0 %v428
      %484 = vmatprep.subr.mxu0 0.0
      %485 = vmatpush1.msra.mxu0 %v429
      %486 = vmatprep.subr.mxu0 0.0
      %487 = vmatpush1.msra.mxu0 %v430
      %488 = vmatprep.subr.mxu0 0.0
      %489 = vmatpush1.msra.mxu0 %v431
      %490 = vmatprep.subr.mxu0 0.0
      %491 = vmatpush1.msra.mxu0 %v432
      %492 = vmatprep.subr.mxu0 0.0
      %493 = vmatpush1.msra.mxu0 %v433
      %494 = vmatprep.subr.mxu0 0.0
      %495 = vmatpush1.msra.mxu0 %v434
      %496 = vmatprep.subr.mxu0 0.0
      %497 = vmatpush1.msra.mxu0 %v435
      %498 = vmatprep.subr.mxu0 0.0
      %499 = vmatpush1.msra.mxu0 %v436
      %500 = vmatprep.subr.mxu0 0.0
      %501 = vmatpush1.msra.mxu0 %v437
      %502 = vmatprep.mubr.f32.mxu0 %v403
      %503 = vmatmul.mubr.f32.gmra.mrb[0].mxu0 %v402
      %v504 = vpop.f32.mrb[0].mxu0
      %v505 = vadd.f32 0.0, %v504
      %v506 = vpop.f32.mrb[0].mxu0
      %507 = vmatprep.mubr.f32.mxu0 %v405
      %508 = vmatmul.mubr.f32.gmra.mrb[0].mxu0 %v404
      %v509 = vpop.f32.mrb[0].mxu0
      %v510 = vadd.f32 0.0, %v509
      %v511 = vpop.f32.mrb[0].mxu0
      %512 = vdwg.mxu0
      %v513 = vadd.f32 %v279, %v505
      %v514 = vadd.f32 %v280, %v510
      %v515 = vld [vmem:[%s4] sm:$0x1]
      %v517 = vlaneseq
      %v518 = vshrl.u32 %v517, 7
      %v519 = vsub.s32 0, %v518
      %v520 = vrot.slane %v515, %v519
      %v522 = vadd.f32 %v513, %v520
      %v523 = vadd.f32 %v514, %v520
      %v524 = vld [vmem:[%s5] sm:$0x1]
      %v525 = vld [vmem:[%s6] sm:$0x1]
      %526 = vadd.xlane.f32.xlu0 %v522
      %v527 = vpop.xlane.xlu0 %526
      %528 = vadd.xlane.f32.xlu0 %v523
      %v529 = vpop.xlane.xlu0 %528
      %v530 = vrcp.pop 128.0
      %v531 = vmul.f32 %v527, %v530
      %v532 = vmul.f32 %v529, %v530
      %v533 = vsub.f32 %v522, %v531
      %v534 = vsub.f32 %v523, %v532
      %v535 = vmul.f32 %v533, %v533
      %v536 = vmul.f32 %v534, %v534
      %537 = vadd.xlane.f32.xlu0 %v535
      %v538 = vpop.xlane.xlu0 %537
      %539 = vadd.xlane.f32.xlu0 %v536
      %v540 = vpop.xlane.xlu0 %539
      %v541 = vmul.f32 %v538, %v530
      %v542 = vmul.f32 %v540, %v530
      %v543 = vadd.f32 %v541, 1e-05
      %v544 = vadd.f32 %v542, 1e-05
      %v545 = vrsqrt.pop %v543
      %v546 = vrsqrt.pop %v544
      %v547 = vmul.f32 %v533, %v545
      %v548 = vmul.f32 %v534, %v546
      %v550 = vlaneseq
      %v551 = vshrl.u32 %v550, 7
      %v552 = vsub.s32 0, %v551
      %v553 = vrot.slane %v524, %v552
      %v555 = vmul.f32 %v547, %v553
      %v556 = vmul.f32 %v548, %v553
      %v558 = vlaneseq
      %v559 = vshrl.u32 %v558, 7
      %v560 = vsub.s32 0, %v559
      %v561 = vrot.slane %v525, %v560
      %v563 = vadd.f32 %v555, %v561
      %v564 = vadd.f32 %v556, %v561
      %565 = vst [vmem:[%s278] sm:$0xff] %v563
      %566 = vst [vmem:[%s278 + $0x8] sm:$0xff] %v564
      %p567 = scmp.lt.s32.totalorder %s18, 1
      %s568 = scalar_select %p567, %s18, 1
      %s569 = smul.addr %s568, 2
      %s570 = smul.addr %s569, 8
      %s571 = scalar_lea.vmem %s7, %s570
      // Predicated region
      $region49: #{transformer_layer_forward.7} parent=47 // pred_check
        %p572 = pneg %p188
      $region50: #{transformer_layer_forward.7} parent=47 // pred_check_branch
        %574 = sbr.rel (%p572) target = $region52
      $region51: #{transformer_layer_forward.7} parent=47 // pred_region
        _
      $region52: #{transformer_layer_forward.7} parent=47 // pred_fallthru
        _
    $region48: #{transformer_layer_forward.7} parent=5 // pred_fallthru
      _
    %p575 = scmp.le.s32.totalorder 2, %s13
    // Predicated region
    $region53: #{transformer_layer_forward.7} parent=5 // pred_check
      %p576 = pneg %p575
    $region54: #{transformer_layer_forward.7} parent=5 // pred_check_branch
      %578 = sbr.rel (%p576) target = $region56
    $region55: #{transformer_layer_forward.7} parent=5 // pred_region
      %s579 = ssub.s32 %s13, 2
      // Predicated region
      $region57: #{transformer_layer_forward.7} parent=55 // pred_check
        %p580 = pneg %p194
      $region58: #{transformer_layer_forward.7} parent=55 // pred_check_branch
        %582 = sbr.rel (%p580) target = $region60
      $region59: #{transformer_layer_forward.7} parent=55 // pred_region
        %p583 = scmp.lt.s32.totalorder %s19, 1
        %s584 = scalar_select %p583, %s19, 1
        %s585 = smul.addr %s584, 2
        %s586 = smul.addr %s585, 8
        %s587 = scalar_lea.vmem %s7, %s586
      $region60: #{transformer_layer_forward.7} parent=55 // pred_fallthru
        _
    $region56: #{transformer_layer_forward.7} parent=5 // pred_fallthru
      _
  $region6: #{transformer_layer_forward.7} parent=0 // loop_footer
    %s17 = sadd.s32 1, %s13
  $region7: #{transformer_layer_forward.7} parent=0 // loop_footer_branch
    %12 = sbr.rel target = $region3
  $region8: #{transformer_layer_forward.7} parent=0 // loop_exit
    _

// kernel: transformer_layer_forward.6
$region0: #{transformer_layer_forward.6}
  #allocation0 [shape = 'u32[]', space=smem, size = 0x4, offset = 0x4, fixed_abs, tag = 'smem constant byte address 0x4 - core index']
  #allocation1 [shape = 'u32[144,128]{1,0:T(1,128)}', space=vmem, size = 0x12000, scoped, tag = 'internal scratch']
  %s0 = inlined_call_operand.vmem [shape: f32[2,16,128], index: 0, kind: input, shape index: {}, may-alias: {0,2}]
  %s1 = inlined_call_operand.vmem [shape: f32[2,16,128], index: 1, kind: input, shape index: {}, may-alias: {1,3}]
  %s2 = inlined_call_operand.vmem [shape: f32[2,16,128], index: 2, kind: input, shape index: {}, may-alias: {0,2}]
  %s3 = inlined_call_operand.vmem [shape: f32[2,16,128], index: 3, kind: input, shape index: {}, may-alias: {1,3}]
  %s4 = inlined_call_operand.vmem [shape: f32[2,1,16], index: 4, kind: input, shape index: {}]
  %s5 = inlined_call_operand.vmem [shape: f32[128,128], index: 5, kind: input, shape index: {}]
  %s6 = inlined_call_operand.vmem [shape: f32[1,128], index: 6, kind: input, shape index: {}]
  %s7 = inlined_call_operand.hbm [shape: f32[128,128], index: 7, kind: input, shape index: {}]
  %s8 = inlined_call_operand.vmem [shape: f32[1,128], index: 8, kind: input, shape index: {}]
  %s9 = inlined_call_operand.hbm [shape: f32[128,128], index: 9, kind: input, shape index: {}]
  %s10 = inlined_call_operand.vmem [shape: f32[1,128], index: 10, kind: input, shape index: {}]
  %s11 = inlined_call_operand.hbm [shape: f32[128,128], index: 11, kind: input, shape index: {}]
  %s12 = inlined_call_operand.vmem [shape: f32[1,128], index: 12, kind: input, shape index: {}]
  %s13 = inlined_call_operand.vmem [shape: f32[1,128], index: 13, kind: input, shape index: {}]
  %s14 = inlined_call_operand.vmem [shape: f32[1,128], index: 14, kind: input, shape index: {}]
  %s15 = inlined_call_operand.vmem [shape: f32[2,16,128], index: 15, kind: output, shape index: {}]
  %s16 = sld [smem:[#allocation0]]
  $region105: #{transformer_layer_forward.6} parent=0
    _
  %s18 = ssub.s32 1, %s16
  %s19 = scalar_select 0, %s18, %s16
  $region1: #{transformer_layer_forward.6} parent=0
    #allocation2 [shape = 'u8[65536]{0}', space=vmem, size = 0x10000, scoped, tag = 'input window, operand 7, single buffered']
    #allocation3 [shape = 's32[2]{0}', space=sflag, size = 0x8, scoped, tag = 'scoped memory for transformer_layer_forward.6']
    #allocation4 [shape = 'u8[65536]{0}', space=vmem, size = 0x10000, scoped, tag = 'input window, operand 9, single buffered']
    #allocation5 [shape = 's32[1]{0}', space=sflag, size = 0x4, scoped, tag = 'scoped memory for transformer_layer_forward.6']
    #allocation6 [shape = 'u8[65536]{0}', space=vmem, size = 0x10000, scoped, tag = 'input window, operand 11, single buffered']
    %20 = vsyncpa [#allocation3], 0
    %21 = vsyncpa [#allocation5], 0
    loop: start=0, step=1, limit=4
    $region2: #{transformer_layer_forward.6} parent=1 // loop_pre_header
      _
    $region3: #{transformer_layer_forward.6} parent=1 // loop_header
      %s23 = sphi 0, %s27
      %p24 = scmp.ge.s32.totalorder %s23, 4
      %s33 = sphi 0, %s35
      %s36 = sphi 0, %s33
      %s37 = sphi 0, %s36
      %s53 = sphi 0, %s37
      %s59 = sphi 0, %s61
      %s62 = sphi 0, %s59
      %s63 = sphi 0, %s62
      %s79 = sphi 0, %s63
      %s85 = sphi 0, %s87
      %s88 = sphi 0, %s85
      %s89 = sphi 0, %s88
      %s105 = sphi 0, %s89
      %s111 = sphi 0, %s113
      %s114 = sphi 0, %s111
      %s115 = sphi 0, %s114
      %s131 = sphi 0, %s115
      %s137 = sphi 0, %s139
      %s140 = sphi 0, %s137
      %s141 = sphi 0, %s140
      %s157 = sphi 0, %s141
      %s161 = sphi 0, %s161
      %s163 = sphi 0, %s161
      %s164 = sphi 0, %s163
      %s178 = sphi 0, %s164
      %s182 = sphi 0, %s182
      %s184 = sphi 0, %s182
      %s185 = sphi 0, %s184
      %s199 = sphi 0, %s185
      %s203 = sphi 0, %s203
      %s205 = sphi 0, %s203
      %s206 = sphi 0, %s205
      %s220 = sphi 0, %s206
      %s224 = sphi 0, %s224
      %s226 = sphi 0, %s224
      %s227 = sphi 0, %s226
      %s241 = sphi 0, %s227
      %s245 = sphi 0, %s245
      %s247 = sphi 0, %s245
      %s248 = sphi 0, %s247
      %s262 = sphi 0, %s248
      %s266 = sphi 0, %s266
      %s268 = sphi 0, %s266
      %s269 = sphi 0, %s268
      %s283 = sphi 0, %s269
      %s287 = sphi 0, %s287
      %s289 = sphi 0, %s287
      %s290 = sphi 0, %s289
      %s304 = sphi 0, %s290
      %s308 = sphi 0, %s308
      %s310 = sphi 0, %s308
      %s311 = sphi 0, %s310
      %s325 = sphi 0, %s311
      %s329 = sphi 0, %s329
      %s331 = sphi 0, %s329
      %s332 = sphi 0, %s331
      %s346 = sphi 0, %s332
      %s350 = sphi 0, %s350
      %s352 = sphi 0, %s350
      %s353 = sphi 0, %s352
      %s367 = sphi 0, %s353
      %s373 = sphi 0, %s375
      %s376 = sphi 0, %s373
      %s377 = sphi 0, %s376
      %s393 = sphi 0, %s377
    $region4: #{transformer_layer_forward.6} parent=1 // loop_header_branch
      %26 = sbr.rel (%p24) target = $region8
    $region5: #{transformer_layer_forward.6} parent=1 // loop_body
      %s28 = ssub.s32 %s23, 1
      %s29 = ssub.s32 %s23, 2
      %s30 = sadd.s32 %s23, 1
      %s31 = ssub.s32 %s23, %s30
      %p32 = scmp.eq.s32.totalorder %s31, 0
      %s34 = sadd.s32 %s33, 1
      %s35 = scalar_select %p32, %s33, %s34
      %p38 = pneg %p32
      %p39 = scmp.eq.s32.totalorder %s23, 1
      %p40 = por %p38, %p39
      %p41 = scmp.ne.s32.totalorder %s33, %s36
      %p42 = scmp.eq.s32.totalorder %s23, 0
      %p43 = por %p41, %p42
      %p44 = scmp.ne.s32.totalorder %s33, %s36
      %p45 = scmp.eq.s32.totalorder %s28, 1
      %p46 = por %p44, %p45
      %p47 = scmp.ne.s32.totalorder %s36, %s37
      %p48 = scmp.eq.s32.totalorder %s28, 0
      %p49 = por %p47, %p48
      %p50 = scmp.ne.s32.totalorder %s36, %s37
      %p51 = scmp.eq.s32.totalorder %s29, 1
      %p52 = por %p50, %p51
      %p54 = scmp.ne.s32.totalorder %s37, %s53
      %p55 = scmp.eq.s32.totalorder %s29, 0
      %p56 = por %p54, %p55
      %s57 = ssub.s32 %s23, %s30
      %p58 = scmp.eq.s32.totalorder %s57, 0
      %s60 = sadd.s32 %s59, 1
      %s61 = scalar_select %p58, %s59, %s60
      %p64 = pneg %p58
      %p65 = scmp.eq.s32.totalorder %s23, 1
      %p66 = por %p64, %p65
      %p67 = scmp.ne.s32.totalorder %s59, %s62
      %p68 = scmp.eq.s32.totalorder %s23, 0
      %p69 = por %p67, %p68
      %p70 = scmp.ne.s32.totalorder %s59, %s62
      %p71 = scmp.eq.s32.totalorder %s28, 1
      %p72 = por %p70, %p71
      %p73 = scmp.ne.s32.totalorder %s62, %s63
      %p74 = scmp.eq.s32.totalorder %s28, 0
      %p75 = por %p73, %p74
      %p76 = scmp.ne.s32.totalorder %s62, %s63
      %p77 = scmp.eq.s32.totalorder %s29, 1
      %p78 = por %p76, %p77
      %p80 = scmp.ne.s32.totalorder %s63, %s79
      %p81 = scmp.eq.s32.totalorder %s29, 0
      %p82 = por %p80, %p81
      %s83 = ssub.s32 %s23, %s30
      %p84 = scmp.eq.s32.totalorder %s83, 0
      %s86 = sadd.s32 %s85, 1
      %s87 = scalar_select %p84, %s85, %s86
      %p90 = pneg %p84
      %p91 = scmp.eq.s32.totalorder %s23, 1
      %p92 = por %p90, %p91
      %p93 = scmp.ne.s32.totalorder %s85, %s88
      %p94 = scmp.eq.s32.totalorder %s23, 0
      %p95 = por %p93, %p94
      %p96 = scmp.ne.s32.totalorder %s85, %s88
      %p97 = scmp.eq.s32.totalorder %s28, 1
      %p98 = por %p96, %p97
      %p99 = scmp.ne.s32.totalorder %s88, %s89
      %p100 = scmp.eq.s32.totalorder %s28, 0
      %p101 = por %p99, %p100
      %p102 = scmp.ne.s32.totalorder %s88, %s89
      %p103 = scmp.eq.s32.totalorder %s29, 1
      %p104 = por %p102, %p103
      %p106 = scmp.ne.s32.totalorder %s89, %s105
      %p107 = scmp.eq.s32.totalorder %s29, 0
      %p108 = por %p106, %p107
      %s109 = ssub.s32 %s23, %s30
      %p110 = scmp.eq.s32.totalorder %s109, 0
      %s112 = sadd.s32 %s111, 1
      %s113 = scalar_select %p110, %s111, %s112
      %p116 = pneg %p110
      %p117 = scmp.eq.s32.totalorder %s23, 1
      %p118 = por %p116, %p117
      %p119 = scmp.ne.s32.totalorder %s111, %s114
      %p120 = scmp.eq.s32.totalorder %s23, 0
      %p121 = por %p119, %p120
      %p122 = scmp.ne.s32.totalorder %s111, %s114
      %p123 = scmp.eq.s32.totalorder %s28, 1
      %p124 = por %p122, %p123
      %p125 = scmp.ne.s32.totalorder %s114, %s115
      %p126 = scmp.eq.s32.totalorder %s28, 0
      %p127 = por %p125, %p126
      %p128 = scmp.ne.s32.totalorder %s114, %s115
      %p129 = scmp.eq.s32.totalorder %s29, 1
      %p130 = por %p128, %p129
      %p132 = scmp.ne.s32.totalorder %s115, %s131
      %p133 = scmp.eq.s32.totalorder %s29, 0
      %p134 = por %p132, %p133
      %s135 = ssub.s32 %s23, %s30
      %p136 = scmp.eq.s32.totalorder %s135, 0
      %s138 = sadd.s32 %s137, 1
      %s139 = scalar_select %p136, %s137, %s138
      %p142 = pneg %p136
      %p143 = scmp.eq.s32.totalorder %s23, 1
      %p144 = por %p142, %p143
      %p145 = scmp.ne.s32.totalorder %s137, %s140
      %p146 = scmp.eq.s32.totalorder %s23, 0
      %p147 = por %p145, %p146
      %p148 = scmp.ne.s32.totalorder %s137, %s140
      %p149 = scmp.eq.s32.totalorder %s28, 1
      %p150 = por %p148, %p149
      %p151 = scmp.ne.s32.totalorder %s140, %s141
      %p152 = scmp.eq.s32.totalorder %s28, 0
      %p153 = por %p151, %p152
      %p154 = scmp.ne.s32.totalorder %s140, %s141
      %p155 = scmp.eq.s32.totalorder %s29, 1
      %p156 = por %p154, %p155
      %p158 = scmp.ne.s32.totalorder %s141, %s157
      %p159 = scmp.eq.s32.totalorder %s29, 0
      %p160 = por %p158, %p159
      %s162 = sadd.s32 %s161, 1
      %p165 = scmp.eq.s32.totalorder %s23, 1
      %p166 = scmp.ne.s32.totalorder %s161, %s163
      %p167 = scmp.eq.s32.totalorder %s23, 0
      %p168 = por %p166, %p167
      %p169 = scmp.ne.s32.totalorder %s161, %s163
      %p170 = scmp.eq.s32.totalorder %s28, 1
      %p171 = por %p169, %p170
      %p172 = scmp.ne.s32.totalorder %s163, %s164
      %p173 = scmp.eq.s32.totalorder %s28, 0
      %p174 = por %p172, %p173
      %p175 = scmp.ne.s32.totalorder %s163, %s164
      %p176 = scmp.eq.s32.totalorder %s29, 1
      %p177 = por %p175, %p176
      %p179 = scmp.ne.s32.totalorder %s164, %s178
      %p180 = scmp.eq.s32.totalorder %s29, 0
      %p181 = por %p179, %p180
      %s183 = sadd.s32 %s182, 1
      %p186 = scmp.eq.s32.totalorder %s23, 1
      %p187 = scmp.ne.s32.totalorder %s182, %s184
      %p188 = scmp.eq.s32.totalorder %s23, 0
      %p189 = por %p187, %p188
      %p190 = scmp.ne.s32.totalorder %s182, %s184
      %p191 = scmp.eq.s32.totalorder %s28, 1
      %p192 = por %p190, %p191
      %p193 = scmp.ne.s32.totalorder %s184, %s185
      %p194 = scmp.eq.s32.totalorder %s28, 0
      %p195 = por %p193, %p194
      %p196 = scmp.ne.s32.totalorder %s184, %s185
      %p197 = scmp.eq.s32.totalorder %s29, 1
      %p198 = por %p196, %p197
      %p200 = scmp.ne.s32.totalorder %s185, %s199
      %p201 = scmp.eq.s32.totalorder %s29, 0
      %p202 = por %p200, %p201
      %s204 = sadd.s32 %s203, 1
      %p207 = scmp.eq.s32.totalorder %s23, 1
      %p208 = scmp.ne.s32.totalorder %s203, %s205
      %p209 = scmp.eq.s32.totalorder %s23, 0
      %p210 = por %p208, %p209
      %p211 = scmp.ne.s32.totalorder %s203, %s205
      %p212 = scmp.eq.s32.totalorder %s28, 1
      %p213 = por %p211, %p212
      %p214 = scmp.ne.s32.totalorder %s205, %s206
      %p215 = scmp.eq.s32.totalorder %s28, 0
      %p216 = por %p214, %p215
      %p217 = scmp.ne.s32.totalorder %s205, %s206
      %p218 = scmp.eq.s32.totalorder %s29, 1
      %p219 = por %p217, %p218
      %p221 = scmp.ne.s32.totalorder %s206, %s220
      %p222 = scmp.eq.s32.totalorder %s29, 0
      %p223 = por %p221, %p222
      %s225 = sadd.s32 %s224, 1
      %p228 = scmp.eq.s32.totalorder %s23, 1
      %p229 = scmp.ne.s32.totalorder %s224, %s226
      %p230 = scmp.eq.s32.totalorder %s23, 0
      %p231 = por %p229, %p230
      %p232 = scmp.ne.s32.totalorder %s224, %s226
      %p233 = scmp.eq.s32.totalorder %s28, 1
      %p234 = por %p232, %p233
      %p235 = scmp.ne.s32.totalorder %s226, %s227
      %p236 = scmp.eq.s32.totalorder %s28, 0
      %p237 = por %p235, %p236
      %p238 = scmp.ne.s32.totalorder %s226, %s227
      %p239 = scmp.eq.s32.totalorder %s29, 1
      %p240 = por %p238, %p239
      %p242 = scmp.ne.s32.totalorder %s227, %s241
      %p243 = scmp.eq.s32.totalorder %s29, 0
      %p244 = por %p242, %p243
      %s246 = sadd.s32 %s245, 1
      %p249 = scmp.eq.s32.totalorder %s23, 1
      %p250 = scmp.ne.s32.totalorder %s245, %s247
      %p251 = scmp.eq.s32.totalorder %s23, 0
      %p252 = por %p250, %p251
      %p253 = scmp.ne.s32.totalorder %s245, %s247
      %p254 = scmp.eq.s32.totalorder %s28, 1
      %p255 = por %p253, %p254
      %p256 = scmp.ne.s32.totalorder %s247, %s248
      %p257 = scmp.eq.s32.totalorder %s28, 0
      %p258 = por %p256, %p257
      %p259 = scmp.ne.s32.totalorder %s247, %s248
      %p260 = scmp.eq.s32.totalorder %s29, 1
      %p261 = por %p259, %p260
      %p263 = scmp.ne.s32.totalorder %s248, %s262
      %p264 = scmp.eq.s32.totalorder %s29, 0
      %p265 = por %p263, %p264
      %s267 = sadd.s32 %s266, 1
      %p270 = scmp.eq.s32.totalorder %s23, 1
      %p271 = scmp.ne.s32.totalorder %s266, %s268
      %p272 = scmp.eq.s32.totalorder %s23, 0
      %p273 = por %p271, %p272
      %p274 = scmp.ne.s32.totalorder %s266, %s268
      %p275 = scmp.eq.s32.totalorder %s28, 1
      %p276 = por %p274, %p275
      %p277 = scmp.ne.s32.totalorder %s268, %s269
      %p278 = scmp.eq.s32.totalorder %s28, 0
      %p279 = por %p277, %p278
      %p280 = scmp.ne.s32.totalorder %s268, %s269
      %p281 = scmp.eq.s32.totalorder %s29, 1
      %p282 = por %p280, %p281
      %p284 = scmp.ne.s32.totalorder %s269, %s283
      %p285 = scmp.eq.s32.totalorder %s29, 0
      %p286 = por %p284, %p285
      %s288 = sadd.s32 %s287, 1
      %p291 = scmp.eq.s32.totalorder %s23, 1
      %p292 = scmp.ne.s32.totalorder %s287, %s289
      %p293 = scmp.eq.s32.totalorder %s23, 0
      %p294 = por %p292, %p293
      %p295 = scmp.ne.s32.totalorder %s287, %s289
      %p296 = scmp.eq.s32.totalorder %s28, 1
      %p297 = por %p295, %p296
      %p298 = scmp.ne.s32.totalorder %s289, %s290
      %p299 = scmp.eq.s32.totalorder %s28, 0
      %p300 = por %p298, %p299
      %p301 = scmp.ne.s32.totalorder %s289, %s290
      %p302 = scmp.eq.s32.totalorder %s29, 1
      %p303 = por %p301, %p302
      %p305 = scmp.ne.s32.totalorder %s290, %s304
      %p306 = scmp.eq.s32.totalorder %s29, 0
      %p307 = por %p305, %p306
      %s309 = sadd.s32 %s308, 1
      %p312 = scmp.eq.s32.totalorder %s23, 1
      %p313 = scmp.ne.s32.totalorder %s308, %s310
      %p314 = scmp.eq.s32.totalorder %s23, 0
      %p315 = por %p313, %p314
      %p316 = scmp.ne.s32.totalorder %s308, %s310
      %p317 = scmp.eq.s32.totalorder %s28, 1
      %p318 = por %p316, %p317
      %p319 = scmp.ne.s32.totalorder %s310, %s311
      %p320 = scmp.eq.s32.totalorder %s28, 0
      %p321 = por %p319, %p320
      %p322 = scmp.ne.s32.totalorder %s310, %s311
      %p323 = scmp.eq.s32.totalorder %s29, 1
      %p324 = por %p322, %p323
      %p326 = scmp.ne.s32.totalorder %s311, %s325
      %p327 = scmp.eq.s32.totalorder %s29, 0
      %p328 = por %p326, %p327
      %s330 = sadd.s32 %s329, 1
      %p333 = scmp.eq.s32.totalorder %s23, 1
      %p334 = scmp.ne.s32.totalorder %s329, %s331
      %p335 = scmp.eq.s32.totalorder %s23, 0
      %p336 = por %p334, %p335
      %p337 = scmp.ne.s32.totalorder %s329, %s331
      %p338 = scmp.eq.s32.totalorder %s28, 1
      %p339 = por %p337, %p338
      %p340 = scmp.ne.s32.totalorder %s331, %s332
      %p341 = scmp.eq.s32.totalorder %s28, 0
      %p342 = por %p340, %p341
      %p343 = scmp.ne.s32.totalorder %s331, %s332
      %p344 = scmp.eq.s32.totalorder %s29, 1
      %p345 = por %p343, %p344
      %p347 = scmp.ne.s32.totalorder %s332, %s346
      %p348 = scmp.eq.s32.totalorder %s29, 0
      %p349 = por %p347, %p348
      %s351 = sadd.s32 %s350, 1
      %p354 = scmp.eq.s32.totalorder %s23, 1
      %p355 = scmp.ne.s32.totalorder %s350, %s352
      %p356 = scmp.eq.s32.totalorder %s23, 0
      %p357 = por %p355, %p356
      %p358 = scmp.ne.s32.totalorder %s350, %s352
      %p359 = scmp.eq.s32.totalorder %s28, 1
      %p360 = por %p358, %p359
      %p361 = scmp.ne.s32.totalorder %s352, %s353
      %p362 = scmp.eq.s32.totalorder %s28, 0
      %p363 = por %p361, %p362
      %p364 = scmp.ne.s32.totalorder %s352, %s353
      %p365 = scmp.eq.s32.totalorder %s29, 1
      %p366 = por %p364, %p365
      %p368 = scmp.ne.s32.totalorder %s353, %s367
      %p369 = scmp.eq.s32.totalorder %s29, 0
      %p370 = por %p368, %p369
      %s371 = ssub.s32 %s23, %s30
      %p372 = scmp.eq.s32.totalorder %s371, 0
      %s374 = sadd.s32 %s373, 1
      %s375 = scalar_select %p372, %s373, %s374
      %p378 = pneg %p372
      %p379 = scmp.eq.s32.totalorder %s23, 1
      %p380 = por %p378, %p379
      %p381 = scmp.ne.s32.totalorder %s373, %s376
      %p382 = scmp.eq.s32.totalorder %s23, 0
      %p383 = por %p381, %p382
      %p384 = scmp.ne.s32.totalorder %s373, %s376
      %p385 = scmp.eq.s32.totalorder %s28, 1
      %p386 = por %p384, %p385
      %p387 = scmp.ne.s32.totalorder %s376, %s377
      %p388 = scmp.eq.s32.totalorder %s28, 0
      %p389 = por %p387, %p388
      %p390 = scmp.ne.s32.totalorder %s376, %s377
      %p391 = scmp.eq.s32.totalorder %s29, 1
      %p392 = por %p390, %p391
      %p394 = scmp.ne.s32.totalorder %s377, %s393
      %p395 = scmp.eq.s32.totalorder %s29, 0
      %p396 = por %p394, %p395
      %p397 = scmp.le.s32.totalorder 1, %s23
      %p398 = scmp.lt.s32.totalorder %s23, 3
      %p399 = pnand %p397, %p398
      %p400 = pneg %p399
      // Predicated region
      $region9: #{transformer_layer_forward.6} parent=5 // pred_check
        _
      $region10: #{transformer_layer_forward.6} parent=5 // pred_check_branch
        %402 = sbr.rel (%p399) target = $region12
      $region11: #{transformer_layer_forward.6} parent=5 // pred_region
        %s403 = ssub.s32 %s23, 1
        // Predicated region
        $region13: #{transformer_layer_forward.6} parent=11 // pred_check
          %p404 = pneg %p174
        $region14: #{transformer_layer_forward.6} parent=11 // pred_check_branch
          %406 = sbr.rel (%p404) target = $region16
        $region15: #{transformer_layer_forward.6} parent=11 // pred_region
          _
        $region16: #{transformer_layer_forward.6} parent=11 // pred_fallthru
          _
        // Predicated region
        $region17: #{transformer_layer_forward.6} parent=11 // pred_check
          %p407 = pneg %p195
        $region18: #{transformer_layer_forward.6} parent=11 // pred_check_branch
          %409 = sbr.rel (%p407) target = $region20
        $region19: #{transformer_layer_forward.6} parent=11 // pred_region
          _
        $region20: #{transformer_layer_forward.6} parent=11 // pred_fallthru
          _
        // Predicated region
        $region21: #{transformer_layer_forward.6} parent=11 // pred_check
          %p410 = pneg %p216
        $region22: #{transformer_layer_forward.6} parent=11 // pred_check_branch
          %412 = sbr.rel (%p410) target = $region24
        $region23: #{transformer_layer_forward.6} parent=11 // pred_region
          %s414 = ssub.s32 2048, 2048
          %415 = vsyncadd [#allocation3], %s414
          %s416 = sshll.u32 [#allocation2], 4
          %s417 = int_to_ptr.vmem [resolvable:$true] %s416
          %422 = dma.hbm_to_vmem [thread:$0]  %s7, 2048, %s417, [#allocation3], 128, 128, 8
        $region24: #{transformer_layer_forward.6} parent=11 // pred_fallthru
          _
        // Predicated region
        $region25: #{transformer_layer_forward.6} parent=11 // pred_check
          %p423 = pneg %p237
        $region26: #{transformer_layer_forward.6} parent=11 // pred_check_branch
          %425 = sbr.rel (%p423) target = $region28
        $region27: #{transformer_layer_forward.6} parent=11 // pred_region
          _
        $region28: #{transformer_layer_forward.6} parent=11 // pred_fallthru
          _
        // Predicated region
        $region29: #{transformer_layer_forward.6} parent=11 // pred_check
          %p426 = pneg %p258
        $region30: #{transformer_layer_forward.6} parent=11 // pred_check_branch
          %428 = sbr.rel (%p426) target = $region32
        $region31: #{transformer_layer_forward.6} parent=11 // pred_region
          %s430 = ssub.s32 2048, 2048
          %431 = vsyncadd [#allocation5], %s430
          %s432 = sshll.u32 [#allocation4], 4
          %s433 = int_to_ptr.vmem [resolvable:$true] %s432
          %438 = dma.hbm_to_vmem [thread:$0]  %s9, 2048, %s433, [#allocation5], 128, 128, 8
        $region32: #{transformer_layer_forward.6} parent=11 // pred_fallthru
          _
        // Predicated region
        $region33: #{transformer_layer_forward.6} parent=11 // pred_check
          %p439 = pneg %p279
        $region34: #{transformer_layer_forward.6} parent=11 // pred_check_branch
          %441 = sbr.rel (%p439) target = $region36
        $region35: #{transformer_layer_forward.6} parent=11 // pred_region
          _
        $region36: #{transformer_layer_forward.6} parent=11 // pred_fallthru
          _
        // Predicated region
        $region37: #{transformer_layer_forward.6} parent=11 // pred_check
          %p442 = pneg %p300
        $region38: #{transformer_layer_forward.6} parent=11 // pred_check_branch
          %444 = sbr.rel (%p442) target = $region40
        $region39: #{transformer_layer_forward.6} parent=11 // pred_region
          %s446 = ssub.s32 2048, 2048
          %447 = vsyncadd [#allocation5], %s446
          %s448 = sshll.u32 [#allocation6], 4
          %s449 = int_to_ptr.vmem [resolvable:$true] %s448
          %454 = dma.hbm_to_vmem [thread:$0]  %s11, 2048, %s449, [#allocation5], 128, 128, 8
        $region40: #{transformer_layer_forward.6} parent=11 // pred_fallthru
          _
        // Predicated region
        $region41: #{transformer_layer_forward.6} parent=11 // pred_check
          %p455 = pneg %p321
        $region42: #{transformer_layer_forward.6} parent=11 // pred_check_branch
          %457 = sbr.rel (%p455) target = $region44
        $region43: #{transformer_layer_forward.6} parent=11 // pred_region
          _
        $region44: #{transformer_layer_forward.6} parent=11 // pred_fallthru
          _
        // Predicated region
        $region45: #{transformer_layer_forward.6} parent=11 // pred_check
          %p458 = pneg %p342
        $region46: #{transformer_layer_forward.6} parent=11 // pred_check_branch
          %460 = sbr.rel (%p458) target = $region48
        $region47: #{transformer_layer_forward.6} parent=11 // pred_region
          _
        $region48: #{transformer_layer_forward.6} parent=11 // pred_fallthru
          _
        // Predicated region
        $region49: #{transformer_layer_forward.6} parent=11 // pred_check
          %p461 = pneg %p363
        $region50: #{transformer_layer_forward.6} parent=11 // pred_check_branch
          %463 = sbr.rel (%p461) target = $region52
        $region51: #{transformer_layer_forward.6} parent=11 // pred_region
          _
        $region52: #{transformer_layer_forward.6} parent=11 // pred_fallthru
          _
      $region12: #{transformer_layer_forward.6} parent=5 // pred_fallthru
        _
      %p464 = scmp.lt.s32.totalorder %s23, 2
      // Predicated region
      $region53: #{transformer_layer_forward.6} parent=5 // pred_check
        %p465 = pneg %p464
      $region54: #{transformer_layer_forward.6} parent=5 // pred_check_branch
        %467 = sbr.rel (%p465) target = $region56
      $region55: #{transformer_layer_forward.6} parent=5 // pred_region
        // Predicated region
        $region57: #{transformer_layer_forward.6} parent=55 // pred_check
          %p468 = pneg %p43
        $region58: #{transformer_layer_forward.6} parent=55 // pred_check_branch
          %470 = sbr.rel (%p468) target = $region60
        $region59: #{transformer_layer_forward.6} parent=55 // pred_region
          %p471 = scmp.lt.s32.totalorder %s23, 1
          %s472 = scalar_select %p471, %s23, 1
          %s473 = smul.addr %s472, 2
          %s474 = smul.addr %s473, 8
          %s475 = scalar_lea.vmem %s0, %s474
        $region60: #{transformer_layer_forward.6} parent=55 // pred_fallthru
          _
        // Predicated region
        $region61: #{transformer_layer_forward.6} parent=55 // pred_check
          %p476 = pneg %p69
        $region62: #{transformer_layer_forward.6} parent=55 // pred_check_branch
          %478 = sbr.rel (%p476) target = $region64
        $region63: #{transformer_layer_forward.6} parent=55 // pred_region
          %p479 = scmp.lt.s32.totalorder %s23, 1
          %s480 = scalar_select %p479, %s23, 1
          %s481 = smul.addr %s480, 2
          %s482 = smul.addr %s481, 8
          %s483 = scalar_lea.vmem %s1, %s482
        $region64: #{transformer_layer_forward.6} parent=55 // pred_fallthru
          _
        // Predicated region
        $region65: #{transformer_layer_forward.6} parent=55 // pred_check
          %p484 = pneg %p95
        $region66: #{transformer_layer_forward.6} parent=55 // pred_check_branch
          %486 = sbr.rel (%p484) target = $region68
        $region67: #{transformer_layer_forward.6} parent=55 // pred_region
          %p487 = scmp.lt.s32.totalorder %s23, 1
          %s488 = scalar_select %p487, %s23, 1
          %s489 = smul.addr %s488, 2
          %s490 = smul.addr %s489, 8
          %s491 = scalar_lea.vmem %s2, %s490
        $region68: #{transformer_layer_forward.6} parent=55 // pred_fallthru
          _
        // Predicated region
        $region69: #{transformer_layer_forward.6} parent=55 // pred_check
          %p492 = pneg %p121
        $region70: #{transformer_layer_forward.6} parent=55 // pred_check_branch
          %494 = sbr.rel (%p492) target = $region72
        $region71: #{transformer_layer_forward.6} parent=55 // pred_region
          %p495 = scmp.lt.s32.totalorder %s23, 1
          %s496 = scalar_select %p495, %s23, 1
          %s497 = smul.addr %s496, 2
          %s498 = smul.addr %s497, 8
          %s499 = scalar_lea.vmem %s3, %s498
        $region72: #{transformer_layer_forward.6} parent=55 // pred_fallthru
          _
        // Predicated region
        $region73: #{transformer_layer_forward.6} parent=55 // pred_check
          %p500 = pneg %p147
        $region74: #{transformer_layer_forward.6} parent=55 // pred_check_branch
          %502 = sbr.rel (%p500) target = $region76
        $region75: #{transformer_layer_forward.6} parent=55 // pred_region
          %p503 = scmp.lt.s32.totalorder %s23, 1
          %s504 = scalar_select %p503, %s23, 1
          %s505 = scalar_lea.vmem %s4, %s504
        $region76: #{transformer_layer_forward.6} parent=55 // pred_fallthru
          _
      $region56: #{transformer_layer_forward.6} parent=5 // pred_fallthru
        _
      %p506 = scmp.le.s32.totalorder 1, %s23
      %p507 = scmp.lt.s32.totalorder %s23, 3
      %p508 = pnand %p506, %p507
      %p509 = pneg %p508
      // Predicated region
      $region77: #{transformer_layer_forward.6} parent=5 // pred_check
        _
      $region78: #{transformer_layer_forward.6} parent=5 // pred_check_branch
        %511 = sbr.rel (%p508) target = $region80
      $region79: #{transformer_layer_forward.6} parent=5 // pred_region
        %s512 = ssub.s32 %s23, 1
        // Predicated region
        $region81: #{transformer_layer_forward.6} parent=79 // pred_check
          %p513 = pneg %p216
        $region82: #{transformer_layer_forward.6} parent=79 // pred_check_branch
          %515 = sbr.rel (%p513) target = $region84
        $region83: #{transformer_layer_forward.6} parent=79 // pred_region
          %516 = dma.done [#allocation3], 2048
        $region84: #{transformer_layer_forward.6} parent=79 // pred_fallthru
          _
        // Predicated region
        $region85: #{transformer_layer_forward.6} parent=79 // pred_check
          %p517 = pneg %p258
        $region86: #{transformer_layer_forward.6} parent=79 // pred_check_branch
          %519 = sbr.rel (%p517) target = $region88
        $region87: #{transformer_layer_forward.6} parent=79 // pred_region
          %520 = dma.done [#allocation5], 2048
        $region88: #{transformer_layer_forward.6} parent=79 // pred_fallthru
          _
        // Predicated region
        $region89: #{transformer_layer_forward.6} parent=79 // pred_check
          %p521 = pneg %p300
        $region90: #{transformer_layer_forward.6} parent=79 // pred_check_branch
          %523 = sbr.rel (%p521) target = $region92
        $region91: #{transformer_layer_forward.6} parent=79 // pred_region
          %524 = dma.done [#allocation5], 2048
        $region92: #{transformer_layer_forward.6} parent=79 // pred_fallthru
          _
        %p525 = scmp.lt.s32.totalorder %s28, 1
        %s526 = scalar_select %p525, %s28, 1
        %s527 = smul.addr %s526, 2
        %s528 = smul.addr %s527, 8
        %s529 = scalar_lea.vmem %s0, %s528
        %p530 = pneg %p49
        %p531 = pneg %p46
        %p532 = scmp.lt.s32.totalorder %s28, 1
        %s533 = scalar_select %p532, %s28, 1
        %s534 = smul.addr %s533, 2
        %s535 = smul.addr %s534, 8
        %s536 = scalar_lea.vmem %s1, %s535
        %p537 = pneg %p75
        %p538 = pneg %p72
        %p539 = scmp.lt.s32.totalorder %s28, 1
        %s540 = scalar_select %p539, %s28, 1
        %s541 = smul.addr %s540, 2
        %s542 = smul.addr %s541, 8
        %s543 = scalar_lea.vmem %s2, %s542
        %p544 = pneg %p101
        %p545 = pneg %p98
        %p546 = scmp.lt.s32.totalorder %s28, 1
        %s547 = scalar_select %p546, %s28, 1
        %s548 = smul.addr %s547, 2
        %s549 = smul.addr %s548, 8
        %s550 = scalar_lea.vmem %s3, %s549
        %p551 = pneg %p127
        %p552 = pneg %p124
        %p553 = scmp.lt.s32.totalorder %s28, 1
        %s554 = scalar_select %p553, %s28, 1
        %s555 = scalar_lea.vmem %s4, %s554
        %p556 = pneg %p153
        %p557 = pneg %p150
        %p558 = pneg %p174
        %p559 = pneg %p171
        %p560 = pneg %p195
        %p561 = pneg %p192
        %p562 = pneg %p216
        %p563 = pneg %p213
        %p564 = pneg %p237
        %p565 = pneg %p234
        %p566 = pneg %p258
        %p567 = pneg %p255
        %p568 = pneg %p279
        %p569 = pneg %p276
        %p570 = pneg %p300
        %p571 = pneg %p297
        %p572 = pneg %p321
        %p573 = pneg %p318
        %p574 = pneg %p342
        %p575 = pneg %p339
        %p576 = pneg %p363
        %p577 = pneg %p360
        %p578 = pneg %p389
        %p579 = pneg %p386
        %p580 = scmp.lt.s32.totalorder %s28, 1
        %s581 = scalar_select %p580, %s28, 1
        %s582 = smul.addr %s581, 2
        %s583 = smul.addr %s582, 8
        %s584 = scalar_lea.vmem %s15, %s583
        %p585 = scmp.lt.s32.totalorder %s28, 1
        %s586 = scalar_select %p585, %s28, 1
        %s587 = smul.addr %s586, 2
        %s588 = smul.addr %s587, 8
        %s589 = scalar_lea.vmem %s0, %s588
        %p590 = scmp.lt.s32.totalorder %s28, 1
        %s591 = scalar_select %p590, %s28, 1
        %s592 = smul.addr %s591, 2
        %s593 = smul.addr %s592, 8
        %s594 = scalar_lea.vmem %s1, %s593
        %p595 = scmp.lt.s32.totalorder %s28, 1
        %s596 = scalar_select %p595, %s28, 1
        %s597 = smul.addr %s596, 2
        %s598 = smul.addr %s597, 8
        %s599 = scalar_lea.vmem %s2, %s598
        %p600 = scmp.lt.s32.totalorder %s28, 1
        %s601 = scalar_select %p600, %s28, 1
        %s602 = smul.addr %s601, 2
        %s603 = smul.addr %s602, 8
        %s604 = scalar_lea.vmem %s3, %s603
        %p605 = scmp.lt.s32.totalorder %s28, 1
        %s606 = scalar_select %p605, %s28, 1
        %s607 = scalar_lea.vmem %s4, %s606
        %p608 = scmp.lt.s32.totalorder %s28, 1
        %s609 = scalar_select %p608, %s28, 1
        %s610 = smul.addr %s609, 2
        %s611 = smul.addr %s610, 8
        %s612 = scalar_lea.vmem %s15, %s611
        %v613 = vld [vmem:[%s589] sm:$0xff]
        %v614 = vld [vmem:[%s589 + $0x8] sm:$0xff]
        %v615 = vld [vmem:[%s594] sm:$0xff]
        %v616 = vld [vmem:[%s594 + $0x8] sm:$0xff]
        %v617 = vadd.f32 %v613, %v615
        %v618 = vadd.f32 %v614, %v616
        %v619 = vld [vmem:[%s599] sm:$0xff]
        %v620 = vld [vmem:[%s599 + $0x8] sm:$0xff]
        %v621 = vld [vmem:[%s604] sm:$0xff]
        %v622 = vld [vmem:[%s604 + $0x8] sm:$0xff]
        %v623 = vadd.f32 %v619, %v621
        %v624 = vadd.f32 %v620, %v622
        %v625 = vld [vmem:[%s5] sm:$0xff]
        %v626 = vld [vmem:[%s5 + $0x8] sm:$0xff]
        %v627 = vld [vmem:[%s5 + $0x10] sm:$0xff]
        %v628 = vld [vmem:[%s5 + $0x18] sm:$0xff]
        %v629 = vld [vmem:[%s5 + $0x20] sm:$0xff]
        %v630 = vld [vmem:[%s5 + $0x28] sm:$0xff]
        %v631 = vld [vmem:[%s5 + $0x30] sm:$0xff]
        %v632 = vld [vmem:[%s5 + $0x38] sm:$0xff]
        %v633 = vld [vmem:[%s5 + $0x40] sm:$0xff]
        %v634 = vld [vmem:[%s5 + $0x48] sm:$0xff]
        %v635 = vld [vmem:[%s5 + $0x50] sm:$0xff]
        %v636 = vld [vmem:[%s5 + $0x58] sm:$0xff]
        %v637 = vld [vmem:[%s5 + $0x60] sm:$0xff]
        %v638 = vld [vmem:[%s5 + $0x68] sm:$0xff]
        %v639 = vld [vmem:[%s5 + $0x70] sm:$0xff]
        %v640 = vld [vmem:[%s5 + $0x78] sm:$0xff]
        %v641 = vld [vmem:[%s6] sm:$0x1]
        %v643 = vlaneseq
        %v644 = vshrl.u32 %v643, 7
        %v645 = vsub.s32 0, %v644
        %v646 = vrot.slane %v641, %v645
        %648 = vmatprep.subr.mxu0 0.0
        %649 = vmatpush1.msra.mxu0 %v625
        %650 = vmatprep.subr.mxu0 0.0
        %651 = vmatpush1.msra.mxu0 %v626
        %652 = vmatprep.subr.mxu0 0.0
        %653 = vmatpush1.msra.mxu0 %v627
        %654 = vmatprep.subr.mxu0 0.0
        %655 = vmatpush1.msra.mxu0 %v628
        %656 = vmatprep.subr.mxu0 0.0
        %657 = vmatpush1.msra.mxu0 %v629
        %658 = vmatprep.subr.mxu0 0.0
        %659 = vmatpush1.msra.mxu0 %v630
        %660 = vmatprep.subr.mxu0 0.0
        %661 = vmatpush1.msra.mxu0 %v631
        %662 = vmatprep.subr.mxu0 0.0
        %663 = vmatpush1.msra.mxu0 %v632
        %664 = vmatprep.subr.mxu0 0.0
        %665 = vmatpush1.msra.mxu0 %v633
        %666 = vmatprep.subr.mxu0 0.0
        %667 = vmatpush1.msra.mxu0 %v634
        %668 = vmatprep.subr.mxu0 0.0
        %669 = vmatpush1.msra.mxu0 %v635
        %670 = vmatprep.subr.mxu0 0.0
        %671 = vmatpush1.msra.mxu0 %v636
        %672 = vmatprep.subr.mxu0 0.0
        %673 = vmatpush1.msra.mxu0 %v637
        %674 = vmatprep.subr.mxu0 0.0
        %675 = vmatpush1.msra.mxu0 %v638
        %676 = vmatprep.subr.mxu0 0.0
        %677 = vmatpush1.msra.mxu0 %v639
        %678 = vmatprep.subr.mxu0 0.0
        %679 = vmatpush1.msra.mxu0 %v640
        %680 = vmatprep.subr.mxu0 0.0
        %681 = vmatpush1.msra.mxu0 0.0
        %682 = vmatprep.subr.mxu0 0.0
        %683 = vmatpush1.msra.mxu0 0.0
        %684 = vmatprep.subr.mxu0 0.0
        %685 = vmatpush1.msra.mxu0 0.0
        %686 = vmatprep.subr.mxu0 0.0
        %687 = vmatpush1.msra.mxu0 0.0
        %688 = vmatprep.subr.mxu0 0.0
        %689 = vmatpush1.msra.mxu0 0.0
        %690 = vmatprep.subr.mxu0 0.0
        %691 = vmatpush1.msra.mxu0 0.0
        %692 = vmatprep.subr.mxu0 0.0
        %693 = vmatpush1.msra.mxu0 0.0
        %694 = vmatprep.subr.mxu0 0.0
        %695 = vmatpush1.msra.mxu0 0.0
        %696 = vmatprep.subr.mxu0 0.0
        %697 = vmatpush1.msra.mxu0 0.0
        %698 = vmatprep.subr.mxu0 0.0
        %699 = vmatpush1.msra.mxu0 0.0
        %700 = vmatprep.subr.mxu0 0.0
        %701 = vmatpush1.msra.mxu0 0.0
        %702 = vmatprep.subr.mxu0 0.0
        %703 = vmatpush1.msra.mxu0 0.0
        %704 = vmatprep.subr.mxu0 0.0
        %705 = vmatpush1.msra.mxu0 0.0
        %706 = vmatprep.subr.mxu0 0.0
        %707 = vmatpush1.msra.mxu0 0.0
        %708 = vmatprep.subr.mxu0 0.0
        %709 = vmatpush1.msra.mxu0 0.0
        %710 = vmatprep.subr.mxu0 0.0
        %711 = vmatpush1.msra.mxu0 0.0
        %712 = vmatprep.mubr.f32.mxu0 0.0
        %713 = vmatmul.mubr.f32.gmra.mrb[0].mxu0 %v617
        %v714 = vpop.f32.mrb[0].mxu0
        %v715 = vadd.f32 %v646, %v714
        %v716 = vpop.f32.mrb[0].mxu0
        %717 = vmatprep.mubr.f32.mxu0 0.0
        %718 = vmatmul.mubr.f32.gmra.mrb[0].mxu0 %v618
        %v719 = vpop.f32.mrb[0].mxu0
        %v720 = vadd.f32 %v646, %v719
        %v721 = vpop.f32.mrb[0].mxu0
        %722 = vdwg.mxu0
        %v723 = vld [vmem:[#allocation2] sm:$0xff]
        %v724 = vld [vmem:[#allocation2 + $0x8] sm:$0xff]
        %v725 = vld [vmem:[#allocation2 + $0x10] sm:$0xff]
        %v726 = vld [vmem:[#allocation2 + $0x18] sm:$0xff]
        %v727 = vld [vmem:[#allocation2 + $0x20] sm:$0xff]
        %v728 = vld [vmem:[#allocation2 + $0x28] sm:$0xff]
        %v729 = vld [vmem:[#allocation2 + $0x30] sm:$0xff]
        %v730 = vld [vmem:[#allocation2 + $0x38] sm:$0xff]
        %v731 = vld [vmem:[#allocation2 + $0x40] sm:$0xff]
        %v732 = vld [vmem:[#allocation2 + $0x48] sm:$0xff]
        %v733 = vld [vmem:[#allocation2 + $0x50] sm:$0xff]
        %v734 = vld [vmem:[#allocation2 + $0x58] sm:$0xff]
        %v735 = vld [vmem:[#allocation2 + $0x60] sm:$0xff]
        %v736 = vld [vmem:[#allocation2 + $0x68] sm:$0xff]
        %v737 = vld [vmem:[#allocation2 + $0x70] sm:$0xff]
        %v738 = vld [vmem:[#allocation2 + $0x78] sm:$0xff]
        %v739 = vld [vmem:[%s8] sm:$0x1]
        %v741 = vlaneseq
        %v742 = vshrl.u32 %v741, 7
        %v743 = vsub.s32 0, %v742
        %v744 = vrot.slane %v739, %v743
        %746 = vmatprep.subr.mxu0 0.0
        %747 = vmatpush1.msra.mxu0 %v723
        %748 = vmatprep.subr.mxu0 0.0
        %749 = vmatpush1.msra.mxu0 %v724
        %750 = vmatprep.subr.mxu0 0.0
        %751 = vmatpush1.msra.mxu0 %v725
        %752 = vmatprep.subr.mxu0 0.0
        %753 = vmatpush1.msra.mxu0 %v726
        %754 = vmatprep.subr.mxu0 0.0
        %755 = vmatpush1.msra.mxu0 %v727
        %756 = vmatprep.subr.mxu0 0.0
        %757 = vmatpush1.msra.mxu0 %v728
        %758 = vmatprep.subr.mxu0 0.0
        %759 = vmatpush1.msra.mxu0 %v729
        %760 = vmatprep.subr.mxu0 0.0
        %761 = vmatpush1.msra.mxu0 %v730
        %762 = vmatprep.subr.mxu0 0.0
        %763 = vmatpush1.msra.mxu0 %v731
        %764 = vmatprep.subr.mxu0 0.0
        %765 = vmatpush1.msra.mxu0 %v732
        %766 = vmatprep.subr.mxu0 0.0
        %767 = vmatpush1.msra.mxu0 %v733
        %768 = vmatprep.subr.mxu0 0.0
        %769 = vmatpush1.msra.mxu0 %v734
        %770 = vmatprep.subr.mxu0 0.0
        %771 = vmatpush1.msra.mxu0 %v735
        %772 = vmatprep.subr.mxu0 0.0
        %773 = vmatpush1.msra.mxu0 %v736
        %774 = vmatprep.subr.mxu0 0.0
        %775 = vmatpush1.msra.mxu0 %v737
        %776 = vmatprep.subr.mxu0 0.0
        %777 = vmatpush1.msra.mxu0 %v738
        %778 = vmatprep.subr.mxu0 0.0
        %779 = vmatpush1.msra.mxu0 0.0
        %780 = vmatprep.subr.mxu0 0.0
        %781 = vmatpush1.msra.mxu0 0.0
        %782 = vmatprep.subr.mxu0 0.0
        %783 = vmatpush1.msra.mxu0 0.0
        %784 = vmatprep.subr.mxu0 0.0
        %785 = vmatpush1.msra.mxu0 0.0
        %786 = vmatprep.subr.mxu0 0.0
        %787 = vmatpush1.msra.mxu0 0.0
        %788 = vmatprep.subr.mxu0 0.0
        %789 = vmatpush1.msra.mxu0 0.0
        %790 = vmatprep.subr.mxu0 0.0
        %791 = vmatpush1.msra.mxu0 0.0
        %792 = vmatprep.subr.mxu0 0.0
        %793 = vmatpush1.msra.mxu0 0.0
        %794 = vmatprep.subr.mxu0 0.0
        %795 = vmatpush1.msra.mxu0 0.0
        %796 = vmatprep.subr.mxu0 0.0
        %797 = vmatpush1.msra.mxu0 0.0
        %798 = vmatprep.subr.mxu0 0.0
        %799 = vmatpush1.msra.mxu0 0.0
        %800 = vmatprep.subr.mxu0 0.0
        %801 = vmatpush1.msra.mxu0 0.0
        %802 = vmatprep.subr.mxu0 0.0
        %803 = vmatpush1.msra.mxu0 0.0
        %804 = vmatprep.subr.mxu0 0.0
        %805 = vmatpush1.msra.mxu0 0.0
        %806 = vmatprep.subr.mxu0 0.0
        %807 = vmatpush1.msra.mxu0 0.0
        %808 = vmatprep.subr.mxu0 0.0
        %809 = vmatpush1.msra.mxu0 0.0
        %810 = vmatprep.mubr.f32.mxu0 0.0
        %811 = vmatmul.mubr.f32.gmra.mrb[0].mxu0 %v623
        %v812 = vpop.f32.mrb[0].mxu0
        %v813 = vadd.f32 %v744, %v812
        %v814 = vpop.f32.mrb[0].mxu0
        %815 = vmatprep.mubr.f32.mxu0 0.0
        %816 = vmatmul.mubr.f32.gmra.mrb[0].mxu0 %v624
        %v817 = vpop.f32.mrb[0].mxu0
        %v818 = vadd.f32 %v744, %v817
        %v819 = vpop.f32.mrb[0].mxu0
        %820 = vdwg.mxu0
        %v821 = vld [vmem:[#allocation4] sm:$0xff]
        %v822 = vld [vmem:[#allocation4 + $0x8] sm:$0xff]
        %v823 = vld [vmem:[#allocation4 + $0x10] sm:$0xff]
        %v824 = vld [vmem:[#allocation4 + $0x18] sm:$0xff]
        %v825 = vld [vmem:[#allocation4 + $0x20] sm:$0xff]
        %v826 = vld [vmem:[#allocation4 + $0x28] sm:$0xff]
        %v827 = vld [vmem:[#allocation4 + $0x30] sm:$0xff]
        %v828 = vld [vmem:[#allocation4 + $0x38] sm:$0xff]
        %v829 = vld [vmem:[#allocation4 + $0x40] sm:$0xff]
        %v830 = vld [vmem:[#allocation4 + $0x48] sm:$0xff]
        %v831 = vld [vmem:[#allocation4 + $0x50] sm:$0xff]
        %v832 = vld [vmem:[#allocation4 + $0x58] sm:$0xff]
        %v833 = vld [vmem:[#allocation4 + $0x60] sm:$0xff]
        %v834 = vld [vmem:[#allocation4 + $0x68] sm:$0xff]
        %v835 = vld [vmem:[#allocation4 + $0x70] sm:$0xff]
        %v836 = vld [vmem:[#allocation4 + $0x78] sm:$0xff]
        %v837 = vld [vmem:[%s10] sm:$0x1]
        %v839 = vlaneseq
        %v840 = vshrl.u32 %v839, 7
        %v841 = vsub.s32 0, %v840
        %v842 = vrot.slane %v837, %v841
        %844 = vmatprep.subr.mxu0 0.0
        %845 = vmatpush1.msra.mxu0 %v821
        %846 = vmatprep.subr.mxu0 0.0
        %847 = vmatpush1.msra.mxu0 %v822
        %848 = vmatprep.subr.mxu0 0.0
        %849 = vmatpush1.msra.mxu0 %v823
        %850 = vmatprep.subr.mxu0 0.0
        %851 = vmatpush1.msra.mxu0 %v824
        %852 = vmatprep.subr.mxu0 0.0
        %853 = vmatpush1.msra.mxu0 %v825
        %854 = vmatprep.subr.mxu0 0.0
        %855 = vmatpush1.msra.mxu0 %v826
        %856 = vmatprep.subr.mxu0 0.0
        %857 = vmatpush1.msra.mxu0 %v827
        %858 = vmatprep.subr.mxu0 0.0
        %859 = vmatpush1.msra.mxu0 %v828
        %860 = vmatprep.subr.mxu0 0.0
        %861 = vmatpush1.msra.mxu0 %v829
        %862 = vmatprep.subr.mxu0 0.0
        %863 = vmatpush1.msra.mxu0 %v830
        %864 = vmatprep.subr.mxu0 0.0
        %865 = vmatpush1.msra.mxu0 %v831
        %866 = vmatprep.subr.mxu0 0.0
        %867 = vmatpush1.msra.mxu0 %v832
        %868 = vmatprep.subr.mxu0 0.0
        %869 = vmatpush1.msra.mxu0 %v833
        %870 = vmatprep.subr.mxu0 0.0
        %871 = vmatpush1.msra.mxu0 %v834
        %872 = vmatprep.subr.mxu0 0.0
        %873 = vmatpush1.msra.mxu0 %v835
        %874 = vmatprep.subr.mxu0 0.0
        %875 = vmatpush1.msra.mxu0 %v836
        %876 = vmatprep.subr.mxu0 0.0
        %877 = vmatpush1.msra.mxu0 0.0
        %878 = vmatprep.subr.mxu0 0.0
        %879 = vmatpush1.msra.mxu0 0.0
        %880 = vmatprep.subr.mxu0 0.0
        %881 = vmatpush1.msra.mxu0 0.0
        %882 = vmatprep.subr.mxu0 0.0
        %883 = vmatpush1.msra.mxu0 0.0
        %884 = vmatprep.subr.mxu0 0.0
        %885 = vmatpush1.msra.mxu0 0.0
        %886 = vmatprep.subr.mxu0 0.0
        %887 = vmatpush1.msra.mxu0 0.0
        %888 = vmatprep.subr.mxu0 0.0
        %889 = vmatpush1.msra.mxu0 0.0
        %890 = vmatprep.subr.mxu0 0.0
        %891 = vmatpush1.msra.mxu0 0.0
        %892 = vmatprep.subr.mxu0 0.0
        %893 = vmatpush1.msra.mxu0 0.0
        %894 = vmatprep.subr.mxu0 0.0
        %895 = vmatpush1.msra.mxu0 0.0
        %896 = vmatprep.subr.mxu0 0.0
        %897 = vmatpush1.msra.mxu0 0.0
        %898 = vmatprep.subr.mxu0 0.0
        %899 = vmatpush1.msra.mxu0 0.0
        %900 = vmatprep.subr.mxu0 0.0
        %901 = vmatpush1.msra.mxu0 0.0
        %902 = vmatprep.subr.mxu0 0.0
        %903 = vmatpush1.msra.mxu0 0.0
        %904 = vmatprep.subr.mxu0 0.0
        %905 = vmatpush1.msra.mxu0 0.0
        %906 = vmatprep.subr.mxu0 0.0
        %907 = vmatpush1.msra.mxu0 0.0
        %908 = vmatprep.mubr.f32.mxu0 0.0
        %909 = vmatmul.mubr.f32.gmra.mrb[0].mxu0 %v619
        %v910 = vpop.f32.mrb[0].mxu0
        %v911 = vadd.f32 %v842, %v910
        %v912 = vpop.f32.mrb[0].mxu0
        %913 = vmatprep.mubr.f32.mxu0 0.0
        %914 = vmatmul.mubr.f32.gmra.mrb[0].mxu0 %v620
        %v915 = vpop.f32.mrb[0].mxu0
        %v916 = vadd.f32 %v842, %v915
        %v917 = vpop.f32.mrb[0].mxu0
        %918 = vdwg.mxu0
        %v919 = vld [vmem:[%s607] sm:$0x1]
        %vm920 = vcmask 261120
        %v922 = vsel %vm920, %v715, 0
        %v925 = vsel %vm920, %v720, 0
        %v928 = vsel %vm920, %v813, 0
        %v931 = vsel %vm920, %v818, 0
        %933 = vmatprep.subr.mxu0 0.0
        %934 = vmatpush1.xpose.msra.mxu0 %v928
        %935 = vmatprep.subr.mxu0 0.0
        %936 = vmatpush1.xpose.msra.mxu0 %v931
        %937 = vmatprep.subr.mxu0 0.0
        %938 = vmatpush1.xpose.msra.mxu0 0.0
        %939 = vmatprep.subr.mxu0 0.0
        %940 = vmatpush1.xpose.msra.mxu0 0.0
        %941 = vmatprep.subr.mxu0 0.0
        %942 = vmatpush1.xpose.msra.mxu0 0.0
        %943 = vmatprep.subr.mxu0 0.0
        %944 = vmatpush1.xpose.msra.mxu0 0.0
        %945 = vmatprep.subr.mxu0 0.0
        %946 = vmatpush1.xpose.msra.mxu0 0.0
        %947 = vmatprep.subr.mxu0 0.0
        %948 = vmatpush1.xpose.msra.mxu0 0.0
        %949 = vmatprep.subr.mxu0 0.0
        %950 = vmatpush1.xpose.msra.mxu0 0.0
        %951 = vmatprep.subr.mxu0 0.0
        %952 = vmatpush1.xpose.msra.mxu0 0.0
        %953 = vmatprep.subr.mxu0 0.0
        %954 = vmatpush1.xpose.msra.mxu0 0.0
        %955 = vmatprep.subr.mxu0 0.0
        %956 = vmatpush1.xpose.msra.mxu0 0.0
        %957 = vmatprep.subr.mxu0 0.0
        %958 = vmatpush1.xpose.msra.mxu0 0.0
        %959 = vmatprep.subr.mxu0 0.0
        %960 = vmatpush1.xpose.msra.mxu0 0.0
        %961 = vmatprep.subr.mxu0 0.0
        %962 = vmatpush1.xpose.msra.mxu0 0.0
        %963 = vmatprep.subr.mxu0 0.0
        %964 = vmatpush1.xpose.msra.mxu0 0.0
        %965 = vmatprep.subr.mxu0 0.0
        %966 = vmatpush1.xpose.msra.mxu0 0.0
        %967 = vmatprep.subr.mxu0 0.0
        %968 = vmatpush1.xpose.msra.mxu0 0.0
        %969 = vmatprep.subr.mxu0 0.0
        %970 = vmatpush1.xpose.msra.mxu0 0.0
        %971 = vmatprep.subr.mxu0 0.0
        %972 = vmatpush1.xpose.msra.mxu0 0.0
        %973 = vmatprep.subr.mxu0 0.0
        %974 = vmatpush1.xpose.msra.mxu0 0.0
        %975 = vmatprep.subr.mxu0 0.0
        %976 = vmatpush1.xpose.msra.mxu0 0.0
        %977 = vmatprep.subr.mxu0 0.0
        %978 = vmatpush1.xpose.msra.mxu0 0.0
        %979 = vmatprep.subr.mxu0 0.0
        %980 = vmatpush1.xpose.msra.mxu0 0.0
        %981 = vmatprep.subr.mxu0 0.0
        %982 = vmatpush1.xpose.msra.mxu0 0.0
        %983 = vmatprep.subr.mxu0 0.0
        %984 = vmatpush1.xpose.msra.mxu0 0.0
        %985 = vmatprep.subr.mxu0 0.0
        %986 = vmatpush1.xpose.msra.mxu0 0.0
        %987 = vmatprep.subr.mxu0 0.0
        %988 = vmatpush1.xpose.msra.mxu0 0.0
        %989 = vmatprep.subr.mxu0 0.0
        %990 = vmatpush1.xpose.msra.mxu0 0.0
        %991 = vmatprep.subr.mxu0 0.0
        %992 = vmatpush1.xpose.msra.mxu0 0.0
        %993 = vmatprep.subr.mxu0 0.0
        %994 = vmatpush1.xpose.msra.mxu0 0.0
        %995 = vmatprep.subr.mxu0 0.0
        %996 = vmatpush1.xpose.msra.mxu0 0.0
        %997 = vmatprep.mubr.f32.mxu0 0.0
        %998 = vmatmul.mubr.f32.gmra.mrb[0].mxu0 %v922
        %v999 = vpop.f32.mrb[0].mxu0
        %v1000 = vadd.f32 0.0, %v999
        %v1001 = vpop.f32.mrb[0].mxu0
        %1002 = vmatprep.mubr.f32.mxu0 0.0
        %1003 = vmatmul.mubr.f32.gmra.mrb[0].mxu0 %v925
        %v1004 = vpop.f32.mrb[0].mxu0
        %v1005 = vadd.f32 0.0, %v1004
        %v1006 = vpop.f32.mrb[0].mxu0
        %1007 = vdwg.mxu0
        %v1008 = vmul.f32 %v1000, 0.17677669
        %v1009 = vmul.f32 %v1005, 0.17677669
        %v1011 = vlaneseq
        %v1012 = vshrl.u32 %v1011, 7
        %v1013 = vsub.s32 0, %v1012
        %v1014 = vrot.slane %v919, %v1013
        %v1016 = vadd.f32 %v1008, %v1014
        %v1017 = vadd.f32 %v1009, %v1014
        %vm1018 = vcmask 130048
        %v1019 = vsel %vm1018, %v1016, -inf
        %1020 = vmax.xlane.f32.xlu0 %v1019
        %v1021 = vpop.xlane.xlu0 %1020
        %v1022 = vsel %vm1018, %v1017, -inf
        %1023 = vmax.xlane.f32.xlu0 %v1022
        %v1024 = vpop.xlane.xlu0 %1023
        %v1025 = vsub.f32 %v1016, %v1021
        %v1026 = vsub.f32 %v1017, %v1024
        %v1027 = vmul.f32 %v1025, 1.442695
        %v1028 = vpow.pop %v1027
        %v1029 = vmul.f32 %v1026, 1.442695
        %v1030 = vpow.pop %v1029
        %v1031 = vsel %vm1018, %v1028, 0.0
        %1032 = vadd.xlane.f32.xlu0 %v1031
        %v1033 = vpop.xlane.xlu0 %1032
        %v1034 = vsel %vm1018, %v1030, 0.0
        %1035 = vadd.xlane.f32.xlu0 %v1034
        %v1036 = vpop.xlane.xlu0 %1035
        %v1037 = vrcp.pop %v1033
        %v1038 = vmul.f32 %v1028, %v1037
        %v1039 = vrcp.pop %v1036
        %v1040 = vmul.f32 %v1030, %v1039
        %v1042 = vsel %vm1018, %v1038, 0
        %v1045 = vsel %vm1018, %v1040, 0
        %1047 = vmatprep.subr.mxu0 0.0
        %1048 = vmatpush1.msra.mxu0 %v911
        %1049 = vmatprep.subr.mxu0 0.0
        %1050 = vmatpush1.msra.mxu0 %v916
        %1051 = vmatprep.subr.mxu0 0.0
        %1052 = vmatpush1.msra.mxu0 0.0
        %1053 = vmatprep.subr.mxu0 0.0
        %1054 = vmatpush1.msra.mxu0 0.0
        %1055 = vmatprep.subr.mxu0 0.0
        %1056 = vmatpush1.msra.mxu0 0.0
        %1057 = vmatprep.subr.mxu0 0.0
        %1058 = vmatpush1.msra.mxu0 0.0
        %1059 = vmatprep.subr.mxu0 0.0
        %1060 = vmatpush1.msra.mxu0 0.0
        %1061 = vmatprep.subr.mxu0 0.0
        %1062 = vmatpush1.msra.mxu0 0.0
        %1063 = vmatprep.subr.mxu0 0.0
        %1064 = vmatpush1.msra.mxu0 0.0
        %1065 = vmatprep.subr.mxu0 0.0
        %1066 = vmatpush1.msra.mxu0 0.0
        %1067 = vmatprep.subr.mxu0 0.0
        %1068 = vmatpush1.msra.mxu0 0.0
        %1069 = vmatprep.subr.mxu0 0.0
        %1070 = vmatpush1.msra.mxu0 0.0
        %1071 = vmatprep.subr.mxu0 0.0
        %1072 = vmatpush1.msra.mxu0 0.0
        %1073 = vmatprep.subr.mxu0 0.0
        %1074 = vmatpush1.msra.mxu0 0.0
        %1075 = vmatprep.subr.mxu0 0.0
        %1076 = vmatpush1.msra.mxu0 0.0
        %1077 = vmatprep.subr.mxu0 0.0
        %1078 = vmatpush1.msra.mxu0 0.0
        %1079 = vmatprep.subr.mxu0 0.0
        %1080 = vmatpush1.msra.mxu0 0.0
        %1081 = vmatprep.subr.mxu0 0.0
        %1082 = vmatpush1.msra.mxu0 0.0
        %1083 = vmatprep.subr.mxu0 0.0
        %1084 = vmatpush1.msra.mxu0 0.0
        %1085 = vmatprep.subr.mxu0 0.0
        %1086 = vmatpush1.msra.mxu0 0.0
        %1087 = vmatprep.subr.mxu0 0.0
        %1088 = vmatpush1.msra.mxu0 0.0
        %1089 = vmatprep.subr.mxu0 0.0
        %1090 = vmatpush1.msra.mxu0 0.0
        %1091 = vmatprep.subr.mxu0 0.0
        %1092 = vmatpush1.msra.mxu0 0.0
        %1093 = vmatprep.subr.mxu0 0.0
        %1094 = vmatpush1.msra.mxu0 0.0
        %1095 = vmatprep.subr.mxu0 0.0
        %1096 = vmatpush1.msra.mxu0 0.0
        %1097 = vmatprep.subr.mxu0 0.0
        %1098 = vmatpush1.msra.mxu0 0.0
        %1099 = vmatprep.subr.mxu0 0.0
        %1100 = vmatpush1.msra.mxu0 0.0
        %1101 = vmatprep.subr.mxu0 0.0
        %1102 = vmatpush1.msra.mxu0 0.0
        %1103 = vmatprep.subr.mxu0 0.0
        %1104 = vmatpush1.msra.mxu0 0.0
        %1105 = vmatprep.subr.mxu0 0.0
        %1106 = vmatpush1.msra.mxu0 0.0
        %1107 = vmatprep.subr.mxu0 0.0
        %1108 = vmatpush1.msra.mxu0 0.0
        %1109 = vmatprep.subr.mxu0 0.0
        %1110 = vmatpush1.msra.mxu0 0.0
        %1111 = vmatprep.mubr.f32.mxu0 0.0
        %1112 = vmatmul.mubr.f32.gmra.mrb[0].mxu0 %v1042
        %v1113 = vpop.f32.mrb[0].mxu0
        %v1114 = vadd.f32 0.0, %v1113
        %v1115 = vpop.f32.mrb[0].mxu0
        %1116 = vmatprep.mubr.f32.mxu0 0.0
        %1117 = vmatmul.mubr.f32.gmra.mrb[0].mxu0 %v1045
        %v1118 = vpop.f32.mrb[0].mxu0
        %v1119 = vadd.f32 0.0, %v1118
        %v1120 = vpop.f32.mrb[0].mxu0
        %1121 = vdwg.mxu0
        %1122 = vrot.lane.b32.xlu0 %v715, 96
        %v1123 = vpop.permute.xlu0 %1122
        %1124 = vrot.lane.b32.xlu0 %v720, 96
        %v1125 = vpop.permute.xlu0 %1124
        %1126 = vrot.lane.b32.xlu0 %v813, 96
        %v1127 = vpop.permute.xlu0 %1126
        %1128 = vrot.lane.b32.xlu0 %v818, 96
        %v1129 = vpop.permute.xlu0 %1128
        %v1130 = vsel %vm920, %v1123, 0
        %v1132 = vsel %vm920, %v1125, 0
        %v1134 = vsel %vm920, %v1127, 0
        %v1136 = vsel %vm920, %v1129, 0
        %1138 = vmatprep.subr.mxu0 0.0
        %1139 = vmatpush1.xpose.msra.mxu0 %v1134
        %1140 = vmatprep.subr.mxu0 0.0
        %1141 = vmatpush1.xpose.msra.mxu0 %v1136
        %1142 = vmatprep.subr.mxu0 0.0
        %1143 = vmatpush1.xpose.msra.mxu0 0.0
        %1144 = vmatprep.subr.mxu0 0.0
        %1145 = vmatpush1.xpose.msra.mxu0 0.0
        %1146 = vmatprep.subr.mxu0 0.0
        %1147 = vmatpush1.xpose.msra.mxu0 0.0
        %1148 = vmatprep.subr.mxu0 0.0
        %1149 = vmatpush1.xpose.msra.mxu0 0.0
        %1150 = vmatprep.subr.mxu0 0.0
        %1151 = vmatpush1.xpose.msra.mxu0 0.0
        %1152 = vmatprep.subr.mxu0 0.0
        %1153 = vmatpush1.xpose.msra.mxu0 0.0
        %1154 = vmatprep.subr.mxu0 0.0
        %1155 = vmatpush1.xpose.msra.mxu0 0.0
        %1156 = vmatprep.subr.mxu0 0.0
        %1157 = vmatpush1.xpose.msra.mxu0 0.0
        %1158 = vmatprep.subr.mxu0 0.0
        %1159 = vmatpush1.xpose.msra.mxu0 0.0
        %1160 = vmatprep.subr.mxu0 0.0
        %1161 = vmatpush1.xpose.msra.mxu0 0.0
        %1162 = vmatprep.subr.mxu0 0.0
        %1163 = vmatpush1.xpose.msra.mxu0 0.0
        %1164 = vmatprep.subr.mxu0 0.0
        %1165 = vmatpush1.xpose.msra.mxu0 0.0
        %1166 = vmatprep.subr.mxu0 0.0
        %1167 = vmatpush1.xpose.msra.mxu0 0.0
        %1168 = vmatprep.subr.mxu0 0.0
        %1169 = vmatpush1.xpose.msra.mxu0 0.0
        %1170 = vmatprep.subr.mxu0 0.0
        %1171 = vmatpush1.xpose.msra.mxu0 0.0
        %1172 = vmatprep.subr.mxu0 0.0
        %1173 = vmatpush1.xpose.msra.mxu0 0.0
        %1174 = vmatprep.subr.mxu0 0.0
        %1175 = vmatpush1.xpose.msra.mxu0 0.0
        %1176 = vmatprep.subr.mxu0 0.0
        %1177 = vmatpush1.xpose.msra.mxu0 0.0
        %1178 = vmatprep.subr.mxu0 0.0
        %1179 = vmatpush1.xpose.msra.mxu0 0.0
        %1180 = vmatprep.subr.mxu0 0.0
        %1181 = vmatpush1.xpose.msra.mxu0 0.0
        %1182 = vmatprep.subr.mxu0 0.0
        %1183 = vmatpush1.xpose.msra.mxu0 0.0
        %1184 = vmatprep.subr.mxu0 0.0
        %1185 = vmatpush1.xpose.msra.mxu0 0.0
        %1186 = vmatprep.subr.mxu0 0.0
        %1187 = vmatpush1.xpose.msra.mxu0 0.0
        %1188 = vmatprep.subr.mxu0 0.0
        %1189 = vmatpush1.xpose.msra.mxu0 0.0
        %1190 = vmatprep.subr.mxu0 0.0
        %1191 = vmatpush1.xpose.msra.mxu0 0.0
        %1192 = vmatprep.subr.mxu0 0.0
        %1193 = vmatpush1.xpose.msra.mxu0 0.0
        %1194 = vmatprep.subr.mxu0 0.0
        %1195 = vmatpush1.xpose.msra.mxu0 0.0
        %1196 = vmatprep.subr.mxu0 0.0
        %1197 = vmatpush1.xpose.msra.mxu0 0.0
        %1198 = vmatprep.subr.mxu0 0.0
        %1199 = vmatpush1.xpose.msra.mxu0 0.0
        %1200 = vmatprep.subr.mxu0 0.0
        %1201 = vmatpush1.xpose.msra.mxu0 0.0
        %1202 = vmatprep.mubr.f32.mxu0 0.0
        %1203 = vmatmul.mubr.f32.gmra.mrb[0].mxu0 %v1130
        %v1204 = vpop.f32.mrb[0].mxu0
        %v1205 = vadd.f32 0.0, %v1204
        %v1206 = vpop.f32.mrb[0].mxu0
        %1207 = vmatprep.mubr.f32.mxu0 0.0
        %1208 = vmatmul.mubr.f32.gmra.mrb[0].mxu0 %v1132
        %v1209 = vpop.f32.mrb[0].mxu0
        %v1210 = vadd.f32 0.0, %v1209
        %v1211 = vpop.f32.mrb[0].mxu0
        %1212 = vdwg.mxu0
        %v1213 = vmul.f32 %v1205, 0.17677669
        %v1214 = vmul.f32 %v1210, 0.17677669
        %v1215 = vadd.f32 %v1213, %v1014
        %v1216 = vadd.f32 %v1214, %v1014
        %v1217 = vsel %vm1018, %v1215, -inf
        %1218 = vmax.xlane.f32.xlu0 %v1217
        %v1219 = vpop.xlane.xlu0 %1218
        %v1220 = vsel %vm1018, %v1216, -inf
        %1221 = vmax.xlane.f32.xlu0 %v1220
        %v1222 = vpop.xlane.xlu0 %1221
        %v1223 = vsub.f32 %v1215, %v1219
        %v1224 = vsub.f32 %v1216, %v1222
        %v1225 = vmul.f32 %v1223, 1.442695
        %v1226 = vpow.pop %v1225
        %v1227 = vmul.f32 %v1224, 1.442695
        %v1228 = vpow.pop %v1227
        %v1229 = vsel %vm1018, %v1226, 0.0
        %1230 = vadd.xlane.f32.xlu0 %v1229
        %v1231 = vpop.xlane.xlu0 %1230
        %v1232 = vsel %vm1018, %v1228, 0.0
        %1233 = vadd.xlane.f32.xlu0 %v1232
        %v1234 = vpop.xlane.xlu0 %1233
        %v1235 = vrcp.pop %v1231
        %v1236 = vmul.f32 %v1226, %v1235
        %v1237 = vrcp.pop %v1234
        %v1238 = vmul.f32 %v1228, %v1237
        %1241 = vrot.lane.b32.xlu0 %v911, 96
        %v1242 = vpop.permute.xlu0 %1241
        %1243 = vrot.lane.b32.xlu0 %v916, 96
        %v1244 = vpop.permute.xlu0 %1243
        %v1248 = vsel %vm1018, %v1236, 0
        %v1251 = vsel %vm1018, %v1238, 0
        %1253 = vmatprep.subr.mxu0 0.0
        %1254 = vmatpush1.msra.mxu0 %v1242
        %1255 = vmatprep.subr.mxu0 0.0
        %1256 = vmatpush1.msra.mxu0 %v1244
        %1257 = vmatprep.subr.mxu0 0.0
        %1258 = vmatpush1.msra.mxu0 0.0
        %1259 = vmatprep.subr.mxu0 0.0
        %1260 = vmatpush1.msra.mxu0 0.0
        %1261 = vmatprep.subr.mxu0 0.0
        %1262 = vmatpush1.msra.mxu0 0.0
        %1263 = vmatprep.subr.mxu0 0.0
        %1264 = vmatpush1.msra.mxu0 0.0
        %1265 = vmatprep.subr.mxu0 0.0
        %1266 = vmatpush1.msra.mxu0 0.0
        %1267 = vmatprep.subr.mxu0 0.0
        %1268 = vmatpush1.msra.mxu0 0.0
        %1269 = vmatprep.subr.mxu0 0.0
        %1270 = vmatpush1.msra.mxu0 0.0
        %1271 = vmatprep.subr.mxu0 0.0
        %1272 = vmatpush1.msra.mxu0 0.0
        %1273 = vmatprep.subr.mxu0 0.0
        %1274 = vmatpush1.msra.mxu0 0.0
        %1275 = vmatprep.subr.mxu0 0.0
        %1276 = vmatpush1.msra.mxu0 0.0
        %1277 = vmatprep.subr.mxu0 0.0
        %1278 = vmatpush1.msra.mxu0 0.0
        %1279 = vmatprep.subr.mxu0 0.0
        %1280 = vmatpush1.msra.mxu0 0.0
        %1281 = vmatprep.subr.mxu0 0.0
        %1282 = vmatpush1.msra.mxu0 0.0
        %1283 = vmatprep.subr.mxu0 0.0
        %1284 = vmatpush1.msra.mxu0 0.0
        %1285 = vmatprep.subr.mxu0 0.0
        %1286 = vmatpush1.msra.mxu0 0.0
        %1287 = vmatprep.subr.mxu0 0.0
        %1288 = vmatpush1.msra.mxu0 0.0
        %1289 = vmatprep.subr.mxu0 0.0
        %1290 = vmatpush1.msra.mxu0 0.0
        %1291 = vmatprep.subr.mxu0 0.0
        %1292 = vmatpush1.msra.mxu0 0.0
        %1293 = vmatprep.subr.mxu0 0.0
        %1294 = vmatpush1.msra.mxu0 0.0
        %1295 = vmatprep.subr.mxu0 0.0
        %1296 = vmatpush1.msra.mxu0 0.0
        %1297 = vmatprep.subr.mxu0 0.0
        %1298 = vmatpush1.msra.mxu0 0.0
        %1299 = vmatprep.subr.mxu0 0.0
        %1300 = vmatpush1.msra.mxu0 0.0
        %1301 = vmatprep.subr.mxu0 0.0
        %1302 = vmatpush1.msra.mxu0 0.0
        %1303 = vmatprep.subr.mxu0 0.0
        %1304 = vmatpush1.msra.mxu0 0.0
        %1305 = vmatprep.subr.mxu0 0.0
        %1306 = vmatpush1.msra.mxu0 0.0
        %1307 = vmatprep.subr.mxu0 0.0
        %1308 = vmatpush1.msra.mxu0 0.0
        %1309 = vmatprep.subr.mxu0 0.0
        %1310 = vmatpush1.msra.mxu0 0.0
        %1311 = vmatprep.subr.mxu0 0.0
        %1312 = vmatpush1.msra.mxu0 0.0
        %1313 = vmatprep.subr.mxu0 0.0
        %1314 = vmatpush1.msra.mxu0 0.0
        %1315 = vmatprep.subr.mxu0 0.0
        %1316 = vmatpush1.msra.mxu0 0.0
        %1317 = vmatprep.mubr.f32.mxu0 0.0
        %1318 = vmatmul.mubr.f32.gmra.mrb[0].mxu0 %v1248
        %v1319 = vpop.f32.mrb[0].mxu0
        %v1320 = vadd.f32 0.0, %v1319
        %v1321 = vpop.f32.mrb[0].mxu0
        %1322 = vmatprep.mubr.f32.mxu0 0.0
        %1323 = vmatmul.mubr.f32.gmra.mrb[0].mxu0 %v1251
        %v1324 = vpop.f32.mrb[0].mxu0
        %v1325 = vadd.f32 0.0, %v1324
        %v1326 = vpop.f32.mrb[0].mxu0
        %1327 = vdwg.mxu0
        %1328 = vrot.lane.b32.xlu0 %v715, 64
        %v1329 = vpop.permute.xlu0 %1328
        %1330 = vrot.lane.b32.xlu0 %v720, 64
        %v1331 = vpop.permute.xlu0 %1330
        %1332 = vrot.lane.b32.xlu0 %v813, 64
        %v1333 = vpop.permute.xlu0 %1332
        %1334 = vrot.lane.b32.xlu0 %v818, 64
        %v1335 = vpop.permute.xlu0 %1334
        %v1336 = vsel %vm920, %v1329, 0
        %v1338 = vsel %vm920, %v1331, 0
        %v1340 = vsel %vm920, %v1333, 0
        %v1342 = vsel %vm920, %v1335, 0
        %1344 = vmatprep.subr.mxu0 0.0
        %1345 = vmatpush1.xpose.msra.mxu0 %v1340
        %1346 = vmatprep.subr.mxu0 0.0
        %1347 = vmatpush1.xpose.msra.mxu0 %v1342
        %1348 = vmatprep.subr.mxu0 0.0
        %1349 = vmatpush1.xpose.msra.mxu0 0.0
        %1350 = vmatprep.subr.mxu0 0.0
        %1351 = vmatpush1.xpose.msra.mxu0 0.0
        %1352 = vmatprep.subr.mxu0 0.0
        %1353 = vmatpush1.xpose.msra.mxu0 0.0
        %1354 = vmatprep.subr.mxu0 0.0
        %1355 = vmatpush1.xpose.msra.mxu0 0.0
        %1356 = vmatprep.subr.mxu0 0.0
        %1357 = vmatpush1.xpose.msra.mxu0 0.0
        %1358 = vmatprep.subr.mxu0 0.0
        %1359 = vmatpush1.xpose.msra.mxu0 0.0
        %1360 = vmatprep.subr.mxu0 0.0
        %1361 = vmatpush1.xpose.msra.mxu0 0.0
        %1362 = vmatprep.subr.mxu0 0.0
        %1363 = vmatpush1.xpose.msra.mxu0 0.0
        %1364 = vmatprep.subr.mxu0 0.0
        %1365 = vmatpush1.xpose.msra.mxu0 0.0
        %1366 = vmatprep.subr.mxu0 0.0
        %1367 = vmatpush1.xpose.msra.mxu0 0.0
        %1368 = vmatprep.subr.mxu0 0.0
        %1369 = vmatpush1.xpose.msra.mxu0 0.0
        %1370 = vmatprep.subr.mxu0 0.0
        %1371 = vmatpush1.xpose.msra.mxu0 0.0
        %1372 = vmatprep.subr.mxu0 0.0
        %1373 = vmatpush1.xpose.msra.mxu0 0.0
        %1374 = vmatprep.subr.mxu0 0.0
        %1375 = vmatpush1.xpose.msra.mxu0 0.0
        %1376 = vmatprep.subr.mxu0 0.0
        %1377 = vmatpush1.xpose.msra.mxu0 0.0
        %1378 = vmatprep.subr.mxu0 0.0
        %1379 = vmatpush1.xpose.msra.mxu0 0.0
        %1380 = vmatprep.subr.mxu0 0.0
        %1381 = vmatpush1.xpose.msra.mxu0 0.0
        %1382 = vmatprep.subr.mxu0 0.0
        %1383 = vmatpush1.xpose.msra.mxu0 0.0
        %1384 = vmatprep.subr.mxu0 0.0
        %1385 = vmatpush1.xpose.msra.mxu0 0.0
        %1386 = vmatprep.subr.mxu0 0.0
        %1387 = vmatpush1.xpose.msra.mxu0 0.0
        %1388 = vmatprep.subr.mxu0 0.0
        %1389 = vmatpush1.xpose.msra.mxu0 0.0
        %1390 = vmatprep.subr.mxu0 0.0
        %1391 = vmatpush1.xpose.msra.mxu0 0.0
        %1392 = vmatprep.subr.mxu0 0.0
        %1393 = vmatpush1.xpose.msra.mxu0 0.0
        %1394 = vmatprep.subr.mxu0 0.0
        %1395 = vmatpush1.xpose.msra.mxu0 0.0
        %1396 = vmatprep.subr.mxu0 0.0
        %1397 = vmatpush1.xpose.msra.mxu0 0.0
        %1398 = vmatprep.subr.mxu0 0.0
        %1399 = vmatpush1.xpose.msra.mxu0 0.0
        %1400 = vmatprep.subr.mxu0 0.0
        %1401 = vmatpush1.xpose.msra.mxu0 0.0
        %1402 = vmatprep.subr.mxu0 0.0
        %1403 = vmatpush1.xpose.msra.mxu0 0.0
        %1404 = vmatprep.subr.mxu0 0.0
        %1405 = vmatpush1.xpose.msra.mxu0 0.0
        %1406 = vmatprep.subr.mxu0 0.0
        %1407 = vmatpush1.xpose.msra.mxu0 0.0
        %1408 = vmatprep.mubr.f32.mxu0 0.0
        %1409 = vmatmul.mubr.f32.gmra.mrb[0].mxu0 %v1336
        %v1410 = vpop.f32.mrb[0].mxu0
        %v1411 = vadd.f32 0.0, %v1410
        %v1412 = vpop.f32.mrb[0].mxu0
        %1413 = vmatprep.mubr.f32.mxu0 0.0
        %1414 = vmatmul.mubr.f32.gmra.mrb[0].mxu0 %v1338
        %v1415 = vpop.f32.mrb[0].mxu0
        %v1416 = vadd.f32 0.0, %v1415
        %v1417 = vpop.f32.mrb[0].mxu0
        %1418 = vdwg.mxu0
        %v1419 = vmul.f32 %v1411, 0.17677669
        %v1420 = vmul.f32 %v1416, 0.17677669
        %v1421 = vadd.f32 %v1419, %v1014
        %v1422 = vadd.f32 %v1420, %v1014
        %v1423 = vsel %vm1018, %v1421, -inf
        %1424 = vmax.xlane.f32.xlu0 %v1423
        %v1425 = vpop.xlane.xlu0 %1424
        %v1426 = vsel %vm1018, %v1422, -inf
        %1427 = vmax.xlane.f32.xlu0 %v1426
        %v1428 = vpop.xlane.xlu0 %1427
        %v1429 = vsub.f32 %v1421, %v1425
        %v1430 = vsub.f32 %v1422, %v1428
        %v1431 = vmul.f32 %v1429, 1.442695
        %v1432 = vpow.pop %v1431
        %v1433 = vmul.f32 %v1430, 1.442695
        %v1434 = vpow.pop %v1433
        %v1435 = vsel %vm1018, %v1432, 0.0
        %1436 = vadd.xlane.f32.xlu0 %v1435
        %v1437 = vpop.xlane.xlu0 %1436
        %v1438 = vsel %vm1018, %v1434, 0.0
        %1439 = vadd.xlane.f32.xlu0 %v1438
        %v1440 = vpop.xlane.xlu0 %1439
        %v1441 = vrcp.pop %v1437
        %v1442 = vmul.f32 %v1432, %v1441
        %v1443 = vrcp.pop %v1440
        %v1444 = vmul.f32 %v1434, %v1443
        %1445 = vrot.lane.b32.xlu0 %v911, 64
        %v1446 = vpop.permute.xlu0 %1445
        %1447 = vrot.lane.b32.xlu0 %v916, 64
        %v1448 = vpop.permute.xlu0 %1447
        %v1452 = vsel %vm1018, %v1442, 0
        %v1455 = vsel %vm1018, %v1444, 0
        %1457 = vmatprep.subr.mxu0 0.0
        %1458 = vmatpush1.msra.mxu0 %v1446
        %1459 = vmatprep.subr.mxu0 0.0
        %1460 = vmatpush1.msra.mxu0 %v1448
        %1461 = vmatprep.subr.mxu0 0.0
        %1462 = vmatpush1.msra.mxu0 0.0
        %1463 = vmatprep.subr.mxu0 0.0
        %1464 = vmatpush1.msra.mxu0 0.0
        %1465 = vmatprep.subr.mxu0 0.0
        %1466 = vmatpush1.msra.mxu0 0.0
        %1467 = vmatprep.subr.mxu0 0.0
        %1468 = vmatpush1.msra.mxu0 0.0
        %1469 = vmatprep.subr.mxu0 0.0
        %1470 = vmatpush1.msra.mxu0 0.0
        %1471 = vmatprep.subr.mxu0 0.0
        %1472 = vmatpush1.msra.mxu0 0.0
        %1473 = vmatprep.subr.mxu0 0.0
        %1474 = vmatpush1.msra.mxu0 0.0
        %1475 = vmatprep.subr.mxu0 0.0
        %1476 = vmatpush1.msra.mxu0 0.0
        %1477 = vmatprep.subr.mxu0 0.0
        %1478 = vmatpush1.msra.mxu0 0.0
        %1479 = vmatprep.subr.mxu0 0.0
        %1480 = vmatpush1.msra.mxu0 0.0
        %1481 = vmatprep.subr.mxu0 0.0
        %1482 = vmatpush1.msra.mxu0 0.0
        %1483 = vmatprep.subr.mxu0 0.0
        %1484 = vmatpush1.msra.mxu0 0.0
        %1485 = vmatprep.subr.mxu0 0.0
        %1486 = vmatpush1.msra.mxu0 0.0
        %1487 = vmatprep.subr.mxu0 0.0
        %1488 = vmatpush1.msra.mxu0 0.0
        %1489 = vmatprep.subr.mxu0 0.0
        %1490 = vmatpush1.msra.mxu0 0.0
        %1491 = vmatprep.subr.mxu0 0.0
        %1492 = vmatpush1.msra.mxu0 0.0
        %1493 = vmatprep.subr.mxu0 0.0
        %1494 = vmatpush1.msra.mxu0 0.0
        %1495 = vmatprep.subr.mxu0 0.0
        %1496 = vmatpush1.msra.mxu0 0.0
        %1497 = vmatprep.subr.mxu0 0.0
        %1498 = vmatpush1.msra.mxu0 0.0
        %1499 = vmatprep.subr.mxu0 0.0
        %1500 = vmatpush1.msra.mxu0 0.0
        %1501 = vmatprep.subr.mxu0 0.0
        %1502 = vmatpush1.msra.mxu0 0.0
        %1503 = vmatprep.subr.mxu0 0.0
        %1504 = vmatpush1.msra.mxu0 0.0
        %1505 = vmatprep.subr.mxu0 0.0
        %1506 = vmatpush1.msra.mxu0 0.0
        %1507 = vmatprep.subr.mxu0 0.0
        %1508 = vmatpush1.msra.mxu0 0.0
        %1509 = vmatprep.subr.mxu0 0.0
        %1510 = vmatpush1.msra.mxu0 0.0
        %1511 = vmatprep.subr.mxu0 0.0
        %1512 = vmatpush1.msra.mxu0 0.0
        %1513 = vmatprep.subr.mxu0 0.0
        %1514 = vmatpush1.msra.mxu0 0.0
        %1515 = vmatprep.subr.mxu0 0.0
        %1516 = vmatpush1.msra.mxu0 0.0
        %1517 = vmatprep.subr.mxu0 0.0
        %1518 = vmatpush1.msra.mxu0 0.0
        %1519 = vmatprep.subr.mxu0 0.0
        %1520 = vmatpush1.msra.mxu0 0.0
        %1521 = vmatprep.mubr.f32.mxu0 0.0
        %1522 = vmatmul.mubr.f32.gmra.mrb[0].mxu0 %v1452
        %v1523 = vpop.f32.mrb[0].mxu0
        %v1524 = vadd.f32 0.0, %v1523
        %v1525 = vpop.f32.mrb[0].mxu0
        %1526 = vmatprep.mubr.f32.mxu0 0.0
        %1527 = vmatmul.mubr.f32.gmra.mrb[0].mxu0 %v1455
        %v1528 = vpop.f32.mrb[0].mxu0
        %v1529 = vadd.f32 0.0, %v1528
        %v1530 = vpop.f32.mrb[0].mxu0
        %1531 = vdwg.mxu0
        %1532 = vrot.lane.b32.xlu0 %v715, 32
        %v1533 = vpop.permute.xlu0 %1532
        %1534 = vrot.lane.b32.xlu0 %v720, 32
        %v1535 = vpop.permute.xlu0 %1534
        %1536 = vrot.lane.b32.xlu0 %v813, 32
        %v1537 = vpop.permute.xlu0 %1536
        %1538 = vrot.lane.b32.xlu0 %v818, 32
        %v1539 = vpop.permute.xlu0 %1538
        %v1540 = vsel %vm920, %v1533, 0
        %v1542 = vsel %vm920, %v1535, 0
        %v1544 = vsel %vm920, %v1537, 0
        %v1546 = vsel %vm920, %v1539, 0
        %1548 = vmatprep.subr.mxu0 0.0
        %1549 = vmatpush1.xpose.msra.mxu0 %v1544
        %1550 = vmatprep.subr.mxu0 0.0
        %1551 = vmatpush1.xpose.msra.mxu0 %v1546
        %1552 = vmatprep.subr.mxu0 0.0
        %1553 = vmatpush1.xpose.msra.mxu0 0.0
        %1554 = vmatprep.subr.mxu0 0.0
        %1555 = vmatpush1.xpose.msra.mxu0 0.0
        %1556 = vmatprep.subr.mxu0 0.0
        %1557 = vmatpush1.xpose.msra.mxu0 0.0
        %1558 = vmatprep.subr.mxu0 0.0
        %1559 = vmatpush1.xpose.msra.mxu0 0.0
        %1560 = vmatprep.subr.mxu0 0.0
        %1561 = vmatpush1.xpose.msra.mxu0 0.0
        %1562 = vmatprep.subr.mxu0 0.0
        %1563 = vmatpush1.xpose.msra.mxu0 0.0
        %1564 = vmatprep.subr.mxu0 0.0
        %1565 = vmatpush1.xpose.msra.mxu0 0.0
        %1566 = vmatprep.subr.mxu0 0.0
        %1567 = vmatpush1.xpose.msra.mxu0 0.0
        %1568 = vmatprep.subr.mxu0 0.0
        %1569 = vmatpush1.xpose.msra.mxu0 0.0
        %1570 = vmatprep.subr.mxu0 0.0
        %1571 = vmatpush1.xpose.msra.mxu0 0.0
        %1572 = vmatprep.subr.mxu0 0.0
        %1573 = vmatpush1.xpose.msra.mxu0 0.0
        %1574 = vmatprep.subr.mxu0 0.0
        %1575 = vmatpush1.xpose.msra.mxu0 0.0
        %1576 = vmatprep.subr.mxu0 0.0
        %1577 = vmatpush1.xpose.msra.mxu0 0.0
        %1578 = vmatprep.subr.mxu0 0.0
        %1579 = vmatpush1.xpose.msra.mxu0 0.0
        %1580 = vmatprep.subr.mxu0 0.0
        %1581 = vmatpush1.xpose.msra.mxu0 0.0
        %1582 = vmatprep.subr.mxu0 0.0
        %1583 = vmatpush1.xpose.msra.mxu0 0.0
        %1584 = vmatprep.subr.mxu0 0.0
        %1585 = vmatpush1.xpose.msra.mxu0 0.0
        %1586 = vmatprep.subr.mxu0 0.0
        %1587 = vmatpush1.xpose.msra.mxu0 0.0
        %1588 = vmatprep.subr.mxu0 0.0
        %1589 = vmatpush1.xpose.msra.mxu0 0.0
        %1590 = vmatprep.subr.mxu0 0.0
        %1591 = vmatpush1.xpose.msra.mxu0 0.0
        %1592 = vmatprep.subr.mxu0 0.0
        %1593 = vmatpush1.xpose.msra.mxu0 0.0
        %1594 = vmatprep.subr.mxu0 0.0
        %1595 = vmatpush1.xpose.msra.mxu0 0.0
        %1596 = vmatprep.subr.mxu0 0.0
        %1597 = vmatpush1.xpose.msra.mxu0 0.0
        %1598 = vmatprep.subr.mxu0 0.0
        %1599 = vmatpush1.xpose.msra.mxu0 0.0
        %1600 = vmatprep.subr.mxu0 0.0
        %1601 = vmatpush1.xpose.msra.mxu0 0.0
        %1602 = vmatprep.subr.mxu0 0.0
        %1603 = vmatpush1.xpose.msra.mxu0 0.0
        %1604 = vmatprep.subr.mxu0 0.0
        %1605 = vmatpush1.xpose.msra.mxu0 0.0
        %1606 = vmatprep.subr.mxu0 0.0
        %1607 = vmatpush1.xpose.msra.mxu0 0.0
        %1608 = vmatprep.subr.mxu0 0.0
        %1609 = vmatpush1.xpose.msra.mxu0 0.0
        %1610 = vmatprep.subr.mxu0 0.0
        %1611 = vmatpush1.xpose.msra.mxu0 0.0
        %1612 = vmatprep.mubr.f32.mxu0 0.0
        %1613 = vmatmul.mubr.f32.gmra.mrb[0].mxu0 %v1540
        %v1614 = vpop.f32.mrb[0].mxu0
        %v1615 = vadd.f32 0.0, %v1614
        %v1616 = vpop.f32.mrb[0].mxu0
        %1617 = vmatprep.mubr.f32.mxu0 0.0
        %1618 = vmatmul.mubr.f32.gmra.mrb[0].mxu0 %v1542
        %v1619 = vpop.f32.mrb[0].mxu0
        %v1620 = vadd.f32 0.0, %v1619
        %v1621 = vpop.f32.mrb[0].mxu0
        %1622 = vdwg.mxu0
        %v1623 = vmul.f32 %v1615, 0.17677669
        %v1624 = vmul.f32 %v1620, 0.17677669
        %v1625 = vadd.f32 %v1623, %v1014
        %v1626 = vadd.f32 %v1624, %v1014
        %v1627 = vsel %vm1018, %v1625, -inf
        %1628 = vmax.xlane.f32.xlu0 %v1627
        %v1629 = vpop.xlane.xlu0 %1628
        %v1630 = vsel %vm1018, %v1626, -inf
        %1631 = vmax.xlane.f32.xlu0 %v1630
        %v1632 = vpop.xlane.xlu0 %1631
        %v1633 = vsub.f32 %v1625, %v1629
        %v1634 = vsub.f32 %v1626, %v1632
        %v1635 = vmul.f32 %v1633, 1.442695
        %v1636 = vpow.pop %v1635
        %v1637 = vmul.f32 %v1634, 1.442695
        %v1638 = vpow.pop %v1637
        %v1639 = vsel %vm1018, %v1636, 0.0
        %1640 = vadd.xlane.f32.xlu0 %v1639
        %v1641 = vpop.xlane.xlu0 %1640
        %v1642 = vsel %vm1018, %v1638, 0.0
        %1643 = vadd.xlane.f32.xlu0 %v1642
        %v1644 = vpop.xlane.xlu0 %1643
        %v1645 = vrcp.pop %v1641
        %v1646 = vmul.f32 %v1636, %v1645
        %v1647 = vrcp.pop %v1644
        %v1648 = vmul.f32 %v1638, %v1647
        %1649 = vrot.lane.b32.xlu0 %v911, 32
        %v1650 = vpop.permute.xlu0 %1649
        %1651 = vrot.lane.b32.xlu0 %v916, 32
        %v1652 = vpop.permute.xlu0 %1651
        %v1656 = vsel %vm1018, %v1646, 0
        %v1659 = vsel %vm1018, %v1648, 0
        %1661 = vmatprep.subr.mxu0 0.0
        %1662 = vmatpush1.msra.mxu0 %v1650
        %1663 = vmatprep.subr.mxu0 0.0
        %1664 = vmatpush1.msra.mxu0 %v1652
        %1665 = vmatprep.subr.mxu0 0.0
        %1666 = vmatpush1.msra.mxu0 0.0
        %1667 = vmatprep.subr.mxu0 0.0
        %1668 = vmatpush1.msra.mxu0 0.0
        %1669 = vmatprep.subr.mxu0 0.0
        %1670 = vmatpush1.msra.mxu0 0.0
        %1671 = vmatprep.subr.mxu0 0.0
        %1672 = vmatpush1.msra.mxu0 0.0
        %1673 = vmatprep.subr.mxu0 0.0
        %1674 = vmatpush1.msra.mxu0 0.0
        %1675 = vmatprep.subr.mxu0 0.0
        %1676 = vmatpush1.msra.mxu0 0.0
        %1677 = vmatprep.subr.mxu0 0.0
        %1678 = vmatpush1.msra.mxu0 0.0
        %1679 = vmatprep.subr.mxu0 0.0
        %1680 = vmatpush1.msra.mxu0 0.0
        %1681 = vmatprep.subr.mxu0 0.0
        %1682 = vmatpush1.msra.mxu0 0.0
        %1683 = vmatprep.subr.mxu0 0.0
        %1684 = vmatpush1.msra.mxu0 0.0
        %1685 = vmatprep.subr.mxu0 0.0
        %1686 = vmatpush1.msra.mxu0 0.0
        %1687 = vmatprep.subr.mxu0 0.0
        %1688 = vmatpush1.msra.mxu0 0.0
        %1689 = vmatprep.subr.mxu0 0.0
        %1690 = vmatpush1.msra.mxu0 0.0
        %1691 = vmatprep.subr.mxu0 0.0
        %1692 = vmatpush1.msra.mxu0 0.0
        %1693 = vmatprep.subr.mxu0 0.0
        %1694 = vmatpush1.msra.mxu0 0.0
        %1695 = vmatprep.subr.mxu0 0.0
        %1696 = vmatpush1.msra.mxu0 0.0
        %1697 = vmatprep.subr.mxu0 0.0
        %1698 = vmatpush1.msra.mxu0 0.0
        %1699 = vmatprep.subr.mxu0 0.0
        %1700 = vmatpush1.msra.mxu0 0.0
        %1701 = vmatprep.subr.mxu0 0.0
        %1702 = vmatpush1.msra.mxu0 0.0
        %1703 = vmatprep.subr.mxu0 0.0
        %1704 = vmatpush1.msra.mxu0 0.0
        %1705 = vmatprep.subr.mxu0 0.0
        %1706 = vmatpush1.msra.mxu0 0.0
        %1707 = vmatprep.subr.mxu0 0.0
        %1708 = vmatpush1.msra.mxu0 0.0
        %1709 = vmatprep.subr.mxu0 0.0
        %1710 = vmatpush1.msra.mxu0 0.0
        %1711 = vmatprep.subr.mxu0 0.0
        %1712 = vmatpush1.msra.mxu0 0.0
        %1713 = vmatprep.subr.mxu0 0.0
        %1714 = vmatpush1.msra.mxu0 0.0
        %1715 = vmatprep.subr.mxu0 0.0
        %1716 = vmatpush1.msra.mxu0 0.0
        %1717 = vmatprep.subr.mxu0 0.0
        %1718 = vmatpush1.msra.mxu0 0.0
        %1719 = vmatprep.subr.mxu0 0.0
        %1720 = vmatpush1.msra.mxu0 0.0
        %1721 = vmatprep.subr.mxu0 0.0
        %1722 = vmatpush1.msra.mxu0 0.0
        %1723 = vmatprep.subr.mxu0 0.0
        %1724 = vmatpush1.msra.mxu0 0.0
        %1725 = vmatprep.mubr.f32.mxu0 0.0
        %1726 = vmatmul.mubr.f32.gmra.mrb[0].mxu0 %v1656
        %v1727 = vpop.f32.mrb[0].mxu0
        %v1728 = vadd.f32 0.0, %v1727
        %v1729 = vpop.f32.mrb[0].mxu0
        %1730 = vmatprep.mubr.f32.mxu0 0.0
        %1731 = vmatmul.mubr.f32.gmra.mrb[0].mxu0 %v1659
        %v1732 = vpop.f32.mrb[0].mxu0
        %v1733 = vadd.f32 0.0, %v1732
        %v1734 = vpop.f32.mrb[0].mxu0
        %1735 = vdwg.mxu0
        %1738 = vrot.lane.b32.xlu0 %v1320, 32
        %v1739 = vpop.permute.xlu0 %1738
        %1740 = vrot.lane.b32.xlu0 %v1325, 32
        %v1741 = vpop.permute.xlu0 %1740
        %1746 = vrot.lane.b32.xlu0 %v1524, 64
        %v1747 = vpop.permute.xlu0 %1746
        %1748 = vrot.lane.b32.xlu0 %v1529, 64
        %v1749 = vpop.permute.xlu0 %1748
        %1754 = vrot.lane.b32.xlu0 %v1728, 96
        %v1755 = vpop.permute.xlu0 %1754
        %1756 = vrot.lane.b32.xlu0 %v1733, 96
        %v1757 = vpop.permute.xlu0 %1756
        %v1760 = vsel %vm920, %v1114, %v1739
        %v1761 = vsel %vm920, %v1119, %v1741
        %vm1762 = vcmask 523264
        %v1763 = vsel %vm1762, %v1760, %v1747
        %v1764 = vsel %vm1762, %v1761, %v1749
        %vm1765 = vcmask 785408
        %v1766 = vsel %vm1765, %v1763, %v1755
        %v1767 = vsel %vm1765, %v1764, %v1757
        %v1768 = vld [vmem:[#allocation6] sm:$0xff]
        %v1769 = vld [vmem:[#allocation6 + $0x8] sm:$0xff]
        %v1770 = vld [vmem:[#allocation6 + $0x10] sm:$0xff]
        %v1771 = vld [vmem:[#allocation6 + $0x18] sm:$0xff]
        %v1772 = vld [vmem:[#allocation6 + $0x20] sm:$0xff]
        %v1773 = vld [vmem:[#allocation6 + $0x28] sm:$0xff]
        %v1774 = vld [vmem:[#allocation6 + $0x30] sm:$0xff]
        %v1775 = vld [vmem:[#allocation6 + $0x38] sm:$0xff]
        %v1776 = vld [vmem:[#allocation6 + $0x40] sm:$0xff]
        %v1777 = vld [vmem:[#allocation6 + $0x48] sm:$0xff]
        %v1778 = vld [vmem:[#allocation6 + $0x50] sm:$0xff]
        %v1779 = vld [vmem:[#allocation6 + $0x58] sm:$0xff]
        %v1780 = vld [vmem:[#allocation6 + $0x60] sm:$0xff]
        %v1781 = vld [vmem:[#allocation6 + $0x68] sm:$0xff]
        %v1782 = vld [vmem:[#allocation6 + $0x70] sm:$0xff]
        %v1783 = vld [vmem:[#allocation6 + $0x78] sm:$0xff]
        %v1784 = vld [vmem:[%s12] sm:$0x1]
        %v1786 = vlaneseq
        %v1787 = vshrl.u32 %v1786, 7
        %v1788 = vsub.s32 0, %v1787
        %v1789 = vrot.slane %v1784, %v1788
        %1791 = vmatprep.subr.mxu0 0.0
        %1792 = vmatpush1.msra.mxu0 %v1768
        %1793 = vmatprep.subr.mxu0 0.0
        %1794 = vmatpush1.msra.mxu0 %v1769
        %1795 = vmatprep.subr.mxu0 0.0
        %1796 = vmatpush1.msra.mxu0 %v1770
        %1797 = vmatprep.subr.mxu0 0.0
        %1798 = vmatpush1.msra.mxu0 %v1771
        %1799 = vmatprep.subr.mxu0 0.0
        %1800 = vmatpush1.msra.mxu0 %v1772
        %1801 = vmatprep.subr.mxu0 0.0
        %1802 = vmatpush1.msra.mxu0 %v1773
        %1803 = vmatprep.subr.mxu0 0.0
        %1804 = vmatpush1.msra.mxu0 %v1774
        %1805 = vmatprep.subr.mxu0 0.0
        %1806 = vmatpush1.msra.mxu0 %v1775
        %1807 = vmatprep.subr.mxu0 0.0
        %1808 = vmatpush1.msra.mxu0 %v1776
        %1809 = vmatprep.subr.mxu0 0.0
        %1810 = vmatpush1.msra.mxu0 %v1777
        %1811 = vmatprep.subr.mxu0 0.0
        %1812 = vmatpush1.msra.mxu0 %v1778
        %1813 = vmatprep.subr.mxu0 0.0
        %1814 = vmatpush1.msra.mxu0 %v1779
        %1815 = vmatprep.subr.mxu0 0.0
        %1816 = vmatpush1.msra.mxu0 %v1780
        %1817 = vmatprep.subr.mxu0 0.0
        %1818 = vmatpush1.msra.mxu0 %v1781
        %1819 = vmatprep.subr.mxu0 0.0
        %1820 = vmatpush1.msra.mxu0 %v1782
        %1821 = vmatprep.subr.mxu0 0.0
        %1822 = vmatpush1.msra.mxu0 %v1783
        %1823 = vmatprep.subr.mxu0 0.0
        %1824 = vmatpush1.msra.mxu0 0.0
        %1825 = vmatprep.subr.mxu0 0.0
        %1826 = vmatpush1.msra.mxu0 0.0
        %1827 = vmatprep.subr.mxu0 0.0
        %1828 = vmatpush1.msra.mxu0 0.0
        %1829 = vmatprep.subr.mxu0 0.0
        %1830 = vmatpush1.msra.mxu0 0.0
        %1831 = vmatprep.subr.mxu0 0.0
        %1832 = vmatpush1.msra.mxu0 0.0
        %1833 = vmatprep.subr.mxu0 0.0
        %1834 = vmatpush1.msra.mxu0 0.0
        %1835 = vmatprep.subr.mxu0 0.0
        %1836 = vmatpush1.msra.mxu0 0.0
        %1837 = vmatprep.subr.mxu0 0.0
        %1838 = vmatpush1.msra.mxu0 0.0
        %1839 = vmatprep.subr.mxu0 0.0
        %1840 = vmatpush1.msra.mxu0 0.0
        %1841 = vmatprep.subr.mxu0 0.0
        %1842 = vmatpush1.msra.mxu0 0.0
        %1843 = vmatprep.subr.mxu0 0.0
        %1844 = vmatpush1.msra.mxu0 0.0
        %1845 = vmatprep.subr.mxu0 0.0
        %1846 = vmatpush1.msra.mxu0 0.0
        %1847 = vmatprep.subr.mxu0 0.0
        %1848 = vmatpush1.msra.mxu0 0.0
        %1849 = vmatprep.subr.mxu0 0.0
        %1850 = vmatpush1.msra.mxu0 0.0
        %1851 = vmatprep.subr.mxu0 0.0
        %1852 = vmatpush1.msra.mxu0 0.0
        %1853 = vmatprep.subr.mxu0 0.0
        %1854 = vmatpush1.msra.mxu0 0.0
        %1855 = vmatprep.mubr.f32.mxu0 0.0
        %1856 = vmatmul.mubr.f32.gmra.mrb[0].mxu0 %v1766
        %v1857 = vpop.f32.mrb[0].mxu0
        %v1858 = vadd.f32 %v1789, %v1857
        %v1859 = vpop.f32.mrb[0].mxu0
        %1860 = vmatprep.mubr.f32.mxu0 0.0
        %1861 = vmatmul.mubr.f32.gmra.mrb[0].mxu0 %v1767
        %v1862 = vpop.f32.mrb[0].mxu0
        %v1863 = vadd.f32 %v1789, %v1862
        %v1864 = vpop.f32.mrb[0].mxu0
        %1865 = vdwg.mxu0
        %v1866 = vadd.f32 %v613, %v1858
        %v1867 = vadd.f32 %v614, %v1863
        %v1868 = vld [vmem:[%s13] sm:$0x1]
        %v1869 = vld [vmem:[%s14] sm:$0x1]
        %1870 = vadd.xlane.f32.xlu0 %v1866
        %v1871 = vpop.xlane.xlu0 %1870
        %1872 = vadd.xlane.f32.xlu0 %v1867
        %v1873 = vpop.xlane.xlu0 %1872
        %v1874 = vrcp.pop 128.0
        %v1875 = vmul.f32 %v1871, %v1874
        %v1876 = vmul.f32 %v1873, %v1874
        %v1877 = vsub.f32 %v1866, %v1875
        %v1878 = vsub.f32 %v1867, %v1876
        %v1879 = vmul.f32 %v1877, %v1877
        %v1880 = vmul.f32 %v1878, %v1878
        %1881 = vadd.xlane.f32.xlu0 %v1879
        %v1882 = vpop.xlane.xlu0 %1881
        %1883 = vadd.xlane.f32.xlu0 %v1880
        %v1884 = vpop.xlane.xlu0 %1883
        %v1885 = vmul.f32 %v1882, %v1874
        %v1886 = vmul.f32 %v1884, %v1874
        %v1887 = vadd.f32 %v1885, 1e-05
        %v1888 = vadd.f32 %v1886, 1e-05
        %v1889 = vrsqrt.pop %v1887
        %v1890 = vrsqrt.pop %v1888
        %v1891 = vmul.f32 %v1877, %v1889
        %v1892 = vmul.f32 %v1878, %v1890
        %v1894 = vlaneseq
        %v1895 = vshrl.u32 %v1894, 7
        %v1896 = vsub.s32 0, %v1895
        %v1897 = vrot.slane %v1868, %v1896
        %v1899 = vmul.f32 %v1891, %v1897
        %v1900 = vmul.f32 %v1892, %v1897
        %v1902 = vlaneseq
        %v1903 = vshrl.u32 %v1902, 7
        %v1904 = vsub.s32 0, %v1903
        %v1905 = vrot.slane %v1869, %v1904
        %v1907 = vadd.f32 %v1899, %v1905
        %v1908 = vadd.f32 %v1900, %v1905
        %1909 = vst [vmem:[%s612] sm:$0xff] %v1907
        %1910 = vst [vmem:[%s612 + $0x8] sm:$0xff] %v1908
        %p1911 = scmp.lt.s32.totalorder %s28, 1
        %s1912 = scalar_select %p1911, %s28, 1
        %s1913 = smul.addr %s1912, 2
        %s1914 = smul.addr %s1913, 8
        %s1915 = scalar_lea.vmem %s15, %s1914
        // Predicated region
        $region93: #{transformer_layer_forward.6} parent=79 // pred_check
          %p1916 = pneg %p386
        $region94: #{transformer_layer_forward.6} parent=79 // pred_check_branch
          %1918 = sbr.rel (%p1916) target = $region96
        $region95: #{transformer_layer_forward.6} parent=79 // pred_region
          _
        $region96: #{transformer_layer_forward.6} parent=79 // pred_fallthru
          _
      $region80: #{transformer_layer_forward.6} parent=5 // pred_fallthru
        _
      %p1919 = scmp.le.s32.totalorder 2, %s23
      // Predicated region
      $region97: #{transformer_layer_forward.6} parent=5 // pred_check
        %p1920 = pneg %p1919
      $region98: #{transformer_layer_forward.6} parent=5 // pred_check_branch
        %1922 = sbr.rel (%p1920) target = $region100
      $region99: #{transformer_layer_forward.6} parent=5 // pred_region
        %s1923 = ssub.s32 %s23, 2
        // Predicated region
        $region101: #{transformer_layer_forward.6} parent=99 // pred_check
          %p1924 = pneg %p392
        $region102: #{transformer_layer_forward.6} parent=99 // pred_check_branch
          %1926 = sbr.rel (%p1924) target = $region104
        $region103: #{transformer_layer_forward.6} parent=99 // pred_region
          %p1927 = scmp.lt.s32.totalorder %s29, 1
          %s1928 = scalar_select %p1927, %s29, 1
          %s1929 = smul.addr %s1928, 2
          %s1930 = smul.addr %s1929, 8
          %s1931 = scalar_lea.vmem %s15, %s1930
        $region104: #{transformer_layer_forward.6} parent=99 // pred_fallthru
          _
      $region100: #{transformer_layer_forward.6} parent=5 // pred_fallthru
        _
    $region6: #{transformer_layer_forward.6} parent=1 // loop_footer
      %s27 = sadd.s32 1, %s23
    $region7: #{transformer_layer_forward.6} parent=1 // loop_footer_branch
      %22 = sbr.rel target = $region3
    $region8: #{transformer_layer_forward.6} parent=1 // loop_exit
      _
    %1932 = vsyncpa [#allocation3], 1
    %s1933 = scalar_lea.sflag [#allocation3], 1
    %1934 = vsyncpa %s1933, 1
    %1935 = vsyncpa [#allocation5], 1

// kernel: transformer_layer_forward.9
$region0: #{transformer_layer_forward.9}
  #allocation0 [shape = 'u32[]', space=smem, size = 0x4, offset = 0x4, fixed_abs, tag = 'smem constant byte address 0x4 - core index']
  #allocation1 [shape = 'u32[144,128]{1,0:T(1,128)}', space=vmem, size = 0x12000, scoped, tag = 'internal scratch']
  %s0 = inlined_call_operand.vmem [shape: f32[2,16,128], index: 0, kind: input, shape index: {}]
  %s1 = inlined_call_operand.vmem [shape: f32[2,16,128], index: 1, kind: input, shape index: {}]
  %s2 = inlined_call_operand.vmem [shape: f32[2,24,128], index: 2, kind: input, shape index: {}]
  %s3 = inlined_call_operand.vmem [shape: f32[2,24,128], index: 3, kind: input, shape index: {}]
  %s4 = inlined_call_operand.vmem [shape: f32[2,1,24], index: 4, kind: input, shape index: {}]
  %s5 = inlined_call_operand.vmem [shape: f32[128,128], index: 5, kind: input, shape index: {}]
  %s6 = inlined_call_operand.vmem [shape: f32[1,128], index: 6, kind: input, shape index: {}]
  %s7 = inlined_call_operand.vmem [shape: f32[128,128], index: 7, kind: input, shape index: {}]
  %s8 = inlined_call_operand.vmem [shape: f32[1,128], index: 8, kind: input, shape index: {}]
  %s9 = inlined_call_operand.vmem [shape: f32[128,128], index: 9, kind: input, shape index: {}]
  %s10 = inlined_call_operand.vmem [shape: f32[1,128], index: 10, kind: input, shape index: {}]
  %s11 = inlined_call_operand.vmem [shape: f32[128,128], index: 11, kind: input, shape index: {}]
  %s12 = inlined_call_operand.vmem [shape: f32[1,128], index: 12, kind: input, shape index: {}]
  %s13 = inlined_call_operand.vmem [shape: f32[1,128], index: 13, kind: input, shape index: {}]
  %s14 = inlined_call_operand.vmem [shape: f32[1,128], index: 14, kind: input, shape index: {}]
  %s15 = inlined_call_operand.vmem [shape: f32[2,16,128], index: 15, kind: output, shape index: {}]
  %s16 = sld [smem:[#allocation0]]
  $region93: #{transformer_layer_forward.9} parent=0
    _
  %s18 = ssub.s32 1, %s16
  %s19 = scalar_select 0, %s18, %s16
  loop: start=0, step=1, limit=4
  $region2: #{transformer_layer_forward.9} parent=0 // loop_pre_header
    _
  $region3: #{transformer_layer_forward.9} parent=0 // loop_header
    %s21 = sphi 0, %s25
    %p22 = scmp.ge.s32.totalorder %s21, 4
    %s31 = sphi 0, %s33
    %s34 = sphi 0, %s31
    %s35 = sphi 0, %s34
    %s51 = sphi 0, %s35
    %s57 = sphi 0, %s59
    %s60 = sphi 0, %s57
    %s61 = sphi 0, %s60
    %s77 = sphi 0, %s61
    %s83 = sphi 0, %s85
    %s86 = sphi 0, %s83
    %s87 = sphi 0, %s86
    %s103 = sphi 0, %s87
    %s109 = sphi 0, %s111
    %s112 = sphi 0, %s109
    %s113 = sphi 0, %s112
    %s129 = sphi 0, %s113
    %s135 = sphi 0, %s137
    %s138 = sphi 0, %s135
    %s139 = sphi 0, %s138
    %s155 = sphi 0, %s139
    %s159 = sphi 0, %s159
    %s161 = sphi 0, %s159
    %s162 = sphi 0, %s161
    %s176 = sphi 0, %s162
    %s180 = sphi 0, %s180
    %s182 = sphi 0, %s180
    %s183 = sphi 0, %s182
    %s197 = sphi 0, %s183
    %s201 = sphi 0, %s201
    %s203 = sphi 0, %s201
    %s204 = sphi 0, %s203
    %s218 = sphi 0, %s204
    %s222 = sphi 0, %s222
    %s224 = sphi 0, %s222
    %s225 = sphi 0, %s224
    %s239 = sphi 0, %s225
    %s243 = sphi 0, %s243
    %s245 = sphi 0, %s243
    %s246 = sphi 0, %s245
    %s260 = sphi 0, %s246
    %s264 = sphi 0, %s264
    %s266 = sphi 0, %s264
    %s267 = sphi 0, %s266
    %s281 = sphi 0, %s267
    %s285 = sphi 0, %s285
    %s287 = sphi 0, %s285
    %s288 = sphi 0, %s287
    %s302 = sphi 0, %s288
    %s306 = sphi 0, %s306
    %s308 = sphi 0, %s306
    %s309 = sphi 0, %s308
    %s323 = sphi 0, %s309
    %s327 = sphi 0, %s327
    %s329 = sphi 0, %s327
    %s330 = sphi 0, %s329
    %s344 = sphi 0, %s330
    %s348 = sphi 0, %s348
    %s350 = sphi 0, %s348
    %s351 = sphi 0, %s350
    %s365 = sphi 0, %s351
    %s371 = sphi 0, %s373
    %s374 = sphi 0, %s371
    %s375 = sphi 0, %s374
    %s391 = sphi 0, %s375
  $region4: #{transformer_layer_forward.9} parent=0 // loop_header_branch
    %24 = sbr.rel (%p22) target = $region8
  $region5: #{transformer_layer_forward.9} parent=0 // loop_body
    %s26 = ssub.s32 %s21, 1
    %s27 = ssub.s32 %s21, 2
    %s28 = sadd.s32 %s21, 1
    %s29 = ssub.s32 %s21, %s28
    %p30 = scmp.eq.s32.totalorder %s29, 0
    %s32 = sadd.s32 %s31, 1
    %s33 = scalar_select %p30, %s31, %s32
    %p36 = pneg %p30
    %p37 = scmp.eq.s32.totalorder %s21, 1
    %p38 = por %p36, %p37
    %p39 = scmp.ne.s32.totalorder %s31, %s34
    %p40 = scmp.eq.s32.totalorder %s21, 0
    %p41 = por %p39, %p40
    %p42 = scmp.ne.s32.totalorder %s31, %s34
    %p43 = scmp.eq.s32.totalorder %s26, 1
    %p44 = por %p42, %p43
    %p45 = scmp.ne.s32.totalorder %s34, %s35
    %p46 = scmp.eq.s32.totalorder %s26, 0
    %p47 = por %p45, %p46
    %p48 = scmp.ne.s32.totalorder %s34, %s35
    %p49 = scmp.eq.s32.totalorder %s27, 1
    %p50 = por %p48, %p49
    %p52 = scmp.ne.s32.totalorder %s35, %s51
    %p53 = scmp.eq.s32.totalorder %s27, 0
    %p54 = por %p52, %p53
    %s55 = ssub.s32 %s21, %s28
    %p56 = scmp.eq.s32.totalorder %s55, 0
    %s58 = sadd.s32 %s57, 1
    %s59 = scalar_select %p56, %s57, %s58
    %p62 = pneg %p56
    %p63 = scmp.eq.s32.totalorder %s21, 1
    %p64 = por %p62, %p63
    %p65 = scmp.ne.s32.totalorder %s57, %s60
    %p66 = scmp.eq.s32.totalorder %s21, 0
    %p67 = por %p65, %p66
    %p68 = scmp.ne.s32.totalorder %s57, %s60
    %p69 = scmp.eq.s32.totalorder %s26, 1
    %p70 = por %p68, %p69
    %p71 = scmp.ne.s32.totalorder %s60, %s61
    %p72 = scmp.eq.s32.totalorder %s26, 0
    %p73 = por %p71, %p72
    %p74 = scmp.ne.s32.totalorder %s60, %s61
    %p75 = scmp.eq.s32.totalorder %s27, 1
    %p76 = por %p74, %p75
    %p78 = scmp.ne.s32.totalorder %s61, %s77
    %p79 = scmp.eq.s32.totalorder %s27, 0
    %p80 = por %p78, %p79
    %s81 = ssub.s32 %s21, %s28
    %p82 = scmp.eq.s32.totalorder %s81, 0
    %s84 = sadd.s32 %s83, 1
    %s85 = scalar_select %p82, %s83, %s84
    %p88 = pneg %p82
    %p89 = scmp.eq.s32.totalorder %s21, 1
    %p90 = por %p88, %p89
    %p91 = scmp.ne.s32.totalorder %s83, %s86
    %p92 = scmp.eq.s32.totalorder %s21, 0
    %p93 = por %p91, %p92
    %p94 = scmp.ne.s32.totalorder %s83, %s86
    %p95 = scmp.eq.s32.totalorder %s26, 1
    %p96 = por %p94, %p95
    %p97 = scmp.ne.s32.totalorder %s86, %s87
    %p98 = scmp.eq.s32.totalorder %s26, 0
    %p99 = por %p97, %p98
    %p100 = scmp.ne.s32.totalorder %s86, %s87
    %p101 = scmp.eq.s32.totalorder %s27, 1
    %p102 = por %p100, %p101
    %p104 = scmp.ne.s32.totalorder %s87, %s103
    %p105 = scmp.eq.s32.totalorder %s27, 0
    %p106 = por %p104, %p105
    %s107 = ssub.s32 %s21, %s28
    %p108 = scmp.eq.s32.totalorder %s107, 0
    %s110 = sadd.s32 %s109, 1
    %s111 = scalar_select %p108, %s109, %s110
    %p114 = pneg %p108
    %p115 = scmp.eq.s32.totalorder %s21, 1
    %p116 = por %p114, %p115
    %p117 = scmp.ne.s32.totalorder %s109, %s112
    %p118 = scmp.eq.s32.totalorder %s21, 0
    %p119 = por %p117, %p118
    %p120 = scmp.ne.s32.totalorder %s109, %s112
    %p121 = scmp.eq.s32.totalorder %s26, 1
    %p122 = por %p120, %p121
    %p123 = scmp.ne.s32.totalorder %s112, %s113
    %p124 = scmp.eq.s32.totalorder %s26, 0
    %p125 = por %p123, %p124
    %p126 = scmp.ne.s32.totalorder %s112, %s113
    %p127 = scmp.eq.s32.totalorder %s27, 1
    %p128 = por %p126, %p127
    %p130 = scmp.ne.s32.totalorder %s113, %s129
    %p131 = scmp.eq.s32.totalorder %s27, 0
    %p132 = por %p130, %p131
    %s133 = ssub.s32 %s21, %s28
    %p134 = scmp.eq.s32.totalorder %s133, 0
    %s136 = sadd.s32 %s135, 1
    %s137 = scalar_select %p134, %s135, %s136
    %p140 = pneg %p134
    %p141 = scmp.eq.s32.totalorder %s21, 1
    %p142 = por %p140, %p141
    %p143 = scmp.ne.s32.totalorder %s135, %s138
    %p144 = scmp.eq.s32.totalorder %s21, 0
    %p145 = por %p143, %p144
    %p146 = scmp.ne.s32.totalorder %s135, %s138
    %p147 = scmp.eq.s32.totalorder %s26, 1
    %p148 = por %p146, %p147
    %p149 = scmp.ne.s32.totalorder %s138, %s139
    %p150 = scmp.eq.s32.totalorder %s26, 0
    %p151 = por %p149, %p150
    %p152 = scmp.ne.s32.totalorder %s138, %s139
    %p153 = scmp.eq.s32.totalorder %s27, 1
    %p154 = por %p152, %p153
    %p156 = scmp.ne.s32.totalorder %s139, %s155
    %p157 = scmp.eq.s32.totalorder %s27, 0
    %p158 = por %p156, %p157
    %s160 = sadd.s32 %s159, 1
    %p163 = scmp.eq.s32.totalorder %s21, 1
    %p164 = scmp.ne.s32.totalorder %s159, %s161
    %p165 = scmp.eq.s32.totalorder %s21, 0
    %p166 = por %p164, %p165
    %p167 = scmp.ne.s32.totalorder %s159, %s161
    %p168 = scmp.eq.s32.totalorder %s26, 1
    %p169 = por %p167, %p168
    %p170 = scmp.ne.s32.totalorder %s161, %s162
    %p171 = scmp.eq.s32.totalorder %s26, 0
    %p172 = por %p170, %p171
    %p173 = scmp.ne.s32.totalorder %s161, %s162
    %p174 = scmp.eq.s32.totalorder %s27, 1
    %p175 = por %p173, %p174
    %p177 = scmp.ne.s32.totalorder %s162, %s176
    %p178 = scmp.eq.s32.totalorder %s27, 0
    %p179 = por %p177, %p178
    %s181 = sadd.s32 %s180, 1
    %p184 = scmp.eq.s32.totalorder %s21, 1
    %p185 = scmp.ne.s32.totalorder %s180, %s182
    %p186 = scmp.eq.s32.totalorder %s21, 0
    %p187 = por %p185, %p186
    %p188 = scmp.ne.s32.totalorder %s180, %s182
    %p189 = scmp.eq.s32.totalorder %s26, 1
    %p190 = por %p188, %p189
    %p191 = scmp.ne.s32.totalorder %s182, %s183
    %p192 = scmp.eq.s32.totalorder %s26, 0
    %p193 = por %p191, %p192
    %p194 = scmp.ne.s32.totalorder %s182, %s183
    %p195 = scmp.eq.s32.totalorder %s27, 1
    %p196 = por %p194, %p195
    %p198 = scmp.ne.s32.totalorder %s183, %s197
    %p199 = scmp.eq.s32.totalorder %s27, 0
    %p200 = por %p198, %p199
    %s202 = sadd.s32 %s201, 1
    %p205 = scmp.eq.s32.totalorder %s21, 1
    %p206 = scmp.ne.s32.totalorder %s201, %s203
    %p207 = scmp.eq.s32.totalorder %s21, 0
    %p208 = por %p206, %p207
    %p209 = scmp.ne.s32.totalorder %s201, %s203
    %p210 = scmp.eq.s32.totalorder %s26, 1
    %p211 = por %p209, %p210
    %p212 = scmp.ne.s32.totalorder %s203, %s204
    %p213 = scmp.eq.s32.totalorder %s26, 0
    %p214 = por %p212, %p213
    %p215 = scmp.ne.s32.totalorder %s203, %s204
    %p216 = scmp.eq.s32.totalorder %s27, 1
    %p217 = por %p215, %p216
    %p219 = scmp.ne.s32.totalorder %s204, %s218
    %p220 = scmp.eq.s32.totalorder %s27, 0
    %p221 = por %p219, %p220
    %s223 = sadd.s32 %s222, 1
    %p226 = scmp.eq.s32.totalorder %s21, 1
    %p227 = scmp.ne.s32.totalorder %s222, %s224
    %p228 = scmp.eq.s32.totalorder %s21, 0
    %p229 = por %p227, %p228
    %p230 = scmp.ne.s32.totalorder %s222, %s224
    %p231 = scmp.eq.s32.totalorder %s26, 1
    %p232 = por %p230, %p231
    %p233 = scmp.ne.s32.totalorder %s224, %s225
    %p234 = scmp.eq.s32.totalorder %s26, 0
    %p235 = por %p233, %p234
    %p236 = scmp.ne.s32.totalorder %s224, %s225
    %p237 = scmp.eq.s32.totalorder %s27, 1
    %p238 = por %p236, %p237
    %p240 = scmp.ne.s32.totalorder %s225, %s239
    %p241 = scmp.eq.s32.totalorder %s27, 0
    %p242 = por %p240, %p241
    %s244 = sadd.s32 %s243, 1
    %p247 = scmp.eq.s32.totalorder %s21, 1
    %p248 = scmp.ne.s32.totalorder %s243, %s245
    %p249 = scmp.eq.s32.totalorder %s21, 0
    %p250 = por %p248, %p249
    %p251 = scmp.ne.s32.totalorder %s243, %s245
    %p252 = scmp.eq.s32.totalorder %s26, 1
    %p253 = por %p251, %p252
    %p254 = scmp.ne.s32.totalorder %s245, %s246
    %p255 = scmp.eq.s32.totalorder %s26, 0
    %p256 = por %p254, %p255
    %p257 = scmp.ne.s32.totalorder %s245, %s246
    %p258 = scmp.eq.s32.totalorder %s27, 1
    %p259 = por %p257, %p258
    %p261 = scmp.ne.s32.totalorder %s246, %s260
    %p262 = scmp.eq.s32.totalorder %s27, 0
    %p263 = por %p261, %p262
    %s265 = sadd.s32 %s264, 1
    %p268 = scmp.eq.s32.totalorder %s21, 1
    %p269 = scmp.ne.s32.totalorder %s264, %s266
    %p270 = scmp.eq.s32.totalorder %s21, 0
    %p271 = por %p269, %p270
    %p272 = scmp.ne.s32.totalorder %s264, %s266
    %p273 = scmp.eq.s32.totalorder %s26, 1
    %p274 = por %p272, %p273
    %p275 = scmp.ne.s32.totalorder %s266, %s267
    %p276 = scmp.eq.s32.totalorder %s26, 0
    %p277 = por %p275, %p276
    %p278 = scmp.ne.s32.totalorder %s266, %s267
    %p279 = scmp.eq.s32.totalorder %s27, 1
    %p280 = por %p278, %p279
    %p282 = scmp.ne.s32.totalorder %s267, %s281
    %p283 = scmp.eq.s32.totalorder %s27, 0
    %p284 = por %p282, %p283
    %s286 = sadd.s32 %s285, 1
    %p289 = scmp.eq.s32.totalorder %s21, 1
    %p290 = scmp.ne.s32.totalorder %s285, %s287
    %p291 = scmp.eq.s32.totalorder %s21, 0
    %p292 = por %p290, %p291
    %p293 = scmp.ne.s32.totalorder %s285, %s287
    %p294 = scmp.eq.s32.totalorder %s26, 1
    %p295 = por %p293, %p294
    %p296 = scmp.ne.s32.totalorder %s287, %s288
    %p297 = scmp.eq.s32.totalorder %s26, 0
    %p298 = por %p296, %p297
    %p299 = scmp.ne.s32.totalorder %s287, %s288
    %p300 = scmp.eq.s32.totalorder %s27, 1
    %p301 = por %p299, %p300
    %p303 = scmp.ne.s32.totalorder %s288, %s302
    %p304 = scmp.eq.s32.totalorder %s27, 0
    %p305 = por %p303, %p304
    %s307 = sadd.s32 %s306, 1
    %p310 = scmp.eq.s32.totalorder %s21, 1
    %p311 = scmp.ne.s32.totalorder %s306, %s308
    %p312 = scmp.eq.s32.totalorder %s21, 0
    %p313 = por %p311, %p312
    %p314 = scmp.ne.s32.totalorder %s306, %s308
    %p315 = scmp.eq.s32.totalorder %s26, 1
    %p316 = por %p314, %p315
    %p317 = scmp.ne.s32.totalorder %s308, %s309
    %p318 = scmp.eq.s32.totalorder %s26, 0
    %p319 = por %p317, %p318
    %p320 = scmp.ne.s32.totalorder %s308, %s309
    %p321 = scmp.eq.s32.totalorder %s27, 1
    %p322 = por %p320, %p321
    %p324 = scmp.ne.s32.totalorder %s309, %s323
    %p325 = scmp.eq.s32.totalorder %s27, 0
    %p326 = por %p324, %p325
    %s328 = sadd.s32 %s327, 1
    %p331 = scmp.eq.s32.totalorder %s21, 1
    %p332 = scmp.ne.s32.totalorder %s327, %s329
    %p333 = scmp.eq.s32.totalorder %s21, 0
    %p334 = por %p332, %p333
    %p335 = scmp.ne.s32.totalorder %s327, %s329
    %p336 = scmp.eq.s32.totalorder %s26, 1
    %p337 = por %p335, %p336
    %p338 = scmp.ne.s32.totalorder %s329, %s330
    %p339 = scmp.eq.s32.totalorder %s26, 0
    %p340 = por %p338, %p339
    %p341 = scmp.ne.s32.totalorder %s329, %s330
    %p342 = scmp.eq.s32.totalorder %s27, 1
    %p343 = por %p341, %p342
    %p345 = scmp.ne.s32.totalorder %s330, %s344
    %p346 = scmp.eq.s32.totalorder %s27, 0
    %p347 = por %p345, %p346
    %s349 = sadd.s32 %s348, 1
    %p352 = scmp.eq.s32.totalorder %s21, 1
    %p353 = scmp.ne.s32.totalorder %s348, %s350
    %p354 = scmp.eq.s32.totalorder %s21, 0
    %p355 = por %p353, %p354
    %p356 = scmp.ne.s32.totalorder %s348, %s350
    %p357 = scmp.eq.s32.totalorder %s26, 1
    %p358 = por %p356, %p357
    %p359 = scmp.ne.s32.totalorder %s350, %s351
    %p360 = scmp.eq.s32.totalorder %s26, 0
    %p361 = por %p359, %p360
    %p362 = scmp.ne.s32.totalorder %s350, %s351
    %p363 = scmp.eq.s32.totalorder %s27, 1
    %p364 = por %p362, %p363
    %p366 = scmp.ne.s32.totalorder %s351, %s365
    %p367 = scmp.eq.s32.totalorder %s27, 0
    %p368 = por %p366, %p367
    %s369 = ssub.s32 %s21, %s28
    %p370 = scmp.eq.s32.totalorder %s369, 0
    %s372 = sadd.s32 %s371, 1
    %s373 = scalar_select %p370, %s371, %s372
    %p376 = pneg %p370
    %p377 = scmp.eq.s32.totalorder %s21, 1
    %p378 = por %p376, %p377
    %p379 = scmp.ne.s32.totalorder %s371, %s374
    %p380 = scmp.eq.s32.totalorder %s21, 0
    %p381 = por %p379, %p380
    %p382 = scmp.ne.s32.totalorder %s371, %s374
    %p383 = scmp.eq.s32.totalorder %s26, 1
    %p384 = por %p382, %p383
    %p385 = scmp.ne.s32.totalorder %s374, %s375
    %p386 = scmp.eq.s32.totalorder %s26, 0
    %p387 = por %p385, %p386
    %p388 = scmp.ne.s32.totalorder %s374, %s375
    %p389 = scmp.eq.s32.totalorder %s27, 1
    %p390 = por %p388, %p389
    %p392 = scmp.ne.s32.totalorder %s375, %s391
    %p393 = scmp.eq.s32.totalorder %s27, 0
    %p394 = por %p392, %p393
    %p395 = scmp.le.s32.totalorder 1, %s21
    %p396 = scmp.lt.s32.totalorder %s21, 3
    %p397 = pnand %p395, %p396
    %p398 = pneg %p397
    // Predicated region
    $region9: #{transformer_layer_forward.9} parent=5 // pred_check
      _
    $region10: #{transformer_layer_forward.9} parent=5 // pred_check_branch
      %400 = sbr.rel (%p397) target = $region12
    $region11: #{transformer_layer_forward.9} parent=5 // pred_region
      %s401 = ssub.s32 %s21, 1
      // Predicated region
      $region13: #{transformer_layer_forward.9} parent=11 // pred_check
        %p402 = pneg %p172
      $region14: #{transformer_layer_forward.9} parent=11 // pred_check_branch
        %404 = sbr.rel (%p402) target = $region16
      $region15: #{transformer_layer_forward.9} parent=11 // pred_region
        _
      $region16: #{transformer_layer_forward.9} parent=11 // pred_fallthru
        _
      // Predicated region
      $region17: #{transformer_layer_forward.9} parent=11 // pred_check
        %p405 = pneg %p193
      $region18: #{transformer_layer_forward.9} parent=11 // pred_check_branch
        %407 = sbr.rel (%p405) target = $region20
      $region19: #{transformer_layer_forward.9} parent=11 // pred_region
        _
      $region20: #{transformer_layer_forward.9} parent=11 // pred_fallthru
        _
      // Predicated region
      $region21: #{transformer_layer_forward.9} parent=11 // pred_check
        %p408 = pneg %p214
      $region22: #{transformer_layer_forward.9} parent=11 // pred_check_branch
        %410 = sbr.rel (%p408) target = $region24
      $region23: #{transformer_layer_forward.9} parent=11 // pred_region
        _
      $region24: #{transformer_layer_forward.9} parent=11 // pred_fallthru
        _
      // Predicated region
      $region25: #{transformer_layer_forward.9} parent=11 // pred_check
        %p411 = pneg %p235
      $region26: #{transformer_layer_forward.9} parent=11 // pred_check_branch
        %413 = sbr.rel (%p411) target = $region28
      $region27: #{transformer_layer_forward.9} parent=11 // pred_region
        _
      $region28: #{transformer_layer_forward.9} parent=11 // pred_fallthru
        _
      // Predicated region
      $region29: #{transformer_layer_forward.9} parent=11 // pred_check
        %p414 = pneg %p256
      $region30: #{transformer_layer_forward.9} parent=11 // pred_check_branch
        %416 = sbr.rel (%p414) target = $region32
      $region31: #{transformer_layer_forward.9} parent=11 // pred_region
        _
      $region32: #{transformer_layer_forward.9} parent=11 // pred_fallthru
        _
      // Predicated region
      $region33: #{transformer_layer_forward.9} parent=11 // pred_check
        %p417 = pneg %p277
      $region34: #{transformer_layer_forward.9} parent=11 // pred_check_branch
        %419 = sbr.rel (%p417) target = $region36
      $region35: #{transformer_layer_forward.9} parent=11 // pred_region
        _
      $region36: #{transformer_layer_forward.9} parent=11 // pred_fallthru
        _
      // Predicated region
      $region37: #{transformer_layer_forward.9} parent=11 // pred_check
        %p420 = pneg %p298
      $region38: #{transformer_layer_forward.9} parent=11 // pred_check_branch
        %422 = sbr.rel (%p420) target = $region40
      $region39: #{transformer_layer_forward.9} parent=11 // pred_region
        _
      $region40: #{transformer_layer_forward.9} parent=11 // pred_fallthru
        _
      // Predicated region
      $region41: #{transformer_layer_forward.9} parent=11 // pred_check
        %p423 = pneg %p319
      $region42: #{transformer_layer_forward.9} parent=11 // pred_check_branch
        %425 = sbr.rel (%p423) target = $region44
      $region43: #{transformer_layer_forward.9} parent=11 // pred_region
        _
      $region44: #{transformer_layer_forward.9} parent=11 // pred_fallthru
        _
      // Predicated region
      $region45: #{transformer_layer_forward.9} parent=11 // pred_check
        %p426 = pneg %p340
      $region46: #{transformer_layer_forward.9} parent=11 // pred_check_branch
        %428 = sbr.rel (%p426) target = $region48
      $region47: #{transformer_layer_forward.9} parent=11 // pred_region
        _
      $region48: #{transformer_layer_forward.9} parent=11 // pred_fallthru
        _
      // Predicated region
      $region49: #{transformer_layer_forward.9} parent=11 // pred_check
        %p429 = pneg %p361
      $region50: #{transformer_layer_forward.9} parent=11 // pred_check_branch
        %431 = sbr.rel (%p429) target = $region52
      $region51: #{transformer_layer_forward.9} parent=11 // pred_region
        _
      $region52: #{transformer_layer_forward.9} parent=11 // pred_fallthru
        _
    $region12: #{transformer_layer_forward.9} parent=5 // pred_fallthru
      _
    %p432 = scmp.lt.s32.totalorder %s21, 2
    // Predicated region
    $region53: #{transformer_layer_forward.9} parent=5 // pred_check
      %p433 = pneg %p432
    $region54: #{transformer_layer_forward.9} parent=5 // pred_check_branch
      %435 = sbr.rel (%p433) target = $region56
    $region55: #{transformer_layer_forward.9} parent=5 // pred_region
      // Predicated region
      $region57: #{transformer_layer_forward.9} parent=55 // pred_check
        %p436 = pneg %p41
      $region58: #{transformer_layer_forward.9} parent=55 // pred_check_branch
        %438 = sbr.rel (%p436) target = $region60
      $region59: #{transformer_layer_forward.9} parent=55 // pred_region
        %p439 = scmp.lt.s32.totalorder %s21, 1
        %s440 = scalar_select %p439, %s21, 1
        %s441 = smul.addr %s440, 2
        %s442 = smul.addr %s441, 8
        %s443 = scalar_lea.vmem %s0, %s442
      $region60: #{transformer_layer_forward.9} parent=55 // pred_fallthru
        _
      // Predicated region
      $region61: #{transformer_layer_forward.9} parent=55 // pred_check
        %p444 = pneg %p67
      $region62: #{transformer_layer_forward.9} parent=55 // pred_check_branch
        %446 = sbr.rel (%p444) target = $region64
      $region63: #{transformer_layer_forward.9} parent=55 // pred_region
        %p447 = scmp.lt.s32.totalorder %s21, 1
        %s448 = scalar_select %p447, %s21, 1
        %s449 = smul.addr %s448, 2
        %s450 = smul.addr %s449, 8
        %s451 = scalar_lea.vmem %s1, %s450
      $region64: #{transformer_layer_forward.9} parent=55 // pred_fallthru
        _
      // Predicated region
      $region65: #{transformer_layer_forward.9} parent=55 // pred_check
        %p452 = pneg %p93
      $region66: #{transformer_layer_forward.9} parent=55 // pred_check_branch
        %454 = sbr.rel (%p452) target = $region68
      $region67: #{transformer_layer_forward.9} parent=55 // pred_region
        %p455 = scmp.lt.s32.totalorder %s21, 1
        %s456 = scalar_select %p455, %s21, 1
        %s457 = smul.addr %s456, 3
        %s458 = smul.addr %s457, 8
        %s459 = scalar_lea.vmem %s2, %s458
      $region68: #{transformer_layer_forward.9} parent=55 // pred_fallthru
        _
      // Predicated region
      $region69: #{transformer_layer_forward.9} parent=55 // pred_check
        %p460 = pneg %p119
      $region70: #{transformer_layer_forward.9} parent=55 // pred_check_branch
        %462 = sbr.rel (%p460) target = $region72
      $region71: #{transformer_layer_forward.9} parent=55 // pred_region
        %p463 = scmp.lt.s32.totalorder %s21, 1
        %s464 = scalar_select %p463, %s21, 1
        %s465 = smul.addr %s464, 3
        %s466 = smul.addr %s465, 8
        %s467 = scalar_lea.vmem %s3, %s466
      $region72: #{transformer_layer_forward.9} parent=55 // pred_fallthru
        _
      // Predicated region
      $region73: #{transformer_layer_forward.9} parent=55 // pred_check
        %p468 = pneg %p145
      $region74: #{transformer_layer_forward.9} parent=55 // pred_check_branch
        %470 = sbr.rel (%p468) target = $region76
      $region75: #{transformer_layer_forward.9} parent=55 // pred_region
        %p471 = scmp.lt.s32.totalorder %s21, 1
        %s472 = scalar_select %p471, %s21, 1
        %s473 = scalar_lea.vmem %s4, %s472
      $region76: #{transformer_layer_forward.9} parent=55 // pred_fallthru
        _
    $region56: #{transformer_layer_forward.9} parent=5 // pred_fallthru
      _
    %p474 = scmp.le.s32.totalorder 1, %s21
    %p475 = scmp.lt.s32.totalorder %s21, 3
    %p476 = pnand %p474, %p475
    %p477 = pneg %p476
    // Predicated region
    $region77: #{transformer_layer_forward.9} parent=5 // pred_check
      _
    $region78: #{transformer_layer_forward.9} parent=5 // pred_check_branch
      %479 = sbr.rel (%p476) target = $region80
    $region79: #{transformer_layer_forward.9} parent=5 // pred_region
      %s480 = ssub.s32 %s21, 1
      %p481 = scmp.lt.s32.totalorder %s26, 1
      %s482 = scalar_select %p481, %s26, 1
      %s483 = smul.addr %s482, 2
      %s484 = smul.addr %s483, 8
      %s485 = scalar_lea.vmem %s0, %s484
      %p486 = pneg %p47
      %p487 = pneg %p44
      %p488 = scmp.lt.s32.totalorder %s26, 1
      %s489 = scalar_select %p488, %s26, 1
      %s490 = smul.addr %s489, 2
      %s491 = smul.addr %s490, 8
      %s492 = scalar_lea.vmem %s1, %s491
      %p493 = pneg %p73
      %p494 = pneg %p70
      %p495 = scmp.lt.s32.totalorder %s26, 1
      %s496 = scalar_select %p495, %s26, 1
      %s497 = smul.addr %s496, 3
      %s498 = smul.addr %s497, 8
      %s499 = scalar_lea.vmem %s2, %s498
      %p500 = pneg %p99
      %p501 = pneg %p96
      %p502 = scmp.lt.s32.totalorder %s26, 1
      %s503 = scalar_select %p502, %s26, 1
      %s504 = smul.addr %s503, 3
      %s505 = smul.addr %s504, 8
      %s506 = scalar_lea.vmem %s3, %s505
      %p507 = pneg %p125
      %p508 = pneg %p122
      %p509 = scmp.lt.s32.totalorder %s26, 1
      %s510 = scalar_select %p509, %s26, 1
      %s511 = scalar_lea.vmem %s4, %s510
      %p512 = pneg %p151
      %p513 = pneg %p148
      %p514 = pneg %p172
      %p515 = pneg %p169
      %p516 = pneg %p193
      %p517 = pneg %p190
      %p518 = pneg %p214
      %p519 = pneg %p211
      %p520 = pneg %p235
      %p521 = pneg %p232
      %p522 = pneg %p256
      %p523 = pneg %p253
      %p524 = pneg %p277
      %p525 = pneg %p274
      %p526 = pneg %p298
      %p527 = pneg %p295
      %p528 = pneg %p319
      %p529 = pneg %p316
      %p530 = pneg %p340
      %p531 = pneg %p337
      %p532 = pneg %p361
      %p533 = pneg %p358
      %p534 = pneg %p387
      %p535 = pneg %p384
      %p536 = scmp.lt.s32.totalorder %s26, 1
      %s537 = scalar_select %p536, %s26, 1
      %s538 = smul.addr %s537, 2
      %s539 = smul.addr %s538, 8
      %s540 = scalar_lea.vmem %s15, %s539
      %p541 = scmp.lt.s32.totalorder %s26, 1
      %s542 = scalar_select %p541, %s26, 1
      %s543 = smul.addr %s542, 2
      %s544 = smul.addr %s543, 8
      %s545 = scalar_lea.vmem %s0, %s544
      %p546 = scmp.lt.s32.totalorder %s26, 1
      %s547 = scalar_select %p546, %s26, 1
      %s548 = smul.addr %s547, 2
      %s549 = smul.addr %s548, 8
      %s550 = scalar_lea.vmem %s1, %s549
      %p551 = scmp.lt.s32.totalorder %s26, 1
      %s552 = scalar_select %p551, %s26, 1
      %s553 = smul.addr %s552, 3
      %s554 = smul.addr %s553, 8
      %s555 = scalar_lea.vmem %s2, %s554
      %p556 = scmp.lt.s32.totalorder %s26, 1
      %s557 = scalar_select %p556, %s26, 1
      %s558 = smul.addr %s557, 3
      %s559 = smul.addr %s558, 8
      %s560 = scalar_lea.vmem %s3, %s559
      %p561 = scmp.lt.s32.totalorder %s26, 1
      %s562 = scalar_select %p561, %s26, 1
      %s563 = scalar_lea.vmem %s4, %s562
      %p564 = scmp.lt.s32.totalorder %s26, 1
      %s565 = scalar_select %p564, %s26, 1
      %s566 = smul.addr %s565, 2
      %s567 = smul.addr %s566, 8
      %s568 = scalar_lea.vmem %s15, %s567
      %v569 = vld [vmem:[%s545] sm:$0xff]
      %v570 = vld [vmem:[%s545 + $0x8] sm:$0xff]
      %v571 = vld [vmem:[%s550] sm:$0xff]
      %v572 = vld [vmem:[%s550 + $0x8] sm:$0xff]
      %v573 = vadd.f32 %v569, %v571
      %v574 = vadd.f32 %v570, %v572
      %v575 = vld [vmem:[%s555] sm:$0xff]
      %v576 = vld [vmem:[%s555 + $0x8] sm:$0xff]
      %v577 = vld [vmem:[%s555 + $0x10] sm:$0xff]
      %v578 = vld [vmem:[%s560] sm:$0xff]
      %v579 = vld [vmem:[%s560 + $0x8] sm:$0xff]
      %v580 = vld [vmem:[%s560 + $0x10] sm:$0xff]
      %v581 = vadd.f32 %v575, %v578
      %v582 = vadd.f32 %v576, %v579
      %v583 = vadd.f32 %v577, %v580
      %v584 = vld [vmem:[%s5] sm:$0xff]
      %v585 = vld [vmem:[%s5 + $0x8] sm:$0xff]
      %v586 = vld [vmem:[%s5 + $0x10] sm:$0xff]
      %v587 = vld [vmem:[%s5 + $0x18] sm:$0xff]
      %v588 = vld [vmem:[%s5 + $0x20] sm:$0xff]
      %v589 = vld [vmem:[%s5 + $0x28] sm:$0xff]
      %v590 = vld [vmem:[%s5 + $0x30] sm:$0xff]
      %v591 = vld [vmem:[%s5 + $0x38] sm:$0xff]
      %v592 = vld [vmem:[%s5 + $0x40] sm:$0xff]
      %v593 = vld [vmem:[%s5 + $0x48] sm:$0xff]
      %v594 = vld [vmem:[%s5 + $0x50] sm:$0xff]
      %v595 = vld [vmem:[%s5 + $0x58] sm:$0xff]
      %v596 = vld [vmem:[%s5 + $0x60] sm:$0xff]
      %v597 = vld [vmem:[%s5 + $0x68] sm:$0xff]
      %v598 = vld [vmem:[%s5 + $0x70] sm:$0xff]
      %v599 = vld [vmem:[%s5 + $0x78] sm:$0xff]
      %v600 = vld [vmem:[%s6] sm:$0x1]
      %v602 = vlaneseq
      %v603 = vshrl.u32 %v602, 7
      %v604 = vsub.s32 0, %v603
      %v605 = vrot.slane %v600, %v604
      %607 = vmatprep.subr.mxu0 0.0
      %608 = vmatpush1.msra.mxu0 %v584
      %609 = vmatprep.subr.mxu0 0.0
      %610 = vmatpush1.msra.mxu0 %v585
      %611 = vmatprep.subr.mxu0 0.0
      %612 = vmatpush1.msra.mxu0 %v586
      %613 = vmatprep.subr.mxu0 0.0
      %614 = vmatpush1.msra.mxu0 %v587
      %615 = vmatprep.subr.mxu0 0.0
      %616 = vmatpush1.msra.mxu0 %v588
      %617 = vmatprep.subr.mxu0 0.0
      %618 = vmatpush1.msra.mxu0 %v589
      %619 = vmatprep.subr.mxu0 0.0
      %620 = vmatpush1.msra.mxu0 %v590
      %621 = vmatprep.subr.mxu0 0.0
      %622 = vmatpush1.msra.mxu0 %v591
      %623 = vmatprep.subr.mxu0 0.0
      %624 = vmatpush1.msra.mxu0 %v592
      %625 = vmatprep.subr.mxu0 0.0
      %626 = vmatpush1.msra.mxu0 %v593
      %627 = vmatprep.subr.mxu0 0.0
      %628 = vmatpush1.msra.mxu0 %v594
      %629 = vmatprep.subr.mxu0 0.0
      %630 = vmatpush1.msra.mxu0 %v595
      %631 = vmatprep.subr.mxu0 0.0
      %632 = vmatpush1.msra.mxu0 %v596
      %633 = vmatprep.subr.mxu0 0.0
      %634 = vmatpush1.msra.mxu0 %v597
      %635 = vmatprep.subr.mxu0 0.0
      %636 = vmatpush1.msra.mxu0 %v598
      %637 = vmatprep.subr.mxu0 0.0
      %638 = vmatpush1.msra.mxu0 %v599
      %639 = vmatprep.subr.mxu0 0.0
      %640 = vmatpush1.msra.mxu0 0.0
      %641 = vmatprep.subr.mxu0 0.0
      %642 = vmatpush1.msra.mxu0 0.0
      %643 = vmatprep.subr.mxu0 0.0
      %644 = vmatpush1.msra.mxu0 0.0
      %645 = vmatprep.subr.mxu0 0.0
      %646 = vmatpush1.msra.mxu0 0.0
      %647 = vmatprep.subr.mxu0 0.0
      %648 = vmatpush1.msra.mxu0 0.0
      %649 = vmatprep.subr.mxu0 0.0
      %650 = vmatpush1.msra.mxu0 0.0
      %651 = vmatprep.subr.mxu0 0.0
      %652 = vmatpush1.msra.mxu0 0.0
      %653 = vmatprep.subr.mxu0 0.0
      %654 = vmatpush1.msra.mxu0 0.0
      %655 = vmatprep.subr.mxu0 0.0
      %656 = vmatpush1.msra.mxu0 0.0
      %657 = vmatprep.subr.mxu0 0.0
      %658 = vmatpush1.msra.mxu0 0.0
      %659 = vmatprep.subr.mxu0 0.0
      %660 = vmatpush1.msra.mxu0 0.0
      %661 = vmatprep.subr.mxu0 0.0
      %662 = vmatpush1.msra.mxu0 0.0
      %663 = vmatprep.subr.mxu0 0.0
      %664 = vmatpush1.msra.mxu0 0.0
      %665 = vmatprep.subr.mxu0 0.0
      %666 = vmatpush1.msra.mxu0 0.0
      %667 = vmatprep.subr.mxu0 0.0
      %668 = vmatpush1.msra.mxu0 0.0
      %669 = vmatprep.subr.mxu0 0.0
      %670 = vmatpush1.msra.mxu0 0.0
      %671 = vmatprep.mubr.f32.mxu0 0.0
      %672 = vmatmul.mubr.f32.gmra.mrb[0].mxu0 %v573
      %v673 = vpop.f32.mrb[0].mxu0
      %v674 = vadd.f32 %v605, %v673
      %v675 = vpop.f32.mrb[0].mxu0
      %676 = vmatprep.mubr.f32.mxu0 0.0
      %677 = vmatmul.mubr.f32.gmra.mrb[0].mxu0 %v574
      %v678 = vpop.f32.mrb[0].mxu0
      %v679 = vadd.f32 %v605, %v678
      %v680 = vpop.f32.mrb[0].mxu0
      %681 = vdwg.mxu0
      %v682 = vld [vmem:[%s7] sm:$0xff]
      %v683 = vld [vmem:[%s7 + $0x8] sm:$0xff]
      %v684 = vld [vmem:[%s7 + $0x10] sm:$0xff]
      %v685 = vld [vmem:[%s7 + $0x18] sm:$0xff]
      %v686 = vld [vmem:[%s7 + $0x20] sm:$0xff]
      %v687 = vld [vmem:[%s7 + $0x28] sm:$0xff]
      %v688 = vld [vmem:[%s7 + $0x30] sm:$0xff]
      %v689 = vld [vmem:[%s7 + $0x38] sm:$0xff]
      %v690 = vld [vmem:[%s7 + $0x40] sm:$0xff]
      %v691 = vld [vmem:[%s7 + $0x48] sm:$0xff]
      %v692 = vld [vmem:[%s7 + $0x50] sm:$0xff]
      %v693 = vld [vmem:[%s7 + $0x58] sm:$0xff]
      %v694 = vld [vmem:[%s7 + $0x60] sm:$0xff]
      %v695 = vld [vmem:[%s7 + $0x68] sm:$0xff]
      %v696 = vld [vmem:[%s7 + $0x70] sm:$0xff]
      %v697 = vld [vmem:[%s7 + $0x78] sm:$0xff]
      %v698 = vld [vmem:[%s8] sm:$0x1]
      %v700 = vlaneseq
      %v701 = vshrl.u32 %v700, 7
      %v702 = vsub.s32 0, %v701
      %v703 = vrot.slane %v698, %v702
      %705 = vmatprep.subr.mxu0 0.0
      %706 = vmatpush1.msra.mxu0 %v682
      %707 = vmatprep.subr.mxu0 0.0
      %708 = vmatpush1.msra.mxu0 %v683
      %709 = vmatprep.subr.mxu0 0.0
      %710 = vmatpush1.msra.mxu0 %v684
      %711 = vmatprep.subr.mxu0 0.0
      %712 = vmatpush1.msra.mxu0 %v685
      %713 = vmatprep.subr.mxu0 0.0
      %714 = vmatpush1.msra.mxu0 %v686
      %715 = vmatprep.subr.mxu0 0.0
      %716 = vmatpush1.msra.mxu0 %v687
      %717 = vmatprep.subr.mxu0 0.0
      %718 = vmatpush1.msra.mxu0 %v688
      %719 = vmatprep.subr.mxu0 0.0
      %720 = vmatpush1.msra.mxu0 %v689
      %721 = vmatprep.subr.mxu0 0.0
      %722 = vmatpush1.msra.mxu0 %v690
      %723 = vmatprep.subr.mxu0 0.0
      %724 = vmatpush1.msra.mxu0 %v691
      %725 = vmatprep.subr.mxu0 0.0
      %726 = vmatpush1.msra.mxu0 %v692
      %727 = vmatprep.subr.mxu0 0.0
      %728 = vmatpush1.msra.mxu0 %v693
      %729 = vmatprep.subr.mxu0 0.0
      %730 = vmatpush1.msra.mxu0 %v694
      %731 = vmatprep.subr.mxu0 0.0
      %732 = vmatpush1.msra.mxu0 %v695
      %733 = vmatprep.subr.mxu0 0.0
      %734 = vmatpush1.msra.mxu0 %v696
      %735 = vmatprep.subr.mxu0 0.0
      %736 = vmatpush1.msra.mxu0 %v697
      %737 = vmatprep.subr.mxu0 0.0
      %738 = vmatpush1.msra.mxu0 0.0
      %739 = vmatprep.subr.mxu0 0.0
      %740 = vmatpush1.msra.mxu0 0.0
      %741 = vmatprep.subr.mxu0 0.0
      %742 = vmatpush1.msra.mxu0 0.0
      %743 = vmatprep.subr.mxu0 0.0
      %744 = vmatpush1.msra.mxu0 0.0
      %745 = vmatprep.subr.mxu0 0.0
      %746 = vmatpush1.msra.mxu0 0.0
      %747 = vmatprep.subr.mxu0 0.0
      %748 = vmatpush1.msra.mxu0 0.0
      %749 = vmatprep.subr.mxu0 0.0
      %750 = vmatpush1.msra.mxu0 0.0
      %751 = vmatprep.subr.mxu0 0.0
      %752 = vmatpush1.msra.mxu0 0.0
      %753 = vmatprep.subr.mxu0 0.0
      %754 = vmatpush1.msra.mxu0 0.0
      %755 = vmatprep.subr.mxu0 0.0
      %756 = vmatpush1.msra.mxu0 0.0
      %757 = vmatprep.subr.mxu0 0.0
      %758 = vmatpush1.msra.mxu0 0.0
      %759 = vmatprep.subr.mxu0 0.0
      %760 = vmatpush1.msra.mxu0 0.0
      %761 = vmatprep.subr.mxu0 0.0
      %762 = vmatpush1.msra.mxu0 0.0
      %763 = vmatprep.subr.mxu0 0.0
      %764 = vmatpush1.msra.mxu0 0.0
      %765 = vmatprep.subr.mxu0 0.0
      %766 = vmatpush1.msra.mxu0 0.0
      %767 = vmatprep.subr.mxu0 0.0
      %768 = vmatpush1.msra.mxu0 0.0
      %769 = vmatprep.mubr.f32.mxu0 0.0
      %770 = vmatmul.mubr.f32.gmra.mrb[0].mxu0 %v581
      %v771 = vpop.f32.mrb[0].mxu0
      %v772 = vadd.f32 %v703, %v771
      %v773 = vpop.f32.mrb[0].mxu0
      %774 = vmatprep.mubr.f32.mxu0 0.0
      %775 = vmatmul.mubr.f32.gmra.mrb[0].mxu0 %v582
      %v776 = vpop.f32.mrb[0].mxu0
      %v777 = vadd.f32 %v703, %v776
      %v778 = vpop.f32.mrb[0].mxu0
      %779 = vmatprep.mubr.f32.mxu0 0.0
      %780 = vmatmul.mubr.f32.gmra.mrb[0].mxu0 %v583
      %v781 = vpop.f32.mrb[0].mxu0
      %v782 = vadd.f32 %v703, %v781
      %v783 = vpop.f32.mrb[0].mxu0
      %784 = vdwg.mxu0
      %v785 = vld [vmem:[%s9] sm:$0xff]
      %v786 = vld [vmem:[%s9 + $0x8] sm:$0xff]
      %v787 = vld [vmem:[%s9 + $0x10] sm:$0xff]
      %v788 = vld [vmem:[%s9 + $0x18] sm:$0xff]
      %v789 = vld [vmem:[%s9 + $0x20] sm:$0xff]
      %v790 = vld [vmem:[%s9 + $0x28] sm:$0xff]
      %v791 = vld [vmem:[%s9 + $0x30] sm:$0xff]
      %v792 = vld [vmem:[%s9 + $0x38] sm:$0xff]
      %v793 = vld [vmem:[%s9 + $0x40] sm:$0xff]
      %v794 = vld [vmem:[%s9 + $0x48] sm:$0xff]
      %v795 = vld [vmem:[%s9 + $0x50] sm:$0xff]
      %v796 = vld [vmem:[%s9 + $0x58] sm:$0xff]
      %v797 = vld [vmem:[%s9 + $0x60] sm:$0xff]
      %v798 = vld [vmem:[%s9 + $0x68] sm:$0xff]
      %v799 = vld [vmem:[%s9 + $0x70] sm:$0xff]
      %v800 = vld [vmem:[%s9 + $0x78] sm:$0xff]
      %v801 = vld [vmem:[%s10] sm:$0x1]
      %v803 = vlaneseq
      %v804 = vshrl.u32 %v803, 7
      %v805 = vsub.s32 0, %v804
      %v806 = vrot.slane %v801, %v805
      %808 = vmatprep.subr.mxu0 0.0
      %809 = vmatpush1.msra.mxu0 %v785
      %810 = vmatprep.subr.mxu0 0.0
      %811 = vmatpush1.msra.mxu0 %v786
      %812 = vmatprep.subr.mxu0 0.0
      %813 = vmatpush1.msra.mxu0 %v787
      %814 = vmatprep.subr.mxu0 0.0
      %815 = vmatpush1.msra.mxu0 %v788
      %816 = vmatprep.subr.mxu0 0.0
      %817 = vmatpush1.msra.mxu0 %v789
      %818 = vmatprep.subr.mxu0 0.0
      %819 = vmatpush1.msra.mxu0 %v790
      %820 = vmatprep.subr.mxu0 0.0
      %821 = vmatpush1.msra.mxu0 %v791
      %822 = vmatprep.subr.mxu0 0.0
      %823 = vmatpush1.msra.mxu0 %v792
      %824 = vmatprep.subr.mxu0 0.0
      %825 = vmatpush1.msra.mxu0 %v793
      %826 = vmatprep.subr.mxu0 0.0
      %827 = vmatpush1.msra.mxu0 %v794
      %828 = vmatprep.subr.mxu0 0.0
      %829 = vmatpush1.msra.mxu0 %v795
      %830 = vmatprep.subr.mxu0 0.0
      %831 = vmatpush1.msra.mxu0 %v796
      %832 = vmatprep.subr.mxu0 0.0
      %833 = vmatpush1.msra.mxu0 %v797
      %834 = vmatprep.subr.mxu0 0.0
      %835 = vmatpush1.msra.mxu0 %v798
      %836 = vmatprep.subr.mxu0 0.0
      %837 = vmatpush1.msra.mxu0 %v799
      %838 = vmatprep.subr.mxu0 0.0
      %839 = vmatpush1.msra.mxu0 %v800
      %840 = vmatprep.subr.mxu0 0.0
      %841 = vmatpush1.msra.mxu0 0.0
      %842 = vmatprep.subr.mxu0 0.0
      %843 = vmatpush1.msra.mxu0 0.0
      %844 = vmatprep.subr.mxu0 0.0
      %845 = vmatpush1.msra.mxu0 0.0
      %846 = vmatprep.subr.mxu0 0.0
      %847 = vmatpush1.msra.mxu0 0.0
      %848 = vmatprep.subr.mxu0 0.0
      %849 = vmatpush1.msra.mxu0 0.0
      %850 = vmatprep.subr.mxu0 0.0
      %851 = vmatpush1.msra.mxu0 0.0
      %852 = vmatprep.subr.mxu0 0.0
      %853 = vmatpush1.msra.mxu0 0.0
      %854 = vmatprep.subr.mxu0 0.0
      %855 = vmatpush1.msra.mxu0 0.0
      %856 = vmatprep.subr.mxu0 0.0
      %857 = vmatpush1.msra.mxu0 0.0
      %858 = vmatprep.subr.mxu0 0.0
      %859 = vmatpush1.msra.mxu0 0.0
      %860 = vmatprep.subr.mxu0 0.0
      %861 = vmatpush1.msra.mxu0 0.0
      %862 = vmatprep.subr.mxu0 0.0
      %863 = vmatpush1.msra.mxu0 0.0
      %864 = vmatprep.subr.mxu0 0.0
      %865 = vmatpush1.msra.mxu0 0.0
      %866 = vmatprep.subr.mxu0 0.0
      %867 = vmatpush1.msra.mxu0 0.0
      %868 = vmatprep.subr.mxu0 0.0
      %869 = vmatpush1.msra.mxu0 0.0
      %870 = vmatprep.subr.mxu0 0.0
      %871 = vmatpush1.msra.mxu0 0.0
      %872 = vmatprep.mubr.f32.mxu0 0.0
      %873 = vmatmul.mubr.f32.gmra.mrb[0].mxu0 %v575
      %v874 = vpop.f32.mrb[0].mxu0
      %v875 = vadd.f32 %v806, %v874
      %v876 = vpop.f32.mrb[0].mxu0
      %877 = vmatprep.mubr.f32.mxu0 0.0
      %878 = vmatmul.mubr.f32.gmra.mrb[0].mxu0 %v576
      %v879 = vpop.f32.mrb[0].mxu0
      %v880 = vadd.f32 %v806, %v879
      %v881 = vpop.f32.mrb[0].mxu0
      %882 = vmatprep.mubr.f32.mxu0 0.0
      %883 = vmatmul.mubr.f32.gmra.mrb[0].mxu0 %v577
      %v884 = vpop.f32.mrb[0].mxu0
      %v885 = vadd.f32 %v806, %v884
      %v886 = vpop.f32.mrb[0].mxu0
      %887 = vdwg.mxu0
      %v888 = vld [vmem:[%s563] sm:$0x1]
      %vm889 = vcmask 261120
      %v891 = vsel %vm889, %v674, 0
      %v894 = vsel %vm889, %v679, 0
      %v897 = vsel %vm889, %v772, 0
      %v900 = vsel %vm889, %v777, 0
      %v903 = vsel %vm889, %v782, 0
      %905 = vmatprep.subr.mxu0 0.0
      %906 = vmatpush1.xpose.msra.mxu0 %v897
      %907 = vmatprep.subr.mxu0 0.0
      %908 = vmatpush1.xpose.msra.mxu0 %v900
      %909 = vmatprep.subr.mxu0 0.0
      %910 = vmatpush1.xpose.msra.mxu0 %v903
      %911 = vmatprep.subr.mxu0 0.0
      %912 = vmatpush1.xpose.msra.mxu0 0.0
      %913 = vmatprep.subr.mxu0 0.0
      %914 = vmatpush1.xpose.msra.mxu0 0.0
      %915 = vmatprep.subr.mxu0 0.0
      %916 = vmatpush1.xpose.msra.mxu0 0.0
      %917 = vmatprep.subr.mxu0 0.0
      %918 = vmatpush1.xpose.msra.mxu0 0.0
      %919 = vmatprep.subr.mxu0 0.0
      %920 = vmatpush1.xpose.msra.mxu0 0.0
      %921 = vmatprep.subr.mxu0 0.0
      %922 = vmatpush1.xpose.msra.mxu0 0.0
      %923 = vmatprep.subr.mxu0 0.0
      %924 = vmatpush1.xpose.msra.mxu0 0.0
      %925 = vmatprep.subr.mxu0 0.0
      %926 = vmatpush1.xpose.msra.mxu0 0.0
      %927 = vmatprep.subr.mxu0 0.0
      %928 = vmatpush1.xpose.msra.mxu0 0.0
      %929 = vmatprep.subr.mxu0 0.0
      %930 = vmatpush1.xpose.msra.mxu0 0.0
      %931 = vmatprep.subr.mxu0 0.0
      %932 = vmatpush1.xpose.msra.mxu0 0.0
      %933 = vmatprep.subr.mxu0 0.0
      %934 = vmatpush1.xpose.msra.mxu0 0.0
      %935 = vmatprep.subr.mxu0 0.0
      %936 = vmatpush1.xpose.msra.mxu0 0.0
      %937 = vmatprep.subr.mxu0 0.0
      %938 = vmatpush1.xpose.msra.mxu0 0.0
      %939 = vmatprep.subr.mxu0 0.0
      %940 = vmatpush1.xpose.msra.mxu0 0.0
      %941 = vmatprep.subr.mxu0 0.0
      %942 = vmatpush1.xpose.msra.mxu0 0.0
      %943 = vmatprep.subr.mxu0 0.0
      %944 = vmatpush1.xpose.msra.mxu0 0.0
      %945 = vmatprep.subr.mxu0 0.0
      %946 = vmatpush1.xpose.msra.mxu0 0.0
      %947 = vmatprep.subr.mxu0 0.0
      %948 = vmatpush1.xpose.msra.mxu0 0.0
      %949 = vmatprep.subr.mxu0 0.0
      %950 = vmatpush1.xpose.msra.mxu0 0.0
      %951 = vmatprep.subr.mxu0 0.0
      %952 = vmatpush1.xpose.msra.mxu0 0.0
      %953 = vmatprep.subr.mxu0 0.0
      %954 = vmatpush1.xpose.msra.mxu0 0.0
      %955 = vmatprep.subr.mxu0 0.0
      %956 = vmatpush1.xpose.msra.mxu0 0.0
      %957 = vmatprep.subr.mxu0 0.0
      %958 = vmatpush1.xpose.msra.mxu0 0.0
      %959 = vmatprep.subr.mxu0 0.0
      %960 = vmatpush1.xpose.msra.mxu0 0.0
      %961 = vmatprep.subr.mxu0 0.0
      %962 = vmatpush1.xpose.msra.mxu0 0.0
      %963 = vmatprep.subr.mxu0 0.0
      %964 = vmatpush1.xpose.msra.mxu0 0.0
      %965 = vmatprep.subr.mxu0 0.0
      %966 = vmatpush1.xpose.msra.mxu0 0.0
      %967 = vmatprep.subr.mxu0 0.0
      %968 = vmatpush1.xpose.msra.mxu0 0.0
      %969 = vmatprep.mubr.f32.mxu0 0.0
      %970 = vmatmul.mubr.f32.gmra.mrb[0].mxu0 %v891
      %v971 = vpop.f32.mrb[0].mxu0
      %v972 = vadd.f32 0.0, %v971
      %v973 = vpop.f32.mrb[0].mxu0
      %974 = vmatprep.mubr.f32.mxu0 0.0
      %975 = vmatmul.mubr.f32.gmra.mrb[0].mxu0 %v894
      %v976 = vpop.f32.mrb[0].mxu0
      %v977 = vadd.f32 0.0, %v976
      %v978 = vpop.f32.mrb[0].mxu0
      %979 = vdwg.mxu0
      %v980 = vmul.f32 %v972, 0.17677669
      %v981 = vmul.f32 %v977, 0.17677669
      %v983 = vlaneseq
      %v984 = vshrl.u32 %v983, 7
      %v985 = vsub.s32 0, %v984
      %v986 = vrot.slane %v888, %v985
      %v988 = vadd.f32 %v980, %v986
      %v989 = vadd.f32 %v981, %v986
      %vm990 = vcmask 195584
      %v991 = vsel %vm990, %v988, -inf
      %992 = vmax.xlane.f32.xlu0 %v991
      %v993 = vpop.xlane.xlu0 %992
      %v994 = vsel %vm990, %v989, -inf
      %995 = vmax.xlane.f32.xlu0 %v994
      %v996 = vpop.xlane.xlu0 %995
      %v997 = vsub.f32 %v988, %v993
      %v998 = vsub.f32 %v989, %v996
      %v999 = vmul.f32 %v997, 1.442695
      %v1000 = vpow.pop %v999
      %v1001 = vmul.f32 %v998, 1.442695
      %v1002 = vpow.pop %v1001
      %v1003 = vsel %vm990, %v1000, 0.0
      %1004 = vadd.xlane.f32.xlu0 %v1003
      %v1005 = vpop.xlane.xlu0 %1004
      %v1006 = vsel %vm990, %v1002, 0.0
      %1007 = vadd.xlane.f32.xlu0 %v1006
      %v1008 = vpop.xlane.xlu0 %1007
      %v1009 = vrcp.pop %v1005
      %v1010 = vmul.f32 %v1000, %v1009
      %v1011 = vrcp.pop %v1008
      %v1012 = vmul.f32 %v1002, %v1011
      %v1014 = vsel %vm990, %v1010, 0
      %v1017 = vsel %vm990, %v1012, 0
      %1019 = vmatprep.subr.mxu0 0.0
      %1020 = vmatpush1.msra.mxu0 %v875
      %1021 = vmatprep.subr.mxu0 0.0
      %1022 = vmatpush1.msra.mxu0 %v880
      %1023 = vmatprep.subr.mxu0 0.0
      %1024 = vmatpush1.msra.mxu0 %v885
      %1025 = vmatprep.subr.mxu0 0.0
      %1026 = vmatpush1.msra.mxu0 0.0
      %1027 = vmatprep.subr.mxu0 0.0
      %1028 = vmatpush1.msra.mxu0 0.0
      %1029 = vmatprep.subr.mxu0 0.0
      %1030 = vmatpush1.msra.mxu0 0.0
      %1031 = vmatprep.subr.mxu0 0.0
      %1032 = vmatpush1.msra.mxu0 0.0
      %1033 = vmatprep.subr.mxu0 0.0
      %1034 = vmatpush1.msra.mxu0 0.0
      %1035 = vmatprep.subr.mxu0 0.0
      %1036 = vmatpush1.msra.mxu0 0.0
      %1037 = vmatprep.subr.mxu0 0.0
      %1038 = vmatpush1.msra.mxu0 0.0
      %1039 = vmatprep.subr.mxu0 0.0
      %1040 = vmatpush1.msra.mxu0 0.0
      %1041 = vmatprep.subr.mxu0 0.0
      %1042 = vmatpush1.msra.mxu0 0.0
      %1043 = vmatprep.subr.mxu0 0.0
      %1044 = vmatpush1.msra.mxu0 0.0
      %1045 = vmatprep.subr.mxu0 0.0
      %1046 = vmatpush1.msra.mxu0 0.0
      %1047 = vmatprep.subr.mxu0 0.0
      %1048 = vmatpush1.msra.mxu0 0.0
      %1049 = vmatprep.subr.mxu0 0.0
      %1050 = vmatpush1.msra.mxu0 0.0
      %1051 = vmatprep.subr.mxu0 0.0
      %1052 = vmatpush1.msra.mxu0 0.0
      %1053 = vmatprep.subr.mxu0 0.0
      %1054 = vmatpush1.msra.mxu0 0.0
      %1055 = vmatprep.subr.mxu0 0.0
      %1056 = vmatpush1.msra.mxu0 0.0
      %1057 = vmatprep.subr.mxu0 0.0
      %1058 = vmatpush1.msra.mxu0 0.0
      %1059 = vmatprep.subr.mxu0 0.0
      %1060 = vmatpush1.msra.mxu0 0.0
      %1061 = vmatprep.subr.mxu0 0.0
      %1062 = vmatpush1.msra.mxu0 0.0
      %1063 = vmatprep.subr.mxu0 0.0
      %1064 = vmatpush1.msra.mxu0 0.0
      %1065 = vmatprep.subr.mxu0 0.0
      %1066 = vmatpush1.msra.mxu0 0.0
      %1067 = vmatprep.subr.mxu0 0.0
      %1068 = vmatpush1.msra.mxu0 0.0
      %1069 = vmatprep.subr.mxu0 0.0
      %1070 = vmatpush1.msra.mxu0 0.0
      %1071 = vmatprep.subr.mxu0 0.0
      %1072 = vmatpush1.msra.mxu0 0.0
      %1073 = vmatprep.subr.mxu0 0.0
      %1074 = vmatpush1.msra.mxu0 0.0
      %1075 = vmatprep.subr.mxu0 0.0
      %1076 = vmatpush1.msra.mxu0 0.0
      %1077 = vmatprep.subr.mxu0 0.0
      %1078 = vmatpush1.msra.mxu0 0.0
      %1079 = vmatprep.subr.mxu0 0.0
      %1080 = vmatpush1.msra.mxu0 0.0
      %1081 = vmatprep.subr.mxu0 0.0
      %1082 = vmatpush1.msra.mxu0 0.0
      %1083 = vmatprep.mubr.f32.mxu0 0.0
      %1084 = vmatmul.mubr.f32.gmra.mrb[0].mxu0 %v1014
      %v1085 = vpop.f32.mrb[0].mxu0
      %v1086 = vadd.f32 0.0, %v1085
      %v1087 = vpop.f32.mrb[0].mxu0
      %1088 = vmatprep.mubr.f32.mxu0 0.0
      %1089 = vmatmul.mubr.f32.gmra.mrb[0].mxu0 %v1017
      %v1090 = vpop.f32.mrb[0].mxu0
      %v1091 = vadd.f32 0.0, %v1090
      %v1092 = vpop.f32.mrb[0].mxu0
      %1093 = vdwg.mxu0
      %1094 = vrot.lane.b32.xlu0 %v674, 96
      %v1095 = vpop.permute.xlu0 %1094
      %1096 = vrot.lane.b32.xlu0 %v679, 96
      %v1097 = vpop.permute.xlu0 %1096
      %1098 = vrot.lane.b32.xlu0 %v772, 96
      %v1099 = vpop.permute.xlu0 %1098
      %1100 = vrot.lane.b32.xlu0 %v777, 96
      %v1101 = vpop.permute.xlu0 %1100
      %1102 = vrot.lane.b32.xlu0 %v782, 96
      %v1103 = vpop.permute.xlu0 %1102
      %v1104 = vsel %vm889, %v1095, 0
      %v1106 = vsel %vm889, %v1097, 0
      %v1108 = vsel %vm889, %v1099, 0
      %v1110 = vsel %vm889, %v1101, 0
      %v1112 = vsel %vm889, %v1103, 0
      %1114 = vmatprep.subr.mxu0 0.0
      %1115 = vmatpush1.xpose.msra.mxu0 %v1108
      %1116 = vmatprep.subr.mxu0 0.0
      %1117 = vmatpush1.xpose.msra.mxu0 %v1110
      %1118 = vmatprep.subr.mxu0 0.0
      %1119 = vmatpush1.xpose.msra.mxu0 %v1112
      %1120 = vmatprep.subr.mxu0 0.0
      %1121 = vmatpush1.xpose.msra.mxu0 0.0
      %1122 = vmatprep.subr.mxu0 0.0
      %1123 = vmatpush1.xpose.msra.mxu0 0.0
      %1124 = vmatprep.subr.mxu0 0.0
      %1125 = vmatpush1.xpose.msra.mxu0 0.0
      %1126 = vmatprep.subr.mxu0 0.0
      %1127 = vmatpush1.xpose.msra.mxu0 0.0
      %1128 = vmatprep.subr.mxu0 0.0
      %1129 = vmatpush1.xpose.msra.mxu0 0.0
      %1130 = vmatprep.subr.mxu0 0.0
      %1131 = vmatpush1.xpose.msra.mxu0 0.0
      %1132 = vmatprep.subr.mxu0 0.0
      %1133 = vmatpush1.xpose.msra.mxu0 0.0
      %1134 = vmatprep.subr.mxu0 0.0
      %1135 = vmatpush1.xpose.msra.mxu0 0.0
      %1136 = vmatprep.subr.mxu0 0.0
      %1137 = vmatpush1.xpose.msra.mxu0 0.0
      %1138 = vmatprep.subr.mxu0 0.0
      %1139 = vmatpush1.xpose.msra.mxu0 0.0
      %1140 = vmatprep.subr.mxu0 0.0
      %1141 = vmatpush1.xpose.msra.mxu0 0.0
      %1142 = vmatprep.subr.mxu0 0.0
      %1143 = vmatpush1.xpose.msra.mxu0 0.0
      %1144 = vmatprep.subr.mxu0 0.0
      %1145 = vmatpush1.xpose.msra.mxu0 0.0
      %1146 = vmatprep.subr.mxu0 0.0
      %1147 = vmatpush1.xpose.msra.mxu0 0.0
      %1148 = vmatprep.subr.mxu0 0.0
      %1149 = vmatpush1.xpose.msra.mxu0 0.0
      %1150 = vmatprep.subr.mxu0 0.0
      %1151 = vmatpush1.xpose.msra.mxu0 0.0
      %1152 = vmatprep.subr.mxu0 0.0
      %1153 = vmatpush1.xpose.msra.mxu0 0.0
      %1154 = vmatprep.subr.mxu0 0.0
      %1155 = vmatpush1.xpose.msra.mxu0 0.0
      %1156 = vmatprep.subr.mxu0 0.0
      %1157 = vmatpush1.xpose.msra.mxu0 0.0
      %1158 = vmatprep.subr.mxu0 0.0
      %1159 = vmatpush1.xpose.msra.mxu0 0.0
      %1160 = vmatprep.subr.mxu0 0.0
      %1161 = vmatpush1.xpose.msra.mxu0 0.0
      %1162 = vmatprep.subr.mxu0 0.0
      %1163 = vmatpush1.xpose.msra.mxu0 0.0
      %1164 = vmatprep.subr.mxu0 0.0
      %1165 = vmatpush1.xpose.msra.mxu0 0.0
      %1166 = vmatprep.subr.mxu0 0.0
      %1167 = vmatpush1.xpose.msra.mxu0 0.0
      %1168 = vmatprep.subr.mxu0 0.0
      %1169 = vmatpush1.xpose.msra.mxu0 0.0
      %1170 = vmatprep.subr.mxu0 0.0
      %1171 = vmatpush1.xpose.msra.mxu0 0.0
      %1172 = vmatprep.subr.mxu0 0.0
      %1173 = vmatpush1.xpose.msra.mxu0 0.0
      %1174 = vmatprep.subr.mxu0 0.0
      %1175 = vmatpush1.xpose.msra.mxu0 0.0
      %1176 = vmatprep.subr.mxu0 0.0
      %1177 = vmatpush1.xpose.msra.mxu0 0.0
      %1178 = vmatprep.mubr.f32.mxu0 0.0
      %1179 = vmatmul.mubr.f32.gmra.mrb[0].mxu0 %v1104
      %v1180 = vpop.f32.mrb[0].mxu0
      %v1181 = vadd.f32 0.0, %v1180
      %v1182 = vpop.f32.mrb[0].mxu0
      %1183 = vmatprep.mubr.f32.mxu0 0.0
      %1184 = vmatmul.mubr.f32.gmra.mrb[0].mxu0 %v1106
      %v1185 = vpop.f32.mrb[0].mxu0
      %v1186 = vadd.f32 0.0, %v1185
      %v1187 = vpop.f32.mrb[0].mxu0
      %1188 = vdwg.mxu0
      %v1189 = vmul.f32 %v1181, 0.17677669
      %v1190 = vmul.f32 %v1186, 0.17677669
      %v1191 = vadd.f32 %v1189, %v986
      %v1192 = vadd.f32 %v1190, %v986
      %v1193 = vsel %vm990, %v1191, -inf
      %1194 = vmax.xlane.f32.xlu0 %v1193
      %v1195 = vpop.xlane.xlu0 %1194
      %v1196 = vsel %vm990, %v1192, -inf
      %1197 = vmax.xlane.f32.xlu0 %v1196
      %v1198 = vpop.xlane.xlu0 %1197
      %v1199 = vsub.f32 %v1191, %v1195
      %v1200 = vsub.f32 %v1192, %v1198
      %v1201 = vmul.f32 %v1199, 1.442695
      %v1202 = vpow.pop %v1201
      %v1203 = vmul.f32 %v1200, 1.442695
      %v1204 = vpow.pop %v1203
      %v1205 = vsel %vm990, %v1202, 0.0
      %1206 = vadd.xlane.f32.xlu0 %v1205
      %v1207 = vpop.xlane.xlu0 %1206
      %v1208 = vsel %vm990, %v1204, 0.0
      %1209 = vadd.xlane.f32.xlu0 %v1208
      %v1210 = vpop.xlane.xlu0 %1209
      %v1211 = vrcp.pop %v1207
      %v1212 = vmul.f32 %v1202, %v1211
      %v1213 = vrcp.pop %v1210
      %v1214 = vmul.f32 %v1204, %v1213
      %1218 = vrot.lane.b32.xlu0 %v875, 96
      %v1219 = vpop.permute.xlu0 %1218
      %1220 = vrot.lane.b32.xlu0 %v880, 96
      %v1221 = vpop.permute.xlu0 %1220
      %1222 = vrot.lane.b32.xlu0 %v885, 96
      %v1223 = vpop.permute.xlu0 %1222
      %v1228 = vsel %vm990, %v1212, 0
      %v1231 = vsel %vm990, %v1214, 0
      %1233 = vmatprep.subr.mxu0 0.0
      %1234 = vmatpush1.msra.mxu0 %v1219
      %1235 = vmatprep.subr.mxu0 0.0
      %1236 = vmatpush1.msra.mxu0 %v1221
      %1237 = vmatprep.subr.mxu0 0.0
      %1238 = vmatpush1.msra.mxu0 %v1223
      %1239 = vmatprep.subr.mxu0 0.0
      %1240 = vmatpush1.msra.mxu0 0.0
      %1241 = vmatprep.subr.mxu0 0.0
      %1242 = vmatpush1.msra.mxu0 0.0
      %1243 = vmatprep.subr.mxu0 0.0
      %1244 = vmatpush1.msra.mxu0 0.0
      %1245 = vmatprep.subr.mxu0 0.0
      %1246 = vmatpush1.msra.mxu0 0.0
      %1247 = vmatprep.subr.mxu0 0.0
      %1248 = vmatpush1.msra.mxu0 0.0
      %1249 = vmatprep.subr.mxu0 0.0
      %1250 = vmatpush1.msra.mxu0 0.0
      %1251 = vmatprep.subr.mxu0 0.0
      %1252 = vmatpush1.msra.mxu0 0.0
      %1253 = vmatprep.subr.mxu0 0.0
      %1254 = vmatpush1.msra.mxu0 0.0
      %1255 = vmatprep.subr.mxu0 0.0
      %1256 = vmatpush1.msra.mxu0 0.0
      %1257 = vmatprep.subr.mxu0 0.0
      %1258 = vmatpush1.msra.mxu0 0.0
      %1259 = vmatprep.subr.mxu0 0.0
      %1260 = vmatpush1.msra.mxu0 0.0
      %1261 = vmatprep.subr.mxu0 0.0
      %1262 = vmatpush1.msra.mxu0 0.0
      %1263 = vmatprep.subr.mxu0 0.0
      %1264 = vmatpush1.msra.mxu0 0.0
      %1265 = vmatprep.subr.mxu0 0.0
      %1266 = vmatpush1.msra.mxu0 0.0
      %1267 = vmatprep.subr.mxu0 0.0
      %1268 = vmatpush1.msra.mxu0 0.0
      %1269 = vmatprep.subr.mxu0 0.0
      %1270 = vmatpush1.msra.mxu0 0.0
      %1271 = vmatprep.subr.mxu0 0.0
      %1272 = vmatpush1.msra.mxu0 0.0
      %1273 = vmatprep.subr.mxu0 0.0
      %1274 = vmatpush1.msra.mxu0 0.0
      %1275 = vmatprep.subr.mxu0 0.0
      %1276 = vmatpush1.msra.mxu0 0.0
      %1277 = vmatprep.subr.mxu0 0.0
      %1278 = vmatpush1.msra.mxu0 0.0
      %1279 = vmatprep.subr.mxu0 0.0
      %1280 = vmatpush1.msra.mxu0 0.0
      %1281 = vmatprep.subr.mxu0 0.0
      %1282 = vmatpush1.msra.mxu0 0.0
      %1283 = vmatprep.subr.mxu0 0.0
      %1284 = vmatpush1.msra.mxu0 0.0
      %1285 = vmatprep.subr.mxu0 0.0
      %1286 = vmatpush1.msra.mxu0 0.0
      %1287 = vmatprep.subr.mxu0 0.0
      %1288 = vmatpush1.msra.mxu0 0.0
      %1289 = vmatprep.subr.mxu0 0.0
      %1290 = vmatpush1.msra.mxu0 0.0
      %1291 = vmatprep.subr.mxu0 0.0
      %1292 = vmatpush1.msra.mxu0 0.0
      %1293 = vmatprep.subr.mxu0 0.0
      %1294 = vmatpush1.msra.mxu0 0.0
      %1295 = vmatprep.subr.mxu0 0.0
      %1296 = vmatpush1.msra.mxu0 0.0
      %1297 = vmatprep.mubr.f32.mxu0 0.0
      %1298 = vmatmul.mubr.f32.gmra.mrb[0].mxu0 %v1228
      %v1299 = vpop.f32.mrb[0].mxu0
      %v1300 = vadd.f32 0.0, %v1299
      %v1301 = vpop.f32.mrb[0].mxu0
      %1302 = vmatprep.mubr.f32.mxu0 0.0
      %1303 = vmatmul.mubr.f32.gmra.mrb[0].mxu0 %v1231
      %v1304 = vpop.f32.mrb[0].mxu0
      %v1305 = vadd.f32 0.0, %v1304
      %v1306 = vpop.f32.mrb[0].mxu0
      %1307 = vdwg.mxu0
      %1308 = vrot.lane.b32.xlu0 %v674, 64
      %v1309 = vpop.permute.xlu0 %1308
      %1310 = vrot.lane.b32.xlu0 %v679, 64
      %v1311 = vpop.permute.xlu0 %1310
      %1312 = vrot.lane.b32.xlu0 %v772, 64
      %v1313 = vpop.permute.xlu0 %1312
      %1314 = vrot.lane.b32.xlu0 %v777, 64
      %v1315 = vpop.permute.xlu0 %1314
      %1316 = vrot.lane.b32.xlu0 %v782, 64
      %v1317 = vpop.permute.xlu0 %1316
      %v1318 = vsel %vm889, %v1309, 0
      %v1320 = vsel %vm889, %v1311, 0
      %v1322 = vsel %vm889, %v1313, 0
      %v1324 = vsel %vm889, %v1315, 0
      %v1326 = vsel %vm889, %v1317, 0
      %1328 = vmatprep.subr.mxu0 0.0
      %1329 = vmatpush1.xpose.msra.mxu0 %v1322
      %1330 = vmatprep.subr.mxu0 0.0
      %1331 = vmatpush1.xpose.msra.mxu0 %v1324
      %1332 = vmatprep.subr.mxu0 0.0
      %1333 = vmatpush1.xpose.msra.mxu0 %v1326
      %1334 = vmatprep.subr.mxu0 0.0
      %1335 = vmatpush1.xpose.msra.mxu0 0.0
      %1336 = vmatprep.subr.mxu0 0.0
      %1337 = vmatpush1.xpose.msra.mxu0 0.0
      %1338 = vmatprep.subr.mxu0 0.0
      %1339 = vmatpush1.xpose.msra.mxu0 0.0
      %1340 = vmatprep.subr.mxu0 0.0
      %1341 = vmatpush1.xpose.msra.mxu0 0.0
      %1342 = vmatprep.subr.mxu0 0.0
      %1343 = vmatpush1.xpose.msra.mxu0 0.0
      %1344 = vmatprep.subr.mxu0 0.0
      %1345 = vmatpush1.xpose.msra.mxu0 0.0
      %1346 = vmatprep.subr.mxu0 0.0
      %1347 = vmatpush1.xpose.msra.mxu0 0.0
      %1348 = vmatprep.subr.mxu0 0.0
      %1349 = vmatpush1.xpose.msra.mxu0 0.0
      %1350 = vmatprep.subr.mxu0 0.0
      %1351 = vmatpush1.xpose.msra.mxu0 0.0
      %1352 = vmatprep.subr.mxu0 0.0
      %1353 = vmatpush1.xpose.msra.mxu0 0.0
      %1354 = vmatprep.subr.mxu0 0.0
      %1355 = vmatpush1.xpose.msra.mxu0 0.0
      %1356 = vmatprep.subr.mxu0 0.0
      %1357 = vmatpush1.xpose.msra.mxu0 0.0
      %1358 = vmatprep.subr.mxu0 0.0
      %1359 = vmatpush1.xpose.msra.mxu0 0.0
      %1360 = vmatprep.subr.mxu0 0.0
      %1361 = vmatpush1.xpose.msra.mxu0 0.0
      %1362 = vmatprep.subr.mxu0 0.0
      %1363 = vmatpush1.xpose.msra.mxu0 0.0
      %1364 = vmatprep.subr.mxu0 0.0
      %1365 = vmatpush1.xpose.msra.mxu0 0.0
      %1366 = vmatprep.subr.mxu0 0.0
      %1367 = vmatpush1.xpose.msra.mxu0 0.0
      %1368 = vmatprep.subr.mxu0 0.0
      %1369 = vmatpush1.xpose.msra.mxu0 0.0
      %1370 = vmatprep.subr.mxu0 0.0
      %1371 = vmatpush1.xpose.msra.mxu0 0.0
      %1372 = vmatprep.subr.mxu0 0.0
      %1373 = vmatpush1.xpose.msra.mxu0 0.0
      %1374 = vmatprep.subr.mxu0 0.0
      %1375 = vmatpush1.xpose.msra.mxu0 0.0
      %1376 = vmatprep.subr.mxu0 0.0
      %1377 = vmatpush1.xpose.msra.mxu0 0.0
      %1378 = vmatprep.subr.mxu0 0.0
      %1379 = vmatpush1.xpose.msra.mxu0 0.0
      %1380 = vmatprep.subr.mxu0 0.0
      %1381 = vmatpush1.xpose.msra.mxu0 0.0
      %1382 = vmatprep.subr.mxu0 0.0
      %1383 = vmatpush1.xpose.msra.mxu0 0.0
      %1384 = vmatprep.subr.mxu0 0.0
      %1385 = vmatpush1.xpose.msra.mxu0 0.0
      %1386 = vmatprep.subr.mxu0 0.0
      %1387 = vmatpush1.xpose.msra.mxu0 0.0
      %1388 = vmatprep.subr.mxu0 0.0
      %1389 = vmatpush1.xpose.msra.mxu0 0.0
      %1390 = vmatprep.subr.mxu0 0.0
      %1391 = vmatpush1.xpose.msra.mxu0 0.0
      %1392 = vmatprep.mubr.f32.mxu0 0.0
      %1393 = vmatmul.mubr.f32.gmra.mrb[0].mxu0 %v1318
      %v1394 = vpop.f32.mrb[0].mxu0
      %v1395 = vadd.f32 0.0, %v1394
      %v1396 = vpop.f32.mrb[0].mxu0
      %1397 = vmatprep.mubr.f32.mxu0 0.0
      %1398 = vmatmul.mubr.f32.gmra.mrb[0].mxu0 %v1320
      %v1399 = vpop.f32.mrb[0].mxu0
      %v1400 = vadd.f32 0.0, %v1399
      %v1401 = vpop.f32.mrb[0].mxu0
      %1402 = vdwg.mxu0
      %v1403 = vmul.f32 %v1395, 0.17677669
      %v1404 = vmul.f32 %v1400, 0.17677669
      %v1405 = vadd.f32 %v1403, %v986
      %v1406 = vadd.f32 %v1404, %v986
      %v1407 = vsel %vm990, %v1405, -inf
      %1408 = vmax.xlane.f32.xlu0 %v1407
      %v1409 = vpop.xlane.xlu0 %1408
      %v1410 = vsel %vm990, %v1406, -inf
      %1411 = vmax.xlane.f32.xlu0 %v1410
      %v1412 = vpop.xlane.xlu0 %1411
      %v1413 = vsub.f32 %v1405, %v1409
      %v1414 = vsub.f32 %v1406, %v1412
      %v1415 = vmul.f32 %v1413, 1.442695
      %v1416 = vpow.pop %v1415
      %v1417 = vmul.f32 %v1414, 1.442695
      %v1418 = vpow.pop %v1417
      %v1419 = vsel %vm990, %v1416, 0.0
      %1420 = vadd.xlane.f32.xlu0 %v1419
      %v1421 = vpop.xlane.xlu0 %1420
      %v1422 = vsel %vm990, %v1418, 0.0
      %1423 = vadd.xlane.f32.xlu0 %v1422
      %v1424 = vpop.xlane.xlu0 %1423
      %v1425 = vrcp.pop %v1421
      %v1426 = vmul.f32 %v1416, %v1425
      %v1427 = vrcp.pop %v1424
      %v1428 = vmul.f32 %v1418, %v1427
      %1429 = vrot.lane.b32.xlu0 %v875, 64
      %v1430 = vpop.permute.xlu0 %1429
      %1431 = vrot.lane.b32.xlu0 %v880, 64
      %v1432 = vpop.permute.xlu0 %1431
      %1433 = vrot.lane.b32.xlu0 %v885, 64
      %v1434 = vpop.permute.xlu0 %1433
      %v1439 = vsel %vm990, %v1426, 0
      %v1442 = vsel %vm990, %v1428, 0
      %1444 = vmatprep.subr.mxu0 0.0
      %1445 = vmatpush1.msra.mxu0 %v1430
      %1446 = vmatprep.subr.mxu0 0.0
      %1447 = vmatpush1.msra.mxu0 %v1432
      %1448 = vmatprep.subr.mxu0 0.0
      %1449 = vmatpush1.msra.mxu0 %v1434
      %1450 = vmatprep.subr.mxu0 0.0
      %1451 = vmatpush1.msra.mxu0 0.0
      %1452 = vmatprep.subr.mxu0 0.0
      %1453 = vmatpush1.msra.mxu0 0.0
      %1454 = vmatprep.subr.mxu0 0.0
      %1455 = vmatpush1.msra.mxu0 0.0
      %1456 = vmatprep.subr.mxu0 0.0
      %1457 = vmatpush1.msra.mxu0 0.0
      %1458 = vmatprep.subr.mxu0 0.0
      %1459 = vmatpush1.msra.mxu0 0.0
      %1460 = vmatprep.subr.mxu0 0.0
      %1461 = vmatpush1.msra.mxu0 0.0
      %1462 = vmatprep.subr.mxu0 0.0
      %1463 = vmatpush1.msra.mxu0 0.0
      %1464 = vmatprep.subr.mxu0 0.0
      %1465 = vmatpush1.msra.mxu0 0.0
      %1466 = vmatprep.subr.mxu0 0.0
      %1467 = vmatpush1.msra.mxu0 0.0
      %1468 = vmatprep.subr.mxu0 0.0
      %1469 = vmatpush1.msra.mxu0 0.0
      %1470 = vmatprep.subr.mxu0 0.0
      %1471 = vmatpush1.msra.mxu0 0.0
      %1472 = vmatprep.subr.mxu0 0.0
      %1473 = vmatpush1.msra.mxu0 0.0
      %1474 = vmatprep.subr.mxu0 0.0
      %1475 = vmatpush1.msra.mxu0 0.0
      %1476 = vmatprep.subr.mxu0 0.0
      %1477 = vmatpush1.msra.mxu0 0.0
      %1478 = vmatprep.subr.mxu0 0.0
      %1479 = vmatpush1.msra.mxu0 0.0
      %1480 = vmatprep.subr.mxu0 0.0
      %1481 = vmatpush1.msra.mxu0 0.0
      %1482 = vmatprep.subr.mxu0 0.0
      %1483 = vmatpush1.msra.mxu0 0.0
      %1484 = vmatprep.subr.mxu0 0.0
      %1485 = vmatpush1.msra.mxu0 0.0
      %1486 = vmatprep.subr.mxu0 0.0
      %1487 = vmatpush1.msra.mxu0 0.0
      %1488 = vmatprep.subr.mxu0 0.0
      %1489 = vmatpush1.msra.mxu0 0.0
      %1490 = vmatprep.subr.mxu0 0.0
      %1491 = vmatpush1.msra.mxu0 0.0
      %1492 = vmatprep.subr.mxu0 0.0
      %1493 = vmatpush1.msra.mxu0 0.0
      %1494 = vmatprep.subr.mxu0 0.0
      %1495 = vmatpush1.msra.mxu0 0.0
      %1496 = vmatprep.subr.mxu0 0.0
      %1497 = vmatpush1.msra.mxu0 0.0
      %1498 = vmatprep.subr.mxu0 0.0
      %1499 = vmatpush1.msra.mxu0 0.0
      %1500 = vmatprep.subr.mxu0 0.0
      %1501 = vmatpush1.msra.mxu0 0.0
      %1502 = vmatprep.subr.mxu0 0.0
      %1503 = vmatpush1.msra.mxu0 0.0
      %1504 = vmatprep.subr.mxu0 0.0
      %1505 = vmatpush1.msra.mxu0 0.0
      %1506 = vmatprep.subr.mxu0 0.0
      %1507 = vmatpush1.msra.mxu0 0.0
      %1508 = vmatprep.mubr.f32.mxu0 0.0
      %1509 = vmatmul.mubr.f32.gmra.mrb[0].mxu0 %v1439
      %v1510 = vpop.f32.mrb[0].mxu0
      %v1511 = vadd.f32 0.0, %v1510
      %v1512 = vpop.f32.mrb[0].mxu0
      %1513 = vmatprep.mubr.f32.mxu0 0.0
      %1514 = vmatmul.mubr.f32.gmra.mrb[0].mxu0 %v1442
      %v1515 = vpop.f32.mrb[0].mxu0
      %v1516 = vadd.f32 0.0, %v1515
      %v1517 = vpop.f32.mrb[0].mxu0
      %1518 = vdwg.mxu0
      %1519 = vrot.lane.b32.xlu0 %v674, 32
      %v1520 = vpop.permute.xlu0 %1519
      %1521 = vrot.lane.b32.xlu0 %v679, 32
      %v1522 = vpop.permute.xlu0 %1521
      %1523 = vrot.lane.b32.xlu0 %v772, 32
      %v1524 = vpop.permute.xlu0 %1523
      %1525 = vrot.lane.b32.xlu0 %v777, 32
      %v1526 = vpop.permute.xlu0 %1525
      %1527 = vrot.lane.b32.xlu0 %v782, 32
      %v1528 = vpop.permute.xlu0 %1527
      %v1529 = vsel %vm889, %v1520, 0
      %v1531 = vsel %vm889, %v1522, 0
      %v1533 = vsel %vm889, %v1524, 0
      %v1535 = vsel %vm889, %v1526, 0
      %v1537 = vsel %vm889, %v1528, 0
      %1539 = vmatprep.subr.mxu0 0.0
      %1540 = vmatpush1.xpose.msra.mxu0 %v1533
      %1541 = vmatprep.subr.mxu0 0.0
      %1542 = vmatpush1.xpose.msra.mxu0 %v1535
      %1543 = vmatprep.subr.mxu0 0.0
      %1544 = vmatpush1.xpose.msra.mxu0 %v1537
      %1545 = vmatprep.subr.mxu0 0.0
      %1546 = vmatpush1.xpose.msra.mxu0 0.0
      %1547 = vmatprep.subr.mxu0 0.0
      %1548 = vmatpush1.xpose.msra.mxu0 0.0
      %1549 = vmatprep.subr.mxu0 0.0
      %1550 = vmatpush1.xpose.msra.mxu0 0.0
      %1551 = vmatprep.subr.mxu0 0.0
      %1552 = vmatpush1.xpose.msra.mxu0 0.0
      %1553 = vmatprep.subr.mxu0 0.0
      %1554 = vmatpush1.xpose.msra.mxu0 0.0
      %1555 = vmatprep.subr.mxu0 0.0
      %1556 = vmatpush1.xpose.msra.mxu0 0.0
      %1557 = vmatprep.subr.mxu0 0.0
      %1558 = vmatpush1.xpose.msra.mxu0 0.0
      %1559 = vmatprep.subr.mxu0 0.0
      %1560 = vmatpush1.xpose.msra.mxu0 0.0
      %1561 = vmatprep.subr.mxu0 0.0
      %1562 = vmatpush1.xpose.msra.mxu0 0.0
      %1563 = vmatprep.subr.mxu0 0.0
      %1564 = vmatpush1.xpose.msra.mxu0 0.0
      %1565 = vmatprep.subr.mxu0 0.0
      %1566 = vmatpush1.xpose.msra.mxu0 0.0
      %1567 = vmatprep.subr.mxu0 0.0
      %1568 = vmatpush1.xpose.msra.mxu0 0.0
      %1569 = vmatprep.subr.mxu0 0.0
      %1570 = vmatpush1.xpose.msra.mxu0 0.0
      %1571 = vmatprep.subr.mxu0 0.0
      %1572 = vmatpush1.xpose.msra.mxu0 0.0
      %1573 = vmatprep.subr.mxu0 0.0
      %1574 = vmatpush1.xpose.msra.mxu0 0.0
      %1575 = vmatprep.subr.mxu0 0.0
      %1576 = vmatpush1.xpose.msra.mxu0 0.0
      %1577 = vmatprep.subr.mxu0 0.0
      %1578 = vmatpush1.xpose.msra.mxu0 0.0
      %1579 = vmatprep.subr.mxu0 0.0
      %1580 = vmatpush1.xpose.msra.mxu0 0.0
      %1581 = vmatprep.subr.mxu0 0.0
      %1582 = vmatpush1.xpose.msra.mxu0 0.0
      %1583 = vmatprep.subr.mxu0 0.0
      %1584 = vmatpush1.xpose.msra.mxu0 0.0
      %1585 = vmatprep.subr.mxu0 0.0
      %1586 = vmatpush1.xpose.msra.mxu0 0.0
      %1587 = vmatprep.subr.mxu0 0.0
      %1588 = vmatpush1.xpose.msra.mxu0 0.0
      %1589 = vmatprep.subr.mxu0 0.0
      %1590 = vmatpush1.xpose.msra.mxu0 0.0
      %1591 = vmatprep.subr.mxu0 0.0
      %1592 = vmatpush1.xpose.msra.mxu0 0.0
      %1593 = vmatprep.subr.mxu0 0.0
      %1594 = vmatpush1.xpose.msra.mxu0 0.0
      %1595 = vmatprep.subr.mxu0 0.0
      %1596 = vmatpush1.xpose.msra.mxu0 0.0
      %1597 = vmatprep.subr.mxu0 0.0
      %1598 = vmatpush1.xpose.msra.mxu0 0.0
      %1599 = vmatprep.subr.mxu0 0.0
      %1600 = vmatpush1.xpose.msra.mxu0 0.0
      %1601 = vmatprep.subr.mxu0 0.0
      %1602 = vmatpush1.xpose.msra.mxu0 0.0
      %1603 = vmatprep.mubr.f32.mxu0 0.0
      %1604 = vmatmul.mubr.f32.gmra.mrb[0].mxu0 %v1529
      %v1605 = vpop.f32.mrb[0].mxu0
      %v1606 = vadd.f32 0.0, %v1605
      %v1607 = vpop.f32.mrb[0].mxu0
      %1608 = vmatprep.mubr.f32.mxu0 0.0
      %1609 = vmatmul.mubr.f32.gmra.mrb[0].mxu0 %v1531
      %v1610 = vpop.f32.mrb[0].mxu0
      %v1611 = vadd.f32 0.0, %v1610
      %v1612 = vpop.f32.mrb[0].mxu0
      %1613 = vdwg.mxu0
      %v1614 = vmul.f32 %v1606, 0.17677669
      %v1615 = vmul.f32 %v1611, 0.17677669
      %v1616 = vadd.f32 %v1614, %v986
      %v1617 = vadd.f32 %v1615, %v986
      %v1618 = vsel %vm990, %v1616, -inf
      %1619 = vmax.xlane.f32.xlu0 %v1618
      %v1620 = vpop.xlane.xlu0 %1619
      %v1621 = vsel %vm990, %v1617, -inf
      %1622 = vmax.xlane.f32.xlu0 %v1621
      %v1623 = vpop.xlane.xlu0 %1622
      %v1624 = vsub.f32 %v1616, %v1620
      %v1625 = vsub.f32 %v1617, %v1623
      %v1626 = vmul.f32 %v1624, 1.442695
      %v1627 = vpow.pop %v1626
      %v1628 = vmul.f32 %v1625, 1.442695
      %v1629 = vpow.pop %v1628
      %v1630 = vsel %vm990, %v1627, 0.0
      %1631 = vadd.xlane.f32.xlu0 %v1630
      %v1632 = vpop.xlane.xlu0 %1631
      %v1633 = vsel %vm990, %v1629, 0.0
      %1634 = vadd.xlane.f32.xlu0 %v1633
      %v1635 = vpop.xlane.xlu0 %1634
      %v1636 = vrcp.pop %v1632
      %v1637 = vmul.f32 %v1627, %v1636
      %v1638 = vrcp.pop %v1635
      %v1639 = vmul.f32 %v1629, %v1638
      %1640 = vrot.lane.b32.xlu0 %v875, 32
      %v1641 = vpop.permute.xlu0 %1640
      %1642 = vrot.lane.b32.xlu0 %v880, 32
      %v1643 = vpop.permute.xlu0 %1642
      %1644 = vrot.lane.b32.xlu0 %v885, 32
      %v1645 = vpop.permute.xlu0 %1644
      %v1650 = vsel %vm990, %v1637, 0
      %v1653 = vsel %vm990, %v1639, 0
      %1655 = vmatprep.subr.mxu0 0.0
      %1656 = vmatpush1.msra.mxu0 %v1641
      %1657 = vmatprep.subr.mxu0 0.0
      %1658 = vmatpush1.msra.mxu0 %v1643
      %1659 = vmatprep.subr.mxu0 0.0
      %1660 = vmatpush1.msra.mxu0 %v1645
      %1661 = vmatprep.subr.mxu0 0.0
      %1662 = vmatpush1.msra.mxu0 0.0
      %1663 = vmatprep.subr.mxu0 0.0
      %1664 = vmatpush1.msra.mxu0 0.0
      %1665 = vmatprep.subr.mxu0 0.0
      %1666 = vmatpush1.msra.mxu0 0.0
      %1667 = vmatprep.subr.mxu0 0.0
      %1668 = vmatpush1.msra.mxu0 0.0
      %1669 = vmatprep.subr.mxu0 0.0
      %1670 = vmatpush1.msra.mxu0 0.0
      %1671 = vmatprep.subr.mxu0 0.0
      %1672 = vmatpush1.msra.mxu0 0.0
      %1673 = vmatprep.subr.mxu0 0.0
      %1674 = vmatpush1.msra.mxu0 0.0
      %1675 = vmatprep.subr.mxu0 0.0
      %1676 = vmatpush1.msra.mxu0 0.0
      %1677 = vmatprep.subr.mxu0 0.0
      %1678 = vmatpush1.msra.mxu0 0.0
      %1679 = vmatprep.subr.mxu0 0.0
      %1680 = vmatpush1.msra.mxu0 0.0
      %1681 = vmatprep.subr.mxu0 0.0
      %1682 = vmatpush1.msra.mxu0 0.0
      %1683 = vmatprep.subr.mxu0 0.0
      %1684 = vmatpush1.msra.mxu0 0.0
      %1685 = vmatprep.subr.mxu0 0.0
      %1686 = vmatpush1.msra.mxu0 0.0
      %1687 = vmatprep.subr.mxu0 0.0
      %1688 = vmatpush1.msra.mxu0 0.0
      %1689 = vmatprep.subr.mxu0 0.0
      %1690 = vmatpush1.msra.mxu0 0.0
      %1691 = vmatprep.subr.mxu0 0.0
      %1692 = vmatpush1.msra.mxu0 0.0
      %1693 = vmatprep.subr.mxu0 0.0
      %1694 = vmatpush1.msra.mxu0 0.0
      %1695 = vmatprep.subr.mxu0 0.0
      %1696 = vmatpush1.msra.mxu0 0.0
      %1697 = vmatprep.subr.mxu0 0.0
      %1698 = vmatpush1.msra.mxu0 0.0
      %1699 = vmatprep.subr.mxu0 0.0
      %1700 = vmatpush1.msra.mxu0 0.0
      %1701 = vmatprep.subr.mxu0 0.0
      %1702 = vmatpush1.msra.mxu0 0.0
      %1703 = vmatprep.subr.mxu0 0.0
      %1704 = vmatpush1.msra.mxu0 0.0
      %1705 = vmatprep.subr.mxu0 0.0
      %1706 = vmatpush1.msra.mxu0 0.0
      %1707 = vmatprep.subr.mxu0 0.0
      %1708 = vmatpush1.msra.mxu0 0.0
      %1709 = vmatprep.subr.mxu0 0.0
      %1710 = vmatpush1.msra.mxu0 0.0
      %1711 = vmatprep.subr.mxu0 0.0
      %1712 = vmatpush1.msra.mxu0 0.0
      %1713 = vmatprep.subr.mxu0 0.0
      %1714 = vmatpush1.msra.mxu0 0.0
      %1715 = vmatprep.subr.mxu0 0.0
      %1716 = vmatpush1.msra.mxu0 0.0
      %1717 = vmatprep.subr.mxu0 0.0
      %1718 = vmatpush1.msra.mxu0 0.0
      %1719 = vmatprep.mubr.f32.mxu0 0.0
      %1720 = vmatmul.mubr.f32.gmra.mrb[0].mxu0 %v1650
      %v1721 = vpop.f32.mrb[0].mxu0
      %v1722 = vadd.f32 0.0, %v1721
      %v1723 = vpop.f32.mrb[0].mxu0
      %1724 = vmatprep.mubr.f32.mxu0 0.0
      %1725 = vmatmul.mubr.f32.gmra.mrb[0].mxu0 %v1653
      %v1726 = vpop.f32.mrb[0].mxu0
      %v1727 = vadd.f32 0.0, %v1726
      %v1728 = vpop.f32.mrb[0].mxu0
      %1729 = vdwg.mxu0
      %1732 = vrot.lane.b32.xlu0 %v1300, 32
      %v1733 = vpop.permute.xlu0 %1732
      %1734 = vrot.lane.b32.xlu0 %v1305, 32
      %v1735 = vpop.permute.xlu0 %1734
      %1740 = vrot.lane.b32.xlu0 %v1511, 64
      %v1741 = vpop.permute.xlu0 %1740
      %1742 = vrot.lane.b32.xlu0 %v1516, 64
      %v1743 = vpop.permute.xlu0 %1742
      %1748 = vrot.lane.b32.xlu0 %v1722, 96
      %v1749 = vpop.permute.xlu0 %1748
      %1750 = vrot.lane.b32.xlu0 %v1727, 96
      %v1751 = vpop.permute.xlu0 %1750
      %v1754 = vsel %vm889, %v1086, %v1733
      %v1755 = vsel %vm889, %v1091, %v1735
      %vm1756 = vcmask 523264
      %v1757 = vsel %vm1756, %v1754, %v1741
      %v1758 = vsel %vm1756, %v1755, %v1743
      %vm1759 = vcmask 785408
      %v1760 = vsel %vm1759, %v1757, %v1749
      %v1761 = vsel %vm1759, %v1758, %v1751
      %v1762 = vld [vmem:[%s11] sm:$0xff]
      %v1763 = vld [vmem:[%s11 + $0x8] sm:$0xff]
      %v1764 = vld [vmem:[%s11 + $0x10] sm:$0xff]
      %v1765 = vld [vmem:[%s11 + $0x18] sm:$0xff]
      %v1766 = vld [vmem:[%s11 + $0x20] sm:$0xff]
      %v1767 = vld [vmem:[%s11 + $0x28] sm:$0xff]
      %v1768 = vld [vmem:[%s11 + $0x30] sm:$0xff]
      %v1769 = vld [vmem:[%s11 + $0x38] sm:$0xff]
      %v1770 = vld [vmem:[%s11 + $0x40] sm:$0xff]
      %v1771 = vld [vmem:[%s11 + $0x48] sm:$0xff]
      %v1772 = vld [vmem:[%s11 + $0x50] sm:$0xff]
      %v1773 = vld [vmem:[%s11 + $0x58] sm:$0xff]
      %v1774 = vld [vmem:[%s11 + $0x60] sm:$0xff]
      %v1775 = vld [vmem:[%s11 + $0x68] sm:$0xff]
      %v1776 = vld [vmem:[%s11 + $0x70] sm:$0xff]
      %v1777 = vld [vmem:[%s11 + $0x78] sm:$0xff]
      %v1778 = vld [vmem:[%s12] sm:$0x1]
      %v1780 = vlaneseq
      %v1781 = vshrl.u32 %v1780, 7
      %v1782 = vsub.s32 0, %v1781
      %v1783 = vrot.slane %v1778, %v1782
      %1785 = vmatprep.subr.mxu0 0.0
      %1786 = vmatpush1.msra.mxu0 %v1762
      %1787 = vmatprep.subr.mxu0 0.0
      %1788 = vmatpush1.msra.mxu0 %v1763
      %1789 = vmatprep.subr.mxu0 0.0
      %1790 = vmatpush1.msra.mxu0 %v1764
      %1791 = vmatprep.subr.mxu0 0.0
      %1792 = vmatpush1.msra.mxu0 %v1765
      %1793 = vmatprep.subr.mxu0 0.0
      %1794 = vmatpush1.msra.mxu0 %v1766
      %1795 = vmatprep.subr.mxu0 0.0
      %1796 = vmatpush1.msra.mxu0 %v1767
      %1797 = vmatprep.subr.mxu0 0.0
      %1798 = vmatpush1.msra.mxu0 %v1768
      %1799 = vmatprep.subr.mxu0 0.0
      %1800 = vmatpush1.msra.mxu0 %v1769
      %1801 = vmatprep.subr.mxu0 0.0
      %1802 = vmatpush1.msra.mxu0 %v1770
      %1803 = vmatprep.subr.mxu0 0.0
      %1804 = vmatpush1.msra.mxu0 %v1771
      %1805 = vmatprep.subr.mxu0 0.0
      %1806 = vmatpush1.msra.mxu0 %v1772
      %1807 = vmatprep.subr.mxu0 0.0
      %1808 = vmatpush1.msra.mxu0 %v1773
      %1809 = vmatprep.subr.mxu0 0.0
      %1810 = vmatpush1.msra.mxu0 %v1774
      %1811 = vmatprep.subr.mxu0 0.0
      %1812 = vmatpush1.msra.mxu0 %v1775
      %1813 = vmatprep.subr.mxu0 0.0
      %1814 = vmatpush1.msra.mxu0 %v1776
      %1815 = vmatprep.subr.mxu0 0.0
      %1816 = vmatpush1.msra.mxu0 %v1777
      %1817 = vmatprep.subr.mxu0 0.0
      %1818 = vmatpush1.msra.mxu0 0.0
      %1819 = vmatprep.subr.mxu0 0.0
      %1820 = vmatpush1.msra.mxu0 0.0
      %1821 = vmatprep.subr.mxu0 0.0
      %1822 = vmatpush1.msra.mxu0 0.0
      %1823 = vmatprep.subr.mxu0 0.0
      %1824 = vmatpush1.msra.mxu0 0.0
      %1825 = vmatprep.subr.mxu0 0.0
      %1826 = vmatpush1.msra.mxu0 0.0
      %1827 = vmatprep.subr.mxu0 0.0
      %1828 = vmatpush1.msra.mxu0 0.0
      %1829 = vmatprep.subr.mxu0 0.0
      %1830 = vmatpush1.msra.mxu0 0.0
      %1831 = vmatprep.subr.mxu0 0.0
      %1832 = vmatpush1.msra.mxu0 0.0
      %1833 = vmatprep.subr.mxu0 0.0
      %1834 = vmatpush1.msra.mxu0 0.0
      %1835 = vmatprep.subr.mxu0 0.0
      %1836 = vmatpush1.msra.mxu0 0.0
      %1837 = vmatprep.subr.mxu0 0.0
      %1838 = vmatpush1.msra.mxu0 0.0
      %1839 = vmatprep.subr.mxu0 0.0
      %1840 = vmatpush1.msra.mxu0 0.0
      %1841 = vmatprep.subr.mxu0 0.0
      %1842 = vmatpush1.msra.mxu0 0.0
      %1843 = vmatprep.subr.mxu0 0.0
      %1844 = vmatpush1.msra.mxu0 0.0
      %1845 = vmatprep.subr.mxu0 0.0
      %1846 = vmatpush1.msra.mxu0 0.0
      %1847 = vmatprep.subr.mxu0 0.0
      %1848 = vmatpush1.msra.mxu0 0.0
      %1849 = vmatprep.mubr.f32.mxu0 0.0
      %1850 = vmatmul.mubr.f32.gmra.mrb[0].mxu0 %v1760
      %v1851 = vpop.f32.mrb[0].mxu0
      %v1852 = vadd.f32 %v1783, %v1851
      %v1853 = vpop.f32.mrb[0].mxu0
      %1854 = vmatprep.mubr.f32.mxu0 0.0
      %1855 = vmatmul.mubr.f32.gmra.mrb[0].mxu0 %v1761
      %v1856 = vpop.f32.mrb[0].mxu0
      %v1857 = vadd.f32 %v1783, %v1856
      %v1858 = vpop.f32.mrb[0].mxu0
      %1859 = vdwg.mxu0
      %v1860 = vadd.f32 %v569, %v1852
      %v1861 = vadd.f32 %v570, %v1857
      %v1862 = vld [vmem:[%s13] sm:$0x1]
      %v1863 = vld [vmem:[%s14] sm:$0x1]
      %1864 = vadd.xlane.f32.xlu0 %v1860
      %v1865 = vpop.xlane.xlu0 %1864
      %1866 = vadd.xlane.f32.xlu0 %v1861
      %v1867 = vpop.xlane.xlu0 %1866
      %v1868 = vrcp.pop 128.0
      %v1869 = vmul.f32 %v1865, %v1868
      %v1870 = vmul.f32 %v1867, %v1868
      %v1871 = vsub.f32 %v1860, %v1869
      %v1872 = vsub.f32 %v1861, %v1870
      %v1873 = vmul.f32 %v1871, %v1871
      %v1874 = vmul.f32 %v1872, %v1872
      %1875 = vadd.xlane.f32.xlu0 %v1873
      %v1876 = vpop.xlane.xlu0 %1875
      %1877 = vadd.xlane.f32.xlu0 %v1874
      %v1878 = vpop.xlane.xlu0 %1877
      %v1879 = vmul.f32 %v1876, %v1868
      %v1880 = vmul.f32 %v1878, %v1868
      %v1881 = vadd.f32 %v1879, 1e-05
      %v1882 = vadd.f32 %v1880, 1e-05
      %v1883 = vrsqrt.pop %v1881
      %v1884 = vrsqrt.pop %v1882
      %v1885 = vmul.f32 %v1871, %v1883
      %v1886 = vmul.f32 %v1872, %v1884
      %v1888 = vlaneseq
      %v1889 = vshrl.u32 %v1888, 7
      %v1890 = vsub.s32 0, %v1889
      %v1891 = vrot.slane %v1862, %v1890
      %v1893 = vmul.f32 %v1885, %v1891
      %v1894 = vmul.f32 %v1886, %v1891
      %v1896 = vlaneseq
      %v1897 = vshrl.u32 %v1896, 7
      %v1898 = vsub.s32 0, %v1897
      %v1899 = vrot.slane %v1863, %v1898
      %v1901 = vadd.f32 %v1893, %v1899
      %v1902 = vadd.f32 %v1894, %v1899
      %1903 = vst [vmem:[%s568] sm:$0xff] %v1901
      %1904 = vst [vmem:[%s568 + $0x8] sm:$0xff] %v1902
      %p1905 = scmp.lt.s32.totalorder %s26, 1
      %s1906 = scalar_select %p1905, %s26, 1
      %s1907 = smul.addr %s1906, 2
      %s1908 = smul.addr %s1907, 8
      %s1909 = scalar_lea.vmem %s15, %s1908
      // Predicated region
      $region81: #{transformer_layer_forward.9} parent=79 // pred_check
        %p1910 = pneg %p384
      $region82: #{transformer_layer_forward.9} parent=79 // pred_check_branch
        %1912 = sbr.rel (%p1910) target = $region84
      $region83: #{transformer_layer_forward.9} parent=79 // pred_region
        _
      $region84: #{transformer_layer_forward.9} parent=79 // pred_fallthru
        _
    $region80: #{transformer_layer_forward.9} parent=5 // pred_fallthru
      _
    %p1913 = scmp.le.s32.totalorder 2, %s21
    // Predicated region
    $region85: #{transformer_layer_forward.9} parent=5 // pred_check
      %p1914 = pneg %p1913
    $region86: #{transformer_layer_forward.9} parent=5 // pred_check_branch
      %1916 = sbr.rel (%p1914) target = $region88
    $region87: #{transformer_layer_forward.9} parent=5 // pred_region
      %s1917 = ssub.s32 %s21, 2
      // Predicated region
      $region89: #{transformer_layer_forward.9} parent=87 // pred_check
        %p1918 = pneg %p390
      $region90: #{transformer_layer_forward.9} parent=87 // pred_check_branch
        %1920 = sbr.rel (%p1918) target = $region92
      $region91: #{transformer_layer_forward.9} parent=87 // pred_region
        %p1921 = scmp.lt.s32.totalorder %s27, 1
        %s1922 = scalar_select %p1921, %s27, 1
        %s1923 = smul.addr %s1922, 2
        %s1924 = smul.addr %s1923, 8
        %s1925 = scalar_lea.vmem %s15, %s1924
      $region92: #{transformer_layer_forward.9} parent=87 // pred_fallthru
        _
    $region88: #{transformer_layer_forward.9} parent=5 // pred_fallthru
      _
  $region6: #{transformer_layer_forward.9} parent=0 // loop_footer
    %s25 = sadd.s32 1, %s21
  $region7: #{transformer_layer_forward.9} parent=0 // loop_footer_branch
    %20 = sbr.rel target = $region3
  $region8: #{transformer_layer_forward.9} parent=0 // loop_exit
    _

// kernel: transformer_layer_forward.8
$region0: #{transformer_layer_forward.8}
  #allocation0 [shape = 'u32[]', space=smem, size = 0x4, offset = 0x4, fixed_abs, tag = 'smem constant byte address 0x4 - core index']
  #allocation1 [shape = 'u32[144,128]{1,0:T(1,128)}', space=vmem, size = 0x12000, scoped, tag = 'internal scratch']
  %s0 = inlined_call_operand.vmem [shape: f32[2,16,128], index: 0, kind: input, shape index: {}, may-alias: {0,2}]
  %s1 = inlined_call_operand.vmem [shape: f32[2,16,128], index: 1, kind: input, shape index: {}, may-alias: {1,3}]
  %s2 = inlined_call_operand.vmem [shape: f32[2,16,128], index: 2, kind: input, shape index: {}, may-alias: {0,2}]
  %s3 = inlined_call_operand.vmem [shape: f32[2,16,128], index: 3, kind: input, shape index: {}, may-alias: {1,3}]
  %s4 = inlined_call_operand.vmem [shape: f32[2,1,16], index: 4, kind: input, shape index: {}]
  %s5 = inlined_call_operand.vmem [shape: f32[128,128], index: 5, kind: input, shape index: {}]
  %s6 = inlined_call_operand.vmem [shape: f32[1,128], index: 6, kind: input, shape index: {}]
  %s7 = inlined_call_operand.vmem [shape: f32[128,128], index: 7, kind: input, shape index: {}]
  %s8 = inlined_call_operand.vmem [shape: f32[1,128], index: 8, kind: input, shape index: {}]
  %s9 = inlined_call_operand.vmem [shape: f32[128,128], index: 9, kind: input, shape index: {}]
  %s10 = inlined_call_operand.vmem [shape: f32[1,128], index: 10, kind: input, shape index: {}]
  %s11 = inlined_call_operand.vmem [shape: f32[128,128], index: 11, kind: input, shape index: {}]
  %s12 = inlined_call_operand.vmem [shape: f32[1,128], index: 12, kind: input, shape index: {}]
  %s13 = inlined_call_operand.vmem [shape: f32[1,128], index: 13, kind: input, shape index: {}]
  %s14 = inlined_call_operand.vmem [shape: f32[1,128], index: 14, kind: input, shape index: {}]
  %s15 = inlined_call_operand.vmem [shape: f32[2,16,128], index: 15, kind: output, shape index: {}]
  %s16 = sld [smem:[#allocation0]]
  $region93: #{transformer_layer_forward.8} parent=0
    _
  %s18 = ssub.s32 1, %s16
  %s19 = scalar_select 0, %s18, %s16
  loop: start=0, step=1, limit=4
  $region2: #{transformer_layer_forward.8} parent=0 // loop_pre_header
    _
  $region3: #{transformer_layer_forward.8} parent=0 // loop_header
    %s21 = sphi 0, %s25
    %p22 = scmp.ge.s32.totalorder %s21, 4
    %s31 = sphi 0, %s33
    %s34 = sphi 0, %s31
    %s35 = sphi 0, %s34
    %s51 = sphi 0, %s35
    %s57 = sphi 0, %s59
    %s60 = sphi 0, %s57
    %s61 = sphi 0, %s60
    %s77 = sphi 0, %s61
    %s83 = sphi 0, %s85
    %s86 = sphi 0, %s83
    %s87 = sphi 0, %s86
    %s103 = sphi 0, %s87
    %s109 = sphi 0, %s111
    %s112 = sphi 0, %s109
    %s113 = sphi 0, %s112
    %s129 = sphi 0, %s113
    %s135 = sphi 0, %s137
    %s138 = sphi 0, %s135
    %s139 = sphi 0, %s138
    %s155 = sphi 0, %s139
    %s159 = sphi 0, %s159
    %s161 = sphi 0, %s159
    %s162 = sphi 0, %s161
    %s176 = sphi 0, %s162
    %s180 = sphi 0, %s180
    %s182 = sphi 0, %s180
    %s183 = sphi 0, %s182
    %s197 = sphi 0, %s183
    %s201 = sphi 0, %s201
    %s203 = sphi 0, %s201
    %s204 = sphi 0, %s203
    %s218 = sphi 0, %s204
    %s222 = sphi 0, %s222
    %s224 = sphi 0, %s222
    %s225 = sphi 0, %s224
    %s239 = sphi 0, %s225
    %s243 = sphi 0, %s243
    %s245 = sphi 0, %s243
    %s246 = sphi 0, %s245
    %s260 = sphi 0, %s246
    %s264 = sphi 0, %s264
    %s266 = sphi 0, %s264
    %s267 = sphi 0, %s266
    %s281 = sphi 0, %s267
    %s285 = sphi 0, %s285
    %s287 = sphi 0, %s285
    %s288 = sphi 0, %s287
    %s302 = sphi 0, %s288
    %s306 = sphi 0, %s306
    %s308 = sphi 0, %s306
    %s309 = sphi 0, %s308
    %s323 = sphi 0, %s309
    %s327 = sphi 0, %s327
    %s329 = sphi 0, %s327
    %s330 = sphi 0, %s329
    %s344 = sphi 0, %s330
    %s348 = sphi 0, %s348
    %s350 = sphi 0, %s348
    %s351 = sphi 0, %s350
    %s365 = sphi 0, %s351
    %s371 = sphi 0, %s373
    %s374 = sphi 0, %s371
    %s375 = sphi 0, %s374
    %s391 = sphi 0, %s375
  $region4: #{transformer_layer_forward.8} parent=0 // loop_header_branch
    %24 = sbr.rel (%p22) target = $region8
  $region5: #{transformer_layer_forward.8} parent=0 // loop_body
    %s26 = ssub.s32 %s21, 1
    %s27 = ssub.s32 %s21, 2
    %s28 = sadd.s32 %s21, 1
    %s29 = ssub.s32 %s21, %s28
    %p30 = scmp.eq.s32.totalorder %s29, 0
    %s32 = sadd.s32 %s31, 1
    %s33 = scalar_select %p30, %s31, %s32
    %p36 = pneg %p30
    %p37 = scmp.eq.s32.totalorder %s21, 1
    %p38 = por %p36, %p37
    %p39 = scmp.ne.s32.totalorder %s31, %s34
    %p40 = scmp.eq.s32.totalorder %s21, 0
    %p41 = por %p39, %p40
    %p42 = scmp.ne.s32.totalorder %s31, %s34
    %p43 = scmp.eq.s32.totalorder %s26, 1
    %p44 = por %p42, %p43
    %p45 = scmp.ne.s32.totalorder %s34, %s35
    %p46 = scmp.eq.s32.totalorder %s26, 0
    %p47 = por %p45, %p46
    %p48 = scmp.ne.s32.totalorder %s34, %s35
    %p49 = scmp.eq.s32.totalorder %s27, 1
    %p50 = por %p48, %p49
    %p52 = scmp.ne.s32.totalorder %s35, %s51
    %p53 = scmp.eq.s32.totalorder %s27, 0
    %p54 = por %p52, %p53
    %s55 = ssub.s32 %s21, %s28
    %p56 = scmp.eq.s32.totalorder %s55, 0
    %s58 = sadd.s32 %s57, 1
    %s59 = scalar_select %p56, %s57, %s58
    %p62 = pneg %p56
    %p63 = scmp.eq.s32.totalorder %s21, 1
    %p64 = por %p62, %p63
    %p65 = scmp.ne.s32.totalorder %s57, %s60
    %p66 = scmp.eq.s32.totalorder %s21, 0
    %p67 = por %p65, %p66
    %p68 = scmp.ne.s32.totalorder %s57, %s60
    %p69 = scmp.eq.s32.totalorder %s26, 1
    %p70 = por %p68, %p69
    %p71 = scmp.ne.s32.totalorder %s60, %s61
    %p72 = scmp.eq.s32.totalorder %s26, 0
    %p73 = por %p71, %p72
    %p74 = scmp.ne.s32.totalorder %s60, %s61
    %p75 = scmp.eq.s32.totalorder %s27, 1
    %p76 = por %p74, %p75
    %p78 = scmp.ne.s32.totalorder %s61, %s77
    %p79 = scmp.eq.s32.totalorder %s27, 0
    %p80 = por %p78, %p79
    %s81 = ssub.s32 %s21, %s28
    %p82 = scmp.eq.s32.totalorder %s81, 0
    %s84 = sadd.s32 %s83, 1
    %s85 = scalar_select %p82, %s83, %s84
    %p88 = pneg %p82
    %p89 = scmp.eq.s32.totalorder %s21, 1
    %p90 = por %p88, %p89
    %p91 = scmp.ne.s32.totalorder %s83, %s86
    %p92 = scmp.eq.s32.totalorder %s21, 0
    %p93 = por %p91, %p92
    %p94 = scmp.ne.s32.totalorder %s83, %s86
    %p95 = scmp.eq.s32.totalorder %s26, 1
    %p96 = por %p94, %p95
    %p97 = scmp.ne.s32.totalorder %s86, %s87
    %p98 = scmp.eq.s32.totalorder %s26, 0
    %p99 = por %p97, %p98
    %p100 = scmp.ne.s32.totalorder %s86, %s87
    %p101 = scmp.eq.s32.totalorder %s27, 1
    %p102 = por %p100, %p101
    %p104 = scmp.ne.s32.totalorder %s87, %s103
    %p105 = scmp.eq.s32.totalorder %s27, 0
    %p106 = por %p104, %p105
    %s107 = ssub.s32 %s21, %s28
    %p108 = scmp.eq.s32.totalorder %s107, 0
    %s110 = sadd.s32 %s109, 1
    %s111 = scalar_select %p108, %s109, %s110
    %p114 = pneg %p108
    %p115 = scmp.eq.s32.totalorder %s21, 1
    %p116 = por %p114, %p115
    %p117 = scmp.ne.s32.totalorder %s109, %s112
    %p118 = scmp.eq.s32.totalorder %s21, 0
    %p119 = por %p117, %p118
    %p120 = scmp.ne.s32.totalorder %s109, %s112
    %p121 = scmp.eq.s32.totalorder %s26, 1
    %p122 = por %p120, %p121
    %p123 = scmp.ne.s32.totalorder %s112, %s113
    %p124 = scmp.eq.s32.totalorder %s26, 0
    %p125 = por %p123, %p124
    %p126 = scmp.ne.s32.totalorder %s112, %s113
    %p127 = scmp.eq.s32.totalorder %s27, 1
    %p128 = por %p126, %p127
    %p130 = scmp.ne.s32.totalorder %s113, %s129
    %p131 = scmp.eq.s32.totalorder %s27, 0
    %p132 = por %p130, %p131
    %s133 = ssub.s32 %s21, %s28
    %p134 = scmp.eq.s32.totalorder %s133, 0
    %s136 = sadd.s32 %s135, 1
    %s137 = scalar_select %p134, %s135, %s136
    %p140 = pneg %p134
    %p141 = scmp.eq.s32.totalorder %s21, 1
    %p142 = por %p140, %p141
    %p143 = scmp.ne.s32.totalorder %s135, %s138
    %p144 = scmp.eq.s32.totalorder %s21, 0
    %p145 = por %p143, %p144
    %p146 = scmp.ne.s32.totalorder %s135, %s138
    %p147 = scmp.eq.s32.totalorder %s26, 1
    %p148 = por %p146, %p147
    %p149 = scmp.ne.s32.totalorder %s138, %s139
    %p150 = scmp.eq.s32.totalorder %s26, 0
    %p151 = por %p149, %p150
    %p152 = scmp.ne.s32.totalorder %s138, %s139
    %p153 = scmp.eq.s32.totalorder %s27, 1
    %p154 = por %p152, %p153
    %p156 = scmp.ne.s32.totalorder %s139, %s155
    %p157 = scmp.eq.s32.totalorder %s27, 0
    %p158 = por %p156, %p157
    %s160 = sadd.s32 %s159, 1
    %p163 = scmp.eq.s32.totalorder %s21, 1
    %p164 = scmp.ne.s32.totalorder %s159, %s161
    %p165 = scmp.eq.s32.totalorder %s21, 0
    %p166 = por %p164, %p165
    %p167 = scmp.ne.s32.totalorder %s159, %s161
    %p168 = scmp.eq.s32.totalorder %s26, 1
    %p169 = por %p167, %p168
    %p170 = scmp.ne.s32.totalorder %s161, %s162
    %p171 = scmp.eq.s32.totalorder %s26, 0
    %p172 = por %p170, %p171
    %p173 = scmp.ne.s32.totalorder %s161, %s162
    %p174 = scmp.eq.s32.totalorder %s27, 1
    %p175 = por %p173, %p174
    %p177 = scmp.ne.s32.totalorder %s162, %s176
    %p178 = scmp.eq.s32.totalorder %s27, 0
    %p179 = por %p177, %p178
    %s181 = sadd.s32 %s180, 1
    %p184 = scmp.eq.s32.totalorder %s21, 1
    %p185 = scmp.ne.s32.totalorder %s180, %s182
    %p186 = scmp.eq.s32.totalorder %s21, 0
    %p187 = por %p185, %p186
    %p188 = scmp.ne.s32.totalorder %s180, %s182
    %p189 = scmp.eq.s32.totalorder %s26, 1
    %p190 = por %p188, %p189
    %p191 = scmp.ne.s32.totalorder %s182, %s183
    %p192 = scmp.eq.s32.totalorder %s26, 0
    %p193 = por %p191, %p192
    %p194 = scmp.ne.s32.totalorder %s182, %s183
    %p195 = scmp.eq.s32.totalorder %s27, 1
    %p196 = por %p194, %p195
    %p198 = scmp.ne.s32.totalorder %s183, %s197
    %p199 = scmp.eq.s32.totalorder %s27, 0
    %p200 = por %p198, %p199
    %s202 = sadd.s32 %s201, 1
    %p205 = scmp.eq.s32.totalorder %s21, 1
    %p206 = scmp.ne.s32.totalorder %s201, %s203
    %p207 = scmp.eq.s32.totalorder %s21, 0
    %p208 = por %p206, %p207
    %p209 = scmp.ne.s32.totalorder %s201, %s203
    %p210 = scmp.eq.s32.totalorder %s26, 1
    %p211 = por %p209, %p210
    %p212 = scmp.ne.s32.totalorder %s203, %s204
    %p213 = scmp.eq.s32.totalorder %s26, 0
    %p214 = por %p212, %p213
    %p215 = scmp.ne.s32.totalorder %s203, %s204
    %p216 = scmp.eq.s32.totalorder %s27, 1
    %p217 = por %p215, %p216
    %p219 = scmp.ne.s32.totalorder %s204, %s218
    %p220 = scmp.eq.s32.totalorder %s27, 0
    %p221 = por %p219, %p220
    %s223 = sadd.s32 %s222, 1
    %p226 = scmp.eq.s32.totalorder %s21, 1
    %p227 = scmp.ne.s32.totalorder %s222, %s224
    %p228 = scmp.eq.s32.totalorder %s21, 0
    %p229 = por %p227, %p228
    %p230 = scmp.ne.s32.totalorder %s222, %s224
    %p231 = scmp.eq.s32.totalorder %s26, 1
    %p232 = por %p230, %p231
    %p233 = scmp.ne.s32.totalorder %s224, %s225
    %p234 = scmp.eq.s32.totalorder %s26, 0
    %p235 = por %p233, %p234
    %p236 = scmp.ne.s32.totalorder %s224, %s225
    %p237 = scmp.eq.s32.totalorder %s27, 1
    %p238 = por %p236, %p237
    %p240 = scmp.ne.s32.totalorder %s225, %s239
    %p241 = scmp.eq.s32.totalorder %s27, 0
    %p242 = por %p240, %p241
    %s244 = sadd.s32 %s243, 1
    %p247 = scmp.eq.s32.totalorder %s21, 1
    %p248 = scmp.ne.s32.totalorder %s243, %s245
    %p249 = scmp.eq.s32.totalorder %s21, 0
    %p250 = por %p248, %p249
    %p251 = scmp.ne.s32.totalorder %s243, %s245
    %p252 = scmp.eq.s32.totalorder %s26, 1
    %p253 = por %p251, %p252
    %p254 = scmp.ne.s32.totalorder %s245, %s246
    %p255 = scmp.eq.s32.totalorder %s26, 0
    %p256 = por %p254, %p255
    %p257 = scmp.ne.s32.totalorder %s245, %s246
    %p258 = scmp.eq.s32.totalorder %s27, 1
    %p259 = por %p257, %p258
    %p261 = scmp.ne.s32.totalorder %s246, %s260
    %p262 = scmp.eq.s32.totalorder %s27, 0
    %p263 = por %p261, %p262
    %s265 = sadd.s32 %s264, 1
    %p268 = scmp.eq.s32.totalorder %s21, 1
    %p269 = scmp.ne.s32.totalorder %s264, %s266
    %p270 = scmp.eq.s32.totalorder %s21, 0
    %p271 = por %p269, %p270
    %p272 = scmp.ne.s32.totalorder %s264, %s266
    %p273 = scmp.eq.s32.totalorder %s26, 1
    %p274 = por %p272, %p273
    %p275 = scmp.ne.s32.totalorder %s266, %s267
    %p276 = scmp.eq.s32.totalorder %s26, 0
    %p277 = por %p275, %p276
    %p278 = scmp.ne.s32.totalorder %s266, %s267
    %p279 = scmp.eq.s32.totalorder %s27, 1
    %p280 = por %p278, %p279
    %p282 = scmp.ne.s32.totalorder %s267, %s281
    %p283 = scmp.eq.s32.totalorder %s27, 0
    %p284 = por %p282, %p283
    %s286 = sadd.s32 %s285, 1
    %p289 = scmp.eq.s32.totalorder %s21, 1
    %p290 = scmp.ne.s32.totalorder %s285, %s287
    %p291 = scmp.eq.s32.totalorder %s21, 0
    %p292 = por %p290, %p291
    %p293 = scmp.ne.s32.totalorder %s285, %s287
    %p294 = scmp.eq.s32.totalorder %s26, 1
    %p295 = por %p293, %p294
    %p296 = scmp.ne.s32.totalorder %s287, %s288
    %p297 = scmp.eq.s32.totalorder %s26, 0
    %p298 = por %p296, %p297
    %p299 = scmp.ne.s32.totalorder %s287, %s288
    %p300 = scmp.eq.s32.totalorder %s27, 1
    %p301 = por %p299, %p300
    %p303 = scmp.ne.s32.totalorder %s288, %s302
    %p304 = scmp.eq.s32.totalorder %s27, 0
    %p305 = por %p303, %p304
    %s307 = sadd.s32 %s306, 1
    %p310 = scmp.eq.s32.totalorder %s21, 1
    %p311 = scmp.ne.s32.totalorder %s306, %s308
    %p312 = scmp.eq.s32.totalorder %s21, 0
    %p313 = por %p311, %p312
    %p314 = scmp.ne.s32.totalorder %s306, %s308
    %p315 = scmp.eq.s32.totalorder %s26, 1
    %p316 = por %p314, %p315
    %p317 = scmp.ne.s32.totalorder %s308, %s309
    %p318 = scmp.eq.s32.totalorder %s26, 0
    %p319 = por %p317, %p318
    %p320 = scmp.ne.s32.totalorder %s308, %s309
    %p321 = scmp.eq.s32.totalorder %s27, 1
    %p322 = por %p320, %p321
    %p324 = scmp.ne.s32.totalorder %s309, %s323
    %p325 = scmp.eq.s32.totalorder %s27, 0
    %p326 = por %p324, %p325
    %s328 = sadd.s32 %s327, 1
    %p331 = scmp.eq.s32.totalorder %s21, 1
    %p332 = scmp.ne.s32.totalorder %s327, %s329
    %p333 = scmp.eq.s32.totalorder %s21, 0
    %p334 = por %p332, %p333
    %p335 = scmp.ne.s32.totalorder %s327, %s329
    %p336 = scmp.eq.s32.totalorder %s26, 1
    %p337 = por %p335, %p336
    %p338 = scmp.ne.s32.totalorder %s329, %s330
    %p339 = scmp.eq.s32.totalorder %s26, 0
    %p340 = por %p338, %p339
    %p341 = scmp.ne.s32.totalorder %s329, %s330
    %p342 = scmp.eq.s32.totalorder %s27, 1
    %p343 = por %p341, %p342
    %p345 = scmp.ne.s32.totalorder %s330, %s344
    %p346 = scmp.eq.s32.totalorder %s27, 0
    %p347 = por %p345, %p346
    %s349 = sadd.s32 %s348, 1
    %p352 = scmp.eq.s32.totalorder %s21, 1
    %p353 = scmp.ne.s32.totalorder %s348, %s350
    %p354 = scmp.eq.s32.totalorder %s21, 0
    %p355 = por %p353, %p354
    %p356 = scmp.ne.s32.totalorder %s348, %s350
    %p357 = scmp.eq.s32.totalorder %s26, 1
    %p358 = por %p356, %p357
    %p359 = scmp.ne.s32.totalorder %s350, %s351
    %p360 = scmp.eq.s32.totalorder %s26, 0
    %p361 = por %p359, %p360
    %p362 = scmp.ne.s32.totalorder %s350, %s351
    %p363 = scmp.eq.s32.totalorder %s27, 1
    %p364 = por %p362, %p363
    %p366 = scmp.ne.s32.totalorder %s351, %s365
    %p367 = scmp.eq.s32.totalorder %s27, 0
    %p368 = por %p366, %p367
    %s369 = ssub.s32 %s21, %s28
    %p370 = scmp.eq.s32.totalorder %s369, 0
    %s372 = sadd.s32 %s371, 1
    %s373 = scalar_select %p370, %s371, %s372
    %p376 = pneg %p370
    %p377 = scmp.eq.s32.totalorder %s21, 1
    %p378 = por %p376, %p377
    %p379 = scmp.ne.s32.totalorder %s371, %s374
    %p380 = scmp.eq.s32.totalorder %s21, 0
    %p381 = por %p379, %p380
    %p382 = scmp.ne.s32.totalorder %s371, %s374
    %p383 = scmp.eq.s32.totalorder %s26, 1
    %p384 = por %p382, %p383
    %p385 = scmp.ne.s32.totalorder %s374, %s375
    %p386 = scmp.eq.s32.totalorder %s26, 0
    %p387 = por %p385, %p386
    %p388 = scmp.ne.s32.totalorder %s374, %s375
    %p389 = scmp.eq.s32.totalorder %s27, 1
    %p390 = por %p388, %p389
    %p392 = scmp.ne.s32.totalorder %s375, %s391
    %p393 = scmp.eq.s32.totalorder %s27, 0
    %p394 = por %p392, %p393
    %p395 = scmp.le.s32.totalorder 1, %s21
    %p396 = scmp.lt.s32.totalorder %s21, 3
    %p397 = pnand %p395, %p396
    %p398 = pneg %p397
    // Predicated region
    $region9: #{transformer_layer_forward.8} parent=5 // pred_check
      _
    $region10: #{transformer_layer_forward.8} parent=5 // pred_check_branch
      %400 = sbr.rel (%p397) target = $region12
    $region11: #{transformer_layer_forward.8} parent=5 // pred_region
      %s401 = ssub.s32 %s21, 1
      // Predicated region
      $region13: #{transformer_layer_forward.8} parent=11 // pred_check
        %p402 = pneg %p172
      $region14: #{transformer_layer_forward.8} parent=11 // pred_check_branch
        %404 = sbr.rel (%p402) target = $region16
      $region15: #{transformer_layer_forward.8} parent=11 // pred_region
        _
      $region16: #{transformer_layer_forward.8} parent=11 // pred_fallthru
        _
      // Predicated region
      $region17: #{transformer_layer_forward.8} parent=11 // pred_check
        %p405 = pneg %p193
      $region18: #{transformer_layer_forward.8} parent=11 // pred_check_branch
        %407 = sbr.rel (%p405) target = $region20
      $region19: #{transformer_layer_forward.8} parent=11 // pred_region
        _
      $region20: #{transformer_layer_forward.8} parent=11 // pred_fallthru
        _
      // Predicated region
      $region21: #{transformer_layer_forward.8} parent=11 // pred_check
        %p408 = pneg %p214
      $region22: #{transformer_layer_forward.8} parent=11 // pred_check_branch
        %410 = sbr.rel (%p408) target = $region24
      $region23: #{transformer_layer_forward.8} parent=11 // pred_region
        _
      $region24: #{transformer_layer_forward.8} parent=11 // pred_fallthru
        _
      // Predicated region
      $region25: #{transformer_layer_forward.8} parent=11 // pred_check
        %p411 = pneg %p235
      $region26: #{transformer_layer_forward.8} parent=11 // pred_check_branch
        %413 = sbr.rel (%p411) target = $region28
      $region27: #{transformer_layer_forward.8} parent=11 // pred_region
        _
      $region28: #{transformer_layer_forward.8} parent=11 // pred_fallthru
        _
      // Predicated region
      $region29: #{transformer_layer_forward.8} parent=11 // pred_check
        %p414 = pneg %p256
      $region30: #{transformer_layer_forward.8} parent=11 // pred_check_branch
        %416 = sbr.rel (%p414) target = $region32
      $region31: #{transformer_layer_forward.8} parent=11 // pred_region
        _
      $region32: #{transformer_layer_forward.8} parent=11 // pred_fallthru
        _
      // Predicated region
      $region33: #{transformer_layer_forward.8} parent=11 // pred_check
        %p417 = pneg %p277
      $region34: #{transformer_layer_forward.8} parent=11 // pred_check_branch
        %419 = sbr.rel (%p417) target = $region36
      $region35: #{transformer_layer_forward.8} parent=11 // pred_region
        _
      $region36: #{transformer_layer_forward.8} parent=11 // pred_fallthru
        _
      // Predicated region
      $region37: #{transformer_layer_forward.8} parent=11 // pred_check
        %p420 = pneg %p298
      $region38: #{transformer_layer_forward.8} parent=11 // pred_check_branch
        %422 = sbr.rel (%p420) target = $region40
      $region39: #{transformer_layer_forward.8} parent=11 // pred_region
        _
      $region40: #{transformer_layer_forward.8} parent=11 // pred_fallthru
        _
      // Predicated region
      $region41: #{transformer_layer_forward.8} parent=11 // pred_check
        %p423 = pneg %p319
      $region42: #{transformer_layer_forward.8} parent=11 // pred_check_branch
        %425 = sbr.rel (%p423) target = $region44
      $region43: #{transformer_layer_forward.8} parent=11 // pred_region
        _
      $region44: #{transformer_layer_forward.8} parent=11 // pred_fallthru
        _
      // Predicated region
      $region45: #{transformer_layer_forward.8} parent=11 // pred_check
        %p426 = pneg %p340
      $region46: #{transformer_layer_forward.8} parent=11 // pred_check_branch
        %428 = sbr.rel (%p426) target = $region48
      $region47: #{transformer_layer_forward.8} parent=11 // pred_region
        _
      $region48: #{transformer_layer_forward.8} parent=11 // pred_fallthru
        _
      // Predicated region
      $region49: #{transformer_layer_forward.8} parent=11 // pred_check
        %p429 = pneg %p361
      $region50: #{transformer_layer_forward.8} parent=11 // pred_check_branch
        %431 = sbr.rel (%p429) target = $region52
      $region51: #{transformer_layer_forward.8} parent=11 // pred_region
        _
      $region52: #{transformer_layer_forward.8} parent=11 // pred_fallthru
        _
    $region12: #{transformer_layer_forward.8} parent=5 // pred_fallthru
      _
    %p432 = scmp.lt.s32.totalorder %s21, 2
    // Predicated region
    $region53: #{transformer_layer_forward.8} parent=5 // pred_check
      %p433 = pneg %p432
    $region54: #{transformer_layer_forward.8} parent=5 // pred_check_branch
      %435 = sbr.rel (%p433) target = $region56
    $region55: #{transformer_layer_forward.8} parent=5 // pred_region
      // Predicated region
      $region57: #{transformer_layer_forward.8} parent=55 // pred_check
        %p436 = pneg %p41
      $region58: #{transformer_layer_forward.8} parent=55 // pred_check_branch
        %438 = sbr.rel (%p436) target = $region60
      $region59: #{transformer_layer_forward.8} parent=55 // pred_region
        %p439 = scmp.lt.s32.totalorder %s21, 1
        %s440 = scalar_select %p439, %s21, 1
        %s441 = smul.addr %s440, 2
        %s442 = smul.addr %s441, 8
        %s443 = scalar_lea.vmem %s0, %s442
      $region60: #{transformer_layer_forward.8} parent=55 // pred_fallthru
        _
      // Predicated region
      $region61: #{transformer_layer_forward.8} parent=55 // pred_check
        %p444 = pneg %p67
      $region62: #{transformer_layer_forward.8} parent=55 // pred_check_branch
        %446 = sbr.rel (%p444) target = $region64
      $region63: #{transformer_layer_forward.8} parent=55 // pred_region
        %p447 = scmp.lt.s32.totalorder %s21, 1
        %s448 = scalar_select %p447, %s21, 1
        %s449 = smul.addr %s448, 2
        %s450 = smul.addr %s449, 8
        %s451 = scalar_lea.vmem %s1, %s450
      $region64: #{transformer_layer_forward.8} parent=55 // pred_fallthru
        _
      // Predicated region
      $region65: #{transformer_layer_forward.8} parent=55 // pred_check
        %p452 = pneg %p93
      $region66: #{transformer_layer_forward.8} parent=55 // pred_check_branch
        %454 = sbr.rel (%p452) target = $region68
      $region67: #{transformer_layer_forward.8} parent=55 // pred_region
        %p455 = scmp.lt.s32.totalorder %s21, 1
        %s456 = scalar_select %p455, %s21, 1
        %s457 = smul.addr %s456, 2
        %s458 = smul.addr %s457, 8
        %s459 = scalar_lea.vmem %s2, %s458
      $region68: #{transformer_layer_forward.8} parent=55 // pred_fallthru
        _
      // Predicated region
      $region69: #{transformer_layer_forward.8} parent=55 // pred_check
        %p460 = pneg %p119
      $region70: #{transformer_layer_forward.8} parent=55 // pred_check_branch
        %462 = sbr.rel (%p460) target = $region72
      $region71: #{transformer_layer_forward.8} parent=55 // pred_region
        %p463 = scmp.lt.s32.totalorder %s21, 1
        %s464 = scalar_select %p463, %s21, 1
        %s465 = smul.addr %s464, 2
        %s466 = smul.addr %s465, 8
        %s467 = scalar_lea.vmem %s3, %s466
      $region72: #{transformer_layer_forward.8} parent=55 // pred_fallthru
        _
      // Predicated region
      $region73: #{transformer_layer_forward.8} parent=55 // pred_check
        %p468 = pneg %p145
      $region74: #{transformer_layer_forward.8} parent=55 // pred_check_branch
        %470 = sbr.rel (%p468) target = $region76
      $region75: #{transformer_layer_forward.8} parent=55 // pred_region
        %p471 = scmp.lt.s32.totalorder %s21, 1
        %s472 = scalar_select %p471, %s21, 1
        %s473 = scalar_lea.vmem %s4, %s472
      $region76: #{transformer_layer_forward.8} parent=55 // pred_fallthru
        _
    $region56: #{transformer_layer_forward.8} parent=5 // pred_fallthru
      _
    %p474 = scmp.le.s32.totalorder 1, %s21
    %p475 = scmp.lt.s32.totalorder %s21, 3
    %p476 = pnand %p474, %p475
    %p477 = pneg %p476
    // Predicated region
    $region77: #{transformer_layer_forward.8} parent=5 // pred_check
      _
    $region78: #{transformer_layer_forward.8} parent=5 // pred_check_branch
      %479 = sbr.rel (%p476) target = $region80
    $region79: #{transformer_layer_forward.8} parent=5 // pred_region
      %s480 = ssub.s32 %s21, 1
      %p481 = scmp.lt.s32.totalorder %s26, 1
      %s482 = scalar_select %p481, %s26, 1
      %s483 = smul.addr %s482, 2
      %s484 = smul.addr %s483, 8
      %s485 = scalar_lea.vmem %s0, %s484
      %p486 = pneg %p47
      %p487 = pneg %p44
      %p488 = scmp.lt.s32.totalorder %s26, 1
      %s489 = scalar_select %p488, %s26, 1
      %s490 = smul.addr %s489, 2
      %s491 = smul.addr %s490, 8
      %s492 = scalar_lea.vmem %s1, %s491
      %p493 = pneg %p73
      %p494 = pneg %p70
      %p495 = scmp.lt.s32.totalorder %s26, 1
      %s496 = scalar_select %p495, %s26, 1
      %s497 = smul.addr %s496, 2
      %s498 = smul.addr %s497, 8
      %s499 = scalar_lea.vmem %s2, %s498
      %p500 = pneg %p99
      %p501 = pneg %p96
      %p502 = scmp.lt.s32.totalorder %s26, 1
      %s503 = scalar_select %p502, %s26, 1
      %s504 = smul.addr %s503, 2
      %s505 = smul.addr %s504, 8
      %s506 = scalar_lea.vmem %s3, %s505
      %p507 = pneg %p125
      %p508 = pneg %p122
      %p509 = scmp.lt.s32.totalorder %s26, 1
      %s510 = scalar_select %p509, %s26, 1
      %s511 = scalar_lea.vmem %s4, %s510
      %p512 = pneg %p151
      %p513 = pneg %p148
      %p514 = pneg %p172
      %p515 = pneg %p169
      %p516 = pneg %p193
      %p517 = pneg %p190
      %p518 = pneg %p214
      %p519 = pneg %p211
      %p520 = pneg %p235
      %p521 = pneg %p232
      %p522 = pneg %p256
      %p523 = pneg %p253
      %p524 = pneg %p277
      %p525 = pneg %p274
      %p526 = pneg %p298
      %p527 = pneg %p295
      %p528 = pneg %p319
      %p529 = pneg %p316
      %p530 = pneg %p340
      %p531 = pneg %p337
      %p532 = pneg %p361
      %p533 = pneg %p358
      %p534 = pneg %p387
      %p535 = pneg %p384
      %p536 = scmp.lt.s32.totalorder %s26, 1
      %s537 = scalar_select %p536, %s26, 1
      %s538 = smul.addr %s537, 2
      %s539 = smul.addr %s538, 8
      %s540 = scalar_lea.vmem %s15, %s539
      %p541 = scmp.lt.s32.totalorder %s26, 1
      %s542 = scalar_select %p541, %s26, 1
      %s543 = smul.addr %s542, 2
      %s544 = smul.addr %s543, 8
      %s545 = scalar_lea.vmem %s0, %s544
      %p546 = scmp.lt.s32.totalorder %s26, 1
      %s547 = scalar_select %p546, %s26, 1
      %s548 = smul.addr %s547, 2
      %s549 = smul.addr %s548, 8
      %s550 = scalar_lea.vmem %s1, %s549
      %p551 = scmp.lt.s32.totalorder %s26, 1
      %s552 = scalar_select %p551, %s26, 1
      %s553 = smul.addr %s552, 2
      %s554 = smul.addr %s553, 8
      %s555 = scalar_lea.vmem %s2, %s554
      %p556 = scmp.lt.s32.totalorder %s26, 1
      %s557 = scalar_select %p556, %s26, 1
      %s558 = smul.addr %s557, 2
      %s559 = smul.addr %s558, 8
      %s560 = scalar_lea.vmem %s3, %s559
      %p561 = scmp.lt.s32.totalorder %s26, 1
      %s562 = scalar_select %p561, %s26, 1
      %s563 = scalar_lea.vmem %s4, %s562
      %p564 = scmp.lt.s32.totalorder %s26, 1
      %s565 = scalar_select %p564, %s26, 1
      %s566 = smul.addr %s565, 2
      %s567 = smul.addr %s566, 8
      %s568 = scalar_lea.vmem %s15, %s567
      %v569 = vld [vmem:[%s545] sm:$0xff]
      %v570 = vld [vmem:[%s545 + $0x8] sm:$0xff]
      %v571 = vld [vmem:[%s550] sm:$0xff]
      %v572 = vld [vmem:[%s550 + $0x8] sm:$0xff]
      %v573 = vadd.f32 %v569, %v571
      %v574 = vadd.f32 %v570, %v572
      %v575 = vld [vmem:[%s555] sm:$0xff]
      %v576 = vld [vmem:[%s555 + $0x8] sm:$0xff]
      %v577 = vld [vmem:[%s560] sm:$0xff]
      %v578 = vld [vmem:[%s560 + $0x8] sm:$0xff]
      %v579 = vadd.f32 %v575, %v577
      %v580 = vadd.f32 %v576, %v578
      %v581 = vld [vmem:[%s5] sm:$0xff]
      %v582 = vld [vmem:[%s5 + $0x8] sm:$0xff]
      %v583 = vld [vmem:[%s5 + $0x10] sm:$0xff]
      %v584 = vld [vmem:[%s5 + $0x18] sm:$0xff]
      %v585 = vld [vmem:[%s5 + $0x20] sm:$0xff]
      %v586 = vld [vmem:[%s5 + $0x28] sm:$0xff]
      %v587 = vld [vmem:[%s5 + $0x30] sm:$0xff]
      %v588 = vld [vmem:[%s5 + $0x38] sm:$0xff]
      %v589 = vld [vmem:[%s5 + $0x40] sm:$0xff]
      %v590 = vld [vmem:[%s5 + $0x48] sm:$0xff]
      %v591 = vld [vmem:[%s5 + $0x50] sm:$0xff]
      %v592 = vld [vmem:[%s5 + $0x58] sm:$0xff]
      %v593 = vld [vmem:[%s5 + $0x60] sm:$0xff]
      %v594 = vld [vmem:[%s5 + $0x68] sm:$0xff]
      %v595 = vld [vmem:[%s5 + $0x70] sm:$0xff]
      %v596 = vld [vmem:[%s5 + $0x78] sm:$0xff]
      %v597 = vld [vmem:[%s6] sm:$0x1]
      %v599 = vlaneseq
      %v600 = vshrl.u32 %v599, 7
      %v601 = vsub.s32 0, %v600
      %v602 = vrot.slane %v597, %v601
      %604 = vmatprep.subr.mxu0 0.0
      %605 = vmatpush1.msra.mxu0 %v581
      %606 = vmatprep.subr.mxu0 0.0
      %607 = vmatpush1.msra.mxu0 %v582
      %608 = vmatprep.subr.mxu0 0.0
      %609 = vmatpush1.msra.mxu0 %v583
      %610 = vmatprep.subr.mxu0 0.0
      %611 = vmatpush1.msra.mxu0 %v584
      %612 = vmatprep.subr.mxu0 0.0
      %613 = vmatpush1.msra.mxu0 %v585
      %614 = vmatprep.subr.mxu0 0.0
      %615 = vmatpush1.msra.mxu0 %v586
      %616 = vmatprep.subr.mxu0 0.0
      %617 = vmatpush1.msra.mxu0 %v587
      %618 = vmatprep.subr.mxu0 0.0
      %619 = vmatpush1.msra.mxu0 %v588
      %620 = vmatprep.subr.mxu0 0.0
      %621 = vmatpush1.msra.mxu0 %v589
      %622 = vmatprep.subr.mxu0 0.0
      %623 = vmatpush1.msra.mxu0 %v590
      %624 = vmatprep.subr.mxu0 0.0
      %625 = vmatpush1.msra.mxu0 %v591
      %626 = vmatprep.subr.mxu0 0.0
      %627 = vmatpush1.msra.mxu0 %v592
      %628 = vmatprep.subr.mxu0 0.0
      %629 = vmatpush1.msra.mxu0 %v593
      %630 = vmatprep.subr.mxu0 0.0
      %631 = vmatpush1.msra.mxu0 %v594
      %632 = vmatprep.subr.mxu0 0.0
      %633 = vmatpush1.msra.mxu0 %v595
      %634 = vmatprep.subr.mxu0 0.0
      %635 = vmatpush1.msra.mxu0 %v596
      %636 = vmatprep.subr.mxu0 0.0
      %637 = vmatpush1.msra.mxu0 0.0
      %638 = vmatprep.subr.mxu0 0.0
      %639 = vmatpush1.msra.mxu0 0.0
      %640 = vmatprep.subr.mxu0 0.0
      %641 = vmatpush1.msra.mxu0 0.0
      %642 = vmatprep.subr.mxu0 0.0
      %643 = vmatpush1.msra.mxu0 0.0
      %644 = vmatprep.subr.mxu0 0.0
      %645 = vmatpush1.msra.mxu0 0.0
      %646 = vmatprep.subr.mxu0 0.0
      %647 = vmatpush1.msra.mxu0 0.0
      %648 = vmatprep.subr.mxu0 0.0
      %649 = vmatpush1.msra.mxu0 0.0
      %650 = vmatprep.subr.mxu0 0.0
      %651 = vmatpush1.msra.mxu0 0.0
      %652 = vmatprep.subr.mxu0 0.0
      %653 = vmatpush1.msra.mxu0 0.0
      %654 = vmatprep.subr.mxu0 0.0
      %655 = vmatpush1.msra.mxu0 0.0
      %656 = vmatprep.subr.mxu0 0.0
      %657 = vmatpush1.msra.mxu0 0.0
      %658 = vmatprep.subr.mxu0 0.0
      %659 = vmatpush1.msra.mxu0 0.0
      %660 = vmatprep.subr.mxu0 0.0
      %661 = vmatpush1.msra.mxu0 0.0
      %662 = vmatprep.subr.mxu0 0.0
      %663 = vmatpush1.msra.mxu0 0.0
      %664 = vmatprep.subr.mxu0 0.0
      %665 = vmatpush1.msra.mxu0 0.0
      %666 = vmatprep.subr.mxu0 0.0
      %667 = vmatpush1.msra.mxu0 0.0
      %668 = vmatprep.mubr.f32.mxu0 0.0
      %669 = vmatmul.mubr.f32.gmra.mrb[0].mxu0 %v573
      %v670 = vpop.f32.mrb[0].mxu0
      %v671 = vadd.f32 %v602, %v670
      %v672 = vpop.f32.mrb[0].mxu0
      %673 = vmatprep.mubr.f32.mxu0 0.0
      %674 = vmatmul.mubr.f32.gmra.mrb[0].mxu0 %v574
      %v675 = vpop.f32.mrb[0].mxu0
      %v676 = vadd.f32 %v602, %v675
      %v677 = vpop.f32.mrb[0].mxu0
      %678 = vdwg.mxu0
      %v679 = vld [vmem:[%s7] sm:$0xff]
      %v680 = vld [vmem:[%s7 + $0x8] sm:$0xff]
      %v681 = vld [vmem:[%s7 + $0x10] sm:$0xff]
      %v682 = vld [vmem:[%s7 + $0x18] sm:$0xff]
      %v683 = vld [vmem:[%s7 + $0x20] sm:$0xff]
      %v684 = vld [vmem:[%s7 + $0x28] sm:$0xff]
      %v685 = vld [vmem:[%s7 + $0x30] sm:$0xff]
      %v686 = vld [vmem:[%s7 + $0x38] sm:$0xff]
      %v687 = vld [vmem:[%s7 + $0x40] sm:$0xff]
      %v688 = vld [vmem:[%s7 + $0x48] sm:$0xff]
      %v689 = vld [vmem:[%s7 + $0x50] sm:$0xff]
      %v690 = vld [vmem:[%s7 + $0x58] sm:$0xff]
      %v691 = vld [vmem:[%s7 + $0x60] sm:$0xff]
      %v692 = vld [vmem:[%s7 + $0x68] sm:$0xff]
      %v693 = vld [vmem:[%s7 + $0x70] sm:$0xff]
      %v694 = vld [vmem:[%s7 + $0x78] sm:$0xff]
      %v695 = vld [vmem:[%s8] sm:$0x1]
      %v697 = vlaneseq
      %v698 = vshrl.u32 %v697, 7
      %v699 = vsub.s32 0, %v698
      %v700 = vrot.slane %v695, %v699
      %702 = vmatprep.subr.mxu0 0.0
      %703 = vmatpush1.msra.mxu0 %v679
      %704 = vmatprep.subr.mxu0 0.0
      %705 = vmatpush1.msra.mxu0 %v680
      %706 = vmatprep.subr.mxu0 0.0
      %707 = vmatpush1.msra.mxu0 %v681
      %708 = vmatprep.subr.mxu0 0.0
      %709 = vmatpush1.msra.mxu0 %v682
      %710 = vmatprep.subr.mxu0 0.0
      %711 = vmatpush1.msra.mxu0 %v683
      %712 = vmatprep.subr.mxu0 0.0
      %713 = vmatpush1.msra.mxu0 %v684
      %714 = vmatprep.subr.mxu0 0.0
      %715 = vmatpush1.msra.mxu0 %v685
      %716 = vmatprep.subr.mxu0 0.0
      %717 = vmatpush1.msra.mxu0 %v686
      %718 = vmatprep.subr.mxu0 0.0
      %719 = vmatpush1.msra.mxu0 %v687
      %720 = vmatprep.subr.mxu0 0.0
      %721 = vmatpush1.msra.mxu0 %v688
      %722 = vmatprep.subr.mxu0 0.0
      %723 = vmatpush1.msra.mxu0 %v689
      %724 = vmatprep.subr.mxu0 0.0
      %725 = vmatpush1.msra.mxu0 %v690
      %726 = vmatprep.subr.mxu0 0.0
      %727 = vmatpush1.msra.mxu0 %v691
      %728 = vmatprep.subr.mxu0 0.0
      %729 = vmatpush1.msra.mxu0 %v692
      %730 = vmatprep.subr.mxu0 0.0
      %731 = vmatpush1.msra.mxu0 %v693
      %732 = vmatprep.subr.mxu0 0.0
      %733 = vmatpush1.msra.mxu0 %v694
      %734 = vmatprep.subr.mxu0 0.0
      %735 = vmatpush1.msra.mxu0 0.0
      %736 = vmatprep.subr.mxu0 0.0
      %737 = vmatpush1.msra.mxu0 0.0
      %738 = vmatprep.subr.mxu0 0.0
      %739 = vmatpush1.msra.mxu0 0.0
      %740 = vmatprep.subr.mxu0 0.0
      %741 = vmatpush1.msra.mxu0 0.0
      %742 = vmatprep.subr.mxu0 0.0
      %743 = vmatpush1.msra.mxu0 0.0
      %744 = vmatprep.subr.mxu0 0.0
      %745 = vmatpush1.msra.mxu0 0.0
      %746 = vmatprep.subr.mxu0 0.0
      %747 = vmatpush1.msra.mxu0 0.0
      %748 = vmatprep.subr.mxu0 0.0
      %749 = vmatpush1.msra.mxu0 0.0
      %750 = vmatprep.subr.mxu0 0.0
      %751 = vmatpush1.msra.mxu0 0.0
      %752 = vmatprep.subr.mxu0 0.0
      %753 = vmatpush1.msra.mxu0 0.0
      %754 = vmatprep.subr.mxu0 0.0
      %755 = vmatpush1.msra.mxu0 0.0
      %756 = vmatprep.subr.mxu0 0.0
      %757 = vmatpush1.msra.mxu0 0.0
      %758 = vmatprep.subr.mxu0 0.0
      %759 = vmatpush1.msra.mxu0 0.0
      %760 = vmatprep.subr.mxu0 0.0
      %761 = vmatpush1.msra.mxu0 0.0
      %762 = vmatprep.subr.mxu0 0.0
      %763 = vmatpush1.msra.mxu0 0.0
      %764 = vmatprep.subr.mxu0 0.0
      %765 = vmatpush1.msra.mxu0 0.0
      %766 = vmatprep.mubr.f32.mxu0 0.0
      %767 = vmatmul.mubr.f32.gmra.mrb[0].mxu0 %v579
      %v768 = vpop.f32.mrb[0].mxu0
      %v769 = vadd.f32 %v700, %v768
      %v770 = vpop.f32.mrb[0].mxu0
      %771 = vmatprep.mubr.f32.mxu0 0.0
      %772 = vmatmul.mubr.f32.gmra.mrb[0].mxu0 %v580
      %v773 = vpop.f32.mrb[0].mxu0
      %v774 = vadd.f32 %v700, %v773
      %v775 = vpop.f32.mrb[0].mxu0
      %776 = vdwg.mxu0
      %v777 = vld [vmem:[%s9] sm:$0xff]
      %v778 = vld [vmem:[%s9 + $0x8] sm:$0xff]
      %v779 = vld [vmem:[%s9 + $0x10] sm:$0xff]
      %v780 = vld [vmem:[%s9 + $0x18] sm:$0xff]
      %v781 = vld [vmem:[%s9 + $0x20] sm:$0xff]
      %v782 = vld [vmem:[%s9 + $0x28] sm:$0xff]
      %v783 = vld [vmem:[%s9 + $0x30] sm:$0xff]
      %v784 = vld [vmem:[%s9 + $0x38] sm:$0xff]
      %v785 = vld [vmem:[%s9 + $0x40] sm:$0xff]
      %v786 = vld [vmem:[%s9 + $0x48] sm:$0xff]
      %v787 = vld [vmem:[%s9 + $0x50] sm:$0xff]
      %v788 = vld [vmem:[%s9 + $0x58] sm:$0xff]
      %v789 = vld [vmem:[%s9 + $0x60] sm:$0xff]
      %v790 = vld [vmem:[%s9 + $0x68] sm:$0xff]
      %v791 = vld [vmem:[%s9 + $0x70] sm:$0xff]
      %v792 = vld [vmem:[%s9 + $0x78] sm:$0xff]
      %v793 = vld [vmem:[%s10] sm:$0x1]
      %v795 = vlaneseq
      %v796 = vshrl.u32 %v795, 7
      %v797 = vsub.s32 0, %v796
      %v798 = vrot.slane %v793, %v797
      %800 = vmatprep.subr.mxu0 0.0
      %801 = vmatpush1.msra.mxu0 %v777
      %802 = vmatprep.subr.mxu0 0.0
      %803 = vmatpush1.msra.mxu0 %v778
      %804 = vmatprep.subr.mxu0 0.0
      %805 = vmatpush1.msra.mxu0 %v779
      %806 = vmatprep.subr.mxu0 0.0
      %807 = vmatpush1.msra.mxu0 %v780
      %808 = vmatprep.subr.mxu0 0.0
      %809 = vmatpush1.msra.mxu0 %v781
      %810 = vmatprep.subr.mxu0 0.0
      %811 = vmatpush1.msra.mxu0 %v782
      %812 = vmatprep.subr.mxu0 0.0
      %813 = vmatpush1.msra.mxu0 %v783
      %814 = vmatprep.subr.mxu0 0.0
      %815 = vmatpush1.msra.mxu0 %v784
      %816 = vmatprep.subr.mxu0 0.0
      %817 = vmatpush1.msra.mxu0 %v785
      %818 = vmatprep.subr.mxu0 0.0
      %819 = vmatpush1.msra.mxu0 %v786
      %820 = vmatprep.subr.mxu0 0.0
      %821 = vmatpush1.msra.mxu0 %v787
      %822 = vmatprep.subr.mxu0 0.0
      %823 = vmatpush1.msra.mxu0 %v788
      %824 = vmatprep.subr.mxu0 0.0
      %825 = vmatpush1.msra.mxu0 %v789
      %826 = vmatprep.subr.mxu0 0.0
      %827 = vmatpush1.msra.mxu0 %v790
      %828 = vmatprep.subr.mxu0 0.0
      %829 = vmatpush1.msra.mxu0 %v791
      %830 = vmatprep.subr.mxu0 0.0
      %831 = vmatpush1.msra.mxu0 %v792
      %832 = vmatprep.subr.mxu0 0.0
      %833 = vmatpush1.msra.mxu0 0.0
      %834 = vmatprep.subr.mxu0 0.0
      %835 = vmatpush1.msra.mxu0 0.0
      %836 = vmatprep.subr.mxu0 0.0
      %837 = vmatpush1.msra.mxu0 0.0
      %838 = vmatprep.subr.mxu0 0.0
      %839 = vmatpush1.msra.mxu0 0.0
      %840 = vmatprep.subr.mxu0 0.0
      %841 = vmatpush1.msra.mxu0 0.0
      %842 = vmatprep.subr.mxu0 0.0
      %843 = vmatpush1.msra.mxu0 0.0
      %844 = vmatprep.subr.mxu0 0.0
      %845 = vmatpush1.msra.mxu0 0.0
      %846 = vmatprep.subr.mxu0 0.0
      %847 = vmatpush1.msra.mxu0 0.0
      %848 = vmatprep.subr.mxu0 0.0
      %849 = vmatpush1.msra.mxu0 0.0
      %850 = vmatprep.subr.mxu0 0.0
      %851 = vmatpush1.msra.mxu0 0.0
      %852 = vmatprep.subr.mxu0 0.0
      %853 = vmatpush1.msra.mxu0 0.0
      %854 = vmatprep.subr.mxu0 0.0
      %855 = vmatpush1.msra.mxu0 0.0
      %856 = vmatprep.subr.mxu0 0.0
      %857 = vmatpush1.msra.mxu0 0.0
      %858 = vmatprep.subr.mxu0 0.0
      %859 = vmatpush1.msra.mxu0 0.0
      %860 = vmatprep.subr.mxu0 0.0
      %861 = vmatpush1.msra.mxu0 0.0
      %862 = vmatprep.subr.mxu0 0.0
      %863 = vmatpush1.msra.mxu0 0.0
      %864 = vmatprep.mubr.f32.mxu0 0.0
      %865 = vmatmul.mubr.f32.gmra.mrb[0].mxu0 %v575
      %v866 = vpop.f32.mrb[0].mxu0
      %v867 = vadd.f32 %v798, %v866
      %v868 = vpop.f32.mrb[0].mxu0
      %869 = vmatprep.mubr.f32.mxu0 0.0
      %870 = vmatmul.mubr.f32.gmra.mrb[0].mxu0 %v576
      %v871 = vpop.f32.mrb[0].mxu0
      %v872 = vadd.f32 %v798, %v871
      %v873 = vpop.f32.mrb[0].mxu0
      %874 = vdwg.mxu0
      %v875 = vld [vmem:[%s563] sm:$0x1]
      %vm876 = vcmask 261120
      %v878 = vsel %vm876, %v671, 0
      %v881 = vsel %vm876, %v676, 0
      %v884 = vsel %vm876, %v769, 0
      %v887 = vsel %vm876, %v774, 0
      %889 = vmatprep.subr.mxu0 0.0
      %890 = vmatpush1.xpose.msra.mxu0 %v884
      %891 = vmatprep.subr.mxu0 0.0
      %892 = vmatpush1.xpose.msra.mxu0 %v887
      %893 = vmatprep.subr.mxu0 0.0
      %894 = vmatpush1.xpose.msra.mxu0 0.0
      %895 = vmatprep.subr.mxu0 0.0
      %896 = vmatpush1.xpose.msra.mxu0 0.0
      %897 = vmatprep.subr.mxu0 0.0
      %898 = vmatpush1.xpose.msra.mxu0 0.0
      %899 = vmatprep.subr.mxu0 0.0
      %900 = vmatpush1.xpose.msra.mxu0 0.0
      %901 = vmatprep.subr.mxu0 0.0
      %902 = vmatpush1.xpose.msra.mxu0 0.0
      %903 = vmatprep.subr.mxu0 0.0
      %904 = vmatpush1.xpose.msra.mxu0 0.0
      %905 = vmatprep.subr.mxu0 0.0
      %906 = vmatpush1.xpose.msra.mxu0 0.0
      %907 = vmatprep.subr.mxu0 0.0
      %908 = vmatpush1.xpose.msra.mxu0 0.0
      %909 = vmatprep.subr.mxu0 0.0
      %910 = vmatpush1.xpose.msra.mxu0 0.0
      %911 = vmatprep.subr.mxu0 0.0
      %912 = vmatpush1.xpose.msra.mxu0 0.0
      %913 = vmatprep.subr.mxu0 0.0
      %914 = vmatpush1.xpose.msra.mxu0 0.0
      %915 = vmatprep.subr.mxu0 0.0
      %916 = vmatpush1.xpose.msra.mxu0 0.0
      %917 = vmatprep.subr.mxu0 0.0
      %918 = vmatpush1.xpose.msra.mxu0 0.0
      %919 = vmatprep.subr.mxu0 0.0
      %920 = vmatpush1.xpose.msra.mxu0 0.0
      %921 = vmatprep.subr.mxu0 0.0
      %922 = vmatpush1.xpose.msra.mxu0 0.0
      %923 = vmatprep.subr.mxu0 0.0
      %924 = vmatpush1.xpose.msra.mxu0 0.0
      %925 = vmatprep.subr.mxu0 0.0
      %926 = vmatpush1.xpose.msra.mxu0 0.0
      %927 = vmatprep.subr.mxu0 0.0
      %928 = vmatpush1.xpose.msra.mxu0 0.0
      %929 = vmatprep.subr.mxu0 0.0
      %930 = vmatpush1.xpose.msra.mxu0 0.0
      %931 = vmatprep.subr.mxu0 0.0
      %932 = vmatpush1.xpose.msra.mxu0 0.0
      %933 = vmatprep.subr.mxu0 0.0
      %934 = vmatpush1.xpose.msra.mxu0 0.0
      %935 = vmatprep.subr.mxu0 0.0
      %936 = vmatpush1.xpose.msra.mxu0 0.0
      %937 = vmatprep.subr.mxu0 0.0
      %938 = vmatpush1.xpose.msra.mxu0 0.0
      %939 = vmatprep.subr.mxu0 0.0
      %940 = vmatpush1.xpose.msra.mxu0 0.0
      %941 = vmatprep.subr.mxu0 0.0
      %942 = vmatpush1.xpose.msra.mxu0 0.0
      %943 = vmatprep.subr.mxu0 0.0
      %944 = vmatpush1.xpose.msra.mxu0 0.0
      %945 = vmatprep.subr.mxu0 0.0
      %946 = vmatpush1.xpose.msra.mxu0 0.0
      %947 = vmatprep.subr.mxu0 0.0
      %948 = vmatpush1.xpose.msra.mxu0 0.0
      %949 = vmatprep.subr.mxu0 0.0
      %950 = vmatpush1.xpose.msra.mxu0 0.0
      %951 = vmatprep.subr.mxu0 0.0
      %952 = vmatpush1.xpose.msra.mxu0 0.0
      %953 = vmatprep.mubr.f32.mxu0 0.0
      %954 = vmatmul.mubr.f32.gmra.mrb[0].mxu0 %v878
      %v955 = vpop.f32.mrb[0].mxu0
      %v956 = vadd.f32 0.0, %v955
      %v957 = vpop.f32.mrb[0].mxu0
      %958 = vmatprep.mubr.f32.mxu0 0.0
      %959 = vmatmul.mubr.f32.gmra.mrb[0].mxu0 %v881
      %v960 = vpop.f32.mrb[0].mxu0
      %v961 = vadd.f32 0.0, %v960
      %v962 = vpop.f32.mrb[0].mxu0
      %963 = vdwg.mxu0
      %v964 = vmul.f32 %v956, 0.17677669
      %v965 = vmul.f32 %v961, 0.17677669
      %v967 = vlaneseq
      %v968 = vshrl.u32 %v967, 7
      %v969 = vsub.s32 0, %v968
      %v970 = vrot.slane %v875, %v969
      %v972 = vadd.f32 %v964, %v970
      %v973 = vadd.f32 %v965, %v970
      %vm974 = vcmask 130048
      %v975 = vsel %vm974, %v972, -inf
      %976 = vmax.xlane.f32.xlu0 %v975
      %v977 = vpop.xlane.xlu0 %976
      %v978 = vsel %vm974, %v973, -inf
      %979 = vmax.xlane.f32.xlu0 %v978
      %v980 = vpop.xlane.xlu0 %979
      %v981 = vsub.f32 %v972, %v977
      %v982 = vsub.f32 %v973, %v980
      %v983 = vmul.f32 %v981, 1.442695
      %v984 = vpow.pop %v983
      %v985 = vmul.f32 %v982, 1.442695
      %v986 = vpow.pop %v985
      %v987 = vsel %vm974, %v984, 0.0
      %988 = vadd.xlane.f32.xlu0 %v987
      %v989 = vpop.xlane.xlu0 %988
      %v990 = vsel %vm974, %v986, 0.0
      %991 = vadd.xlane.f32.xlu0 %v990
      %v992 = vpop.xlane.xlu0 %991
      %v993 = vrcp.pop %v989
      %v994 = vmul.f32 %v984, %v993
      %v995 = vrcp.pop %v992
      %v996 = vmul.f32 %v986, %v995
      %v998 = vsel %vm974, %v994, 0
      %v1001 = vsel %vm974, %v996, 0
      %1003 = vmatprep.subr.mxu0 0.0
      %1004 = vmatpush1.msra.mxu0 %v867
      %1005 = vmatprep.subr.mxu0 0.0
      %1006 = vmatpush1.msra.mxu0 %v872
      %1007 = vmatprep.subr.mxu0 0.0
      %1008 = vmatpush1.msra.mxu0 0.0
      %1009 = vmatprep.subr.mxu0 0.0
      %1010 = vmatpush1.msra.mxu0 0.0
      %1011 = vmatprep.subr.mxu0 0.0
      %1012 = vmatpush1.msra.mxu0 0.0
      %1013 = vmatprep.subr.mxu0 0.0
      %1014 = vmatpush1.msra.mxu0 0.0
      %1015 = vmatprep.subr.mxu0 0.0
      %1016 = vmatpush1.msra.mxu0 0.0
      %1017 = vmatprep.subr.mxu0 0.0
      %1018 = vmatpush1.msra.mxu0 0.0
      %1019 = vmatprep.subr.mxu0 0.0
      %1020 = vmatpush1.msra.mxu0 0.0
      %1021 = vmatprep.subr.mxu0 0.0
      %1022 = vmatpush1.msra.mxu0 0.0
      %1023 = vmatprep.subr.mxu0 0.0
      %1024 = vmatpush1.msra.mxu0 0.0
      %1025 = vmatprep.subr.mxu0 0.0
      %1026 = vmatpush1.msra.mxu0 0.0
      %1027 = vmatprep.subr.mxu0 0.0
      %1028 = vmatpush1.msra.mxu0 0.0
      %1029 = vmatprep.subr.mxu0 0.0
      %1030 = vmatpush1.msra.mxu0 0.0
      %1031 = vmatprep.subr.mxu0 0.0
      %1032 = vmatpush1.msra.mxu0 0.0
      %1033 = vmatprep.subr.mxu0 0.0
      %1034 = vmatpush1.msra.mxu0 0.0
      %1035 = vmatprep.subr.mxu0 0.0
      %1036 = vmatpush1.msra.mxu0 0.0
      %1037 = vmatprep.subr.mxu0 0.0
      %1038 = vmatpush1.msra.mxu0 0.0
      %1039 = vmatprep.subr.mxu0 0.0
      %1040 = vmatpush1.msra.mxu0 0.0
      %1041 = vmatprep.subr.mxu0 0.0
      %1042 = vmatpush1.msra.mxu0 0.0
      %1043 = vmatprep.subr.mxu0 0.0
      %1044 = vmatpush1.msra.mxu0 0.0
      %1045 = vmatprep.subr.mxu0 0.0
      %1046 = vmatpush1.msra.mxu0 0.0
      %1047 = vmatprep.subr.mxu0 0.0
      %1048 = vmatpush1.msra.mxu0 0.0
      %1049 = vmatprep.subr.mxu0 0.0
      %1050 = vmatpush1.msra.mxu0 0.0
      %1051 = vmatprep.subr.mxu0 0.0
      %1052 = vmatpush1.msra.mxu0 0.0
      %1053 = vmatprep.subr.mxu0 0.0
      %1054 = vmatpush1.msra.mxu0 0.0
      %1055 = vmatprep.subr.mxu0 0.0
      %1056 = vmatpush1.msra.mxu0 0.0
      %1057 = vmatprep.subr.mxu0 0.0
      %1058 = vmatpush1.msra.mxu0 0.0
      %1059 = vmatprep.subr.mxu0 0.0
      %1060 = vmatpush1.msra.mxu0 0.0
      %1061 = vmatprep.subr.mxu0 0.0
      %1062 = vmatpush1.msra.mxu0 0.0
      %1063 = vmatprep.subr.mxu0 0.0
      %1064 = vmatpush1.msra.mxu0 0.0
      %1065 = vmatprep.subr.mxu0 0.0
      %1066 = vmatpush1.msra.mxu0 0.0
      %1067 = vmatprep.mubr.f32.mxu0 0.0
      %1068 = vmatmul.mubr.f32.gmra.mrb[0].mxu0 %v998
      %v1069 = vpop.f32.mrb[0].mxu0
      %v1070 = vadd.f32 0.0, %v1069
      %v1071 = vpop.f32.mrb[0].mxu0
      %1072 = vmatprep.mubr.f32.mxu0 0.0
      %1073 = vmatmul.mubr.f32.gmra.mrb[0].mxu0 %v1001
      %v1074 = vpop.f32.mrb[0].mxu0
      %v1075 = vadd.f32 0.0, %v1074
      %v1076 = vpop.f32.mrb[0].mxu0
      %1077 = vdwg.mxu0
      %1078 = vrot.lane.b32.xlu0 %v671, 96
      %v1079 = vpop.permute.xlu0 %1078
      %1080 = vrot.lane.b32.xlu0 %v676, 96
      %v1081 = vpop.permute.xlu0 %1080
      %1082 = vrot.lane.b32.xlu0 %v769, 96
      %v1083 = vpop.permute.xlu0 %1082
      %1084 = vrot.lane.b32.xlu0 %v774, 96
      %v1085 = vpop.permute.xlu0 %1084
      %v1086 = vsel %vm876, %v1079, 0
      %v1088 = vsel %vm876, %v1081, 0
      %v1090 = vsel %vm876, %v1083, 0
      %v1092 = vsel %vm876, %v1085, 0
      %1094 = vmatprep.subr.mxu0 0.0
      %1095 = vmatpush1.xpose.msra.mxu0 %v1090
      %1096 = vmatprep.subr.mxu0 0.0
      %1097 = vmatpush1.xpose.msra.mxu0 %v1092
      %1098 = vmatprep.subr.mxu0 0.0
      %1099 = vmatpush1.xpose.msra.mxu0 0.0
      %1100 = vmatprep.subr.mxu0 0.0
      %1101 = vmatpush1.xpose.msra.mxu0 0.0
      %1102 = vmatprep.subr.mxu0 0.0
      %1103 = vmatpush1.xpose.msra.mxu0 0.0
      %1104 = vmatprep.subr.mxu0 0.0
      %1105 = vmatpush1.xpose.msra.mxu0 0.0
      %1106 = vmatprep.subr.mxu0 0.0
      %1107 = vmatpush1.xpose.msra.mxu0 0.0
      %1108 = vmatprep.subr.mxu0 0.0
      %1109 = vmatpush1.xpose.msra.mxu0 0.0
      %1110 = vmatprep.subr.mxu0 0.0
      %1111 = vmatpush1.xpose.msra.mxu0 0.0
      %1112 = vmatprep.subr.mxu0 0.0
      %1113 = vmatpush1.xpose.msra.mxu0 0.0
      %1114 = vmatprep.subr.mxu0 0.0
      %1115 = vmatpush1.xpose.msra.mxu0 0.0
      %1116 = vmatprep.subr.mxu0 0.0
      %1117 = vmatpush1.xpose.msra.mxu0 0.0
      %1118 = vmatprep.subr.mxu0 0.0
      %1119 = vmatpush1.xpose.msra.mxu0 0.0
      %1120 = vmatprep.subr.mxu0 0.0
      %1121 = vmatpush1.xpose.msra.mxu0 0.0
      %1122 = vmatprep.subr.mxu0 0.0
      %1123 = vmatpush1.xpose.msra.mxu0 0.0
      %1124 = vmatprep.subr.mxu0 0.0
      %1125 = vmatpush1.xpose.msra.mxu0 0.0
      %1126 = vmatprep.subr.mxu0 0.0
      %1127 = vmatpush1.xpose.msra.mxu0 0.0
      %1128 = vmatprep.subr.mxu0 0.0
      %1129 = vmatpush1.xpose.msra.mxu0 0.0
      %1130 = vmatprep.subr.mxu0 0.0
      %1131 = vmatpush1.xpose.msra.mxu0 0.0
      %1132 = vmatprep.subr.mxu0 0.0
      %1133 = vmatpush1.xpose.msra.mxu0 0.0
      %1134 = vmatprep.subr.mxu0 0.0
      %1135 = vmatpush1.xpose.msra.mxu0 0.0
      %1136 = vmatprep.subr.mxu0 0.0
      %1137 = vmatpush1.xpose.msra.mxu0 0.0
      %1138 = vmatprep.subr.mxu0 0.0
      %1139 = vmatpush1.xpose.msra.mxu0 0.0
      %1140 = vmatprep.subr.mxu0 0.0
      %1141 = vmatpush1.xpose.msra.mxu0 0.0
      %1142 = vmatprep.subr.mxu0 0.0
      %1143 = vmatpush1.xpose.msra.mxu0 0.0
      %1144 = vmatprep.subr.mxu0 0.0
      %1145 = vmatpush1.xpose.msra.mxu0 0.0
      %1146 = vmatprep.subr.mxu0 0.0
      %1147 = vmatpush1.xpose.msra.mxu0 0.0
      %1148 = vmatprep.subr.mxu0 0.0
      %1149 = vmatpush1.xpose.msra.mxu0 0.0
      %1150 = vmatprep.subr.mxu0 0.0
      %1151 = vmatpush1.xpose.msra.mxu0 0.0
      %1152 = vmatprep.subr.mxu0 0.0
      %1153 = vmatpush1.xpose.msra.mxu0 0.0
      %1154 = vmatprep.subr.mxu0 0.0
      %1155 = vmatpush1.xpose.msra.mxu0 0.0
      %1156 = vmatprep.subr.mxu0 0.0
      %1157 = vmatpush1.xpose.msra.mxu0 0.0
      %1158 = vmatprep.mubr.f32.mxu0 0.0
      %1159 = vmatmul.mubr.f32.gmra.mrb[0].mxu0 %v1086
      %v1160 = vpop.f32.mrb[0].mxu0
      %v1161 = vadd.f32 0.0, %v1160
      %v1162 = vpop.f32.mrb[0].mxu0
      %1163 = vmatprep.mubr.f32.mxu0 0.0
      %1164 = vmatmul.mubr.f32.gmra.mrb[0].mxu0 %v1088
      %v1165 = vpop.f32.mrb[0].mxu0
      %v1166 = vadd.f32 0.0, %v1165
      %v1167 = vpop.f32.mrb[0].mxu0
      %1168 = vdwg.mxu0
      %v1169 = vmul.f32 %v1161, 0.17677669
      %v1170 = vmul.f32 %v1166, 0.17677669
      %v1171 = vadd.f32 %v1169, %v970
      %v1172 = vadd.f32 %v1170, %v970
      %v1173 = vsel %vm974, %v1171, -inf
      %1174 = vmax.xlane.f32.xlu0 %v1173
      %v1175 = vpop.xlane.xlu0 %1174
      %v1176 = vsel %vm974, %v1172, -inf
      %1177 = vmax.xlane.f32.xlu0 %v1176
      %v1178 = vpop.xlane.xlu0 %1177
      %v1179 = vsub.f32 %v1171, %v1175
      %v1180 = vsub.f32 %v1172, %v1178
      %v1181 = vmul.f32 %v1179, 1.442695
      %v1182 = vpow.pop %v1181
      %v1183 = vmul.f32 %v1180, 1.442695
      %v1184 = vpow.pop %v1183
      %v1185 = vsel %vm974, %v1182, 0.0
      %1186 = vadd.xlane.f32.xlu0 %v1185
      %v1187 = vpop.xlane.xlu0 %1186
      %v1188 = vsel %vm974, %v1184, 0.0
      %1189 = vadd.xlane.f32.xlu0 %v1188
      %v1190 = vpop.xlane.xlu0 %1189
      %v1191 = vrcp.pop %v1187
      %v1192 = vmul.f32 %v1182, %v1191
      %v1193 = vrcp.pop %v1190
      %v1194 = vmul.f32 %v1184, %v1193
      %1197 = vrot.lane.b32.xlu0 %v867, 96
      %v1198 = vpop.permute.xlu0 %1197
      %1199 = vrot.lane.b32.xlu0 %v872, 96
      %v1200 = vpop.permute.xlu0 %1199
      %v1204 = vsel %vm974, %v1192, 0
      %v1207 = vsel %vm974, %v1194, 0
      %1209 = vmatprep.subr.mxu0 0.0
      %1210 = vmatpush1.msra.mxu0 %v1198
      %1211 = vmatprep.subr.mxu0 0.0
      %1212 = vmatpush1.msra.mxu0 %v1200
      %1213 = vmatprep.subr.mxu0 0.0
      %1214 = vmatpush1.msra.mxu0 0.0
      %1215 = vmatprep.subr.mxu0 0.0
      %1216 = vmatpush1.msra.mxu0 0.0
      %1217 = vmatprep.subr.mxu0 0.0
      %1218 = vmatpush1.msra.mxu0 0.0
      %1219 = vmatprep.subr.mxu0 0.0
      %1220 = vmatpush1.msra.mxu0 0.0
      %1221 = vmatprep.subr.mxu0 0.0
      %1222 = vmatpush1.msra.mxu0 0.0
      %1223 = vmatprep.subr.mxu0 0.0
      %1224 = vmatpush1.msra.mxu0 0.0
      %1225 = vmatprep.subr.mxu0 0.0
      %1226 = vmatpush1.msra.mxu0 0.0
      %1227 = vmatprep.subr.mxu0 0.0
      %1228 = vmatpush1.msra.mxu0 0.0
      %1229 = vmatprep.subr.mxu0 0.0
      %1230 = vmatpush1.msra.mxu0 0.0
      %1231 = vmatprep.subr.mxu0 0.0
      %1232 = vmatpush1.msra.mxu0 0.0
      %1233 = vmatprep.subr.mxu0 0.0
      %1234 = vmatpush1.msra.mxu0 0.0
      %1235 = vmatprep.subr.mxu0 0.0
      %1236 = vmatpush1.msra.mxu0 0.0
      %1237 = vmatprep.subr.mxu0 0.0
      %1238 = vmatpush1.msra.mxu0 0.0
      %1239 = vmatprep.subr.mxu0 0.0
      %1240 = vmatpush1.msra.mxu0 0.0
      %1241 = vmatprep.subr.mxu0 0.0
      %1242 = vmatpush1.msra.mxu0 0.0
      %1243 = vmatprep.subr.mxu0 0.0
      %1244 = vmatpush1.msra.mxu0 0.0
      %1245 = vmatprep.subr.mxu0 0.0
      %1246 = vmatpush1.msra.mxu0 0.0
      %1247 = vmatprep.subr.mxu0 0.0
      %1248 = vmatpush1.msra.mxu0 0.0
      %1249 = vmatprep.subr.mxu0 0.0
      %1250 = vmatpush1.msra.mxu0 0.0
      %1251 = vmatprep.subr.mxu0 0.0
      %1252 = vmatpush1.msra.mxu0 0.0
      %1253 = vmatprep.subr.mxu0 0.0
      %1254 = vmatpush1.msra.mxu0 0.0
      %1255 = vmatprep.subr.mxu0 0.0
      %1256 = vmatpush1.msra.mxu0 0.0
      %1257 = vmatprep.subr.mxu0 0.0
      %1258 = vmatpush1.msra.mxu0 0.0
      %1259 = vmatprep.subr.mxu0 0.0
      %1260 = vmatpush1.msra.mxu0 0.0
      %1261 = vmatprep.subr.mxu0 0.0
      %1262 = vmatpush1.msra.mxu0 0.0
      %1263 = vmatprep.subr.mxu0 0.0
      %1264 = vmatpush1.msra.mxu0 0.0
      %1265 = vmatprep.subr.mxu0 0.0
      %1266 = vmatpush1.msra.mxu0 0.0
      %1267 = vmatprep.subr.mxu0 0.0
      %1268 = vmatpush1.msra.mxu0 0.0
      %1269 = vmatprep.subr.mxu0 0.0
      %1270 = vmatpush1.msra.mxu0 0.0
      %1271 = vmatprep.subr.mxu0 0.0
      %1272 = vmatpush1.msra.mxu0 0.0
      %1273 = vmatprep.mubr.f32.mxu0 0.0
      %1274 = vmatmul.mubr.f32.gmra.mrb[0].mxu0 %v1204
      %v1275 = vpop.f32.mrb[0].mxu0
      %v1276 = vadd.f32 0.0, %v1275
      %v1277 = vpop.f32.mrb[0].mxu0
      %1278 = vmatprep.mubr.f32.mxu0 0.0
      %1279 = vmatmul.mubr.f32.gmra.mrb[0].mxu0 %v1207
      %v1280 = vpop.f32.mrb[0].mxu0
      %v1281 = vadd.f32 0.0, %v1280
      %v1282 = vpop.f32.mrb[0].mxu0
      %1283 = vdwg.mxu0
      %1284 = vrot.lane.b32.xlu0 %v671, 64
      %v1285 = vpop.permute.xlu0 %1284
      %1286 = vrot.lane.b32.xlu0 %v676, 64
      %v1287 = vpop.permute.xlu0 %1286
      %1288 = vrot.lane.b32.xlu0 %v769, 64
      %v1289 = vpop.permute.xlu0 %1288
      %1290 = vrot.lane.b32.xlu0 %v774, 64
      %v1291 = vpop.permute.xlu0 %1290
      %v1292 = vsel %vm876, %v1285, 0
      %v1294 = vsel %vm876, %v1287, 0
      %v1296 = vsel %vm876, %v1289, 0
      %v1298 = vsel %vm876, %v1291, 0
      %1300 = vmatprep.subr.mxu0 0.0
      %1301 = vmatpush1.xpose.msra.mxu0 %v1296
      %1302 = vmatprep.subr.mxu0 0.0
      %1303 = vmatpush1.xpose.msra.mxu0 %v1298
      %1304 = vmatprep.subr.mxu0 0.0
      %1305 = vmatpush1.xpose.msra.mxu0 0.0
      %1306 = vmatprep.subr.mxu0 0.0
      %1307 = vmatpush1.xpose.msra.mxu0 0.0
      %1308 = vmatprep.subr.mxu0 0.0
      %1309 = vmatpush1.xpose.msra.mxu0 0.0
      %1310 = vmatprep.subr.mxu0 0.0
      %1311 = vmatpush1.xpose.msra.mxu0 0.0
      %1312 = vmatprep.subr.mxu0 0.0
      %1313 = vmatpush1.xpose.msra.mxu0 0.0
      %1314 = vmatprep.subr.mxu0 0.0
      %1315 = vmatpush1.xpose.msra.mxu0 0.0
      %1316 = vmatprep.subr.mxu0 0.0
      %1317 = vmatpush1.xpose.msra.mxu0 0.0
      %1318 = vmatprep.subr.mxu0 0.0
      %1319 = vmatpush1.xpose.msra.mxu0 0.0
      %1320 = vmatprep.subr.mxu0 0.0
      %1321 = vmatpush1.xpose.msra.mxu0 0.0
      %1322 = vmatprep.subr.mxu0 0.0
      %1323 = vmatpush1.xpose.msra.mxu0 0.0
      %1324 = vmatprep.subr.mxu0 0.0
      %1325 = vmatpush1.xpose.msra.mxu0 0.0
      %1326 = vmatprep.subr.mxu0 0.0
      %1327 = vmatpush1.xpose.msra.mxu0 0.0
      %1328 = vmatprep.subr.mxu0 0.0
      %1329 = vmatpush1.xpose.msra.mxu0 0.0
      %1330 = vmatprep.subr.mxu0 0.0
      %1331 = vmatpush1.xpose.msra.mxu0 0.0
      %1332 = vmatprep.subr.mxu0 0.0
      %1333 = vmatpush1.xpose.msra.mxu0 0.0
      %1334 = vmatprep.subr.mxu0 0.0
      %1335 = vmatpush1.xpose.msra.mxu0 0.0
      %1336 = vmatprep.subr.mxu0 0.0
      %1337 = vmatpush1.xpose.msra.mxu0 0.0
      %1338 = vmatprep.subr.mxu0 0.0
      %1339 = vmatpush1.xpose.msra.mxu0 0.0
      %1340 = vmatprep.subr.mxu0 0.0
      %1341 = vmatpush1.xpose.msra.mxu0 0.0
      %1342 = vmatprep.subr.mxu0 0.0
      %1343 = vmatpush1.xpose.msra.mxu0 0.0
      %1344 = vmatprep.subr.mxu0 0.0
      %1345 = vmatpush1.xpose.msra.mxu0 0.0
      %1346 = vmatprep.subr.mxu0 0.0
      %1347 = vmatpush1.xpose.msra.mxu0 0.0
      %1348 = vmatprep.subr.mxu0 0.0
      %1349 = vmatpush1.xpose.msra.mxu0 0.0
      %1350 = vmatprep.subr.mxu0 0.0
      %1351 = vmatpush1.xpose.msra.mxu0 0.0
      %1352 = vmatprep.subr.mxu0 0.0
      %1353 = vmatpush1.xpose.msra.mxu0 0.0
      %1354 = vmatprep.subr.mxu0 0.0
      %1355 = vmatpush1.xpose.msra.mxu0 0.0
      %1356 = vmatprep.subr.mxu0 0.0
      %1357 = vmatpush1.xpose.msra.mxu0 0.0
      %1358 = vmatprep.subr.mxu0 0.0
      %1359 = vmatpush1.xpose.msra.mxu0 0.0
      %1360 = vmatprep.subr.mxu0 0.0
      %1361 = vmatpush1.xpose.msra.mxu0 0.0
      %1362 = vmatprep.subr.mxu0 0.0
      %1363 = vmatpush1.xpose.msra.mxu0 0.0
      %1364 = vmatprep.mubr.f32.mxu0 0.0
      %1365 = vmatmul.mubr.f32.gmra.mrb[0].mxu0 %v1292
      %v1366 = vpop.f32.mrb[0].mxu0
      %v1367 = vadd.f32 0.0, %v1366
      %v1368 = vpop.f32.mrb[0].mxu0
      %1369 = vmatprep.mubr.f32.mxu0 0.0
      %1370 = vmatmul.mubr.f32.gmra.mrb[0].mxu0 %v1294
      %v1371 = vpop.f32.mrb[0].mxu0
      %v1372 = vadd.f32 0.0, %v1371
      %v1373 = vpop.f32.mrb[0].mxu0
      %1374 = vdwg.mxu0
      %v1375 = vmul.f32 %v1367, 0.17677669
      %v1376 = vmul.f32 %v1372, 0.17677669
      %v1377 = vadd.f32 %v1375, %v970
      %v1378 = vadd.f32 %v1376, %v970
      %v1379 = vsel %vm974, %v1377, -inf
      %1380 = vmax.xlane.f32.xlu0 %v1379
      %v1381 = vpop.xlane.xlu0 %1380
      %v1382 = vsel %vm974, %v1378, -inf
      %1383 = vmax.xlane.f32.xlu0 %v1382
      %v1384 = vpop.xlane.xlu0 %1383
      %v1385 = vsub.f32 %v1377, %v1381
      %v1386 = vsub.f32 %v1378, %v1384
      %v1387 = vmul.f32 %v1385, 1.442695
      %v1388 = vpow.pop %v1387
      %v1389 = vmul.f32 %v1386, 1.442695
      %v1390 = vpow.pop %v1389
      %v1391 = vsel %vm974, %v1388, 0.0
      %1392 = vadd.xlane.f32.xlu0 %v1391
      %v1393 = vpop.xlane.xlu0 %1392
      %v1394 = vsel %vm974, %v1390, 0.0
      %1395 = vadd.xlane.f32.xlu0 %v1394
      %v1396 = vpop.xlane.xlu0 %1395
      %v1397 = vrcp.pop %v1393
      %v1398 = vmul.f32 %v1388, %v1397
      %v1399 = vrcp.pop %v1396
      %v1400 = vmul.f32 %v1390, %v1399
      %1401 = vrot.lane.b32.xlu0 %v867, 64
      %v1402 = vpop.permute.xlu0 %1401
      %1403 = vrot.lane.b32.xlu0 %v872, 64
      %v1404 = vpop.permute.xlu0 %1403
      %v1408 = vsel %vm974, %v1398, 0
      %v1411 = vsel %vm974, %v1400, 0
      %1413 = vmatprep.subr.mxu0 0.0
      %1414 = vmatpush1.msra.mxu0 %v1402
      %1415 = vmatprep.subr.mxu0 0.0
      %1416 = vmatpush1.msra.mxu0 %v1404
      %1417 = vmatprep.subr.mxu0 0.0
      %1418 = vmatpush1.msra.mxu0 0.0
      %1419 = vmatprep.subr.mxu0 0.0
      %1420 = vmatpush1.msra.mxu0 0.0
      %1421 = vmatprep.subr.mxu0 0.0
      %1422 = vmatpush1.msra.mxu0 0.0
      %1423 = vmatprep.subr.mxu0 0.0
      %1424 = vmatpush1.msra.mxu0 0.0
      %1425 = vmatprep.subr.mxu0 0.0
      %1426 = vmatpush1.msra.mxu0 0.0
      %1427 = vmatprep.subr.mxu0 0.0
      %1428 = vmatpush1.msra.mxu0 0.0
      %1429 = vmatprep.subr.mxu0 0.0
      %1430 = vmatpush1.msra.mxu0 0.0
      %1431 = vmatprep.subr.mxu0 0.0
      %1432 = vmatpush1.msra.mxu0 0.0
      %1433 = vmatprep.subr.mxu0 0.0
      %1434 = vmatpush1.msra.mxu0 0.0
      %1435 = vmatprep.subr.mxu0 0.0
      %1436 = vmatpush1.msra.mxu0 0.0
      %1437 = vmatprep.subr.mxu0 0.0
      %1438 = vmatpush1.msra.mxu0 0.0
      %1439 = vmatprep.subr.mxu0 0.0
      %1440 = vmatpush1.msra.mxu0 0.0
      %1441 = vmatprep.subr.mxu0 0.0
      %1442 = vmatpush1.msra.mxu0 0.0
      %1443 = vmatprep.subr.mxu0 0.0
      %1444 = vmatpush1.msra.mxu0 0.0
      %1445 = vmatprep.subr.mxu0 0.0
      %1446 = vmatpush1.msra.mxu0 0.0
      %1447 = vmatprep.subr.mxu0 0.0
      %1448 = vmatpush1.msra.mxu0 0.0
      %1449 = vmatprep.subr.mxu0 0.0
      %1450 = vmatpush1.msra.mxu0 0.0
      %1451 = vmatprep.subr.mxu0 0.0
      %1452 = vmatpush1.msra.mxu0 0.0
      %1453 = vmatprep.subr.mxu0 0.0
      %1454 = vmatpush1.msra.mxu0 0.0
      %1455 = vmatprep.subr.mxu0 0.0
      %1456 = vmatpush1.msra.mxu0 0.0
      %1457 = vmatprep.subr.mxu0 0.0
      %1458 = vmatpush1.msra.mxu0 0.0
      %1459 = vmatprep.subr.mxu0 0.0
      %1460 = vmatpush1.msra.mxu0 0.0
      %1461 = vmatprep.subr.mxu0 0.0
      %1462 = vmatpush1.msra.mxu0 0.0
      %1463 = vmatprep.subr.mxu0 0.0
      %1464 = vmatpush1.msra.mxu0 0.0
      %1465 = vmatprep.subr.mxu0 0.0
      %1466 = vmatpush1.msra.mxu0 0.0
      %1467 = vmatprep.subr.mxu0 0.0
      %1468 = vmatpush1.msra.mxu0 0.0
      %1469 = vmatprep.subr.mxu0 0.0
      %1470 = vmatpush1.msra.mxu0 0.0
      %1471 = vmatprep.subr.mxu0 0.0
      %1472 = vmatpush1.msra.mxu0 0.0
      %1473 = vmatprep.subr.mxu0 0.0
      %1474 = vmatpush1.msra.mxu0 0.0
      %1475 = vmatprep.subr.mxu0 0.0
      %1476 = vmatpush1.msra.mxu0 0.0
      %1477 = vmatprep.mubr.f32.mxu0 0.0
      %1478 = vmatmul.mubr.f32.gmra.mrb[0].mxu0 %v1408
      %v1479 = vpop.f32.mrb[0].mxu0
      %v1480 = vadd.f32 0.0, %v1479
      %v1481 = vpop.f32.mrb[0].mxu0
      %1482 = vmatprep.mubr.f32.mxu0 0.0
      %1483 = vmatmul.mubr.f32.gmra.mrb[0].mxu0 %v1411
      %v1484 = vpop.f32.mrb[0].mxu0
      %v1485 = vadd.f32 0.0, %v1484
      %v1486 = vpop.f32.mrb[0].mxu0
      %1487 = vdwg.mxu0
      %1488 = vrot.lane.b32.xlu0 %v671, 32
      %v1489 = vpop.permute.xlu0 %1488
      %1490 = vrot.lane.b32.xlu0 %v676, 32
      %v1491 = vpop.permute.xlu0 %1490
      %1492 = vrot.lane.b32.xlu0 %v769, 32
      %v1493 = vpop.permute.xlu0 %1492
      %1494 = vrot.lane.b32.xlu0 %v774, 32
      %v1495 = vpop.permute.xlu0 %1494
      %v1496 = vsel %vm876, %v1489, 0
      %v1498 = vsel %vm876, %v1491, 0
      %v1500 = vsel %vm876, %v1493, 0
      %v1502 = vsel %vm876, %v1495, 0
      %1504 = vmatprep.subr.mxu0 0.0
      %1505 = vmatpush1.xpose.msra.mxu0 %v1500
      %1506 = vmatprep.subr.mxu0 0.0
      %1507 = vmatpush1.xpose.msra.mxu0 %v1502
      %1508 = vmatprep.subr.mxu0 0.0
      %1509 = vmatpush1.xpose.msra.mxu0 0.0
      %1510 = vmatprep.subr.mxu0 0.0
      %1511 = vmatpush1.xpose.msra.mxu0 0.0
      %1512 = vmatprep.subr.mxu0 0.0
      %1513 = vmatpush1.xpose.msra.mxu0 0.0
      %1514 = vmatprep.subr.mxu0 0.0
      %1515 = vmatpush1.xpose.msra.mxu0 0.0
      %1516 = vmatprep.subr.mxu0 0.0
      %1517 = vmatpush1.xpose.msra.mxu0 0.0
      %1518 = vmatprep.subr.mxu0 0.0
      %1519 = vmatpush1.xpose.msra.mxu0 0.0
      %1520 = vmatprep.subr.mxu0 0.0
      %1521 = vmatpush1.xpose.msra.mxu0 0.0
      %1522 = vmatprep.subr.mxu0 0.0
      %1523 = vmatpush1.xpose.msra.mxu0 0.0
      %1524 = vmatprep.subr.mxu0 0.0
      %1525 = vmatpush1.xpose.msra.mxu0 0.0
      %1526 = vmatprep.subr.mxu0 0.0
      %1527 = vmatpush1.xpose.msra.mxu0 0.0
      %1528 = vmatprep.subr.mxu0 0.0
      %1529 = vmatpush1.xpose.msra.mxu0 0.0
      %1530 = vmatprep.subr.mxu0 0.0
      %1531 = vmatpush1.xpose.msra.mxu0 0.0
      %1532 = vmatprep.subr.mxu0 0.0
      %1533 = vmatpush1.xpose.msra.mxu0 0.0
      %1534 = vmatprep.subr.mxu0 0.0
      %1535 = vmatpush1.xpose.msra.mxu0 0.0
      %1536 = vmatprep.subr.mxu0 0.0
      %1537 = vmatpush1.xpose.msra.mxu0 0.0
      %1538 = vmatprep.subr.mxu0 0.0
      %1539 = vmatpush1.xpose.msra.mxu0 0.0
      %1540 = vmatprep.subr.mxu0 0.0
      %1541 = vmatpush1.xpose.msra.mxu0 0.0
      %1542 = vmatprep.subr.mxu0 0.0
      %1543 = vmatpush1.xpose.msra.mxu0 0.0
      %1544 = vmatprep.subr.mxu0 0.0
      %1545 = vmatpush1.xpose.msra.mxu0 0.0
      %1546 = vmatprep.subr.mxu0 0.0
      %1547 = vmatpush1.xpose.msra.mxu0 0.0
      %1548 = vmatprep.subr.mxu0 0.0
      %1549 = vmatpush1.xpose.msra.mxu0 0.0
      %1550 = vmatprep.subr.mxu0 0.0
      %1551 = vmatpush1.xpose.msra.mxu0 0.0
      %1552 = vmatprep.subr.mxu0 0.0
      %1553 = vmatpush1.xpose.msra.mxu0 0.0
      %1554 = vmatprep.subr.mxu0 0.0
      %1555 = vmatpush1.xpose.msra.mxu0 0.0
      %1556 = vmatprep.subr.mxu0 0.0
      %1557 = vmatpush1.xpose.msra.mxu0 0.0
      %1558 = vmatprep.subr.mxu0 0.0
      %1559 = vmatpush1.xpose.msra.mxu0 0.0
      %1560 = vmatprep.subr.mxu0 0.0
      %1561 = vmatpush1.xpose.msra.mxu0 0.0
      %1562 = vmatprep.subr.mxu0 0.0
      %1563 = vmatpush1.xpose.msra.mxu0 0.0
      %1564 = vmatprep.subr.mxu0 0.0
      %1565 = vmatpush1.xpose.msra.mxu0 0.0
      %1566 = vmatprep.subr.mxu0 0.0
      %1567 = vmatpush1.xpose.msra.mxu0 0.0
      %1568 = vmatprep.mubr.f32.mxu0 0.0
      %1569 = vmatmul.mubr.f32.gmra.mrb[0].mxu0 %v1496
      %v1570 = vpop.f32.mrb[0].mxu0
      %v1571 = vadd.f32 0.0, %v1570
      %v1572 = vpop.f32.mrb[0].mxu0
      %1573 = vmatprep.mubr.f32.mxu0 0.0
      %1574 = vmatmul.mubr.f32.gmra.mrb[0].mxu0 %v1498
      %v1575 = vpop.f32.mrb[0].mxu0
      %v1576 = vadd.f32 0.0, %v1575
      %v1577 = vpop.f32.mrb[0].mxu0
      %1578 = vdwg.mxu0
      %v1579 = vmul.f32 %v1571, 0.17677669
      %v1580 = vmul.f32 %v1576, 0.17677669
      %v1581 = vadd.f32 %v1579, %v970
      %v1582 = vadd.f32 %v1580, %v970
      %v1583 = vsel %vm974, %v1581, -inf
      %1584 = vmax.xlane.f32.xlu0 %v1583
      %v1585 = vpop.xlane.xlu0 %1584
      %v1586 = vsel %vm974, %v1582, -inf
      %1587 = vmax.xlane.f32.xlu0 %v1586
      %v1588 = vpop.xlane.xlu0 %1587
      %v1589 = vsub.f32 %v1581, %v1585
      %v1590 = vsub.f32 %v1582, %v1588
      %v1591 = vmul.f32 %v1589, 1.442695
      %v1592 = vpow.pop %v1591
      %v1593 = vmul.f32 %v1590, 1.442695
      %v1594 = vpow.pop %v1593
      %v1595 = vsel %vm974, %v1592, 0.0
      %1596 = vadd.xlane.f32.xlu0 %v1595
      %v1597 = vpop.xlane.xlu0 %1596
      %v1598 = vsel %vm974, %v1594, 0.0
      %1599 = vadd.xlane.f32.xlu0 %v1598
      %v1600 = vpop.xlane.xlu0 %1599
      %v1601 = vrcp.pop %v1597
      %v1602 = vmul.f32 %v1592, %v1601
      %v1603 = vrcp.pop %v1600
      %v1604 = vmul.f32 %v1594, %v1603
      %1605 = vrot.lane.b32.xlu0 %v867, 32
      %v1606 = vpop.permute.xlu0 %1605
      %1607 = vrot.lane.b32.xlu0 %v872, 32
      %v1608 = vpop.permute.xlu0 %1607
      %v1612 = vsel %vm974, %v1602, 0
      %v1615 = vsel %vm974, %v1604, 0
      %1617 = vmatprep.subr.mxu0 0.0
      %1618 = vmatpush1.msra.mxu0 %v1606
      %1619 = vmatprep.subr.mxu0 0.0
      %1620 = vmatpush1.msra.mxu0 %v1608
      %1621 = vmatprep.subr.mxu0 0.0
      %1622 = vmatpush1.msra.mxu0 0.0
      %1623 = vmatprep.subr.mxu0 0.0
      %1624 = vmatpush1.msra.mxu0 0.0
      %1625 = vmatprep.subr.mxu0 0.0
      %1626 = vmatpush1.msra.mxu0 0.0
      %1627 = vmatprep.subr.mxu0 0.0
      %1628 = vmatpush1.msra.mxu0 0.0
      %1629 = vmatprep.subr.mxu0 0.0
      %1630 = vmatpush1.msra.mxu0 0.0
      %1631 = vmatprep.subr.mxu0 0.0
      %1632 = vmatpush1.msra.mxu0 0.0
      %1633 = vmatprep.subr.mxu0 0.0
      %1634 = vmatpush1.msra.mxu0 0.0
      %1635 = vmatprep.subr.mxu0 0.0
      %1636 = vmatpush1.msra.mxu0 0.0
      %1637 = vmatprep.subr.mxu0 0.0
      %1638 = vmatpush1.msra.mxu0 0.0
      %1639 = vmatprep.subr.mxu0 0.0
      %1640 = vmatpush1.msra.mxu0 0.0
      %1641 = vmatprep.subr.mxu0 0.0
      %1642 = vmatpush1.msra.mxu0 0.0
      %1643 = vmatprep.subr.mxu0 0.0
      %1644 = vmatpush1.msra.mxu0 0.0
      %1645 = vmatprep.subr.mxu0 0.0
      %1646 = vmatpush1.msra.mxu0 0.0
      %1647 = vmatprep.subr.mxu0 0.0
      %1648 = vmatpush1.msra.mxu0 0.0
      %1649 = vmatprep.subr.mxu0 0.0
      %1650 = vmatpush1.msra.mxu0 0.0
      %1651 = vmatprep.subr.mxu0 0.0
      %1652 = vmatpush1.msra.mxu0 0.0
      %1653 = vmatprep.subr.mxu0 0.0
      %1654 = vmatpush1.msra.mxu0 0.0
      %1655 = vmatprep.subr.mxu0 0.0
      %1656 = vmatpush1.msra.mxu0 0.0
      %1657 = vmatprep.subr.mxu0 0.0
      %1658 = vmatpush1.msra.mxu0 0.0
      %1659 = vmatprep.subr.mxu0 0.0
      %1660 = vmatpush1.msra.mxu0 0.0
      %1661 = vmatprep.subr.mxu0 0.0
      %1662 = vmatpush1.msra.mxu0 0.0
      %1663 = vmatprep.subr.mxu0 0.0
      %1664 = vmatpush1.msra.mxu0 0.0
      %1665 = vmatprep.subr.mxu0 0.0
      %1666 = vmatpush1.msra.mxu0 0.0
      %1667 = vmatprep.subr.mxu0 0.0
      %1668 = vmatpush1.msra.mxu0 0.0
      %1669 = vmatprep.subr.mxu0 0.0
      %1670 = vmatpush1.msra.mxu0 0.0
      %1671 = vmatprep.subr.mxu0 0.0
      %1672 = vmatpush1.msra.mxu0 0.0
      %1673 = vmatprep.subr.mxu0 0.0
      %1674 = vmatpush1.msra.mxu0 0.0
      %1675 = vmatprep.subr.mxu0 0.0
      %1676 = vmatpush1.msra.mxu0 0.0
      %1677 = vmatprep.subr.mxu0 0.0
      %1678 = vmatpush1.msra.mxu0 0.0
      %1679 = vmatprep.subr.mxu0 0.0
      %1680 = vmatpush1.msra.mxu0 0.0
      %1681 = vmatprep.mubr.f32.mxu0 0.0
      %1682 = vmatmul.mubr.f32.gmra.mrb[0].mxu0 %v1612
      %v1683 = vpop.f32.mrb[0].mxu0
      %v1684 = vadd.f32 0.0, %v1683
      %v1685 = vpop.f32.mrb[0].mxu0
      %1686 = vmatprep.mubr.f32.mxu0 0.0
      %1687 = vmatmul.mubr.f32.gmra.mrb[0].mxu0 %v1615
      %v1688 = vpop.f32.mrb[0].mxu0
      %v1689 = vadd.f32 0.0, %v1688
      %v1690 = vpop.f32.mrb[0].mxu0
      %1691 = vdwg.mxu0
      %1694 = vrot.lane.b32.xlu0 %v1276, 32
      %v1695 = vpop.permute.xlu0 %1694
      %1696 = vrot.lane.b32.xlu0 %v1281, 32
      %v1697 = vpop.permute.xlu0 %1696
      %1702 = vrot.lane.b32.xlu0 %v1480, 64
      %v1703 = vpop.permute.xlu0 %1702
      %1704 = vrot.lane.b32.xlu0 %v1485, 64
      %v1705 = vpop.permute.xlu0 %1704
      %1710 = vrot.lane.b32.xlu0 %v1684, 96
      %v1711 = vpop.permute.xlu0 %1710
      %1712 = vrot.lane.b32.xlu0 %v1689, 96
      %v1713 = vpop.permute.xlu0 %1712
      %v1716 = vsel %vm876, %v1070, %v1695
      %v1717 = vsel %vm876, %v1075, %v1697
      %vm1718 = vcmask 523264
      %v1719 = vsel %vm1718, %v1716, %v1703
      %v1720 = vsel %vm1718, %v1717, %v1705
      %vm1721 = vcmask 785408
      %v1722 = vsel %vm1721, %v1719, %v1711
      %v1723 = vsel %vm1721, %v1720, %v1713
      %v1724 = vld [vmem:[%s11] sm:$0xff]
      %v1725 = vld [vmem:[%s11 + $0x8] sm:$0xff]
      %v1726 = vld [vmem:[%s11 + $0x10] sm:$0xff]
      %v1727 = vld [vmem:[%s11 + $0x18] sm:$0xff]
      %v1728 = vld [vmem:[%s11 + $0x20] sm:$0xff]
      %v1729 = vld [vmem:[%s11 + $0x28] sm:$0xff]
      %v1730 = vld [vmem:[%s11 + $0x30] sm:$0xff]
      %v1731 = vld [vmem:[%s11 + $0x38] sm:$0xff]
      %v1732 = vld [vmem:[%s11 + $0x40] sm:$0xff]
      %v1733 = vld [vmem:[%s11 + $0x48] sm:$0xff]
      %v1734 = vld [vmem:[%s11 + $0x50] sm:$0xff]
      %v1735 = vld [vmem:[%s11 + $0x58] sm:$0xff]
      %v1736 = vld [vmem:[%s11 + $0x60] sm:$0xff]
      %v1737 = vld [vmem:[%s11 + $0x68] sm:$0xff]
      %v1738 = vld [vmem:[%s11 + $0x70] sm:$0xff]
      %v1739 = vld [vmem:[%s11 + $0x78] sm:$0xff]
      %v1740 = vld [vmem:[%s12] sm:$0x1]
      %v1742 = vlaneseq
      %v1743 = vshrl.u32 %v1742, 7
      %v1744 = vsub.s32 0, %v1743
      %v1745 = vrot.slane %v1740, %v1744
      %1747 = vmatprep.subr.mxu0 0.0
      %1748 = vmatpush1.msra.mxu0 %v1724
      %1749 = vmatprep.subr.mxu0 0.0
      %1750 = vmatpush1.msra.mxu0 %v1725
      %1751 = vmatprep.subr.mxu0 0.0
      %1752 = vmatpush1.msra.mxu0 %v1726
      %1753 = vmatprep.subr.mxu0 0.0
      %1754 = vmatpush1.msra.mxu0 %v1727
      %1755 = vmatprep.subr.mxu0 0.0
      %1756 = vmatpush1.msra.mxu0 %v1728
      %1757 = vmatprep.subr.mxu0 0.0
      %1758 = vmatpush1.msra.mxu0 %v1729
      %1759 = vmatprep.subr.mxu0 0.0
      %1760 = vmatpush1.msra.mxu0 %v1730
      %1761 = vmatprep.subr.mxu0 0.0
      %1762 = vmatpush1.msra.mxu0 %v1731
      %1763 = vmatprep.subr.mxu0 0.0
      %1764 = vmatpush1.msra.mxu0 %v1732
      %1765 = vmatprep.subr.mxu0 0.0
      %1766 = vmatpush1.msra.mxu0 %v1733
      %1767 = vmatprep.subr.mxu0 0.0
      %1768 = vmatpush1.msra.mxu0 %v1734
      %1769 = vmatprep.subr.mxu0 0.0
      %1770 = vmatpush1.msra.mxu0 %v1735
      %1771 = vmatprep.subr.mxu0 0.0
      %1772 = vmatpush1.msra.mxu0 %v1736
      %1773 = vmatprep.subr.mxu0 0.0
      %1774 = vmatpush1.msra.mxu0 %v1737
      %1775 = vmatprep.subr.mxu0 0.0
      %1776 = vmatpush1.msra.mxu0 %v1738
      %1777 = vmatprep.subr.mxu0 0.0
      %1778 = vmatpush1.msra.mxu0 %v1739
      %1779 = vmatprep.subr.mxu0 0.0
      %1780 = vmatpush1.msra.mxu0 0.0
      %1781 = vmatprep.subr.mxu0 0.0
      %1782 = vmatpush1.msra.mxu0 0.0
      %1783 = vmatprep.subr.mxu0 0.0
      %1784 = vmatpush1.msra.mxu0 0.0
      %1785 = vmatprep.subr.mxu0 0.0
      %1786 = vmatpush1.msra.mxu0 0.0
      %1787 = vmatprep.subr.mxu0 0.0
      %1788 = vmatpush1.msra.mxu0 0.0
      %1789 = vmatprep.subr.mxu0 0.0
      %1790 = vmatpush1.msra.mxu0 0.0
      %1791 = vmatprep.subr.mxu0 0.0
      %1792 = vmatpush1.msra.mxu0 0.0
      %1793 = vmatprep.subr.mxu0 0.0
      %1794 = vmatpush1.msra.mxu0 0.0
      %1795 = vmatprep.subr.mxu0 0.0
      %1796 = vmatpush1.msra.mxu0 0.0
      %1797 = vmatprep.subr.mxu0 0.0
      %1798 = vmatpush1.msra.mxu0 0.0
      %1799 = vmatprep.subr.mxu0 0.0
      %1800 = vmatpush1.msra.mxu0 0.0
      %1801 = vmatprep.subr.mxu0 0.0
      %1802 = vmatpush1.msra.mxu0 0.0
      %1803 = vmatprep.subr.mxu0 0.0
      %1804 = vmatpush1.msra.mxu0 0.0
      %1805 = vmatprep.subr.mxu0 0.0
      %1806 = vmatpush1.msra.mxu0 0.0
      %1807 = vmatprep.subr.mxu0 0.0
      %1808 = vmatpush1.msra.mxu0 0.0
      %1809 = vmatprep.subr.mxu0 0.0
      %1810 = vmatpush1.msra.mxu0 0.0
      %1811 = vmatprep.mubr.f32.mxu0 0.0
      %1812 = vmatmul.mubr.f32.gmra.mrb[0].mxu0 %v1722
      %v1813 = vpop.f32.mrb[0].mxu0
      %v1814 = vadd.f32 %v1745, %v1813
      %v1815 = vpop.f32.mrb[0].mxu0
      %1816 = vmatprep.mubr.f32.mxu0 0.0
      %1817 = vmatmul.mubr.f32.gmra.mrb[0].mxu0 %v1723
      %v1818 = vpop.f32.mrb[0].mxu0
      %v1819 = vadd.f32 %v1745, %v1818
      %v1820 = vpop.f32.mrb[0].mxu0
      %1821 = vdwg.mxu0
      %v1822 = vadd.f32 %v569, %v1814
      %v1823 = vadd.f32 %v570, %v1819
      %v1824 = vld [vmem:[%s13] sm:$0x1]
      %v1825 = vld [vmem:[%s14] sm:$0x1]
      %1826 = vadd.xlane.f32.xlu0 %v1822
      %v1827 = vpop.xlane.xlu0 %1826
      %1828 = vadd.xlane.f32.xlu0 %v1823
      %v1829 = vpop.xlane.xlu0 %1828
      %v1830 = vrcp.pop 128.0
      %v1831 = vmul.f32 %v1827, %v1830
      %v1832 = vmul.f32 %v1829, %v1830
      %v1833 = vsub.f32 %v1822, %v1831
      %v1834 = vsub.f32 %v1823, %v1832
      %v1835 = vmul.f32 %v1833, %v1833
      %v1836 = vmul.f32 %v1834, %v1834
      %1837 = vadd.xlane.f32.xlu0 %v1835
      %v1838 = vpop.xlane.xlu0 %1837
      %1839 = vadd.xlane.f32.xlu0 %v1836
      %v1840 = vpop.xlane.xlu0 %1839
      %v1841 = vmul.f32 %v1838, %v1830
      %v1842 = vmul.f32 %v1840, %v1830
      %v1843 = vadd.f32 %v1841, 1e-05
      %v1844 = vadd.f32 %v1842, 1e-05
      %v1845 = vrsqrt.pop %v1843
      %v1846 = vrsqrt.pop %v1844
      %v1847 = vmul.f32 %v1833, %v1845
      %v1848 = vmul.f32 %v1834, %v1846
      %v1850 = vlaneseq
      %v1851 = vshrl.u32 %v1850, 7
      %v1852 = vsub.s32 0, %v1851
      %v1853 = vrot.slane %v1824, %v1852
      %v1855 = vmul.f32 %v1847, %v1853
      %v1856 = vmul.f32 %v1848, %v1853
      %v1858 = vlaneseq
      %v1859 = vshrl.u32 %v1858, 7
      %v1860 = vsub.s32 0, %v1859
      %v1861 = vrot.slane %v1825, %v1860
      %v1863 = vadd.f32 %v1855, %v1861
      %v1864 = vadd.f32 %v1856, %v1861
      %1865 = vst [vmem:[%s568] sm:$0xff] %v1863
      %1866 = vst [vmem:[%s568 + $0x8] sm:$0xff] %v1864
      %p1867 = scmp.lt.s32.totalorder %s26, 1
      %s1868 = scalar_select %p1867, %s26, 1
      %s1869 = smul.addr %s1868, 2
      %s1870 = smul.addr %s1869, 8
      %s1871 = scalar_lea.vmem %s15, %s1870
      // Predicated region
      $region81: #{transformer_layer_forward.8} parent=79 // pred_check
        %p1872 = pneg %p384
      $region82: #{transformer_layer_forward.8} parent=79 // pred_check_branch
        %1874 = sbr.rel (%p1872) target = $region84
      $region83: #{transformer_layer_forward.8} parent=79 // pred_region
        _
      $region84: #{transformer_layer_forward.8} parent=79 // pred_fallthru
        _
    $region80: #{transformer_layer_forward.8} parent=5 // pred_fallthru
      _
    %p1875 = scmp.le.s32.totalorder 2, %s21
    // Predicated region
    $region85: #{transformer_layer_forward.8} parent=5 // pred_check
      %p1876 = pneg %p1875
    $region86: #{transformer_layer_forward.8} parent=5 // pred_check_branch
      %1878 = sbr.rel (%p1876) target = $region88
    $region87: #{transformer_layer_forward.8} parent=5 // pred_region
      %s1879 = ssub.s32 %s21, 2
      // Predicated region
      $region89: #{transformer_layer_forward.8} parent=87 // pred_check
        %p1880 = pneg %p390
      $region90: #{transformer_layer_forward.8} parent=87 // pred_check_branch
        %1882 = sbr.rel (%p1880) target = $region92
      $region91: #{transformer_layer_forward.8} parent=87 // pred_region
        %p1883 = scmp.lt.s32.totalorder %s27, 1
        %s1884 = scalar_select %p1883, %s27, 1
        %s1885 = smul.addr %s1884, 2
        %s1886 = smul.addr %s1885, 8
        %s1887 = scalar_lea.vmem %s15, %s1886
      $region92: #{transformer_layer_forward.8} parent=87 // pred_fallthru
        _
    $region88: #{transformer_layer_forward.8} parent=5 // pred_fallthru
      _
  $region6: #{transformer_layer_forward.8} parent=0 // loop_footer
    %s25 = sadd.s32 1, %s21
  $region7: #{transformer_layer_forward.8} parent=0 // loop_footer_branch
    %20 = sbr.rel target = $region3
  $region8: #{transformer_layer_forward.8} parent=0 // loop_exit
    _

// kernel: transformer_layer_forward.11
$region0: #{transformer_layer_forward.11}
  #allocation0 [shape = 'u32[]', space=smem, size = 0x4, offset = 0x4, fixed_abs, tag = 'smem constant byte address 0x4 - core index']
  #allocation1 [shape = 'u32[144,128]{1,0:T(1,128)}', space=vmem, size = 0x12000, scoped, tag = 'internal scratch']
  %s0 = inlined_call_operand.vmem [shape: f32[2,16,128], index: 0, kind: input, shape index: {}]
  %s1 = inlined_call_operand.vmem [shape: f32[1,128], index: 1, kind: input, shape index: {}]
  %s2 = inlined_call_operand.vmem [shape: f32[1,128], index: 2, kind: input, shape index: {}]
  %s3 = inlined_call_operand.hbm [shape: f32[2,16,128], index: 3, kind: output, shape index: {}]
  %s4 = sld [smem:[#allocation0]]
  $region45: #{transformer_layer_forward.11} parent=0
    _
  %s6 = ssub.s32 1, %s4
  %s7 = scalar_select 0, %s6, %s4
  $region1: #{transformer_layer_forward.11} parent=0
    #allocation2 [shape = 'u8[16384]{0}', space=vmem, size = 0x4000, scoped, tag = 'output window, operand 0']
    #allocation3 [shape = 's32[2]{0}', space=sflag, size = 0x8, scoped, tag = 'scoped memory for transformer_layer_forward.11']
    %8 = vsyncpa [#allocation3], 0
    %s9 = scalar_lea.sflag [#allocation3], 1
    %10 = vsyncpa %s9, 0
    loop: start=0, step=1, limit=4
    $region2: #{transformer_layer_forward.11} parent=1 // loop_pre_header
      _
    $region3: #{transformer_layer_forward.11} parent=1 // loop_header
      %s12 = sphi 0, %s16
      %p13 = scmp.ge.s32.totalorder %s12, 4
      %s22 = sphi 0, %s24
      %s25 = sphi 0, %s22
      %s26 = sphi 0, %s25
      %s42 = sphi 0, %s26
      %s46 = sphi 0, %s46
      %s48 = sphi 0, %s46
      %s49 = sphi 0, %s48
      %s63 = sphi 0, %s49
      %s67 = sphi 0, %s67
      %s69 = sphi 0, %s67
      %s70 = sphi 0, %s69
      %s84 = sphi 0, %s70
      %s90 = sphi 0, %s92
      %s93 = sphi 0, %s90
      %s94 = sphi 0, %s93
      %s110 = sphi 0, %s94
    $region4: #{transformer_layer_forward.11} parent=1 // loop_header_branch
      %15 = sbr.rel (%p13) target = $region8
    $region5: #{transformer_layer_forward.11} parent=1 // loop_body
      %s17 = ssub.s32 %s12, 1
      %s18 = ssub.s32 %s12, 2
      %s19 = sadd.s32 %s12, 1
      %s20 = ssub.s32 %s12, %s19
      %p21 = scmp.eq.s32.totalorder %s20, 0
      %s23 = sadd.s32 %s22, 1
      %s24 = scalar_select %p21, %s22, %s23
      %p27 = pneg %p21
      %p28 = scmp.eq.s32.totalorder %s12, 1
      %p29 = por %p27, %p28
      %p30 = scmp.ne.s32.totalorder %s22, %s25
      %p31 = scmp.eq.s32.totalorder %s12, 0
      %p32 = por %p30, %p31
      %p33 = scmp.ne.s32.totalorder %s22, %s25
      %p34 = scmp.eq.s32.totalorder %s17, 1
      %p35 = por %p33, %p34
      %p36 = scmp.ne.s32.totalorder %s25, %s26
      %p37 = scmp.eq.s32.totalorder %s17, 0
      %p38 = por %p36, %p37
      %p39 = scmp.ne.s32.totalorder %s25, %s26
      %p40 = scmp.eq.s32.totalorder %s18, 1
      %p41 = por %p39, %p40
      %p43 = scmp.ne.s32.totalorder %s26, %s42
      %p44 = scmp.eq.s32.totalorder %s18, 0
      %p45 = por %p43, %p44
      %s47 = sadd.s32 %s46, 1
      %p50 = scmp.eq.s32.totalorder %s12, 1
      %p51 = scmp.ne.s32.totalorder %s46, %s48
      %p52 = scmp.eq.s32.totalorder %s12, 0
      %p53 = por %p51, %p52
      %p54 = scmp.ne.s32.totalorder %s46, %s48
      %p55 = scmp.eq.s32.totalorder %s17, 1
      %p56 = por %p54, %p55
      %p57 = scmp.ne.s32.totalorder %s48, %s49
      %p58 = scmp.eq.s32.totalorder %s17, 0
      %p59 = por %p57, %p58
      %p60 = scmp.ne.s32.totalorder %s48, %s49
      %p61 = scmp.eq.s32.totalorder %s18, 1
      %p62 = por %p60, %p61
      %p64 = scmp.ne.s32.totalorder %s49, %s63
      %p65 = scmp.eq.s32.totalorder %s18, 0
      %p66 = por %p64, %p65
      %s68 = sadd.s32 %s67, 1
      %p71 = scmp.eq.s32.totalorder %s12, 1
      %p72 = scmp.ne.s32.totalorder %s67, %s69
      %p73 = scmp.eq.s32.totalorder %s12, 0
      %p74 = por %p72, %p73
      %p75 = scmp.ne.s32.totalorder %s67, %s69
      %p76 = scmp.eq.s32.totalorder %s17, 1
      %p77 = por %p75, %p76
      %p78 = scmp.ne.s32.totalorder %s69, %s70
      %p79 = scmp.eq.s32.totalorder %s17, 0
      %p80 = por %p78, %p79
      %p81 = scmp.ne.s32.totalorder %s69, %s70
      %p82 = scmp.eq.s32.totalorder %s18, 1
      %p83 = por %p81, %p82
      %p85 = scmp.ne.s32.totalorder %s70, %s84
      %p86 = scmp.eq.s32.totalorder %s18, 0
      %p87 = por %p85, %p86
      %s88 = ssub.s32 %s12, %s19
      %p89 = scmp.eq.s32.totalorder %s88, 0
      %s91 = sadd.s32 %s90, 1
      %s92 = scalar_select %p89, %s90, %s91
      %p95 = pneg %p89
      %p96 = scmp.eq.s32.totalorder %s12, 1
      %p97 = por %p95, %p96
      %p98 = scmp.ne.s32.totalorder %s90, %s93
      %p99 = scmp.eq.s32.totalorder %s12, 0
      %p100 = por %p98, %p99
      %p101 = scmp.ne.s32.totalorder %s90, %s93
      %p102 = scmp.eq.s32.totalorder %s17, 1
      %p103 = por %p101, %p102
      %p104 = scmp.ne.s32.totalorder %s93, %s94
      %p105 = scmp.eq.s32.totalorder %s17, 0
      %p106 = por %p104, %p105
      %p107 = scmp.ne.s32.totalorder %s93, %s94
      %p108 = scmp.eq.s32.totalorder %s18, 1
      %p109 = por %p107, %p108
      %p111 = scmp.ne.s32.totalorder %s94, %s110
      %p112 = scmp.eq.s32.totalorder %s18, 0
      %p113 = por %p111, %p112
      %p114 = scmp.le.s32.totalorder 1, %s12
      %p115 = scmp.lt.s32.totalorder %s12, 3
      %p116 = pnand %p114, %p115
      %p117 = pneg %p116
      // Predicated region
      $region9: #{transformer_layer_forward.11} parent=5 // pred_check
        _
      $region10: #{transformer_layer_forward.11} parent=5 // pred_check_branch
        %119 = sbr.rel (%p116) target = $region12
      $region11: #{transformer_layer_forward.11} parent=5 // pred_region
        %s120 = ssub.s32 %s12, 1
        // Predicated region
        $region13: #{transformer_layer_forward.11} parent=11 // pred_check
          %p121 = pneg %p59
        $region14: #{transformer_layer_forward.11} parent=11 // pred_check_branch
          %123 = sbr.rel (%p121) target = $region16
        $region15: #{transformer_layer_forward.11} parent=11 // pred_region
          _
        $region16: #{transformer_layer_forward.11} parent=11 // pred_fallthru
          _
        // Predicated region
        $region17: #{transformer_layer_forward.11} parent=11 // pred_check
          %p124 = pneg %p80
        $region18: #{transformer_layer_forward.11} parent=11 // pred_check_branch
          %126 = sbr.rel (%p124) target = $region20
        $region19: #{transformer_layer_forward.11} parent=11 // pred_region
          _
        $region20: #{transformer_layer_forward.11} parent=11 // pred_fallthru
          _
      $region12: #{transformer_layer_forward.11} parent=5 // pred_fallthru
        _
      %p127 = scmp.lt.s32.totalorder %s12, 2
      // Predicated region
      $region21: #{transformer_layer_forward.11} parent=5 // pred_check
        %p128 = pneg %p127
      $region22: #{transformer_layer_forward.11} parent=5 // pred_check_branch
        %130 = sbr.rel (%p128) target = $region24
      $region23: #{transformer_layer_forward.11} parent=5 // pred_region
        // Predicated region
        $region25: #{transformer_layer_forward.11} parent=23 // pred_check
          %p131 = pneg %p32
        $region26: #{transformer_layer_forward.11} parent=23 // pred_check_branch
          %133 = sbr.rel (%p131) target = $region28
        $region27: #{transformer_layer_forward.11} parent=23 // pred_region
          %p134 = scmp.lt.s32.totalorder %s12, 1
          %s135 = scalar_select %p134, %s12, 1
          %s136 = smul.addr %s135, 2
          %s137 = smul.addr %s136, 8
          %s138 = scalar_lea.vmem %s0, %s137
        $region28: #{transformer_layer_forward.11} parent=23 // pred_fallthru
          _
      $region24: #{transformer_layer_forward.11} parent=5 // pred_fallthru
        _
      %p139 = scmp.le.s32.totalorder 1, %s12
      %p140 = scmp.lt.s32.totalorder %s12, 3
      %p141 = pnand %p139, %p140
      %p142 = pneg %p141
      // Predicated region
      $region29: #{transformer_layer_forward.11} parent=5 // pred_check
        _
      $region30: #{transformer_layer_forward.11} parent=5 // pred_check_branch
        %144 = sbr.rel (%p141) target = $region32
      $region31: #{transformer_layer_forward.11} parent=5 // pred_region
        %s145 = ssub.s32 %s12, 1
        %p146 = scmp.lt.s32.totalorder %s17, 1
        %s147 = scalar_select %p146, %s17, 1
        %s148 = smul.addr %s147, 2
        %s149 = smul.addr %s148, 8
        %s150 = scalar_lea.vmem %s0, %s149
        %p151 = pneg %p38
        %p152 = pneg %p35
        %p153 = pneg %p59
        %p154 = pneg %p56
        %p155 = pneg %p80
        %p156 = pneg %p77
        %p157 = pneg %p106
        %p158 = pneg %p103
        %s159 = sand.u32 %s93, 1
        %s160 = scalar_lea.sflag [#allocation3], %s159
        %s161 = sand.u32 %s93, 1
        %s162 = smul.addr %s161, 16
        %s163 = scalar_lea.vmem [#allocation2], %s162
        %p164 = scmp.lt.s32.totalorder %s17, 1
        %s165 = scalar_select %p164, %s17, 1
        %s166 = smul.addr %s165, 2
        %s167 = smul.addr %s166, 8
        %s168 = scalar_lea.vmem %s0, %s167
        %v169 = vld [vmem:[%s168] sm:$0xff]
        %v170 = vld [vmem:[%s168 + $0x8] sm:$0xff]
        %v171 = vld [vmem:[%s1] sm:$0x1]
        %v172 = vld [vmem:[%s2] sm:$0x1]
        %173 = vadd.xlane.f32.xlu0 %v169
        %v174 = vpop.xlane.xlu0 %173
        %175 = vadd.xlane.f32.xlu0 %v170
        %v176 = vpop.xlane.xlu0 %175
        %v177 = vrcp.pop 128.0
        %v178 = vmul.f32 %v174, %v177
        %v179 = vmul.f32 %v176, %v177
        %v180 = vsub.f32 %v169, %v178
        %v181 = vsub.f32 %v170, %v179
        %v182 = vmul.f32 %v180, %v180
        %v183 = vmul.f32 %v181, %v181
        %184 = vadd.xlane.f32.xlu0 %v182
        %v185 = vpop.xlane.xlu0 %184
        %186 = vadd.xlane.f32.xlu0 %v183
        %v187 = vpop.xlane.xlu0 %186
        %v188 = vmul.f32 %v185, %v177
        %v189 = vmul.f32 %v187, %v177
        %v190 = vadd.f32 %v188, 1e-05
        %v191 = vadd.f32 %v189, 1e-05
        %v192 = vrsqrt.pop %v190
        %v193 = vrsqrt.pop %v191
        %v194 = vmul.f32 %v180, %v192
        %v195 = vmul.f32 %v181, %v193
        %v197 = vlaneseq
        %v198 = vshrl.u32 %v197, 7
        %v199 = vsub.s32 0, %v198
        %v200 = vrot.slane %v171, %v199
        %v202 = vmul.f32 %v194, %v200
        %v203 = vmul.f32 %v195, %v200
        %v205 = vlaneseq
        %v206 = vshrl.u32 %v205, 7
        %v207 = vsub.s32 0, %v206
        %v208 = vrot.slane %v172, %v207
        %v210 = vadd.f32 %v202, %v208
        %v211 = vadd.f32 %v203, %v208
        %212 = vst [vmem:[%s163] sm:$0xff] %v210
        %213 = vst [vmem:[%s163 + $0x8] sm:$0xff] %v211
        %s214 = sand.u32 %s93, 1
        %s215 = scalar_lea.sflag [#allocation3], %s214
        %s216 = sand.u32 %s93, 1
        %s217 = smul.addr %s216, 16
        %s218 = scalar_lea.vmem [#allocation2], %s217
        // Predicated region
        $region33: #{transformer_layer_forward.11} parent=31 // pred_check
          %p219 = pneg %p103
        $region34: #{transformer_layer_forward.11} parent=31 // pred_check_branch
          %221 = sbr.rel (%p219) target = $region36
        $region35: #{transformer_layer_forward.11} parent=31 // pred_region
          %s223 = ssub.s32 256, 256
          %224 = vsyncadd %s215, %s223
          %s225 = smul.addr %s17, 2
          %s226 = smul.addr %s225, 128
          %s227 = scalar_lea.hbm %s3, %s226
          %s228 = sshll.u32 %s218, 4
          %s229 = int_to_ptr.vmem [resolvable:$true] %s228
          %234 = dma.vmem_to_hbm [thread:$0]  %s229, 256, %s227, %s215, 128, 128, 8
        $region36: #{transformer_layer_forward.11} parent=31 // pred_fallthru
          _
      $region32: #{transformer_layer_forward.11} parent=5 // pred_fallthru
        _
      %p235 = scmp.le.s32.totalorder 2, %s12
      // Predicated region
      $region37: #{transformer_layer_forward.11} parent=5 // pred_check
        %p236 = pneg %p235
      $region38: #{transformer_layer_forward.11} parent=5 // pred_check_branch
        %238 = sbr.rel (%p236) target = $region40
      $region39: #{transformer_layer_forward.11} parent=5 // pred_region
        %s239 = ssub.s32 %s12, 2
        // Predicated region
        $region41: #{transformer_layer_forward.11} parent=39 // pred_check
          %p240 = pneg %p109
        $region42: #{transformer_layer_forward.11} parent=39 // pred_check_branch
          %242 = sbr.rel (%p240) target = $region44
        $region43: #{transformer_layer_forward.11} parent=39 // pred_region
          %s243 = sand.u32 %s94, 1
          %s244 = scalar_lea.sflag [#allocation3], %s243
          %s245 = sand.u32 %s94, 1
          %s246 = smul.addr %s245, 16
          %s247 = scalar_lea.vmem [#allocation2], %s246
          %248 = dma.done %s244, 256
        $region44: #{transformer_layer_forward.11} parent=39 // pred_fallthru
          _
      $region40: #{transformer_layer_forward.11} parent=5 // pred_fallthru
        _
    $region6: #{transformer_layer_forward.11} parent=1 // loop_footer
      %s16 = sadd.s32 1, %s12
    $region7: #{transformer_layer_forward.11} parent=1 // loop_footer_branch
      %11 = sbr.rel target = $region3
    $region8: #{transformer_layer_forward.11} parent=1 // loop_exit
      _
    %249 = vsyncpa [#allocation3], 1
    %s250 = scalar_lea.sflag [#allocation3], 1
    %251 = vsyncpa %s250, 1

</llo_original>
